<compile_context>
chip_gen: v7x
topology: tpu7x:2x2x1
jax: 0.10.0
libtpu: 0.0.40
codegen_flags: <defaults>
</compile_context>

<pallas_src>
import functools

import jax
import jax.numpy as jnp
from jax.experimental import pallas as pl
from jax.experimental.pallas import tpu as pltpu


# ----------------------------------------------------------------------------
# Kernel 1: fused 2-layer MLP   out = relu(relu(x @ W1 + b1) @ W2 + b2)
# ----------------------------------------------------------------------------
def _mlp_kernel(x_ref, w1_ref, b1_ref, w2_ref, b2_ref, o_ref):
    h = jnp.dot(x_ref[...], w1_ref[...], preferred_element_type=jnp.float32)
    h = jnp.maximum(h + b1_ref[...], 0.0)
    o = jnp.dot(h, w2_ref[...], preferred_element_type=jnp.float32)
    o_ref[...] = jnp.maximum(o + b2_ref[...], 0.0)


def mlp_forward(x, w1, b1, w2, b2):
    B, F = x.shape
    # lane-align the contraction dim (110 -> 128); zero rows/cols contribute 0.
    Fp = ((F + 127) // 128) * 128
    if Fp != F:
        x = jnp.pad(x, ((0, 0), (0, Fp - F)))
        w1 = jnp.pad(w1, ((0, Fp - F), (0, 0)))
    out_dim = w2.shape[1]
    return pl.pallas_call(
        _mlp_kernel,
        out_shape=jax.ShapeDtypeStruct((B, out_dim), jnp.float32),
    )(x, w1, b1.reshape(1, -1), w2, b2.reshape(1, -1))


# ----------------------------------------------------------------------------
# Kernel 2: conv-as-single-GEMM, lane-dense (Cout, P) output per batch tile.
#   patches: (B, K*K*Cin, P)   weights: (Cout, K*K*Cin)   bias: (Cout, 1)
#   out:     (B, Cout, P)
# ----------------------------------------------------------------------------
def _conv_gemm_kernel(p_ref, w_ref, b_ref, o_ref, *, relu):
    # p_ref: (1, KKCin, TP)  w_ref: (Cout, KKCin)  b_ref: (Cout, 1)  o_ref: (1, Cout, TP)
    out = jnp.dot(w_ref[...], p_ref[0], preferred_element_type=jnp.float32) + b_ref[...]
    if relu:
        out = jnp.maximum(out, 0.0)
    o_ref[0] = out


def _pixel_tile(P):
    # largest lane-aligned tile (<=512) that divides P; otherwise whole P.
    for cand in (512, 384, 256, 128):
        if P % cand == 0:
            return cand
    return P


def conv_gemm(patches, w_mat, bias, *, out_hw, relu):
    B, KKCin, P = patches.shape
    Cout = w_mat.shape[0]
    TP = _pixel_tile(P)
    kernel = functools.partial(_conv_gemm_kernel, relu=relu)
    out = pl.pallas_call(
        kernel,
        out_shape=jax.ShapeDtypeStruct((B, Cout, P), jnp.float32),
        grid_spec=pltpu.PrefetchScalarGridSpec(
            num_scalar_prefetch=0,
            grid=(B, P // TP),
            in_specs=[
                pl.BlockSpec((1, KKCin, TP), lambda b, p: (b, 0, p)),
                pl.BlockSpec((Cout, KKCin), lambda b, p: (0, 0)),
                pl.BlockSpec((Cout, 1), lambda b, p: (0, 0)),
            ],
            out_specs=pl.BlockSpec((1, Cout, TP), lambda b, p: (b, 0, p)),
        ),
        compiler_params=pltpu.CompilerParams(
            dimension_semantics=("parallel", "parallel")),
    )(patches, w_mat, bias.reshape(Cout, 1))
    H, W = out_hw
    return out.reshape(B, Cout, H, W)


# ----------------------------------------------------------------------------
# XLA glue: weight reformat, nearest x2 upsample, pad, im2col (pure data movement)
# ----------------------------------------------------------------------------
def _deconv_weight_to_gemm(w_pt):
    """PyTorch ConvTranspose2d weight (Cin, Cout, K, K) -> GEMM LHS (Cout, K*K*Cin).

    Transposed conv (stride=1, pad=0) == full correlation with the spatially
    flipped kernel; column ordering is (kh, kw, ci) to match the im2col rows.
    """
    Cin, Cout, K, _ = w_pt.shape
    w = w_pt[:, :, ::-1, ::-1]                 # flip spatial taps
    w = jnp.transpose(w, (2, 3, 0, 1))         # (K, K, Cin, Cout)
    w = w.reshape(K * K * Cin, Cout)           # rows ordered (kh, kw, ci)
    return jnp.transpose(w, (1, 0))            # (Cout, K*K*Cin)


def _upsample2x_nchw(x):
    return jnp.repeat(jnp.repeat(x, 2, axis=2), 2, axis=3)


def _im2col_nchw(x_pad, K):
    """x_pad: (B, C, Hp, Wp) already zero-padded -> patches^T (B, K*K*C, Ho*Wo)."""
    B, C, Hp, Wp = x_pad.shape
    Ho, Wo = Hp - K + 1, Wp - K + 1
    cols = [
        x_pad[:, :, kh:kh + Ho, kw:kw + Wo].reshape(B, C, Ho * Wo)
        for kh in range(K)
        for kw in range(K)
    ]
    return jnp.concatenate(cols, axis=1)       # rows ordered (kh, kw, ci)


# ----------------------------------------------------------------------------
# Full forward pass (parameters are plain JAX arrays, PyTorch layouts)
# ----------------------------------------------------------------------------
def inverse_cifar10_forward(params, x):
    B = x.shape[0]
    # fc1 -> relu -> fc2 -> relu
    h = mlp_forward(x, params["w1"], params["b1"], params["w2"], params["b2"])  # (B,1600)
    # .view(-1, 64, 5, 5)  (NCHW), nearest x2, transposed conv 1 (+relu)
    h = h.reshape(B, 64, 5, 5)
    h = _upsample2x_nchw(h)                                    # (B,64,10,10)
    h = jnp.pad(h, ((0, 0), (0, 0), (4, 4), (4, 4)))           # (B,64,18,18)
    p1 = _im2col_nchw(h, 5)                                    # (B,1600,196)
    c1 = conv_gemm(p1, _deconv_weight_to_gemm(params["dw1"]), params["db1"],
                   out_hw=(14, 14), relu=True)                 # (B,32,14,14)
    # nearest x2, transposed conv 2
    c1 = _upsample2x_nchw(c1)                                  # (B,32,28,28)
    c1 = jnp.pad(c1, ((0, 0), (0, 0), (4, 4), (4, 4)))         # (B,32,36,36)
    p2 = _im2col_nchw(c1, 5)                                   # (B,800,1024)
    out = conv_gemm(p2, _deconv_weight_to_gemm(params["dw2"]), params["db2"],
                    out_hw=(32, 32), relu=False)               # (B,3,32,32) NCHW
    return out


# ----------------------------------------------------------------------------
# Deterministic parameter initialization (shapes from the module __init__)
# ----------------------------------------------------------------------------
def init_params(key, z_dim=100, num_class=10, dim=1600, out_features=3):
    ks = jax.random.split(key, 8)

    def uniform(k, shape, fan_in):
        bound = 1.0 / jnp.sqrt(jnp.float32(fan_in))
        return jax.random.uniform(k, shape, jnp.float32, -bound, bound)

    in1 = z_dim + num_class
    # fc weights stored pre-transposed as (in, out) so the kernel does x @ W.
    w1 = uniform(ks[0], (in1, 512), in1)
    b1 = uniform(ks[1], (512,), in1)
    w2 = uniform(ks[2], (512, dim), 512)
    b2 = uniform(ks[3], (dim,), 512)
    # ConvTranspose2d weights kept in PyTorch layout (Cin, Cout, K, K).
    dw1 = uniform(ks[4], (64, 32, 5, 5), 64 * 25)
    db1 = uniform(ks[5], (32,), 64 * 25)
    dw2 = uniform(ks[6], (32, out_features, 5, 5), 32 * 25)
    db2 = uniform(ks[7], (out_features,), 32 * 25)
    return dict(w1=w1, b1=b1, w2=w2, b2=b2, dw1=dw1, db1=db1, dw2=dw2, db2=db2)


if __name__ == "__main__":
    key = jax.random.PRNGKey(0)
    pkey, xkey = jax.random.split(key)
    params = init_params(pkey)

    B = 2
    x = jax.random.normal(xkey, (B, 110), jnp.float32)  # z_dim + num_class = 110

    fwd = jax.jit(inverse_cifar10_forward)
    out = jax.block_until_ready(fwd(params, x))

    assert out.shape == (B, 3, 32, 32), out.shape
    assert out.dtype == jnp.float32
    assert bool(jnp.all(jnp.isfinite(out)))
    print("KERNEL_OK")
</pallas_src>

<mosaic_0001>
module attributes {stable_mosaic.version = 11 : i64} {
  func.func @_mlp_kernel(%arg0: memref<2x128xf32, #tpu.memory_space<vmem>>, %arg1: memref<128x512xf32, #tpu.memory_space<vmem>>, %arg2: memref<1x512xf32, #tpu.memory_space<vmem>>, %arg3: memref<512x1600xf32, #tpu.memory_space<vmem>>, %arg4: memref<1x1600xf32, #tpu.memory_space<vmem>>, %arg5: memref<2x1600xf32, #tpu.memory_space<vmem>>) attributes {dimension_semantics = [], scalar_prefetch = 0 : i64, scratch_operands = 0 : i64, tpu.core_type = #tpu.core_type<tc>} {
    %c0 = arith.constant 0 : index
    %c0_0 = arith.constant 0 : index
    %0 = vector.load %arg0[%c0, %c0_0] : memref<2x128xf32, #tpu.memory_space<vmem>>, vector<2x128xf32>
    %c0_1 = arith.constant 0 : index
    %c0_2 = arith.constant 0 : index
    %1 = vector.load %arg1[%c0_1, %c0_2] : memref<128x512xf32, #tpu.memory_space<vmem>>, vector<128x512xf32>
    %cst = arith.constant dense<0.000000e+00> : vector<2x512xf32>
    %2 = tpu.matmul %0, %1, %cst {dimension_numbers = #tpu.dot_dimension_numbers<[1], [0], [0], [1], [0, 0, 1, 1], [], []>} : vector<2x128xf32>, vector<128x512xf32>, vector<2x512xf32> -> vector<2x512xf32>
    %c0_3 = arith.constant 0 : index
    %c0_4 = arith.constant 0 : index
    %3 = vector.load %arg2[%c0_3, %c0_4] : memref<1x512xf32, #tpu.memory_space<vmem>>, vector<1x512xf32>
    %4 = vector.broadcast %3 : vector<1x512xf32> to vector<2x512xf32>
    %5 = arith.addf %2, %4 : vector<2x512xf32>
    %cst_5 = arith.constant 0.000000e+00 : f32
    %6 = vector.broadcast %cst_5 : f32 to vector<2x512xf32>
    %7 = arith.maximumf %5, %6 : vector<2x512xf32>
    %c0_6 = arith.constant 0 : index
    %c0_7 = arith.constant 0 : index
    %8 = vector.load %arg3[%c0_6, %c0_7] : memref<512x1600xf32, #tpu.memory_space<vmem>>, vector<512x1600xf32>
    %cst_8 = arith.constant dense<0.000000e+00> : vector<2x1600xf32>
    %9 = tpu.matmul %7, %8, %cst_8 {dimension_numbers = #tpu.dot_dimension_numbers<[1], [0], [0], [1], [0, 0, 1, 1], [], []>} : vector<2x512xf32>, vector<512x1600xf32>, vector<2x1600xf32> -> vector<2x1600xf32>
    %c0_9 = arith.constant 0 : index
    %c0_10 = arith.constant 0 : index
    %10 = vector.load %arg4[%c0_9, %c0_10] : memref<1x1600xf32, #tpu.memory_space<vmem>>, vector<1x1600xf32>
    %11 = vector.broadcast %10 : vector<1x1600xf32> to vector<2x1600xf32>
    %12 = arith.addf %9, %11 : vector<2x1600xf32>
    %cst_11 = arith.constant 0.000000e+00 : f32
    %13 = vector.broadcast %cst_11 : f32 to vector<2x1600xf32>
    %14 = arith.maximumf %12, %13 : vector<2x1600xf32>
    %c0_12 = arith.constant 0 : index
    %c0_13 = arith.constant 0 : index
    %15 = vector.load %arg5[%c0_12, %c0_13] : memref<2x1600xf32, #tpu.memory_space<vmem>>, vector<2x1600xf32>
    tpu.vector_store %arg5[%c0_12, %c0_13], %14 {strides = array<i32>} : memref<2x1600xf32, #tpu.memory_space<vmem>>, vector<2x1600xf32>,
    return
  }
}

module attributes {stable_mosaic.version = 11 : i64} {
  func.func @_conv_gemm_kernel(%arg0: i32, %arg1: i32, %arg2: memref<1x1600x196xf32, #tpu.memory_space<vmem>>, %arg3: memref<32x1600xf32, #tpu.memory_space<vmem>>, %arg4: memref<32x1xf32, #tpu.memory_space<vmem>>, %arg5: memref<1x32x196xf32, #tpu.memory_space<vmem>>) attributes {dimension_semantics = [#tpu.dimension_semantics<parallel>, #tpu.dimension_semantics<parallel>], iteration_bounds = array<i64: 2, 1>, scalar_prefetch = 0 : i64, scratch_operands = 0 : i64, tpu.core_type = #tpu.core_type<tc>, window_params = [{transform_indices = @transform_0, window_bounds = array<i64: 1, 1600, 196>}, {pipeline_mode = #tpu.pipeline_mode<synchronous>, transform_indices = @transform_1, window_bounds = array<i64: 32, 1600>}, {pipeline_mode = #tpu.pipeline_mode<synchronous>, transform_indices = @transform_2, window_bounds = array<i64: 32, 1>}, {transform_indices = @transform_3, window_bounds = array<i64: 1, 32, 196>}]} {
    %c0 = arith.constant 0 : index
    %c0_0 = arith.constant 0 : index
    %0 = vector.load %arg3[%c0, %c0_0] : memref<32x1600xf32, #tpu.memory_space<vmem>>, vector<32x1600xf32>
    %c0_1 = arith.constant 0 : index
    %c0_2 = arith.constant 0 : index
    %c0_3 = arith.constant 0 : index
    %1 = vector.load %arg2[%c0_1, %c0_2, %c0_3] : memref<1x1600x196xf32, #tpu.memory_space<vmem>>, vector<1x1600x196xf32>
    %2 = vector.shape_cast %1 : vector<1x1600x196xf32> to vector<1600x196xf32>
    %cst = arith.constant dense<0.000000e+00> : vector<32x196xf32>
    %3 = tpu.matmul %0, %2, %cst {dimension_numbers = #tpu.dot_dimension_numbers<[1], [0], [0], [1], [0, 0, 1, 1], [], []>} : vector<32x1600xf32>, vector<1600x196xf32>, vector<32x196xf32> -> vector<32x196xf32>
    %c0_4 = arith.constant 0 : index
    %c0_5 = arith.constant 0 : index
    %4 = vector.load %arg4[%c0_4, %c0_5] : memref<32x1xf32, #tpu.memory_space<vmem>>, vector<32x1xf32>
    %5 = vector.broadcast %4 : vector<32x1xf32> to vector<32x196xf32>
    %6 = arith.addf %3, %5 : vector<32x196xf32>
    %cst_6 = arith.constant 0.000000e+00 : f32
    %7 = vector.broadcast %cst_6 : f32 to vector<32x196xf32>
    %8 = arith.maximumf %6, %7 : vector<32x196xf32>
    %c0_7 = arith.constant 0 : index
    %c0_8 = arith.constant 0 : index
    %c0_9 = arith.constant 0 : index
    %9 = vector.load %arg5[%c0_7, %c0_8, %c0_9] : memref<1x32x196xf32, #tpu.memory_space<vmem>>, vector<1x32x196xf32>
    %10 = vector.shape_cast %9 : vector<1x32x196xf32> to vector<32x196xf32>
    %11 = vector.shape_cast %8 : vector<32x196xf32> to vector<1x32x196xf32>
    tpu.vector_store %arg5[%c0_7, %c0_8, %c0_9], %11 {strides = array<i32>} : memref<1x32x196xf32, #tpu.memory_space<vmem>>, vector<1x32x196xf32>,
    return
  }
  func.func @transform_0(%arg0: i32, %arg1: i32) -> (i32, i32, i32) {
    %c0_i32 = arith.constant 0 : i32
    %c0_i32_0 = arith.constant 0 : i32
    return %arg0, %c0_i32, %arg1 : i32, i32, i32
  }
  func.func @transform_1(%arg0: i32, %arg1: i32) -> (i32, i32) {
    %c0_i32 = arith.constant 0 : i32
    %c0_i32_0 = arith.constant 0 : i32
    %c0_i32_1 = arith.constant 0 : i32
    return %c0_i32, %c0_i32_0 : i32, i32
  }
  func.func @transform_2(%arg0: i32, %arg1: i32) -> (i32, i32) {
    %c0_i32 = arith.constant 0 : i32
    %c0_i32_0 = arith.constant 0 : i32
    %c0_i32_1 = arith.constant 0 : i32
    return %c0_i32, %c0_i32_0 : i32, i32
  }
  func.func @transform_3(%arg0: i32, %arg1: i32) -> (i32, i32, i32) {
    %c0_i32 = arith.constant 0 : i32
    %c0_i32_0 = arith.constant 0 : i32
    return %arg0, %c0_i32, %arg1 : i32, i32, i32
  }
}

module attributes {stable_mosaic.version = 11 : i64} {
  func.func @_conv_gemm_kernel(%arg0: i32, %arg1: i32, %arg2: memref<1x800x512xf32, #tpu.memory_space<vmem>>, %arg3: memref<3x800xf32, #tpu.memory_space<vmem>>, %arg4: memref<3x1xf32, #tpu.memory_space<vmem>>, %arg5: memref<1x3x512xf32, #tpu.memory_space<vmem>>) attributes {dimension_semantics = [#tpu.dimension_semantics<parallel>, #tpu.dimension_semantics<parallel>], iteration_bounds = array<i64: 2, 2>, scalar_prefetch = 0 : i64, scratch_operands = 0 : i64, tpu.core_type = #tpu.core_type<tc>, window_params = [{transform_indices = @transform_0, window_bounds = array<i64: 1, 800, 512>}, {pipeline_mode = #tpu.pipeline_mode<synchronous>, transform_indices = @transform_1, window_bounds = array<i64: 3, 800>}, {pipeline_mode = #tpu.pipeline_mode<synchronous>, transform_indices = @transform_2, window_bounds = array<i64: 3, 1>}, {transform_indices = @transform_3, window_bounds = array<i64: 1, 3, 512>}]} {
    %c0 = arith.constant 0 : index
    %c0_0 = arith.constant 0 : index
    %0 = vector.load %arg3[%c0, %c0_0] : memref<3x800xf32, #tpu.memory_space<vmem>>, vector<3x800xf32>
    %c0_1 = arith.constant 0 : index
    %c0_2 = arith.constant 0 : index
    %c0_3 = arith.constant 0 : index
    %1 = vector.load %arg2[%c0_1, %c0_2, %c0_3] : memref<1x800x512xf32, #tpu.memory_space<vmem>>, vector<1x800x512xf32>
    %2 = vector.shape_cast %1 : vector<1x800x512xf32> to vector<800x512xf32>
    %cst = arith.constant dense<0.000000e+00> : vector<3x512xf32>
    %3 = tpu.matmul %0, %2, %cst {dimension_numbers = #tpu.dot_dimension_numbers<[1], [0], [0], [1], [0, 0, 1, 1], [], []>} : vector<3x800xf32>, vector<800x512xf32>, vector<3x512xf32> -> vector<3x512xf32>
    %c0_4 = arith.constant 0 : index
    %c0_5 = arith.constant 0 : index
    %4 = vector.load %arg4[%c0_4, %c0_5] : memref<3x1xf32, #tpu.memory_space<vmem>>, vector<3x1xf32>
    %5 = vector.broadcast %4 : vector<3x1xf32> to vector<3x512xf32>
    %6 = arith.addf %3, %5 : vector<3x512xf32>
    %c0_6 = arith.constant 0 : index
    %c0_7 = arith.constant 0 : index
    %c0_8 = arith.constant 0 : index
    %7 = vector.load %arg5[%c0_6, %c0_7, %c0_8] : memref<1x3x512xf32, #tpu.memory_space<vmem>>, vector<1x3x512xf32>
    %8 = vector.shape_cast %7 : vector<1x3x512xf32> to vector<3x512xf32>
    %9 = vector.shape_cast %6 : vector<3x512xf32> to vector<1x3x512xf32>
    tpu.vector_store %arg5[%c0_6, %c0_7, %c0_8], %9 {strides = array<i32>} : memref<1x3x512xf32, #tpu.memory_space<vmem>>, vector<1x3x512xf32>,
    return
  }
  func.func @transform_0(%arg0: i32, %arg1: i32) -> (i32, i32, i32) {
    %c0_i32 = arith.constant 0 : i32
    %c0_i32_0 = arith.constant 0 : i32
    return %arg0, %c0_i32, %arg1 : i32, i32, i32
  }
  func.func @transform_1(%arg0: i32, %arg1: i32) -> (i32, i32) {
    %c0_i32 = arith.constant 0 : i32
    %c0_i32_0 = arith.constant 0 : i32
    %c0_i32_1 = arith.constant 0 : i32
    return %c0_i32, %c0_i32_0 : i32, i32
  }
  func.func @transform_2(%arg0: i32, %arg1: i32) -> (i32, i32) {
    %c0_i32 = arith.constant 0 : i32
    %c0_i32_0 = arith.constant 0 : i32
    %c0_i32_1 = arith.constant 0 : i32
    return %c0_i32, %c0_i32_0 : i32, i32
  }
  func.func @transform_3(%arg0: i32, %arg1: i32) -> (i32, i32, i32) {
    %c0_i32 = arith.constant 0 : i32
    %c0_i32_0 = arith.constant 0 : i32
    return %arg0, %c0_i32, %arg1 : i32, i32, i32
  }
}

</mosaic_0001>

<llo_original>
// kernel: inverse_cifar10_forward.3
$region0: #{inverse_cifar10_forward.3}
  #allocation0 [shape = 'u32[]', space=smem, size = 0x4, offset = 0x4, fixed_abs, tag = 'smem constant byte address 0x4 - core index']
  #allocation1 [shape = 'u32[144,128]{1,0:T(1,128)}', space=vmem, size = 0x12000, scoped, tag = 'internal scratch']
  %s0 = inlined_call_operand.vmem [shape: f32[2,128], index: 0, kind: input, shape index: {}]
  %s1 = inlined_call_operand.vmem [shape: f32[128,512], index: 1, kind: input, shape index: {}]
  %s2 = inlined_call_operand.vmem [shape: f32[1,512], index: 2, kind: input, shape index: {}]
  %s3 = inlined_call_operand.vmem [shape: f32[512,1600], index: 3, kind: input, shape index: {}]
  %s4 = inlined_call_operand.vmem [shape: f32[1,1600], index: 4, kind: input, shape index: {}]
  %s5 = inlined_call_operand.vmem [shape: f32[2,1600], index: 5, kind: output, shape index: {}]
  %s6 = sld [smem:[#allocation0]]
  $region30: #{inverse_cifar10_forward.3} parent=0
    _
  %s8 = ssub.s32 1, %s6
  %s9 = scalar_select 0, %s8, %s6
  // Predicated region
  $region2: #{inverse_cifar10_forward.3} parent=0 // pred_check
    _
  $region3: #{inverse_cifar10_forward.3} parent=0 // pred_check_branch
    %11 = sbr.rel (0) target = $region5
  $region4: #{inverse_cifar10_forward.3} parent=0 // pred_region
    _
  $region5: #{inverse_cifar10_forward.3} parent=0 // pred_fallthru
    _
  // Predicated region
  $region6: #{inverse_cifar10_forward.3} parent=0 // pred_check
    _
  $region7: #{inverse_cifar10_forward.3} parent=0 // pred_check_branch
    %13 = sbr.rel (0) target = $region9
  $region8: #{inverse_cifar10_forward.3} parent=0 // pred_region
    _
  $region9: #{inverse_cifar10_forward.3} parent=0 // pred_fallthru
    _
  // Predicated region
  $region10: #{inverse_cifar10_forward.3} parent=0 // pred_check
    _
  $region11: #{inverse_cifar10_forward.3} parent=0 // pred_check_branch
    %15 = sbr.rel (0) target = $region13
  $region12: #{inverse_cifar10_forward.3} parent=0 // pred_region
    _
  $region13: #{inverse_cifar10_forward.3} parent=0 // pred_fallthru
    _
  // Predicated region
  $region14: #{inverse_cifar10_forward.3} parent=0 // pred_check
    _
  $region15: #{inverse_cifar10_forward.3} parent=0 // pred_check_branch
    %17 = sbr.rel (0) target = $region17
  $region16: #{inverse_cifar10_forward.3} parent=0 // pred_region
    _
  $region17: #{inverse_cifar10_forward.3} parent=0 // pred_fallthru
    _
  // Predicated region
  $region18: #{inverse_cifar10_forward.3} parent=0 // pred_check
    _
  $region19: #{inverse_cifar10_forward.3} parent=0 // pred_check_branch
    %19 = sbr.rel (0) target = $region21
  $region20: #{inverse_cifar10_forward.3} parent=0 // pred_region
    _
  $region21: #{inverse_cifar10_forward.3} parent=0 // pred_fallthru
    _
  %v20 = vld [vmem:[%s0] sm:$0x3]
  %v21 = vld [vmem:[%s1] sm:$0xff]
  %v22 = vld [vmem:[%s1 + $0x8] sm:$0xff]
  %v23 = vld [vmem:[%s1 + $0x10] sm:$0xff]
  %v24 = vld [vmem:[%s1 + $0x18] sm:$0xff]
  %v25 = vld [vmem:[%s1 + $0x20] sm:$0xff]
  %v26 = vld [vmem:[%s1 + $0x28] sm:$0xff]
  %v27 = vld [vmem:[%s1 + $0x30] sm:$0xff]
  %v28 = vld [vmem:[%s1 + $0x38] sm:$0xff]
  %v29 = vld [vmem:[%s1 + $0x40] sm:$0xff]
  %v30 = vld [vmem:[%s1 + $0x48] sm:$0xff]
  %v31 = vld [vmem:[%s1 + $0x50] sm:$0xff]
  %v32 = vld [vmem:[%s1 + $0x58] sm:$0xff]
  %v33 = vld [vmem:[%s1 + $0x60] sm:$0xff]
  %v34 = vld [vmem:[%s1 + $0x68] sm:$0xff]
  %v35 = vld [vmem:[%s1 + $0x70] sm:$0xff]
  %v36 = vld [vmem:[%s1 + $0x78] sm:$0xff]
  %v37 = vld [vmem:[%s1 + $0x80] sm:$0xff]
  %v38 = vld [vmem:[%s1 + $0x88] sm:$0xff]
  %v39 = vld [vmem:[%s1 + $0x90] sm:$0xff]
  %v40 = vld [vmem:[%s1 + $0x98] sm:$0xff]
  %v41 = vld [vmem:[%s1 + $0xa0] sm:$0xff]
  %v42 = vld [vmem:[%s1 + $0xa8] sm:$0xff]
  %v43 = vld [vmem:[%s1 + $0xb0] sm:$0xff]
  %v44 = vld [vmem:[%s1 + $0xb8] sm:$0xff]
  %v45 = vld [vmem:[%s1 + $0xc0] sm:$0xff]
  %v46 = vld [vmem:[%s1 + $0xc8] sm:$0xff]
  %v47 = vld [vmem:[%s1 + $0xd0] sm:$0xff]
  %v48 = vld [vmem:[%s1 + $0xd8] sm:$0xff]
  %v49 = vld [vmem:[%s1 + $0xe0] sm:$0xff]
  %v50 = vld [vmem:[%s1 + $0xe8] sm:$0xff]
  %v51 = vld [vmem:[%s1 + $0xf0] sm:$0xff]
  %v52 = vld [vmem:[%s1 + $0xf8] sm:$0xff]
  %v53 = vld [vmem:[%s1 + $0x100] sm:$0xff]
  %v54 = vld [vmem:[%s1 + $0x108] sm:$0xff]
  %v55 = vld [vmem:[%s1 + $0x110] sm:$0xff]
  %v56 = vld [vmem:[%s1 + $0x118] sm:$0xff]
  %v57 = vld [vmem:[%s1 + $0x120] sm:$0xff]
  %v58 = vld [vmem:[%s1 + $0x128] sm:$0xff]
  %v59 = vld [vmem:[%s1 + $0x130] sm:$0xff]
  %v60 = vld [vmem:[%s1 + $0x138] sm:$0xff]
  %v61 = vld [vmem:[%s1 + $0x140] sm:$0xff]
  %v62 = vld [vmem:[%s1 + $0x148] sm:$0xff]
  %v63 = vld [vmem:[%s1 + $0x150] sm:$0xff]
  %v64 = vld [vmem:[%s1 + $0x158] sm:$0xff]
  %v65 = vld [vmem:[%s1 + $0x160] sm:$0xff]
  %v66 = vld [vmem:[%s1 + $0x168] sm:$0xff]
  %v67 = vld [vmem:[%s1 + $0x170] sm:$0xff]
  %v68 = vld [vmem:[%s1 + $0x178] sm:$0xff]
  %v69 = vld [vmem:[%s1 + $0x180] sm:$0xff]
  %v70 = vld [vmem:[%s1 + $0x188] sm:$0xff]
  %v71 = vld [vmem:[%s1 + $0x190] sm:$0xff]
  %v72 = vld [vmem:[%s1 + $0x198] sm:$0xff]
  %v73 = vld [vmem:[%s1 + $0x1a0] sm:$0xff]
  %v74 = vld [vmem:[%s1 + $0x1a8] sm:$0xff]
  %v75 = vld [vmem:[%s1 + $0x1b0] sm:$0xff]
  %v76 = vld [vmem:[%s1 + $0x1b8] sm:$0xff]
  %v77 = vld [vmem:[%s1 + $0x1c0] sm:$0xff]
  %v78 = vld [vmem:[%s1 + $0x1c8] sm:$0xff]
  %v79 = vld [vmem:[%s1 + $0x1d0] sm:$0xff]
  %v80 = vld [vmem:[%s1 + $0x1d8] sm:$0xff]
  %v81 = vld [vmem:[%s1 + $0x1e0] sm:$0xff]
  %v82 = vld [vmem:[%s1 + $0x1e8] sm:$0xff]
  %v83 = vld [vmem:[%s1 + $0x1f0] sm:$0xff]
  %v84 = vld [vmem:[%s1 + $0x1f8] sm:$0xff]
  %v85 = vld [vmem:[%s2] sm:$0xf]
  %v87 = vlaneseq
  %v88 = vshrl.u32 %v87, 7
  %v89 = vsub.s32 0, %v88
  %v90 = vrot.slane %v85, %v89
  %v91 = vlaneseq
  %v92 = vshrl.u32 %v91, 7
  %v93 = vsub.s32 1, %v92
  %v94 = vrot.slane %v85, %v93
  %v95 = vlaneseq
  %v96 = vshrl.u32 %v95, 7
  %v97 = vsub.s32 2, %v96
  %v98 = vrot.slane %v85, %v97
  %v99 = vlaneseq
  %v100 = vshrl.u32 %v99, 7
  %v101 = vsub.s32 3, %v100
  %v102 = vrot.slane %v85, %v101
  %107 = vmatprep.subr.mxu0 %v22
  %108 = vmatpush1.msra.mxu0 %v21
  %109 = vmatprep.subr.mxu0 %v26
  %110 = vmatpush1.msra.mxu0 %v25
  %111 = vmatprep.subr.mxu0 %v30
  %112 = vmatpush1.msra.mxu0 %v29
  %113 = vmatprep.subr.mxu0 %v34
  %114 = vmatpush1.msra.mxu0 %v33
  %115 = vmatprep.subr.mxu0 %v38
  %116 = vmatpush1.msra.mxu0 %v37
  %117 = vmatprep.subr.mxu0 %v42
  %118 = vmatpush1.msra.mxu0 %v41
  %119 = vmatprep.subr.mxu0 %v46
  %120 = vmatpush1.msra.mxu0 %v45
  %121 = vmatprep.subr.mxu0 %v50
  %122 = vmatpush1.msra.mxu0 %v49
  %123 = vmatprep.subr.mxu0 %v54
  %124 = vmatpush1.msra.mxu0 %v53
  %125 = vmatprep.subr.mxu0 %v58
  %126 = vmatpush1.msra.mxu0 %v57
  %127 = vmatprep.subr.mxu0 %v62
  %128 = vmatpush1.msra.mxu0 %v61
  %129 = vmatprep.subr.mxu0 %v66
  %130 = vmatpush1.msra.mxu0 %v65
  %131 = vmatprep.subr.mxu0 %v70
  %132 = vmatpush1.msra.mxu0 %v69
  %133 = vmatprep.subr.mxu0 %v74
  %134 = vmatpush1.msra.mxu0 %v73
  %135 = vmatprep.subr.mxu0 %v78
  %136 = vmatpush1.msra.mxu0 %v77
  %137 = vmatprep.subr.mxu0 %v82
  %138 = vmatpush1.msra.mxu0 %v81
  %139 = vmatprep.subr.mxu0 0.0
  %140 = vmatpush1.msra.mxu0 0.0
  %141 = vmatprep.subr.mxu0 0.0
  %142 = vmatpush1.msra.mxu0 0.0
  %143 = vmatprep.subr.mxu0 0.0
  %144 = vmatpush1.msra.mxu0 0.0
  %145 = vmatprep.subr.mxu0 0.0
  %146 = vmatpush1.msra.mxu0 0.0
  %147 = vmatprep.subr.mxu0 0.0
  %148 = vmatpush1.msra.mxu0 0.0
  %149 = vmatprep.subr.mxu0 0.0
  %150 = vmatpush1.msra.mxu0 0.0
  %151 = vmatprep.subr.mxu0 0.0
  %152 = vmatpush1.msra.mxu0 0.0
  %153 = vmatprep.subr.mxu0 0.0
  %154 = vmatpush1.msra.mxu0 0.0
  %155 = vmatprep.subr.mxu0 0.0
  %156 = vmatpush1.msra.mxu0 0.0
  %157 = vmatprep.subr.mxu0 0.0
  %158 = vmatpush1.msra.mxu0 0.0
  %159 = vmatprep.subr.mxu0 0.0
  %160 = vmatpush1.msra.mxu0 0.0
  %161 = vmatprep.subr.mxu0 0.0
  %162 = vmatpush1.msra.mxu0 0.0
  %163 = vmatprep.subr.mxu0 0.0
  %164 = vmatpush1.msra.mxu0 0.0
  %165 = vmatprep.subr.mxu0 0.0
  %166 = vmatpush1.msra.mxu0 0.0
  %167 = vmatprep.subr.mxu0 0.0
  %168 = vmatpush1.msra.mxu0 0.0
  %169 = vmatprep.subr.mxu0 0.0
  %170 = vmatpush1.msra.mxu0 0.0
  %171 = vmatprep.mubr.f32.mxu0 0.0
  %172 = vmatmul.mubr.f32.gmra.mrb[0].mxu0 %v20
  %v173 = vpop.f32.mrb[0].mxu0
  %v174 = vadd.f32 %v90, %v173
  %v175 = vpop.f32.mrb[0].mxu0
  %v176 = vadd.f32 %v94, %v175
  %177 = vdwg.mxu0
  %178 = vmatprep.subr.mxu0 %v24
  %179 = vmatpush1.msra.mxu0 %v23
  %180 = vmatprep.subr.mxu0 %v28
  %181 = vmatpush1.msra.mxu0 %v27
  %182 = vmatprep.subr.mxu0 %v32
  %183 = vmatpush1.msra.mxu0 %v31
  %184 = vmatprep.subr.mxu0 %v36
  %185 = vmatpush1.msra.mxu0 %v35
  %186 = vmatprep.subr.mxu0 %v40
  %187 = vmatpush1.msra.mxu0 %v39
  %188 = vmatprep.subr.mxu0 %v44
  %189 = vmatpush1.msra.mxu0 %v43
  %190 = vmatprep.subr.mxu0 %v48
  %191 = vmatpush1.msra.mxu0 %v47
  %192 = vmatprep.subr.mxu0 %v52
  %193 = vmatpush1.msra.mxu0 %v51
  %194 = vmatprep.subr.mxu0 %v56
  %195 = vmatpush1.msra.mxu0 %v55
  %196 = vmatprep.subr.mxu0 %v60
  %197 = vmatpush1.msra.mxu0 %v59
  %198 = vmatprep.subr.mxu0 %v64
  %199 = vmatpush1.msra.mxu0 %v63
  %200 = vmatprep.subr.mxu0 %v68
  %201 = vmatpush1.msra.mxu0 %v67
  %202 = vmatprep.subr.mxu0 %v72
  %203 = vmatpush1.msra.mxu0 %v71
  %204 = vmatprep.subr.mxu0 %v76
  %205 = vmatpush1.msra.mxu0 %v75
  %206 = vmatprep.subr.mxu0 %v80
  %207 = vmatpush1.msra.mxu0 %v79
  %208 = vmatprep.subr.mxu0 %v84
  %209 = vmatpush1.msra.mxu0 %v83
  %210 = vmatprep.subr.mxu0 0.0
  %211 = vmatpush1.msra.mxu0 0.0
  %212 = vmatprep.subr.mxu0 0.0
  %213 = vmatpush1.msra.mxu0 0.0
  %214 = vmatprep.subr.mxu0 0.0
  %215 = vmatpush1.msra.mxu0 0.0
  %216 = vmatprep.subr.mxu0 0.0
  %217 = vmatpush1.msra.mxu0 0.0
  %218 = vmatprep.subr.mxu0 0.0
  %219 = vmatpush1.msra.mxu0 0.0
  %220 = vmatprep.subr.mxu0 0.0
  %221 = vmatpush1.msra.mxu0 0.0
  %222 = vmatprep.subr.mxu0 0.0
  %223 = vmatpush1.msra.mxu0 0.0
  %224 = vmatprep.subr.mxu0 0.0
  %225 = vmatpush1.msra.mxu0 0.0
  %226 = vmatprep.subr.mxu0 0.0
  %227 = vmatpush1.msra.mxu0 0.0
  %228 = vmatprep.subr.mxu0 0.0
  %229 = vmatpush1.msra.mxu0 0.0
  %230 = vmatprep.subr.mxu0 0.0
  %231 = vmatpush1.msra.mxu0 0.0
  %232 = vmatprep.subr.mxu0 0.0
  %233 = vmatpush1.msra.mxu0 0.0
  %234 = vmatprep.subr.mxu0 0.0
  %235 = vmatpush1.msra.mxu0 0.0
  %236 = vmatprep.subr.mxu0 0.0
  %237 = vmatpush1.msra.mxu0 0.0
  %238 = vmatprep.subr.mxu0 0.0
  %239 = vmatpush1.msra.mxu0 0.0
  %240 = vmatprep.subr.mxu0 0.0
  %241 = vmatpush1.msra.mxu0 0.0
  %242 = vmatprep.mubr.f32.mxu0 0.0
  %243 = vmatmul.mubr.f32.gmra.mrb[0].mxu0 %v20
  %v244 = vpop.f32.mrb[0].mxu0
  %v245 = vadd.f32 %v98, %v244
  %v246 = vpop.f32.mrb[0].mxu0
  %v247 = vadd.f32 %v102, %v246
  %248 = vdwg.mxu0
  %v249 = vmax.f32 %v174, 0.0
  %v250 = vmax.f32 %v176, 0.0
  %v251 = vmax.f32 %v245, 0.0
  %v252 = vmax.f32 %v247, 0.0
  %v253 = vld [vmem:[%s3] sm:$0xff]
  %v254 = vld [vmem:[%s3 + $0x8] sm:$0xff]
  %v255 = vld [vmem:[%s3 + $0x10] sm:$0xff]
  %v256 = vld [vmem:[%s3 + $0x18] sm:$0xff]
  %v257 = vld [vmem:[%s3 + $0x20] sm:$0xff]
  %v258 = vld [vmem:[%s3 + $0x28] sm:$0xff]
  %v259 = vld [vmem:[%s3 + $0x30] sm:$0xff]
  %v260 = vld [vmem:[%s3 + $0x38] sm:$0xff]
  %v261 = vld [vmem:[%s3 + $0x40] sm:$0xff]
  %v262 = vld [vmem:[%s3 + $0x48] sm:$0xff]
  %v263 = vld [vmem:[%s3 + $0x50] sm:$0xff]
  %v264 = vld [vmem:[%s3 + $0x58] sm:$0xff]
  %v265 = vld [vmem:[%s3 + $0x60] sm:$0xff]
  %v266 = vld [vmem:[%s3 + $0x68] sm:$0xff]
  %v267 = vld [vmem:[%s3 + $0x70] sm:$0xff]
  %v268 = vld [vmem:[%s3 + $0x78] sm:$0xff]
  %v269 = vld [vmem:[%s3 + $0x80] sm:$0xff]
  %v270 = vld [vmem:[%s3 + $0x88] sm:$0xff]
  %v271 = vld [vmem:[%s3 + $0x90] sm:$0xff]
  %v272 = vld [vmem:[%s3 + $0x98] sm:$0xff]
  %v273 = vld [vmem:[%s3 + $0xa0] sm:$0xff]
  %v274 = vld [vmem:[%s3 + $0xa8] sm:$0xff]
  %v275 = vld [vmem:[%s3 + $0xb0] sm:$0xff]
  %v276 = vld [vmem:[%s3 + $0xb8] sm:$0xff]
  %v277 = vld [vmem:[%s3 + $0xc0] sm:$0xff]
  %v278 = vld [vmem:[%s3 + $0xc8] sm:$0xff]
  %v279 = vld [vmem:[%s3 + $0xd0] sm:$0xff]
  %v280 = vld [vmem:[%s3 + $0xd8] sm:$0xff]
  %v281 = vld [vmem:[%s3 + $0xe0] sm:$0xff]
  %v282 = vld [vmem:[%s3 + $0xe8] sm:$0xff]
  %v283 = vld [vmem:[%s3 + $0xf0] sm:$0xff]
  %v284 = vld [vmem:[%s3 + $0xf8] sm:$0xff]
  %v285 = vld [vmem:[%s3 + $0x100] sm:$0xff]
  %v286 = vld [vmem:[%s3 + $0x108] sm:$0xff]
  %v287 = vld [vmem:[%s3 + $0x110] sm:$0xff]
  %v288 = vld [vmem:[%s3 + $0x118] sm:$0xff]
  %v289 = vld [vmem:[%s3 + $0x120] sm:$0xff]
  %v290 = vld [vmem:[%s3 + $0x128] sm:$0xff]
  %v291 = vld [vmem:[%s3 + $0x130] sm:$0xff]
  %v292 = vld [vmem:[%s3 + $0x138] sm:$0xff]
  %v293 = vld [vmem:[%s3 + $0x140] sm:$0xff]
  %v294 = vld [vmem:[%s3 + $0x148] sm:$0xff]
  %v295 = vld [vmem:[%s3 + $0x150] sm:$0xff]
  %v296 = vld [vmem:[%s3 + $0x158] sm:$0xff]
  %v297 = vld [vmem:[%s3 + $0x160] sm:$0xff]
  %v298 = vld [vmem:[%s3 + $0x168] sm:$0xff]
  %v299 = vld [vmem:[%s3 + $0x170] sm:$0xff]
  %v300 = vld [vmem:[%s3 + $0x178] sm:$0xff]
  %v301 = vld [vmem:[%s3 + $0x180] sm:$0xff]
  %v302 = vld [vmem:[%s3 + $0x188] sm:$0xff]
  %v303 = vld [vmem:[%s3 + $0x190] sm:$0xff]
  %v304 = vld [vmem:[%s3 + $0x198] sm:$0xff]
  %v305 = vld [vmem:[%s3 + $0x1a0] sm:$0xff]
  %v306 = vld [vmem:[%s3 + $0x1a8] sm:$0xff]
  %v307 = vld [vmem:[%s3 + $0x1b0] sm:$0xff]
  %v308 = vld [vmem:[%s3 + $0x1b8] sm:$0xff]
  %v309 = vld [vmem:[%s3 + $0x1c0] sm:$0xff]
  %v310 = vld [vmem:[%s3 + $0x1c8] sm:$0xff]
  %v311 = vld [vmem:[%s3 + $0x1d0] sm:$0xff]
  %v312 = vld [vmem:[%s3 + $0x1d8] sm:$0xff]
  %v313 = vld [vmem:[%s3 + $0x1e0] sm:$0xff]
  %v314 = vld [vmem:[%s3 + $0x1e8] sm:$0xff]
  %v315 = vld [vmem:[%s3 + $0x1f0] sm:$0xff]
  %v316 = vld [vmem:[%s3 + $0x1f8] sm:$0xff]
  %v317 = vld [vmem:[%s3 + $0x200] sm:$0xff]
  %v318 = vld [vmem:[%s3 + $0x208] sm:$0xff]
  %v319 = vld [vmem:[%s3 + $0x210] sm:$0xff]
  %v320 = vld [vmem:[%s3 + $0x218] sm:$0xff]
  %v321 = vld [vmem:[%s3 + $0x220] sm:$0xff]
  %v322 = vld [vmem:[%s3 + $0x228] sm:$0xff]
  %v323 = vld [vmem:[%s3 + $0x230] sm:$0xff]
  %v324 = vld [vmem:[%s3 + $0x238] sm:$0xff]
  %v325 = vld [vmem:[%s3 + $0x240] sm:$0xff]
  %v326 = vld [vmem:[%s3 + $0x248] sm:$0xff]
  %v327 = vld [vmem:[%s3 + $0x250] sm:$0xff]
  %v328 = vld [vmem:[%s3 + $0x258] sm:$0xff]
  %v329 = vld [vmem:[%s3 + $0x260] sm:$0xff]
  %v330 = vld [vmem:[%s3 + $0x268] sm:$0xff]
  %v331 = vld [vmem:[%s3 + $0x270] sm:$0xff]
  %v332 = vld [vmem:[%s3 + $0x278] sm:$0xff]
  %v333 = vld [vmem:[%s3 + $0x280] sm:$0xff]
  %v334 = vld [vmem:[%s3 + $0x288] sm:$0xff]
  %v335 = vld [vmem:[%s3 + $0x290] sm:$0xff]
  %v336 = vld [vmem:[%s3 + $0x298] sm:$0xff]
  %v337 = vld [vmem:[%s3 + $0x2a0] sm:$0xff]
  %v338 = vld [vmem:[%s3 + $0x2a8] sm:$0xff]
  %v339 = vld [vmem:[%s3 + $0x2b0] sm:$0xff]
  %v340 = vld [vmem:[%s3 + $0x2b8] sm:$0xff]
  %v341 = vld [vmem:[%s3 + $0x2c0] sm:$0xff]
  %v342 = vld [vmem:[%s3 + $0x2c8] sm:$0xff]
  %v343 = vld [vmem:[%s3 + $0x2d0] sm:$0xff]
  %v344 = vld [vmem:[%s3 + $0x2d8] sm:$0xff]
  %v345 = vld [vmem:[%s3 + $0x2e0] sm:$0xff]
  %v346 = vld [vmem:[%s3 + $0x2e8] sm:$0xff]
  %v347 = vld [vmem:[%s3 + $0x2f0] sm:$0xff]
  %v348 = vld [vmem:[%s3 + $0x2f8] sm:$0xff]
  %v349 = vld [vmem:[%s3 + $0x300] sm:$0xff]
  %v350 = vld [vmem:[%s3 + $0x308] sm:$0xff]
  %v351 = vld [vmem:[%s3 + $0x310] sm:$0xff]
  %v352 = vld [vmem:[%s3 + $0x318] sm:$0xff]
  %v353 = vld [vmem:[%s3 + $0x320] sm:$0xff]
  %v354 = vld [vmem:[%s3 + $0x328] sm:$0xff]
  %v355 = vld [vmem:[%s3 + $0x330] sm:$0xff]
  %v356 = vld [vmem:[%s3 + $0x338] sm:$0xff]
  %v357 = vld [vmem:[%s3 + $0x340] sm:$0xff]
  %v358 = vld [vmem:[%s3 + $0x348] sm:$0xff]
  %v359 = vld [vmem:[%s3 + $0x350] sm:$0xff]
  %v360 = vld [vmem:[%s3 + $0x358] sm:$0xff]
  %v361 = vld [vmem:[%s3 + $0x360] sm:$0xff]
  %v362 = vld [vmem:[%s3 + $0x368] sm:$0xff]
  %v363 = vld [vmem:[%s3 + $0x370] sm:$0xff]
  %v364 = vld [vmem:[%s3 + $0x378] sm:$0xff]
  %v365 = vld [vmem:[%s3 + $0x380] sm:$0xff]
  %v366 = vld [vmem:[%s3 + $0x388] sm:$0xff]
  %v367 = vld [vmem:[%s3 + $0x390] sm:$0xff]
  %v368 = vld [vmem:[%s3 + $0x398] sm:$0xff]
  %v369 = vld [vmem:[%s3 + $0x3a0] sm:$0xff]
  %v370 = vld [vmem:[%s3 + $0x3a8] sm:$0xff]
  %v371 = vld [vmem:[%s3 + $0x3b0] sm:$0xff]
  %v372 = vld [vmem:[%s3 + $0x3b8] sm:$0xff]
  %v373 = vld [vmem:[%s3 + $0x3c0] sm:$0xff]
  %v374 = vld [vmem:[%s3 + $0x3c8] sm:$0xff]
  %v375 = vld [vmem:[%s3 + $0x3d0] sm:$0xff]
  %v376 = vld [vmem:[%s3 + $0x3d8] sm:$0xff]
  %v377 = vld [vmem:[%s3 + $0x3e0] sm:$0xff]
  %v378 = vld [vmem:[%s3 + $0x3e8] sm:$0xff]
  %v379 = vld [vmem:[%s3 + $0x3f0] sm:$0xff]
  %v380 = vld [vmem:[%s3 + $0x3f8] sm:$0xff]
  %v381 = vld [vmem:[%s3 + $0x400] sm:$0xff]
  %v382 = vld [vmem:[%s3 + $0x408] sm:$0xff]
  %v383 = vld [vmem:[%s3 + $0x410] sm:$0xff]
  %v384 = vld [vmem:[%s3 + $0x418] sm:$0xff]
  %v385 = vld [vmem:[%s3 + $0x420] sm:$0xff]
  %v386 = vld [vmem:[%s3 + $0x428] sm:$0xff]
  %v387 = vld [vmem:[%s3 + $0x430] sm:$0xff]
  %v388 = vld [vmem:[%s3 + $0x438] sm:$0xff]
  %v389 = vld [vmem:[%s3 + $0x440] sm:$0xff]
  %v390 = vld [vmem:[%s3 + $0x448] sm:$0xff]
  %v391 = vld [vmem:[%s3 + $0x450] sm:$0xff]
  %v392 = vld [vmem:[%s3 + $0x458] sm:$0xff]
  %v393 = vld [vmem:[%s3 + $0x460] sm:$0xff]
  %v394 = vld [vmem:[%s3 + $0x468] sm:$0xff]
  %v395 = vld [vmem:[%s3 + $0x470] sm:$0xff]
  %v396 = vld [vmem:[%s3 + $0x478] sm:$0xff]
  %v397 = vld [vmem:[%s3 + $0x480] sm:$0xff]
  %v398 = vld [vmem:[%s3 + $0x488] sm:$0xff]
  %v399 = vld [vmem:[%s3 + $0x490] sm:$0xff]
  %v400 = vld [vmem:[%s3 + $0x498] sm:$0xff]
  %v401 = vld [vmem:[%s3 + $0x4a0] sm:$0xff]
  %v402 = vld [vmem:[%s3 + $0x4a8] sm:$0xff]
  %v403 = vld [vmem:[%s3 + $0x4b0] sm:$0xff]
  %v404 = vld [vmem:[%s3 + $0x4b8] sm:$0xff]
  %v405 = vld [vmem:[%s3 + $0x4c0] sm:$0xff]
  %v406 = vld [vmem:[%s3 + $0x4c8] sm:$0xff]
  %v407 = vld [vmem:[%s3 + $0x4d0] sm:$0xff]
  %v408 = vld [vmem:[%s3 + $0x4d8] sm:$0xff]
  %v409 = vld [vmem:[%s3 + $0x4e0] sm:$0xff]
  %v410 = vld [vmem:[%s3 + $0x4e8] sm:$0xff]
  %v411 = vld [vmem:[%s3 + $0x4f0] sm:$0xff]
  %v412 = vld [vmem:[%s3 + $0x4f8] sm:$0xff]
  %v413 = vld [vmem:[%s3 + $0x500] sm:$0xff]
  %v414 = vld [vmem:[%s3 + $0x508] sm:$0xff]
  %v415 = vld [vmem:[%s3 + $0x510] sm:$0xff]
  %v416 = vld [vmem:[%s3 + $0x518] sm:$0xff]
  %v417 = vld [vmem:[%s3 + $0x520] sm:$0xff]
  %v418 = vld [vmem:[%s3 + $0x528] sm:$0xff]
  %v419 = vld [vmem:[%s3 + $0x530] sm:$0xff]
  %v420 = vld [vmem:[%s3 + $0x538] sm:$0xff]
  %v421 = vld [vmem:[%s3 + $0x540] sm:$0xff]
  %v422 = vld [vmem:[%s3 + $0x548] sm:$0xff]
  %v423 = vld [vmem:[%s3 + $0x550] sm:$0xff]
  %v424 = vld [vmem:[%s3 + $0x558] sm:$0xff]
  %v425 = vld [vmem:[%s3 + $0x560] sm:$0xff]
  %v426 = vld [vmem:[%s3 + $0x568] sm:$0xff]
  %v427 = vld [vmem:[%s3 + $0x570] sm:$0xff]
  %v428 = vld [vmem:[%s3 + $0x578] sm:$0xff]
  %v429 = vld [vmem:[%s3 + $0x580] sm:$0xff]
  %v430 = vld [vmem:[%s3 + $0x588] sm:$0xff]
  %v431 = vld [vmem:[%s3 + $0x590] sm:$0xff]
  %v432 = vld [vmem:[%s3 + $0x598] sm:$0xff]
  %v433 = vld [vmem:[%s3 + $0x5a0] sm:$0xff]
  %v434 = vld [vmem:[%s3 + $0x5a8] sm:$0xff]
  %v435 = vld [vmem:[%s3 + $0x5b0] sm:$0xff]
  %v436 = vld [vmem:[%s3 + $0x5b8] sm:$0xff]
  %v437 = vld [vmem:[%s3 + $0x5c0] sm:$0xff]
  %v438 = vld [vmem:[%s3 + $0x5c8] sm:$0xff]
  %v439 = vld [vmem:[%s3 + $0x5d0] sm:$0xff]
  %v440 = vld [vmem:[%s3 + $0x5d8] sm:$0xff]
  %v441 = vld [vmem:[%s3 + $0x5e0] sm:$0xff]
  %v442 = vld [vmem:[%s3 + $0x5e8] sm:$0xff]
  %v443 = vld [vmem:[%s3 + $0x5f0] sm:$0xff]
  %v444 = vld [vmem:[%s3 + $0x5f8] sm:$0xff]
  %v445 = vld [vmem:[%s3 + $0x600] sm:$0xff]
  %v446 = vld [vmem:[%s3 + $0x608] sm:$0xff]
  %v447 = vld [vmem:[%s3 + $0x610] sm:$0xff]
  %v448 = vld [vmem:[%s3 + $0x618] sm:$0xff]
  %v449 = vld [vmem:[%s3 + $0x620] sm:$0xff]
  %v450 = vld [vmem:[%s3 + $0x628] sm:$0xff]
  %v451 = vld [vmem:[%s3 + $0x630] sm:$0xff]
  %v452 = vld [vmem:[%s3 + $0x638] sm:$0xff]
  %v453 = vld [vmem:[%s3 + $0x640] sm:$0xff]
  %v454 = vld [vmem:[%s3 + $0x648] sm:$0xff]
  %v455 = vld [vmem:[%s3 + $0x650] sm:$0xff]
  %v456 = vld [vmem:[%s3 + $0x658] sm:$0xff]
  %v457 = vld [vmem:[%s3 + $0x660] sm:$0xff]
  %v458 = vld [vmem:[%s3 + $0x668] sm:$0xff]
  %v459 = vld [vmem:[%s3 + $0x670] sm:$0xff]
  %v460 = vld [vmem:[%s3 + $0x678] sm:$0xff]
  %v461 = vld [vmem:[%s3 + $0x680] sm:$0xff]
  %v462 = vld [vmem:[%s3 + $0x688] sm:$0xff]
  %v463 = vld [vmem:[%s3 + $0x690] sm:$0xff]
  %v464 = vld [vmem:[%s3 + $0x698] sm:$0xff]
  %v465 = vld [vmem:[%s3 + $0x6a0] sm:$0xff]
  %v466 = vld [vmem:[%s3 + $0x6a8] sm:$0xff]
  %v467 = vld [vmem:[%s3 + $0x6b0] sm:$0xff]
  %v468 = vld [vmem:[%s3 + $0x6b8] sm:$0xff]
  %v469 = vld [vmem:[%s3 + $0x6c0] sm:$0xff]
  %v470 = vld [vmem:[%s3 + $0x6c8] sm:$0xff]
  %v471 = vld [vmem:[%s3 + $0x6d0] sm:$0xff]
  %v472 = vld [vmem:[%s3 + $0x6d8] sm:$0xff]
  %v473 = vld [vmem:[%s3 + $0x6e0] sm:$0xff]
  %v474 = vld [vmem:[%s3 + $0x6e8] sm:$0xff]
  %v475 = vld [vmem:[%s3 + $0x6f0] sm:$0xff]
  %v476 = vld [vmem:[%s3 + $0x6f8] sm:$0xff]
  %v477 = vld [vmem:[%s3 + $0x700] sm:$0xff]
  %v478 = vld [vmem:[%s3 + $0x708] sm:$0xff]
  %v479 = vld [vmem:[%s3 + $0x710] sm:$0xff]
  %v480 = vld [vmem:[%s3 + $0x718] sm:$0xff]
  %v481 = vld [vmem:[%s3 + $0x720] sm:$0xff]
  %v482 = vld [vmem:[%s3 + $0x728] sm:$0xff]
  %v483 = vld [vmem:[%s3 + $0x730] sm:$0xff]
  %v484 = vld [vmem:[%s3 + $0x738] sm:$0xff]
  %v485 = vld [vmem:[%s3 + $0x740] sm:$0xff]
  %v486 = vld [vmem:[%s3 + $0x748] sm:$0xff]
  %v487 = vld [vmem:[%s3 + $0x750] sm:$0xff]
  %v488 = vld [vmem:[%s3 + $0x758] sm:$0xff]
  %v489 = vld [vmem:[%s3 + $0x760] sm:$0xff]
  %v490 = vld [vmem:[%s3 + $0x768] sm:$0xff]
  %v491 = vld [vmem:[%s3 + $0x770] sm:$0xff]
  %v492 = vld [vmem:[%s3 + $0x778] sm:$0xff]
  %v493 = vld [vmem:[%s3 + $0x780] sm:$0xff]
  %v494 = vld [vmem:[%s3 + $0x788] sm:$0xff]
  %v495 = vld [vmem:[%s3 + $0x790] sm:$0xff]
  %v496 = vld [vmem:[%s3 + $0x798] sm:$0xff]
  %v497 = vld [vmem:[%s3 + $0x7a0] sm:$0xff]
  %v498 = vld [vmem:[%s3 + $0x7a8] sm:$0xff]
  %v499 = vld [vmem:[%s3 + $0x7b0] sm:$0xff]
  %v500 = vld [vmem:[%s3 + $0x7b8] sm:$0xff]
  %v501 = vld [vmem:[%s3 + $0x7c0] sm:$0xff]
  %v502 = vld [vmem:[%s3 + $0x7c8] sm:$0xff]
  %v503 = vld [vmem:[%s3 + $0x7d0] sm:$0xff]
  %v504 = vld [vmem:[%s3 + $0x7d8] sm:$0xff]
  %v505 = vld [vmem:[%s3 + $0x7e0] sm:$0xff]
  %v506 = vld [vmem:[%s3 + $0x7e8] sm:$0xff]
  %v507 = vld [vmem:[%s3 + $0x7f0] sm:$0xff]
  %v508 = vld [vmem:[%s3 + $0x7f8] sm:$0xff]
  %v509 = vld [vmem:[%s3 + $0x800] sm:$0xff]
  %v510 = vld [vmem:[%s3 + $0x808] sm:$0xff]
  %v511 = vld [vmem:[%s3 + $0x810] sm:$0xff]
  %v512 = vld [vmem:[%s3 + $0x818] sm:$0xff]
  %v513 = vld [vmem:[%s3 + $0x820] sm:$0xff]
  %v514 = vld [vmem:[%s3 + $0x828] sm:$0xff]
  %v515 = vld [vmem:[%s3 + $0x830] sm:$0xff]
  %v516 = vld [vmem:[%s3 + $0x838] sm:$0xff]
  %v517 = vld [vmem:[%s3 + $0x840] sm:$0xff]
  %v518 = vld [vmem:[%s3 + $0x848] sm:$0xff]
  %v519 = vld [vmem:[%s3 + $0x850] sm:$0xff]
  %v520 = vld [vmem:[%s3 + $0x858] sm:$0xff]
  %v521 = vld [vmem:[%s3 + $0x860] sm:$0xff]
  %v522 = vld [vmem:[%s3 + $0x868] sm:$0xff]
  %v523 = vld [vmem:[%s3 + $0x870] sm:$0xff]
  %v524 = vld [vmem:[%s3 + $0x878] sm:$0xff]
  %v525 = vld [vmem:[%s3 + $0x880] sm:$0xff]
  %v526 = vld [vmem:[%s3 + $0x888] sm:$0xff]
  %v527 = vld [vmem:[%s3 + $0x890] sm:$0xff]
  %v528 = vld [vmem:[%s3 + $0x898] sm:$0xff]
  %v529 = vld [vmem:[%s3 + $0x8a0] sm:$0xff]
  %v530 = vld [vmem:[%s3 + $0x8a8] sm:$0xff]
  %v531 = vld [vmem:[%s3 + $0x8b0] sm:$0xff]
  %v532 = vld [vmem:[%s3 + $0x8b8] sm:$0xff]
  %v533 = vld [vmem:[%s3 + $0x8c0] sm:$0xff]
  %v534 = vld [vmem:[%s3 + $0x8c8] sm:$0xff]
  %v535 = vld [vmem:[%s3 + $0x8d0] sm:$0xff]
  %v536 = vld [vmem:[%s3 + $0x8d8] sm:$0xff]
  %v537 = vld [vmem:[%s3 + $0x8e0] sm:$0xff]
  %v538 = vld [vmem:[%s3 + $0x8e8] sm:$0xff]
  %v539 = vld [vmem:[%s3 + $0x8f0] sm:$0xff]
  %v540 = vld [vmem:[%s3 + $0x8f8] sm:$0xff]
  %v541 = vld [vmem:[%s3 + $0x900] sm:$0xff]
  %v542 = vld [vmem:[%s3 + $0x908] sm:$0xff]
  %v543 = vld [vmem:[%s3 + $0x910] sm:$0xff]
  %v544 = vld [vmem:[%s3 + $0x918] sm:$0xff]
  %v545 = vld [vmem:[%s3 + $0x920] sm:$0xff]
  %v546 = vld [vmem:[%s3 + $0x928] sm:$0xff]
  %v547 = vld [vmem:[%s3 + $0x930] sm:$0xff]
  %v548 = vld [vmem:[%s3 + $0x938] sm:$0xff]
  %v549 = vld [vmem:[%s3 + $0x940] sm:$0xff]
  %v550 = vld [vmem:[%s3 + $0x948] sm:$0xff]
  %v551 = vld [vmem:[%s3 + $0x950] sm:$0xff]
  %v552 = vld [vmem:[%s3 + $0x958] sm:$0xff]
  %v553 = vld [vmem:[%s3 + $0x960] sm:$0xff]
  %v554 = vld [vmem:[%s3 + $0x968] sm:$0xff]
  %v555 = vld [vmem:[%s3 + $0x970] sm:$0xff]
  %v556 = vld [vmem:[%s3 + $0x978] sm:$0xff]
  %v557 = vld [vmem:[%s3 + $0x980] sm:$0xff]
  %v558 = vld [vmem:[%s3 + $0x988] sm:$0xff]
  %v559 = vld [vmem:[%s3 + $0x990] sm:$0xff]
  %v560 = vld [vmem:[%s3 + $0x998] sm:$0xff]
  %v561 = vld [vmem:[%s3 + $0x9a0] sm:$0xff]
  %v562 = vld [vmem:[%s3 + $0x9a8] sm:$0xff]
  %v563 = vld [vmem:[%s3 + $0x9b0] sm:$0xff]
  %v564 = vld [vmem:[%s3 + $0x9b8] sm:$0xff]
  %v565 = vld [vmem:[%s3 + $0x9c0] sm:$0xff]
  %v566 = vld [vmem:[%s3 + $0x9c8] sm:$0xff]
  %v567 = vld [vmem:[%s3 + $0x9d0] sm:$0xff]
  %v568 = vld [vmem:[%s3 + $0x9d8] sm:$0xff]
  %v569 = vld [vmem:[%s3 + $0x9e0] sm:$0xff]
  %v570 = vld [vmem:[%s3 + $0x9e8] sm:$0xff]
  %v571 = vld [vmem:[%s3 + $0x9f0] sm:$0xff]
  %v572 = vld [vmem:[%s3 + $0x9f8] sm:$0xff]
  %v573 = vld [vmem:[%s3 + $0xa00] sm:$0xff]
  %v574 = vld [vmem:[%s3 + $0xa08] sm:$0xff]
  %v575 = vld [vmem:[%s3 + $0xa10] sm:$0xff]
  %v576 = vld [vmem:[%s3 + $0xa18] sm:$0xff]
  %v577 = vld [vmem:[%s3 + $0xa20] sm:$0xff]
  %v578 = vld [vmem:[%s3 + $0xa28] sm:$0xff]
  %v579 = vld [vmem:[%s3 + $0xa30] sm:$0xff]
  %v580 = vld [vmem:[%s3 + $0xa38] sm:$0xff]
  %v581 = vld [vmem:[%s3 + $0xa40] sm:$0xff]
  %v582 = vld [vmem:[%s3 + $0xa48] sm:$0xff]
  %v583 = vld [vmem:[%s3 + $0xa50] sm:$0xff]
  %v584 = vld [vmem:[%s3 + $0xa58] sm:$0xff]
  %v585 = vld [vmem:[%s3 + $0xa60] sm:$0xff]
  %v586 = vld [vmem:[%s3 + $0xa68] sm:$0xff]
  %v587 = vld [vmem:[%s3 + $0xa70] sm:$0xff]
  %v588 = vld [vmem:[%s3 + $0xa78] sm:$0xff]
  %v589 = vld [vmem:[%s3 + $0xa80] sm:$0xff]
  %v590 = vld [vmem:[%s3 + $0xa88] sm:$0xff]
  %v591 = vld [vmem:[%s3 + $0xa90] sm:$0xff]
  %v592 = vld [vmem:[%s3 + $0xa98] sm:$0xff]
  %v593 = vld [vmem:[%s3 + $0xaa0] sm:$0xff]
  %v594 = vld [vmem:[%s3 + $0xaa8] sm:$0xff]
  %v595 = vld [vmem:[%s3 + $0xab0] sm:$0xff]
  %v596 = vld [vmem:[%s3 + $0xab8] sm:$0xff]
  %v597 = vld [vmem:[%s3 + $0xac0] sm:$0xff]
  %v598 = vld [vmem:[%s3 + $0xac8] sm:$0xff]
  %v599 = vld [vmem:[%s3 + $0xad0] sm:$0xff]
  %v600 = vld [vmem:[%s3 + $0xad8] sm:$0xff]
  %v601 = vld [vmem:[%s3 + $0xae0] sm:$0xff]
  %v602 = vld [vmem:[%s3 + $0xae8] sm:$0xff]
  %v603 = vld [vmem:[%s3 + $0xaf0] sm:$0xff]
  %v604 = vld [vmem:[%s3 + $0xaf8] sm:$0xff]
  %v605 = vld [vmem:[%s3 + $0xb00] sm:$0xff]
  %v606 = vld [vmem:[%s3 + $0xb08] sm:$0xff]
  %v607 = vld [vmem:[%s3 + $0xb10] sm:$0xff]
  %v608 = vld [vmem:[%s3 + $0xb18] sm:$0xff]
  %v609 = vld [vmem:[%s3 + $0xb20] sm:$0xff]
  %v610 = vld [vmem:[%s3 + $0xb28] sm:$0xff]
  %v611 = vld [vmem:[%s3 + $0xb30] sm:$0xff]
  %v612 = vld [vmem:[%s3 + $0xb38] sm:$0xff]
  %v613 = vld [vmem:[%s3 + $0xb40] sm:$0xff]
  %v614 = vld [vmem:[%s3 + $0xb48] sm:$0xff]
  %v615 = vld [vmem:[%s3 + $0xb50] sm:$0xff]
  %v616 = vld [vmem:[%s3 + $0xb58] sm:$0xff]
  %v617 = vld [vmem:[%s3 + $0xb60] sm:$0xff]
  %v618 = vld [vmem:[%s3 + $0xb68] sm:$0xff]
  %v619 = vld [vmem:[%s3 + $0xb70] sm:$0xff]
  %v620 = vld [vmem:[%s3 + $0xb78] sm:$0xff]
  %v621 = vld [vmem:[%s3 + $0xb80] sm:$0xff]
  %v622 = vld [vmem:[%s3 + $0xb88] sm:$0xff]
  %v623 = vld [vmem:[%s3 + $0xb90] sm:$0xff]
  %v624 = vld [vmem:[%s3 + $0xb98] sm:$0xff]
  %v625 = vld [vmem:[%s3 + $0xba0] sm:$0xff]
  %v626 = vld [vmem:[%s3 + $0xba8] sm:$0xff]
  %v627 = vld [vmem:[%s3 + $0xbb0] sm:$0xff]
  %v628 = vld [vmem:[%s3 + $0xbb8] sm:$0xff]
  %v629 = vld [vmem:[%s3 + $0xbc0] sm:$0xff]
  %v630 = vld [vmem:[%s3 + $0xbc8] sm:$0xff]
  %v631 = vld [vmem:[%s3 + $0xbd0] sm:$0xff]
  %v632 = vld [vmem:[%s3 + $0xbd8] sm:$0xff]
  %v633 = vld [vmem:[%s3 + $0xbe0] sm:$0xff]
  %v634 = vld [vmem:[%s3 + $0xbe8] sm:$0xff]
  %v635 = vld [vmem:[%s3 + $0xbf0] sm:$0xff]
  %v636 = vld [vmem:[%s3 + $0xbf8] sm:$0xff]
  %v637 = vld [vmem:[%s3 + $0xc00] sm:$0xff]
  %v638 = vld [vmem:[%s3 + $0xc08] sm:$0xff]
  %v639 = vld [vmem:[%s3 + $0xc10] sm:$0xff]
  %v640 = vld [vmem:[%s3 + $0xc18] sm:$0xff]
  %v641 = vld [vmem:[%s3 + $0xc20] sm:$0xff]
  %v642 = vld [vmem:[%s3 + $0xc28] sm:$0xff]
  %v643 = vld [vmem:[%s3 + $0xc30] sm:$0xff]
  %v644 = vld [vmem:[%s3 + $0xc38] sm:$0xff]
  %v645 = vld [vmem:[%s3 + $0xc40] sm:$0xff]
  %v646 = vld [vmem:[%s3 + $0xc48] sm:$0xff]
  %v647 = vld [vmem:[%s3 + $0xc50] sm:$0xff]
  %v648 = vld [vmem:[%s3 + $0xc58] sm:$0xff]
  %v649 = vld [vmem:[%s3 + $0xc60] sm:$0xff]
  %v650 = vld [vmem:[%s3 + $0xc68] sm:$0xff]
  %v651 = vld [vmem:[%s3 + $0xc70] sm:$0xff]
  %v652 = vld [vmem:[%s3 + $0xc78] sm:$0xff]
  %v653 = vld [vmem:[%s3 + $0xc80] sm:$0xff]
  %v654 = vld [vmem:[%s3 + $0xc88] sm:$0xff]
  %v655 = vld [vmem:[%s3 + $0xc90] sm:$0xff]
  %v656 = vld [vmem:[%s3 + $0xc98] sm:$0xff]
  %v657 = vld [vmem:[%s3 + $0xca0] sm:$0xff]
  %v658 = vld [vmem:[%s3 + $0xca8] sm:$0xff]
  %v659 = vld [vmem:[%s3 + $0xcb0] sm:$0xff]
  %v660 = vld [vmem:[%s3 + $0xcb8] sm:$0xff]
  %v661 = vld [vmem:[%s3 + $0xcc0] sm:$0xff]
  %v662 = vld [vmem:[%s3 + $0xcc8] sm:$0xff]
  %v663 = vld [vmem:[%s3 + $0xcd0] sm:$0xff]
  %v664 = vld [vmem:[%s3 + $0xcd8] sm:$0xff]
  %v665 = vld [vmem:[%s3 + $0xce0] sm:$0xff]
  %v666 = vld [vmem:[%s3 + $0xce8] sm:$0xff]
  %v667 = vld [vmem:[%s3 + $0xcf0] sm:$0xff]
  %v668 = vld [vmem:[%s3 + $0xcf8] sm:$0xff]
  %v669 = vld [vmem:[%s3 + $0xd00] sm:$0xff]
  %v670 = vld [vmem:[%s3 + $0xd08] sm:$0xff]
  %v671 = vld [vmem:[%s3 + $0xd10] sm:$0xff]
  %v672 = vld [vmem:[%s3 + $0xd18] sm:$0xff]
  %v673 = vld [vmem:[%s3 + $0xd20] sm:$0xff]
  %v674 = vld [vmem:[%s3 + $0xd28] sm:$0xff]
  %v675 = vld [vmem:[%s3 + $0xd30] sm:$0xff]
  %v676 = vld [vmem:[%s3 + $0xd38] sm:$0xff]
  %v677 = vld [vmem:[%s3 + $0xd40] sm:$0xff]
  %v678 = vld [vmem:[%s3 + $0xd48] sm:$0xff]
  %v679 = vld [vmem:[%s3 + $0xd50] sm:$0xff]
  %v680 = vld [vmem:[%s3 + $0xd58] sm:$0xff]
  %v681 = vld [vmem:[%s3 + $0xd60] sm:$0xff]
  %v682 = vld [vmem:[%s3 + $0xd68] sm:$0xff]
  %v683 = vld [vmem:[%s3 + $0xd70] sm:$0xff]
  %v684 = vld [vmem:[%s3 + $0xd78] sm:$0xff]
  %v685 = vld [vmem:[%s3 + $0xd80] sm:$0xff]
  %v686 = vld [vmem:[%s3 + $0xd88] sm:$0xff]
  %v687 = vld [vmem:[%s3 + $0xd90] sm:$0xff]
  %v688 = vld [vmem:[%s3 + $0xd98] sm:$0xff]
  %v689 = vld [vmem:[%s3 + $0xda0] sm:$0xff]
  %v690 = vld [vmem:[%s3 + $0xda8] sm:$0xff]
  %v691 = vld [vmem:[%s3 + $0xdb0] sm:$0xff]
  %v692 = vld [vmem:[%s3 + $0xdb8] sm:$0xff]
  %v693 = vld [vmem:[%s3 + $0xdc0] sm:$0xff]
  %v694 = vld [vmem:[%s3 + $0xdc8] sm:$0xff]
  %v695 = vld [vmem:[%s3 + $0xdd0] sm:$0xff]
  %v696 = vld [vmem:[%s3 + $0xdd8] sm:$0xff]
  %v697 = vld [vmem:[%s3 + $0xde0] sm:$0xff]
  %v698 = vld [vmem:[%s3 + $0xde8] sm:$0xff]
  %v699 = vld [vmem:[%s3 + $0xdf0] sm:$0xff]
  %v700 = vld [vmem:[%s3 + $0xdf8] sm:$0xff]
  %v701 = vld [vmem:[%s3 + $0xe00] sm:$0xff]
  %v702 = vld [vmem:[%s3 + $0xe08] sm:$0xff]
  %v703 = vld [vmem:[%s3 + $0xe10] sm:$0xff]
  %v704 = vld [vmem:[%s3 + $0xe18] sm:$0xff]
  %v705 = vld [vmem:[%s3 + $0xe20] sm:$0xff]
  %v706 = vld [vmem:[%s3 + $0xe28] sm:$0xff]
  %v707 = vld [vmem:[%s3 + $0xe30] sm:$0xff]
  %v708 = vld [vmem:[%s3 + $0xe38] sm:$0xff]
  %v709 = vld [vmem:[%s3 + $0xe40] sm:$0xff]
  %v710 = vld [vmem:[%s3 + $0xe48] sm:$0xff]
  %v711 = vld [vmem:[%s3 + $0xe50] sm:$0xff]
  %v712 = vld [vmem:[%s3 + $0xe58] sm:$0xff]
  %v713 = vld [vmem:[%s3 + $0xe60] sm:$0xff]
  %v714 = vld [vmem:[%s3 + $0xe68] sm:$0xff]
  %v715 = vld [vmem:[%s3 + $0xe70] sm:$0xff]
  %v716 = vld [vmem:[%s3 + $0xe78] sm:$0xff]
  %v717 = vld [vmem:[%s3 + $0xe80] sm:$0xff]
  %v718 = vld [vmem:[%s3 + $0xe88] sm:$0xff]
  %v719 = vld [vmem:[%s3 + $0xe90] sm:$0xff]
  %v720 = vld [vmem:[%s3 + $0xe98] sm:$0xff]
  %v721 = vld [vmem:[%s3 + $0xea0] sm:$0xff]
  %v722 = vld [vmem:[%s3 + $0xea8] sm:$0xff]
  %v723 = vld [vmem:[%s3 + $0xeb0] sm:$0xff]
  %v724 = vld [vmem:[%s3 + $0xeb8] sm:$0xff]
  %v725 = vld [vmem:[%s3 + $0xec0] sm:$0xff]
  %v726 = vld [vmem:[%s3 + $0xec8] sm:$0xff]
  %v727 = vld [vmem:[%s3 + $0xed0] sm:$0xff]
  %v728 = vld [vmem:[%s3 + $0xed8] sm:$0xff]
  %v729 = vld [vmem:[%s3 + $0xee0] sm:$0xff]
  %v730 = vld [vmem:[%s3 + $0xee8] sm:$0xff]
  %v731 = vld [vmem:[%s3 + $0xef0] sm:$0xff]
  %v732 = vld [vmem:[%s3 + $0xef8] sm:$0xff]
  %v733 = vld [vmem:[%s3 + $0xf00] sm:$0xff]
  %v734 = vld [vmem:[%s3 + $0xf08] sm:$0xff]
  %v735 = vld [vmem:[%s3 + $0xf10] sm:$0xff]
  %v736 = vld [vmem:[%s3 + $0xf18] sm:$0xff]
  %v737 = vld [vmem:[%s3 + $0xf20] sm:$0xff]
  %v738 = vld [vmem:[%s3 + $0xf28] sm:$0xff]
  %v739 = vld [vmem:[%s3 + $0xf30] sm:$0xff]
  %v740 = vld [vmem:[%s3 + $0xf38] sm:$0xff]
  %v741 = vld [vmem:[%s3 + $0xf40] sm:$0xff]
  %v742 = vld [vmem:[%s3 + $0xf48] sm:$0xff]
  %v743 = vld [vmem:[%s3 + $0xf50] sm:$0xff]
  %v744 = vld [vmem:[%s3 + $0xf58] sm:$0xff]
  %v745 = vld [vmem:[%s3 + $0xf60] sm:$0xff]
  %v746 = vld [vmem:[%s3 + $0xf68] sm:$0xff]
  %v747 = vld [vmem:[%s3 + $0xf70] sm:$0xff]
  %v748 = vld [vmem:[%s3 + $0xf78] sm:$0xff]
  %v749 = vld [vmem:[%s3 + $0xf80] sm:$0xff]
  %v750 = vld [vmem:[%s3 + $0xf88] sm:$0xff]
  %v751 = vld [vmem:[%s3 + $0xf90] sm:$0xff]
  %v752 = vld [vmem:[%s3 + $0xf98] sm:$0xff]
  %v753 = vld [vmem:[%s3 + $0xfa0] sm:$0xff]
  %v754 = vld [vmem:[%s3 + $0xfa8] sm:$0xff]
  %v755 = vld [vmem:[%s3 + $0xfb0] sm:$0xff]
  %v756 = vld [vmem:[%s3 + $0xfb8] sm:$0xff]
  %v757 = vld [vmem:[%s3 + $0xfc0] sm:$0xff]
  %v758 = vld [vmem:[%s3 + $0xfc8] sm:$0xff]
  %v759 = vld [vmem:[%s3 + $0xfd0] sm:$0xff]
  %v760 = vld [vmem:[%s3 + $0xfd8] sm:$0xff]
  %v761 = vld [vmem:[%s3 + $0xfe0] sm:$0xff]
  %v762 = vld [vmem:[%s3 + $0xfe8] sm:$0xff]
  %v763 = vld [vmem:[%s3 + $0xff0] sm:$0xff]
  %v764 = vld [vmem:[%s3 + $0xff8] sm:$0xff]
  %v765 = vld [vmem:[%s3 + $0x1000] sm:$0xff]
  %v766 = vld [vmem:[%s3 + $0x1008] sm:$0xff]
  %v767 = vld [vmem:[%s3 + $0x1010] sm:$0xff]
  %v768 = vld [vmem:[%s3 + $0x1018] sm:$0xff]
  %v769 = vld [vmem:[%s3 + $0x1020] sm:$0xff]
  %v770 = vld [vmem:[%s3 + $0x1028] sm:$0xff]
  %v771 = vld [vmem:[%s3 + $0x1030] sm:$0xff]
  %v772 = vld [vmem:[%s3 + $0x1038] sm:$0xff]
  %v773 = vld [vmem:[%s3 + $0x1040] sm:$0xff]
  %v774 = vld [vmem:[%s3 + $0x1048] sm:$0xff]
  %v775 = vld [vmem:[%s3 + $0x1050] sm:$0xff]
  %v776 = vld [vmem:[%s3 + $0x1058] sm:$0xff]
  %v777 = vld [vmem:[%s3 + $0x1060] sm:$0xff]
  %v778 = vld [vmem:[%s3 + $0x1068] sm:$0xff]
  %v779 = vld [vmem:[%s3 + $0x1070] sm:$0xff]
  %v780 = vld [vmem:[%s3 + $0x1078] sm:$0xff]
  %v781 = vld [vmem:[%s3 + $0x1080] sm:$0xff]
  %v782 = vld [vmem:[%s3 + $0x1088] sm:$0xff]
  %v783 = vld [vmem:[%s3 + $0x1090] sm:$0xff]
  %v784 = vld [vmem:[%s3 + $0x1098] sm:$0xff]
  %v785 = vld [vmem:[%s3 + $0x10a0] sm:$0xff]
  %v786 = vld [vmem:[%s3 + $0x10a8] sm:$0xff]
  %v787 = vld [vmem:[%s3 + $0x10b0] sm:$0xff]
  %v788 = vld [vmem:[%s3 + $0x10b8] sm:$0xff]
  %v789 = vld [vmem:[%s3 + $0x10c0] sm:$0xff]
  %v790 = vld [vmem:[%s3 + $0x10c8] sm:$0xff]
  %v791 = vld [vmem:[%s3 + $0x10d0] sm:$0xff]
  %v792 = vld [vmem:[%s3 + $0x10d8] sm:$0xff]
  %v793 = vld [vmem:[%s3 + $0x10e0] sm:$0xff]
  %v794 = vld [vmem:[%s3 + $0x10e8] sm:$0xff]
  %v795 = vld [vmem:[%s3 + $0x10f0] sm:$0xff]
  %v796 = vld [vmem:[%s3 + $0x10f8] sm:$0xff]
  %v797 = vld [vmem:[%s3 + $0x1100] sm:$0xff]
  %v798 = vld [vmem:[%s3 + $0x1108] sm:$0xff]
  %v799 = vld [vmem:[%s3 + $0x1110] sm:$0xff]
  %v800 = vld [vmem:[%s3 + $0x1118] sm:$0xff]
  %v801 = vld [vmem:[%s3 + $0x1120] sm:$0xff]
  %v802 = vld [vmem:[%s3 + $0x1128] sm:$0xff]
  %v803 = vld [vmem:[%s3 + $0x1130] sm:$0xff]
  %v804 = vld [vmem:[%s3 + $0x1138] sm:$0xff]
  %v805 = vld [vmem:[%s3 + $0x1140] sm:$0xff]
  %v806 = vld [vmem:[%s3 + $0x1148] sm:$0xff]
  %v807 = vld [vmem:[%s3 + $0x1150] sm:$0xff]
  %v808 = vld [vmem:[%s3 + $0x1158] sm:$0xff]
  %v809 = vld [vmem:[%s3 + $0x1160] sm:$0xff]
  %v810 = vld [vmem:[%s3 + $0x1168] sm:$0xff]
  %v811 = vld [vmem:[%s3 + $0x1170] sm:$0xff]
  %v812 = vld [vmem:[%s3 + $0x1178] sm:$0xff]
  %v813 = vld [vmem:[%s3 + $0x1180] sm:$0xff]
  %v814 = vld [vmem:[%s3 + $0x1188] sm:$0xff]
  %v815 = vld [vmem:[%s3 + $0x1190] sm:$0xff]
  %v816 = vld [vmem:[%s3 + $0x1198] sm:$0xff]
  %v817 = vld [vmem:[%s3 + $0x11a0] sm:$0xff]
  %v818 = vld [vmem:[%s3 + $0x11a8] sm:$0xff]
  %v819 = vld [vmem:[%s3 + $0x11b0] sm:$0xff]
  %v820 = vld [vmem:[%s3 + $0x11b8] sm:$0xff]
  %v821 = vld [vmem:[%s3 + $0x11c0] sm:$0xff]
  %v822 = vld [vmem:[%s3 + $0x11c8] sm:$0xff]
  %v823 = vld [vmem:[%s3 + $0x11d0] sm:$0xff]
  %v824 = vld [vmem:[%s3 + $0x11d8] sm:$0xff]
  %v825 = vld [vmem:[%s3 + $0x11e0] sm:$0xff]
  %v826 = vld [vmem:[%s3 + $0x11e8] sm:$0xff]
  %v827 = vld [vmem:[%s3 + $0x11f0] sm:$0xff]
  %v828 = vld [vmem:[%s3 + $0x11f8] sm:$0xff]
  %v829 = vld [vmem:[%s3 + $0x1200] sm:$0xff]
  %v830 = vld [vmem:[%s3 + $0x1208] sm:$0xff]
  %v831 = vld [vmem:[%s3 + $0x1210] sm:$0xff]
  %v832 = vld [vmem:[%s3 + $0x1218] sm:$0xff]
  %v833 = vld [vmem:[%s3 + $0x1220] sm:$0xff]
  %v834 = vld [vmem:[%s3 + $0x1228] sm:$0xff]
  %v835 = vld [vmem:[%s3 + $0x1230] sm:$0xff]
  %v836 = vld [vmem:[%s3 + $0x1238] sm:$0xff]
  %v837 = vld [vmem:[%s3 + $0x1240] sm:$0xff]
  %v838 = vld [vmem:[%s3 + $0x1248] sm:$0xff]
  %v839 = vld [vmem:[%s3 + $0x1250] sm:$0xff]
  %v840 = vld [vmem:[%s3 + $0x1258] sm:$0xff]
  %v841 = vld [vmem:[%s3 + $0x1260] sm:$0xff]
  %v842 = vld [vmem:[%s3 + $0x1268] sm:$0xff]
  %v843 = vld [vmem:[%s3 + $0x1270] sm:$0xff]
  %v844 = vld [vmem:[%s3 + $0x1278] sm:$0xff]
  %v845 = vld [vmem:[%s3 + $0x1280] sm:$0xff]
  %v846 = vld [vmem:[%s3 + $0x1288] sm:$0xff]
  %v847 = vld [vmem:[%s3 + $0x1290] sm:$0xff]
  %v848 = vld [vmem:[%s3 + $0x1298] sm:$0xff]
  %v849 = vld [vmem:[%s3 + $0x12a0] sm:$0xff]
  %v850 = vld [vmem:[%s3 + $0x12a8] sm:$0xff]
  %v851 = vld [vmem:[%s3 + $0x12b0] sm:$0xff]
  %v852 = vld [vmem:[%s3 + $0x12b8] sm:$0xff]
  %v853 = vld [vmem:[%s3 + $0x12c0] sm:$0xff]
  %v854 = vld [vmem:[%s3 + $0x12c8] sm:$0xff]
  %v855 = vld [vmem:[%s3 + $0x12d0] sm:$0xff]
  %v856 = vld [vmem:[%s3 + $0x12d8] sm:$0xff]
  %v857 = vld [vmem:[%s3 + $0x12e0] sm:$0xff]
  %v858 = vld [vmem:[%s3 + $0x12e8] sm:$0xff]
  %v859 = vld [vmem:[%s3 + $0x12f0] sm:$0xff]
  %v860 = vld [vmem:[%s3 + $0x12f8] sm:$0xff]
  %v861 = vld [vmem:[%s3 + $0x1300] sm:$0xff]
  %v862 = vld [vmem:[%s3 + $0x1308] sm:$0xff]
  %v863 = vld [vmem:[%s3 + $0x1310] sm:$0xff]
  %v864 = vld [vmem:[%s3 + $0x1318] sm:$0xff]
  %v865 = vld [vmem:[%s3 + $0x1320] sm:$0xff]
  %v866 = vld [vmem:[%s3 + $0x1328] sm:$0xff]
  %v867 = vld [vmem:[%s3 + $0x1330] sm:$0xff]
  %v868 = vld [vmem:[%s3 + $0x1338] sm:$0xff]
  %v869 = vld [vmem:[%s3 + $0x1340] sm:$0xff]
  %v870 = vld [vmem:[%s3 + $0x1348] sm:$0xff]
  %v871 = vld [vmem:[%s3 + $0x1350] sm:$0xff]
  %v872 = vld [vmem:[%s3 + $0x1358] sm:$0xff]
  %v873 = vld [vmem:[%s3 + $0x1360] sm:$0xff]
  %v874 = vld [vmem:[%s3 + $0x1368] sm:$0xff]
  %v875 = vld [vmem:[%s3 + $0x1370] sm:$0xff]
  %v876 = vld [vmem:[%s3 + $0x1378] sm:$0xff]
  %v877 = vld [vmem:[%s3 + $0x1380] sm:$0xff]
  %v878 = vld [vmem:[%s3 + $0x1388] sm:$0xff]
  %v879 = vld [vmem:[%s3 + $0x1390] sm:$0xff]
  %v880 = vld [vmem:[%s3 + $0x1398] sm:$0xff]
  %v881 = vld [vmem:[%s3 + $0x13a0] sm:$0xff]
  %v882 = vld [vmem:[%s3 + $0x13a8] sm:$0xff]
  %v883 = vld [vmem:[%s3 + $0x13b0] sm:$0xff]
  %v884 = vld [vmem:[%s3 + $0x13b8] sm:$0xff]
  %v885 = vld [vmem:[%s3 + $0x13c0] sm:$0xff]
  %v886 = vld [vmem:[%s3 + $0x13c8] sm:$0xff]
  %v887 = vld [vmem:[%s3 + $0x13d0] sm:$0xff]
  %v888 = vld [vmem:[%s3 + $0x13d8] sm:$0xff]
  %v889 = vld [vmem:[%s3 + $0x13e0] sm:$0xff]
  %v890 = vld [vmem:[%s3 + $0x13e8] sm:$0xff]
  %v891 = vld [vmem:[%s3 + $0x13f0] sm:$0xff]
  %v892 = vld [vmem:[%s3 + $0x13f8] sm:$0xff]
  %v893 = vld [vmem:[%s3 + $0x1400] sm:$0xff]
  %v894 = vld [vmem:[%s3 + $0x1408] sm:$0xff]
  %v895 = vld [vmem:[%s3 + $0x1410] sm:$0xff]
  %v896 = vld [vmem:[%s3 + $0x1418] sm:$0xff]
  %v897 = vld [vmem:[%s3 + $0x1420] sm:$0xff]
  %v898 = vld [vmem:[%s3 + $0x1428] sm:$0xff]
  %v899 = vld [vmem:[%s3 + $0x1430] sm:$0xff]
  %v900 = vld [vmem:[%s3 + $0x1438] sm:$0xff]
  %v901 = vld [vmem:[%s3 + $0x1440] sm:$0xff]
  %v902 = vld [vmem:[%s3 + $0x1448] sm:$0xff]
  %v903 = vld [vmem:[%s3 + $0x1450] sm:$0xff]
  %v904 = vld [vmem:[%s3 + $0x1458] sm:$0xff]
  %v905 = vld [vmem:[%s3 + $0x1460] sm:$0xff]
  %v906 = vld [vmem:[%s3 + $0x1468] sm:$0xff]
  %v907 = vld [vmem:[%s3 + $0x1470] sm:$0xff]
  %v908 = vld [vmem:[%s3 + $0x1478] sm:$0xff]
  %v909 = vld [vmem:[%s3 + $0x1480] sm:$0xff]
  %v910 = vld [vmem:[%s3 + $0x1488] sm:$0xff]
  %v911 = vld [vmem:[%s3 + $0x1490] sm:$0xff]
  %v912 = vld [vmem:[%s3 + $0x1498] sm:$0xff]
  %v913 = vld [vmem:[%s3 + $0x14a0] sm:$0xff]
  %v914 = vld [vmem:[%s3 + $0x14a8] sm:$0xff]
  %v915 = vld [vmem:[%s3 + $0x14b0] sm:$0xff]
  %v916 = vld [vmem:[%s3 + $0x14b8] sm:$0xff]
  %v917 = vld [vmem:[%s3 + $0x14c0] sm:$0xff]
  %v918 = vld [vmem:[%s3 + $0x14c8] sm:$0xff]
  %v919 = vld [vmem:[%s3 + $0x14d0] sm:$0xff]
  %v920 = vld [vmem:[%s3 + $0x14d8] sm:$0xff]
  %v921 = vld [vmem:[%s3 + $0x14e0] sm:$0xff]
  %v922 = vld [vmem:[%s3 + $0x14e8] sm:$0xff]
  %v923 = vld [vmem:[%s3 + $0x14f0] sm:$0xff]
  %v924 = vld [vmem:[%s3 + $0x14f8] sm:$0xff]
  %v925 = vld [vmem:[%s3 + $0x1500] sm:$0xff]
  %v926 = vld [vmem:[%s3 + $0x1508] sm:$0xff]
  %v927 = vld [vmem:[%s3 + $0x1510] sm:$0xff]
  %v928 = vld [vmem:[%s3 + $0x1518] sm:$0xff]
  %v929 = vld [vmem:[%s3 + $0x1520] sm:$0xff]
  %v930 = vld [vmem:[%s3 + $0x1528] sm:$0xff]
  %v931 = vld [vmem:[%s3 + $0x1530] sm:$0xff]
  %v932 = vld [vmem:[%s3 + $0x1538] sm:$0xff]
  %v933 = vld [vmem:[%s3 + $0x1540] sm:$0xff]
  %v934 = vld [vmem:[%s3 + $0x1548] sm:$0xff]
  %v935 = vld [vmem:[%s3 + $0x1550] sm:$0xff]
  %v936 = vld [vmem:[%s3 + $0x1558] sm:$0xff]
  %v937 = vld [vmem:[%s3 + $0x1560] sm:$0xff]
  %v938 = vld [vmem:[%s3 + $0x1568] sm:$0xff]
  %v939 = vld [vmem:[%s3 + $0x1570] sm:$0xff]
  %v940 = vld [vmem:[%s3 + $0x1578] sm:$0xff]
  %v941 = vld [vmem:[%s3 + $0x1580] sm:$0xff]
  %v942 = vld [vmem:[%s3 + $0x1588] sm:$0xff]
  %v943 = vld [vmem:[%s3 + $0x1590] sm:$0xff]
  %v944 = vld [vmem:[%s3 + $0x1598] sm:$0xff]
  %v945 = vld [vmem:[%s3 + $0x15a0] sm:$0xff]
  %v946 = vld [vmem:[%s3 + $0x15a8] sm:$0xff]
  %v947 = vld [vmem:[%s3 + $0x15b0] sm:$0xff]
  %v948 = vld [vmem:[%s3 + $0x15b8] sm:$0xff]
  %v949 = vld [vmem:[%s3 + $0x15c0] sm:$0xff]
  %v950 = vld [vmem:[%s3 + $0x15c8] sm:$0xff]
  %v951 = vld [vmem:[%s3 + $0x15d0] sm:$0xff]
  %v952 = vld [vmem:[%s3 + $0x15d8] sm:$0xff]
  %v953 = vld [vmem:[%s3 + $0x15e0] sm:$0xff]
  %v954 = vld [vmem:[%s3 + $0x15e8] sm:$0xff]
  %v955 = vld [vmem:[%s3 + $0x15f0] sm:$0xff]
  %v956 = vld [vmem:[%s3 + $0x15f8] sm:$0xff]
  %v957 = vld [vmem:[%s3 + $0x1600] sm:$0xff]
  %v958 = vld [vmem:[%s3 + $0x1608] sm:$0xff]
  %v959 = vld [vmem:[%s3 + $0x1610] sm:$0xff]
  %v960 = vld [vmem:[%s3 + $0x1618] sm:$0xff]
  %v961 = vld [vmem:[%s3 + $0x1620] sm:$0xff]
  %v962 = vld [vmem:[%s3 + $0x1628] sm:$0xff]
  %v963 = vld [vmem:[%s3 + $0x1630] sm:$0xff]
  %v964 = vld [vmem:[%s3 + $0x1638] sm:$0xff]
  %v965 = vld [vmem:[%s3 + $0x1640] sm:$0xff]
  %v966 = vld [vmem:[%s3 + $0x1648] sm:$0xff]
  %v967 = vld [vmem:[%s3 + $0x1650] sm:$0xff]
  %v968 = vld [vmem:[%s3 + $0x1658] sm:$0xff]
  %v969 = vld [vmem:[%s3 + $0x1660] sm:$0xff]
  %v970 = vld [vmem:[%s3 + $0x1668] sm:$0xff]
  %v971 = vld [vmem:[%s3 + $0x1670] sm:$0xff]
  %v972 = vld [vmem:[%s3 + $0x1678] sm:$0xff]
  %v973 = vld [vmem:[%s3 + $0x1680] sm:$0xff]
  %v974 = vld [vmem:[%s3 + $0x1688] sm:$0xff]
  %v975 = vld [vmem:[%s3 + $0x1690] sm:$0xff]
  %v976 = vld [vmem:[%s3 + $0x1698] sm:$0xff]
  %v977 = vld [vmem:[%s3 + $0x16a0] sm:$0xff]
  %v978 = vld [vmem:[%s3 + $0x16a8] sm:$0xff]
  %v979 = vld [vmem:[%s3 + $0x16b0] sm:$0xff]
  %v980 = vld [vmem:[%s3 + $0x16b8] sm:$0xff]
  %v981 = vld [vmem:[%s3 + $0x16c0] sm:$0xff]
  %v982 = vld [vmem:[%s3 + $0x16c8] sm:$0xff]
  %v983 = vld [vmem:[%s3 + $0x16d0] sm:$0xff]
  %v984 = vld [vmem:[%s3 + $0x16d8] sm:$0xff]
  %v985 = vld [vmem:[%s3 + $0x16e0] sm:$0xff]
  %v986 = vld [vmem:[%s3 + $0x16e8] sm:$0xff]
  %v987 = vld [vmem:[%s3 + $0x16f0] sm:$0xff]
  %v988 = vld [vmem:[%s3 + $0x16f8] sm:$0xff]
  %v989 = vld [vmem:[%s3 + $0x1700] sm:$0xff]
  %v990 = vld [vmem:[%s3 + $0x1708] sm:$0xff]
  %v991 = vld [vmem:[%s3 + $0x1710] sm:$0xff]
  %v992 = vld [vmem:[%s3 + $0x1718] sm:$0xff]
  %v993 = vld [vmem:[%s3 + $0x1720] sm:$0xff]
  %v994 = vld [vmem:[%s3 + $0x1728] sm:$0xff]
  %v995 = vld [vmem:[%s3 + $0x1730] sm:$0xff]
  %v996 = vld [vmem:[%s3 + $0x1738] sm:$0xff]
  %v997 = vld [vmem:[%s3 + $0x1740] sm:$0xff]
  %v998 = vld [vmem:[%s3 + $0x1748] sm:$0xff]
  %v999 = vld [vmem:[%s3 + $0x1750] sm:$0xff]
  %v1000 = vld [vmem:[%s3 + $0x1758] sm:$0xff]
  %v1001 = vld [vmem:[%s3 + $0x1760] sm:$0xff]
  %v1002 = vld [vmem:[%s3 + $0x1768] sm:$0xff]
  %v1003 = vld [vmem:[%s3 + $0x1770] sm:$0xff]
  %v1004 = vld [vmem:[%s3 + $0x1778] sm:$0xff]
  %v1005 = vld [vmem:[%s3 + $0x1780] sm:$0xff]
  %v1006 = vld [vmem:[%s3 + $0x1788] sm:$0xff]
  %v1007 = vld [vmem:[%s3 + $0x1790] sm:$0xff]
  %v1008 = vld [vmem:[%s3 + $0x1798] sm:$0xff]
  %v1009 = vld [vmem:[%s3 + $0x17a0] sm:$0xff]
  %v1010 = vld [vmem:[%s3 + $0x17a8] sm:$0xff]
  %v1011 = vld [vmem:[%s3 + $0x17b0] sm:$0xff]
  %v1012 = vld [vmem:[%s3 + $0x17b8] sm:$0xff]
  %v1013 = vld [vmem:[%s3 + $0x17c0] sm:$0xff]
  %v1014 = vld [vmem:[%s3 + $0x17c8] sm:$0xff]
  %v1015 = vld [vmem:[%s3 + $0x17d0] sm:$0xff]
  %v1016 = vld [vmem:[%s3 + $0x17d8] sm:$0xff]
  %v1017 = vld [vmem:[%s3 + $0x17e0] sm:$0xff]
  %v1018 = vld [vmem:[%s3 + $0x17e8] sm:$0xff]
  %v1019 = vld [vmem:[%s3 + $0x17f0] sm:$0xff]
  %v1020 = vld [vmem:[%s3 + $0x17f8] sm:$0xff]
  %v1021 = vld [vmem:[%s3 + $0x1800] sm:$0xff]
  %v1022 = vld [vmem:[%s3 + $0x1808] sm:$0xff]
  %v1023 = vld [vmem:[%s3 + $0x1810] sm:$0xff]
  %v1024 = vld [vmem:[%s3 + $0x1818] sm:$0xff]
  %v1025 = vld [vmem:[%s3 + $0x1820] sm:$0xff]
  %v1026 = vld [vmem:[%s3 + $0x1828] sm:$0xff]
  %v1027 = vld [vmem:[%s3 + $0x1830] sm:$0xff]
  %v1028 = vld [vmem:[%s3 + $0x1838] sm:$0xff]
  %v1029 = vld [vmem:[%s3 + $0x1840] sm:$0xff]
  %v1030 = vld [vmem:[%s3 + $0x1848] sm:$0xff]
  %v1031 = vld [vmem:[%s3 + $0x1850] sm:$0xff]
  %v1032 = vld [vmem:[%s3 + $0x1858] sm:$0xff]
  %v1033 = vld [vmem:[%s3 + $0x1860] sm:$0xff]
  %v1034 = vld [vmem:[%s3 + $0x1868] sm:$0xff]
  %v1035 = vld [vmem:[%s3 + $0x1870] sm:$0xff]
  %v1036 = vld [vmem:[%s3 + $0x1878] sm:$0xff]
  %v1037 = vld [vmem:[%s3 + $0x1880] sm:$0xff]
  %v1038 = vld [vmem:[%s3 + $0x1888] sm:$0xff]
  %v1039 = vld [vmem:[%s3 + $0x1890] sm:$0xff]
  %v1040 = vld [vmem:[%s3 + $0x1898] sm:$0xff]
  %v1041 = vld [vmem:[%s3 + $0x18a0] sm:$0xff]
  %v1042 = vld [vmem:[%s3 + $0x18a8] sm:$0xff]
  %v1043 = vld [vmem:[%s3 + $0x18b0] sm:$0xff]
  %v1044 = vld [vmem:[%s3 + $0x18b8] sm:$0xff]
  %v1045 = vld [vmem:[%s3 + $0x18c0] sm:$0xff]
  %v1046 = vld [vmem:[%s3 + $0x18c8] sm:$0xff]
  %v1047 = vld [vmem:[%s3 + $0x18d0] sm:$0xff]
  %v1048 = vld [vmem:[%s3 + $0x18d8] sm:$0xff]
  %v1049 = vld [vmem:[%s3 + $0x18e0] sm:$0xff]
  %v1050 = vld [vmem:[%s3 + $0x18e8] sm:$0xff]
  %v1051 = vld [vmem:[%s3 + $0x18f0] sm:$0xff]
  %v1052 = vld [vmem:[%s3 + $0x18f8] sm:$0xff]
  %v1053 = vld [vmem:[%s3 + $0x1900] sm:$0xff]
  %v1054 = vld [vmem:[%s3 + $0x1908] sm:$0xff]
  %v1055 = vld [vmem:[%s3 + $0x1910] sm:$0xff]
  %v1056 = vld [vmem:[%s3 + $0x1918] sm:$0xff]
  %v1057 = vld [vmem:[%s3 + $0x1920] sm:$0xff]
  %v1058 = vld [vmem:[%s3 + $0x1928] sm:$0xff]
  %v1059 = vld [vmem:[%s3 + $0x1930] sm:$0xff]
  %v1060 = vld [vmem:[%s3 + $0x1938] sm:$0xff]
  %v1061 = vld [vmem:[%s3 + $0x1940] sm:$0xff]
  %v1062 = vld [vmem:[%s3 + $0x1948] sm:$0xff]
  %v1063 = vld [vmem:[%s3 + $0x1950] sm:$0xff]
  %v1064 = vld [vmem:[%s3 + $0x1958] sm:$0xff]
  %v1065 = vld [vmem:[%s3 + $0x1960] sm:$0xff]
  %v1066 = vld [vmem:[%s3 + $0x1968] sm:$0xff]
  %v1067 = vld [vmem:[%s3 + $0x1970] sm:$0xff]
  %v1068 = vld [vmem:[%s3 + $0x1978] sm:$0xff]
  %v1069 = vld [vmem:[%s3 + $0x1980] sm:$0xff]
  %v1070 = vld [vmem:[%s3 + $0x1988] sm:$0xff]
  %v1071 = vld [vmem:[%s3 + $0x1990] sm:$0xff]
  %v1072 = vld [vmem:[%s3 + $0x1998] sm:$0xff]
  %v1073 = vld [vmem:[%s3 + $0x19a0] sm:$0xff]
  %v1074 = vld [vmem:[%s3 + $0x19a8] sm:$0xff]
  %v1075 = vld [vmem:[%s3 + $0x19b0] sm:$0xff]
  %v1076 = vld [vmem:[%s3 + $0x19b8] sm:$0xff]
  %v1077 = vld [vmem:[%s3 + $0x19c0] sm:$0xff]
  %v1078 = vld [vmem:[%s3 + $0x19c8] sm:$0xff]
  %v1079 = vld [vmem:[%s3 + $0x19d0] sm:$0xff]
  %v1080 = vld [vmem:[%s3 + $0x19d8] sm:$0xff]
  %v1081 = vld [vmem:[%s3 + $0x19e0] sm:$0xff]
  %v1082 = vld [vmem:[%s3 + $0x19e8] sm:$0xff]
  %v1083 = vld [vmem:[%s3 + $0x19f0] sm:$0xff]
  %v1084 = vld [vmem:[%s3 + $0x19f8] sm:$0xff]
  %v1085 = vld [vmem:[%s4] sm:$0xff]
  %v1086 = vld [vmem:[%s4 + $0x8] sm:$0x1f]
  %v1089 = vlaneseq
  %v1090 = vshrl.u32 %v1089, 7
  %v1091 = vsub.s32 0, %v1090
  %v1092 = vrot.slane %v1085, %v1091
  %v1093 = vlaneseq
  %v1094 = vshrl.u32 %v1093, 7
  %v1095 = vsub.s32 1, %v1094
  %v1096 = vrot.slane %v1085, %v1095
  %v1097 = vlaneseq
  %v1098 = vshrl.u32 %v1097, 7
  %v1099 = vsub.s32 2, %v1098
  %v1100 = vrot.slane %v1085, %v1099
  %v1101 = vlaneseq
  %v1102 = vshrl.u32 %v1101, 7
  %v1103 = vsub.s32 3, %v1102
  %v1104 = vrot.slane %v1085, %v1103
  %v1105 = vlaneseq
  %v1106 = vshrl.u32 %v1105, 7
  %v1107 = vsub.s32 4, %v1106
  %v1108 = vrot.slane %v1085, %v1107
  %v1109 = vlaneseq
  %v1110 = vshrl.u32 %v1109, 7
  %v1111 = vsub.s32 5, %v1110
  %v1112 = vrot.slane %v1085, %v1111
  %v1113 = vlaneseq
  %v1114 = vshrl.u32 %v1113, 7
  %v1115 = vsub.s32 6, %v1114
  %v1116 = vrot.slane %v1085, %v1115
  %v1117 = vlaneseq
  %v1118 = vshrl.u32 %v1117, 7
  %v1119 = vsub.s32 7, %v1118
  %v1120 = vrot.slane %v1085, %v1119
  %v1121 = vlaneseq
  %v1122 = vshrl.u32 %v1121, 7
  %v1123 = vsub.s32 0, %v1122
  %v1124 = vrot.slane %v1086, %v1123
  %v1125 = vlaneseq
  %v1126 = vshrl.u32 %v1125, 7
  %v1127 = vsub.s32 1, %v1126
  %v1128 = vrot.slane %v1086, %v1127
  %v1129 = vlaneseq
  %v1130 = vshrl.u32 %v1129, 7
  %v1131 = vsub.s32 2, %v1130
  %v1132 = vrot.slane %v1086, %v1131
  %v1133 = vlaneseq
  %v1134 = vshrl.u32 %v1133, 7
  %v1135 = vsub.s32 3, %v1134
  %v1136 = vrot.slane %v1086, %v1135
  %v1137 = vlaneseq
  %v1138 = vshrl.u32 %v1137, 7
  %v1139 = vsub.s32 4, %v1138
  %v1140 = vrot.slane %v1086, %v1139
  %1154 = vmatprep.subr.mxu0 %v254
  %1155 = vmatpush1.msra.mxu0 %v253
  %1156 = vmatprep.subr.mxu0 %v267
  %1157 = vmatpush1.msra.mxu0 %v266
  %1158 = vmatprep.subr.mxu0 %v280
  %1159 = vmatpush1.msra.mxu0 %v279
  %1160 = vmatprep.subr.mxu0 %v293
  %1161 = vmatpush1.msra.mxu0 %v292
  %1162 = vmatprep.subr.mxu0 %v306
  %1163 = vmatpush1.msra.mxu0 %v305
  %1164 = vmatprep.subr.mxu0 %v319
  %1165 = vmatpush1.msra.mxu0 %v318
  %1166 = vmatprep.subr.mxu0 %v332
  %1167 = vmatpush1.msra.mxu0 %v331
  %1168 = vmatprep.subr.mxu0 %v345
  %1169 = vmatpush1.msra.mxu0 %v344
  %1170 = vmatprep.subr.mxu0 %v358
  %1171 = vmatpush1.msra.mxu0 %v357
  %1172 = vmatprep.subr.mxu0 %v371
  %1173 = vmatpush1.msra.mxu0 %v370
  %1174 = vmatprep.subr.mxu0 %v384
  %1175 = vmatpush1.msra.mxu0 %v383
  %1176 = vmatprep.subr.mxu0 %v397
  %1177 = vmatpush1.msra.mxu0 %v396
  %1178 = vmatprep.subr.mxu0 %v410
  %1179 = vmatpush1.msra.mxu0 %v409
  %1180 = vmatprep.subr.mxu0 %v423
  %1181 = vmatpush1.msra.mxu0 %v422
  %1182 = vmatprep.subr.mxu0 %v436
  %1183 = vmatpush1.msra.mxu0 %v435
  %1184 = vmatprep.subr.mxu0 %v449
  %1185 = vmatpush1.msra.mxu0 %v448
  %1186 = vmatprep.subr.mxu0 %v462
  %1187 = vmatpush1.msra.mxu0 %v461
  %1188 = vmatprep.subr.mxu0 %v475
  %1189 = vmatpush1.msra.mxu0 %v474
  %1190 = vmatprep.subr.mxu0 %v488
  %1191 = vmatpush1.msra.mxu0 %v487
  %1192 = vmatprep.subr.mxu0 %v501
  %1193 = vmatpush1.msra.mxu0 %v500
  %1194 = vmatprep.subr.mxu0 %v514
  %1195 = vmatpush1.msra.mxu0 %v513
  %1196 = vmatprep.subr.mxu0 %v527
  %1197 = vmatpush1.msra.mxu0 %v526
  %1198 = vmatprep.subr.mxu0 %v540
  %1199 = vmatpush1.msra.mxu0 %v539
  %1200 = vmatprep.subr.mxu0 %v553
  %1201 = vmatpush1.msra.mxu0 %v552
  %1202 = vmatprep.subr.mxu0 %v566
  %1203 = vmatpush1.msra.mxu0 %v565
  %1204 = vmatprep.subr.mxu0 %v579
  %1205 = vmatpush1.msra.mxu0 %v578
  %1206 = vmatprep.subr.mxu0 %v592
  %1207 = vmatpush1.msra.mxu0 %v591
  %1208 = vmatprep.subr.mxu0 %v605
  %1209 = vmatpush1.msra.mxu0 %v604
  %1210 = vmatprep.subr.mxu0 %v618
  %1211 = vmatpush1.msra.mxu0 %v617
  %1212 = vmatprep.subr.mxu0 %v631
  %1213 = vmatpush1.msra.mxu0 %v630
  %1214 = vmatprep.subr.mxu0 %v644
  %1215 = vmatpush1.msra.mxu0 %v643
  %1216 = vmatprep.subr.mxu0 %v657
  %1217 = vmatpush1.msra.mxu0 %v656
  %1218 = vmatprep.mubr.f32.mxu0 %v250
  %1219 = vmatmul.mubr.f32.gmra.mrb[0].mxu0 %v249
  %v1220 = vpop.f32.mrb[0].mxu0
  %v1221 = vadd.f32 %v1092, %v1220
  %v1222 = vpop.f32.mrb[0].mxu0
  %v1223 = vadd.f32 %v1096, %v1222
  %1224 = vdwg.mxu0
  %1225 = vmatprep.subr.mxu0 %v670
  %1226 = vmatpush1.msra.mxu0 %v669
  %1227 = vmatprep.subr.mxu0 %v683
  %1228 = vmatpush1.msra.mxu0 %v682
  %1229 = vmatprep.subr.mxu0 %v696
  %1230 = vmatpush1.msra.mxu0 %v695
  %1231 = vmatprep.subr.mxu0 %v709
  %1232 = vmatpush1.msra.mxu0 %v708
  %1233 = vmatprep.subr.mxu0 %v722
  %1234 = vmatpush1.msra.mxu0 %v721
  %1235 = vmatprep.subr.mxu0 %v735
  %1236 = vmatpush1.msra.mxu0 %v734
  %1237 = vmatprep.subr.mxu0 %v748
  %1238 = vmatpush1.msra.mxu0 %v747
  %1239 = vmatprep.subr.mxu0 %v761
  %1240 = vmatpush1.msra.mxu0 %v760
  %1241 = vmatprep.subr.mxu0 %v774
  %1242 = vmatpush1.msra.mxu0 %v773
  %1243 = vmatprep.subr.mxu0 %v787
  %1244 = vmatpush1.msra.mxu0 %v786
  %1245 = vmatprep.subr.mxu0 %v800
  %1246 = vmatpush1.msra.mxu0 %v799
  %1247 = vmatprep.subr.mxu0 %v813
  %1248 = vmatpush1.msra.mxu0 %v812
  %1249 = vmatprep.subr.mxu0 %v826
  %1250 = vmatpush1.msra.mxu0 %v825
  %1251 = vmatprep.subr.mxu0 %v839
  %1252 = vmatpush1.msra.mxu0 %v838
  %1253 = vmatprep.subr.mxu0 %v852
  %1254 = vmatpush1.msra.mxu0 %v851
  %1255 = vmatprep.subr.mxu0 %v865
  %1256 = vmatpush1.msra.mxu0 %v864
  %1257 = vmatprep.subr.mxu0 %v878
  %1258 = vmatpush1.msra.mxu0 %v877
  %1259 = vmatprep.subr.mxu0 %v891
  %1260 = vmatpush1.msra.mxu0 %v890
  %1261 = vmatprep.subr.mxu0 %v904
  %1262 = vmatpush1.msra.mxu0 %v903
  %1263 = vmatprep.subr.mxu0 %v917
  %1264 = vmatpush1.msra.mxu0 %v916
  %1265 = vmatprep.subr.mxu0 %v930
  %1266 = vmatpush1.msra.mxu0 %v929
  %1267 = vmatprep.subr.mxu0 %v943
  %1268 = vmatpush1.msra.mxu0 %v942
  %1269 = vmatprep.subr.mxu0 %v956
  %1270 = vmatpush1.msra.mxu0 %v955
  %1271 = vmatprep.subr.mxu0 %v969
  %1272 = vmatpush1.msra.mxu0 %v968
  %1273 = vmatprep.subr.mxu0 %v982
  %1274 = vmatpush1.msra.mxu0 %v981
  %1275 = vmatprep.subr.mxu0 %v995
  %1276 = vmatpush1.msra.mxu0 %v994
  %1277 = vmatprep.subr.mxu0 %v1008
  %1278 = vmatpush1.msra.mxu0 %v1007
  %1279 = vmatprep.subr.mxu0 %v1021
  %1280 = vmatpush1.msra.mxu0 %v1020
  %1281 = vmatprep.subr.mxu0 %v1034
  %1282 = vmatpush1.msra.mxu0 %v1033
  %1283 = vmatprep.subr.mxu0 %v1047
  %1284 = vmatpush1.msra.mxu0 %v1046
  %1285 = vmatprep.subr.mxu0 %v1060
  %1286 = vmatpush1.msra.mxu0 %v1059
  %1287 = vmatprep.subr.mxu0 %v1073
  %1288 = vmatpush1.msra.mxu0 %v1072
  %1289 = vmatprep.mubr.f32.mxu0 %v252
  %1290 = vmatmul.mubr.f32.gmra.mrb[0].mxu0 %v251
  %v1291 = vpop.f32.mrb[0].mxu0
  %v1292 = vadd.f32 %v1221, %v1291
  %v1293 = vpop.f32.mrb[0].mxu0
  %v1294 = vadd.f32 %v1223, %v1293
  %1295 = vdwg.mxu0
  %1296 = vmatprep.subr.mxu0 %v256
  %1297 = vmatpush1.msra.mxu0 %v255
  %1298 = vmatprep.subr.mxu0 %v269
  %1299 = vmatpush1.msra.mxu0 %v268
  %1300 = vmatprep.subr.mxu0 %v282
  %1301 = vmatpush1.msra.mxu0 %v281
  %1302 = vmatprep.subr.mxu0 %v295
  %1303 = vmatpush1.msra.mxu0 %v294
  %1304 = vmatprep.subr.mxu0 %v308
  %1305 = vmatpush1.msra.mxu0 %v307
  %1306 = vmatprep.subr.mxu0 %v321
  %1307 = vmatpush1.msra.mxu0 %v320
  %1308 = vmatprep.subr.mxu0 %v334
  %1309 = vmatpush1.msra.mxu0 %v333
  %1310 = vmatprep.subr.mxu0 %v347
  %1311 = vmatpush1.msra.mxu0 %v346
  %1312 = vmatprep.subr.mxu0 %v360
  %1313 = vmatpush1.msra.mxu0 %v359
  %1314 = vmatprep.subr.mxu0 %v373
  %1315 = vmatpush1.msra.mxu0 %v372
  %1316 = vmatprep.subr.mxu0 %v386
  %1317 = vmatpush1.msra.mxu0 %v385
  %1318 = vmatprep.subr.mxu0 %v399
  %1319 = vmatpush1.msra.mxu0 %v398
  %1320 = vmatprep.subr.mxu0 %v412
  %1321 = vmatpush1.msra.mxu0 %v411
  %1322 = vmatprep.subr.mxu0 %v425
  %1323 = vmatpush1.msra.mxu0 %v424
  %1324 = vmatprep.subr.mxu0 %v438
  %1325 = vmatpush1.msra.mxu0 %v437
  %1326 = vmatprep.subr.mxu0 %v451
  %1327 = vmatpush1.msra.mxu0 %v450
  %1328 = vmatprep.subr.mxu0 %v464
  %1329 = vmatpush1.msra.mxu0 %v463
  %1330 = vmatprep.subr.mxu0 %v477
  %1331 = vmatpush1.msra.mxu0 %v476
  %1332 = vmatprep.subr.mxu0 %v490
  %1333 = vmatpush1.msra.mxu0 %v489
  %1334 = vmatprep.subr.mxu0 %v503
  %1335 = vmatpush1.msra.mxu0 %v502
  %1336 = vmatprep.subr.mxu0 %v516
  %1337 = vmatpush1.msra.mxu0 %v515
  %1338 = vmatprep.subr.mxu0 %v529
  %1339 = vmatpush1.msra.mxu0 %v528
  %1340 = vmatprep.subr.mxu0 %v542
  %1341 = vmatpush1.msra.mxu0 %v541
  %1342 = vmatprep.subr.mxu0 %v555
  %1343 = vmatpush1.msra.mxu0 %v554
  %1344 = vmatprep.subr.mxu0 %v568
  %1345 = vmatpush1.msra.mxu0 %v567
  %1346 = vmatprep.subr.mxu0 %v581
  %1347 = vmatpush1.msra.mxu0 %v580
  %1348 = vmatprep.subr.mxu0 %v594
  %1349 = vmatpush1.msra.mxu0 %v593
  %1350 = vmatprep.subr.mxu0 %v607
  %1351 = vmatpush1.msra.mxu0 %v606
  %1352 = vmatprep.subr.mxu0 %v620
  %1353 = vmatpush1.msra.mxu0 %v619
  %1354 = vmatprep.subr.mxu0 %v633
  %1355 = vmatpush1.msra.mxu0 %v632
  %1356 = vmatprep.subr.mxu0 %v646
  %1357 = vmatpush1.msra.mxu0 %v645
  %1358 = vmatprep.subr.mxu0 %v659
  %1359 = vmatpush1.msra.mxu0 %v658
  %1360 = vmatprep.mubr.f32.mxu0 %v250
  %1361 = vmatmul.mubr.f32.gmra.mrb[0].mxu0 %v249
  %v1362 = vpop.f32.mrb[0].mxu0
  %v1363 = vadd.f32 %v1100, %v1362
  %v1364 = vpop.f32.mrb[0].mxu0
  %v1365 = vadd.f32 %v1104, %v1364
  %1366 = vdwg.mxu0
  %1367 = vmatprep.subr.mxu0 %v672
  %1368 = vmatpush1.msra.mxu0 %v671
  %1369 = vmatprep.subr.mxu0 %v685
  %1370 = vmatpush1.msra.mxu0 %v684
  %1371 = vmatprep.subr.mxu0 %v698
  %1372 = vmatpush1.msra.mxu0 %v697
  %1373 = vmatprep.subr.mxu0 %v711
  %1374 = vmatpush1.msra.mxu0 %v710
  %1375 = vmatprep.subr.mxu0 %v724
  %1376 = vmatpush1.msra.mxu0 %v723
  %1377 = vmatprep.subr.mxu0 %v737
  %1378 = vmatpush1.msra.mxu0 %v736
  %1379 = vmatprep.subr.mxu0 %v750
  %1380 = vmatpush1.msra.mxu0 %v749
  %1381 = vmatprep.subr.mxu0 %v763
  %1382 = vmatpush1.msra.mxu0 %v762
  %1383 = vmatprep.subr.mxu0 %v776
  %1384 = vmatpush1.msra.mxu0 %v775
  %1385 = vmatprep.subr.mxu0 %v789
  %1386 = vmatpush1.msra.mxu0 %v788
  %1387 = vmatprep.subr.mxu0 %v802
  %1388 = vmatpush1.msra.mxu0 %v801
  %1389 = vmatprep.subr.mxu0 %v815
  %1390 = vmatpush1.msra.mxu0 %v814
  %1391 = vmatprep.subr.mxu0 %v828
  %1392 = vmatpush1.msra.mxu0 %v827
  %1393 = vmatprep.subr.mxu0 %v841
  %1394 = vmatpush1.msra.mxu0 %v840
  %1395 = vmatprep.subr.mxu0 %v854
  %1396 = vmatpush1.msra.mxu0 %v853
  %1397 = vmatprep.subr.mxu0 %v867
  %1398 = vmatpush1.msra.mxu0 %v866
  %1399 = vmatprep.subr.mxu0 %v880
  %1400 = vmatpush1.msra.mxu0 %v879
  %1401 = vmatprep.subr.mxu0 %v893
  %1402 = vmatpush1.msra.mxu0 %v892
  %1403 = vmatprep.subr.mxu0 %v906
  %1404 = vmatpush1.msra.mxu0 %v905
  %1405 = vmatprep.subr.mxu0 %v919
  %1406 = vmatpush1.msra.mxu0 %v918
  %1407 = vmatprep.subr.mxu0 %v932
  %1408 = vmatpush1.msra.mxu0 %v931
  %1409 = vmatprep.subr.mxu0 %v945
  %1410 = vmatpush1.msra.mxu0 %v944
  %1411 = vmatprep.subr.mxu0 %v958
  %1412 = vmatpush1.msra.mxu0 %v957
  %1413 = vmatprep.subr.mxu0 %v971
  %1414 = vmatpush1.msra.mxu0 %v970
  %1415 = vmatprep.subr.mxu0 %v984
  %1416 = vmatpush1.msra.mxu0 %v983
  %1417 = vmatprep.subr.mxu0 %v997
  %1418 = vmatpush1.msra.mxu0 %v996
  %1419 = vmatprep.subr.mxu0 %v1010
  %1420 = vmatpush1.msra.mxu0 %v1009
  %1421 = vmatprep.subr.mxu0 %v1023
  %1422 = vmatpush1.msra.mxu0 %v1022
  %1423 = vmatprep.subr.mxu0 %v1036
  %1424 = vmatpush1.msra.mxu0 %v1035
  %1425 = vmatprep.subr.mxu0 %v1049
  %1426 = vmatpush1.msra.mxu0 %v1048
  %1427 = vmatprep.subr.mxu0 %v1062
  %1428 = vmatpush1.msra.mxu0 %v1061
  %1429 = vmatprep.subr.mxu0 %v1075
  %1430 = vmatpush1.msra.mxu0 %v1074
  %1431 = vmatprep.mubr.f32.mxu0 %v252
  %1432 = vmatmul.mubr.f32.gmra.mrb[0].mxu0 %v251
  %v1433 = vpop.f32.mrb[0].mxu0
  %v1434 = vadd.f32 %v1363, %v1433
  %v1435 = vpop.f32.mrb[0].mxu0
  %v1436 = vadd.f32 %v1365, %v1435
  %1437 = vdwg.mxu0
  %1438 = vmatprep.subr.mxu0 %v258
  %1439 = vmatpush1.msra.mxu0 %v257
  %1440 = vmatprep.subr.mxu0 %v271
  %1441 = vmatpush1.msra.mxu0 %v270
  %1442 = vmatprep.subr.mxu0 %v284
  %1443 = vmatpush1.msra.mxu0 %v283
  %1444 = vmatprep.subr.mxu0 %v297
  %1445 = vmatpush1.msra.mxu0 %v296
  %1446 = vmatprep.subr.mxu0 %v310
  %1447 = vmatpush1.msra.mxu0 %v309
  %1448 = vmatprep.subr.mxu0 %v323
  %1449 = vmatpush1.msra.mxu0 %v322
  %1450 = vmatprep.subr.mxu0 %v336
  %1451 = vmatpush1.msra.mxu0 %v335
  %1452 = vmatprep.subr.mxu0 %v349
  %1453 = vmatpush1.msra.mxu0 %v348
  %1454 = vmatprep.subr.mxu0 %v362
  %1455 = vmatpush1.msra.mxu0 %v361
  %1456 = vmatprep.subr.mxu0 %v375
  %1457 = vmatpush1.msra.mxu0 %v374
  %1458 = vmatprep.subr.mxu0 %v388
  %1459 = vmatpush1.msra.mxu0 %v387
  %1460 = vmatprep.subr.mxu0 %v401
  %1461 = vmatpush1.msra.mxu0 %v400
  %1462 = vmatprep.subr.mxu0 %v414
  %1463 = vmatpush1.msra.mxu0 %v413
  %1464 = vmatprep.subr.mxu0 %v427
  %1465 = vmatpush1.msra.mxu0 %v426
  %1466 = vmatprep.subr.mxu0 %v440
  %1467 = vmatpush1.msra.mxu0 %v439
  %1468 = vmatprep.subr.mxu0 %v453
  %1469 = vmatpush1.msra.mxu0 %v452
  %1470 = vmatprep.subr.mxu0 %v466
  %1471 = vmatpush1.msra.mxu0 %v465
  %1472 = vmatprep.subr.mxu0 %v479
  %1473 = vmatpush1.msra.mxu0 %v478
  %1474 = vmatprep.subr.mxu0 %v492
  %1475 = vmatpush1.msra.mxu0 %v491
  %1476 = vmatprep.subr.mxu0 %v505
  %1477 = vmatpush1.msra.mxu0 %v504
  %1478 = vmatprep.subr.mxu0 %v518
  %1479 = vmatpush1.msra.mxu0 %v517
  %1480 = vmatprep.subr.mxu0 %v531
  %1481 = vmatpush1.msra.mxu0 %v530
  %1482 = vmatprep.subr.mxu0 %v544
  %1483 = vmatpush1.msra.mxu0 %v543
  %1484 = vmatprep.subr.mxu0 %v557
  %1485 = vmatpush1.msra.mxu0 %v556
  %1486 = vmatprep.subr.mxu0 %v570
  %1487 = vmatpush1.msra.mxu0 %v569
  %1488 = vmatprep.subr.mxu0 %v583
  %1489 = vmatpush1.msra.mxu0 %v582
  %1490 = vmatprep.subr.mxu0 %v596
  %1491 = vmatpush1.msra.mxu0 %v595
  %1492 = vmatprep.subr.mxu0 %v609
  %1493 = vmatpush1.msra.mxu0 %v608
  %1494 = vmatprep.subr.mxu0 %v622
  %1495 = vmatpush1.msra.mxu0 %v621
  %1496 = vmatprep.subr.mxu0 %v635
  %1497 = vmatpush1.msra.mxu0 %v634
  %1498 = vmatprep.subr.mxu0 %v648
  %1499 = vmatpush1.msra.mxu0 %v647
  %1500 = vmatprep.subr.mxu0 %v661
  %1501 = vmatpush1.msra.mxu0 %v660
  %1502 = vmatprep.mubr.f32.mxu0 %v250
  %1503 = vmatmul.mubr.f32.gmra.mrb[0].mxu0 %v249
  %v1504 = vpop.f32.mrb[0].mxu0
  %v1505 = vadd.f32 %v1108, %v1504
  %v1506 = vpop.f32.mrb[0].mxu0
  %v1507 = vadd.f32 %v1112, %v1506
  %1508 = vdwg.mxu0
  %1509 = vmatprep.subr.mxu0 %v674
  %1510 = vmatpush1.msra.mxu0 %v673
  %1511 = vmatprep.subr.mxu0 %v687
  %1512 = vmatpush1.msra.mxu0 %v686
  %1513 = vmatprep.subr.mxu0 %v700
  %1514 = vmatpush1.msra.mxu0 %v699
  %1515 = vmatprep.subr.mxu0 %v713
  %1516 = vmatpush1.msra.mxu0 %v712
  %1517 = vmatprep.subr.mxu0 %v726
  %1518 = vmatpush1.msra.mxu0 %v725
  %1519 = vmatprep.subr.mxu0 %v739
  %1520 = vmatpush1.msra.mxu0 %v738
  %1521 = vmatprep.subr.mxu0 %v752
  %1522 = vmatpush1.msra.mxu0 %v751
  %1523 = vmatprep.subr.mxu0 %v765
  %1524 = vmatpush1.msra.mxu0 %v764
  %1525 = vmatprep.subr.mxu0 %v778
  %1526 = vmatpush1.msra.mxu0 %v777
  %1527 = vmatprep.subr.mxu0 %v791
  %1528 = vmatpush1.msra.mxu0 %v790
  %1529 = vmatprep.subr.mxu0 %v804
  %1530 = vmatpush1.msra.mxu0 %v803
  %1531 = vmatprep.subr.mxu0 %v817
  %1532 = vmatpush1.msra.mxu0 %v816
  %1533 = vmatprep.subr.mxu0 %v830
  %1534 = vmatpush1.msra.mxu0 %v829
  %1535 = vmatprep.subr.mxu0 %v843
  %1536 = vmatpush1.msra.mxu0 %v842
  %1537 = vmatprep.subr.mxu0 %v856
  %1538 = vmatpush1.msra.mxu0 %v855
  %1539 = vmatprep.subr.mxu0 %v869
  %1540 = vmatpush1.msra.mxu0 %v868
  %1541 = vmatprep.subr.mxu0 %v882
  %1542 = vmatpush1.msra.mxu0 %v881
  %1543 = vmatprep.subr.mxu0 %v895
  %1544 = vmatpush1.msra.mxu0 %v894
  %1545 = vmatprep.subr.mxu0 %v908
  %1546 = vmatpush1.msra.mxu0 %v907
  %1547 = vmatprep.subr.mxu0 %v921
  %1548 = vmatpush1.msra.mxu0 %v920
  %1549 = vmatprep.subr.mxu0 %v934
  %1550 = vmatpush1.msra.mxu0 %v933
  %1551 = vmatprep.subr.mxu0 %v947
  %1552 = vmatpush1.msra.mxu0 %v946
  %1553 = vmatprep.subr.mxu0 %v960
  %1554 = vmatpush1.msra.mxu0 %v959
  %1555 = vmatprep.subr.mxu0 %v973
  %1556 = vmatpush1.msra.mxu0 %v972
  %1557 = vmatprep.subr.mxu0 %v986
  %1558 = vmatpush1.msra.mxu0 %v985
  %1559 = vmatprep.subr.mxu0 %v999
  %1560 = vmatpush1.msra.mxu0 %v998
  %1561 = vmatprep.subr.mxu0 %v1012
  %1562 = vmatpush1.msra.mxu0 %v1011
  %1563 = vmatprep.subr.mxu0 %v1025
  %1564 = vmatpush1.msra.mxu0 %v1024
  %1565 = vmatprep.subr.mxu0 %v1038
  %1566 = vmatpush1.msra.mxu0 %v1037
  %1567 = vmatprep.subr.mxu0 %v1051
  %1568 = vmatpush1.msra.mxu0 %v1050
  %1569 = vmatprep.subr.mxu0 %v1064
  %1570 = vmatpush1.msra.mxu0 %v1063
  %1571 = vmatprep.subr.mxu0 %v1077
  %1572 = vmatpush1.msra.mxu0 %v1076
  %1573 = vmatprep.mubr.f32.mxu0 %v252
  %1574 = vmatmul.mubr.f32.gmra.mrb[0].mxu0 %v251
  %v1575 = vpop.f32.mrb[0].mxu0
  %v1576 = vadd.f32 %v1505, %v1575
  %v1577 = vpop.f32.mrb[0].mxu0
  %v1578 = vadd.f32 %v1507, %v1577
  %1579 = vdwg.mxu0
  %1580 = vmatprep.subr.mxu0 %v260
  %1581 = vmatpush1.msra.mxu0 %v259
  %1582 = vmatprep.subr.mxu0 %v273
  %1583 = vmatpush1.msra.mxu0 %v272
  %1584 = vmatprep.subr.mxu0 %v286
  %1585 = vmatpush1.msra.mxu0 %v285
  %1586 = vmatprep.subr.mxu0 %v299
  %1587 = vmatpush1.msra.mxu0 %v298
  %1588 = vmatprep.subr.mxu0 %v312
  %1589 = vmatpush1.msra.mxu0 %v311
  %1590 = vmatprep.subr.mxu0 %v325
  %1591 = vmatpush1.msra.mxu0 %v324
  %1592 = vmatprep.subr.mxu0 %v338
  %1593 = vmatpush1.msra.mxu0 %v337
  %1594 = vmatprep.subr.mxu0 %v351
  %1595 = vmatpush1.msra.mxu0 %v350
  %1596 = vmatprep.subr.mxu0 %v364
  %1597 = vmatpush1.msra.mxu0 %v363
  %1598 = vmatprep.subr.mxu0 %v377
  %1599 = vmatpush1.msra.mxu0 %v376
  %1600 = vmatprep.subr.mxu0 %v390
  %1601 = vmatpush1.msra.mxu0 %v389
  %1602 = vmatprep.subr.mxu0 %v403
  %1603 = vmatpush1.msra.mxu0 %v402
  %1604 = vmatprep.subr.mxu0 %v416
  %1605 = vmatpush1.msra.mxu0 %v415
  %1606 = vmatprep.subr.mxu0 %v429
  %1607 = vmatpush1.msra.mxu0 %v428
  %1608 = vmatprep.subr.mxu0 %v442
  %1609 = vmatpush1.msra.mxu0 %v441
  %1610 = vmatprep.subr.mxu0 %v455
  %1611 = vmatpush1.msra.mxu0 %v454
  %1612 = vmatprep.subr.mxu0 %v468
  %1613 = vmatpush1.msra.mxu0 %v467
  %1614 = vmatprep.subr.mxu0 %v481
  %1615 = vmatpush1.msra.mxu0 %v480
  %1616 = vmatprep.subr.mxu0 %v494
  %1617 = vmatpush1.msra.mxu0 %v493
  %1618 = vmatprep.subr.mxu0 %v507
  %1619 = vmatpush1.msra.mxu0 %v506
  %1620 = vmatprep.subr.mxu0 %v520
  %1621 = vmatpush1.msra.mxu0 %v519
  %1622 = vmatprep.subr.mxu0 %v533
  %1623 = vmatpush1.msra.mxu0 %v532
  %1624 = vmatprep.subr.mxu0 %v546
  %1625 = vmatpush1.msra.mxu0 %v545
  %1626 = vmatprep.subr.mxu0 %v559
  %1627 = vmatpush1.msra.mxu0 %v558
  %1628 = vmatprep.subr.mxu0 %v572
  %1629 = vmatpush1.msra.mxu0 %v571
  %1630 = vmatprep.subr.mxu0 %v585
  %1631 = vmatpush1.msra.mxu0 %v584
  %1632 = vmatprep.subr.mxu0 %v598
  %1633 = vmatpush1.msra.mxu0 %v597
  %1634 = vmatprep.subr.mxu0 %v611
  %1635 = vmatpush1.msra.mxu0 %v610
  %1636 = vmatprep.subr.mxu0 %v624
  %1637 = vmatpush1.msra.mxu0 %v623
  %1638 = vmatprep.subr.mxu0 %v637
  %1639 = vmatpush1.msra.mxu0 %v636
  %1640 = vmatprep.subr.mxu0 %v650
  %1641 = vmatpush1.msra.mxu0 %v649
  %1642 = vmatprep.subr.mxu0 %v663
  %1643 = vmatpush1.msra.mxu0 %v662
  %1644 = vmatprep.mubr.f32.mxu0 %v250
  %1645 = vmatmul.mubr.f32.gmra.mrb[0].mxu0 %v249
  %v1646 = vpop.f32.mrb[0].mxu0
  %v1647 = vadd.f32 %v1116, %v1646
  %v1648 = vpop.f32.mrb[0].mxu0
  %v1649 = vadd.f32 %v1120, %v1648
  %1650 = vdwg.mxu0
  %1651 = vmatprep.subr.mxu0 %v676
  %1652 = vmatpush1.msra.mxu0 %v675
  %1653 = vmatprep.subr.mxu0 %v689
  %1654 = vmatpush1.msra.mxu0 %v688
  %1655 = vmatprep.subr.mxu0 %v702
  %1656 = vmatpush1.msra.mxu0 %v701
  %1657 = vmatprep.subr.mxu0 %v715
  %1658 = vmatpush1.msra.mxu0 %v714
  %1659 = vmatprep.subr.mxu0 %v728
  %1660 = vmatpush1.msra.mxu0 %v727
  %1661 = vmatprep.subr.mxu0 %v741
  %1662 = vmatpush1.msra.mxu0 %v740
  %1663 = vmatprep.subr.mxu0 %v754
  %1664 = vmatpush1.msra.mxu0 %v753
  %1665 = vmatprep.subr.mxu0 %v767
  %1666 = vmatpush1.msra.mxu0 %v766
  %1667 = vmatprep.subr.mxu0 %v780
  %1668 = vmatpush1.msra.mxu0 %v779
  %1669 = vmatprep.subr.mxu0 %v793
  %1670 = vmatpush1.msra.mxu0 %v792
  %1671 = vmatprep.subr.mxu0 %v806
  %1672 = vmatpush1.msra.mxu0 %v805
  %1673 = vmatprep.subr.mxu0 %v819
  %1674 = vmatpush1.msra.mxu0 %v818
  %1675 = vmatprep.subr.mxu0 %v832
  %1676 = vmatpush1.msra.mxu0 %v831
  %1677 = vmatprep.subr.mxu0 %v845
  %1678 = vmatpush1.msra.mxu0 %v844
  %1679 = vmatprep.subr.mxu0 %v858
  %1680 = vmatpush1.msra.mxu0 %v857
  %1681 = vmatprep.subr.mxu0 %v871
  %1682 = vmatpush1.msra.mxu0 %v870
  %1683 = vmatprep.subr.mxu0 %v884
  %1684 = vmatpush1.msra.mxu0 %v883
  %1685 = vmatprep.subr.mxu0 %v897
  %1686 = vmatpush1.msra.mxu0 %v896
  %1687 = vmatprep.subr.mxu0 %v910
  %1688 = vmatpush1.msra.mxu0 %v909
  %1689 = vmatprep.subr.mxu0 %v923
  %1690 = vmatpush1.msra.mxu0 %v922
  %1691 = vmatprep.subr.mxu0 %v936
  %1692 = vmatpush1.msra.mxu0 %v935
  %1693 = vmatprep.subr.mxu0 %v949
  %1694 = vmatpush1.msra.mxu0 %v948
  %1695 = vmatprep.subr.mxu0 %v962
  %1696 = vmatpush1.msra.mxu0 %v961
  %1697 = vmatprep.subr.mxu0 %v975
  %1698 = vmatpush1.msra.mxu0 %v974
  %1699 = vmatprep.subr.mxu0 %v988
  %1700 = vmatpush1.msra.mxu0 %v987
  %1701 = vmatprep.subr.mxu0 %v1001
  %1702 = vmatpush1.msra.mxu0 %v1000
  %1703 = vmatprep.subr.mxu0 %v1014
  %1704 = vmatpush1.msra.mxu0 %v1013
  %1705 = vmatprep.subr.mxu0 %v1027
  %1706 = vmatpush1.msra.mxu0 %v1026
  %1707 = vmatprep.subr.mxu0 %v1040
  %1708 = vmatpush1.msra.mxu0 %v1039
  %1709 = vmatprep.subr.mxu0 %v1053
  %1710 = vmatpush1.msra.mxu0 %v1052
  %1711 = vmatprep.subr.mxu0 %v1066
  %1712 = vmatpush1.msra.mxu0 %v1065
  %1713 = vmatprep.subr.mxu0 %v1079
  %1714 = vmatpush1.msra.mxu0 %v1078
  %1715 = vmatprep.mubr.f32.mxu0 %v252
  %1716 = vmatmul.mubr.f32.gmra.mrb[0].mxu0 %v251
  %v1717 = vpop.f32.mrb[0].mxu0
  %v1718 = vadd.f32 %v1647, %v1717
  %v1719 = vpop.f32.mrb[0].mxu0
  %v1720 = vadd.f32 %v1649, %v1719
  %1721 = vdwg.mxu0
  %1722 = vmatprep.subr.mxu0 %v262
  %1723 = vmatpush1.msra.mxu0 %v261
  %1724 = vmatprep.subr.mxu0 %v275
  %1725 = vmatpush1.msra.mxu0 %v274
  %1726 = vmatprep.subr.mxu0 %v288
  %1727 = vmatpush1.msra.mxu0 %v287
  %1728 = vmatprep.subr.mxu0 %v301
  %1729 = vmatpush1.msra.mxu0 %v300
  %1730 = vmatprep.subr.mxu0 %v314
  %1731 = vmatpush1.msra.mxu0 %v313
  %1732 = vmatprep.subr.mxu0 %v327
  %1733 = vmatpush1.msra.mxu0 %v326
  %1734 = vmatprep.subr.mxu0 %v340
  %1735 = vmatpush1.msra.mxu0 %v339
  %1736 = vmatprep.subr.mxu0 %v353
  %1737 = vmatpush1.msra.mxu0 %v352
  %1738 = vmatprep.subr.mxu0 %v366
  %1739 = vmatpush1.msra.mxu0 %v365
  %1740 = vmatprep.subr.mxu0 %v379
  %1741 = vmatpush1.msra.mxu0 %v378
  %1742 = vmatprep.subr.mxu0 %v392
  %1743 = vmatpush1.msra.mxu0 %v391
  %1744 = vmatprep.subr.mxu0 %v405
  %1745 = vmatpush1.msra.mxu0 %v404
  %1746 = vmatprep.subr.mxu0 %v418
  %1747 = vmatpush1.msra.mxu0 %v417
  %1748 = vmatprep.subr.mxu0 %v431
  %1749 = vmatpush1.msra.mxu0 %v430
  %1750 = vmatprep.subr.mxu0 %v444
  %1751 = vmatpush1.msra.mxu0 %v443
  %1752 = vmatprep.subr.mxu0 %v457
  %1753 = vmatpush1.msra.mxu0 %v456
  %1754 = vmatprep.subr.mxu0 %v470
  %1755 = vmatpush1.msra.mxu0 %v469
  %1756 = vmatprep.subr.mxu0 %v483
  %1757 = vmatpush1.msra.mxu0 %v482
  %1758 = vmatprep.subr.mxu0 %v496
  %1759 = vmatpush1.msra.mxu0 %v495
  %1760 = vmatprep.subr.mxu0 %v509
  %1761 = vmatpush1.msra.mxu0 %v508
  %1762 = vmatprep.subr.mxu0 %v522
  %1763 = vmatpush1.msra.mxu0 %v521
  %1764 = vmatprep.subr.mxu0 %v535
  %1765 = vmatpush1.msra.mxu0 %v534
  %1766 = vmatprep.subr.mxu0 %v548
  %1767 = vmatpush1.msra.mxu0 %v547
  %1768 = vmatprep.subr.mxu0 %v561
  %1769 = vmatpush1.msra.mxu0 %v560
  %1770 = vmatprep.subr.mxu0 %v574
  %1771 = vmatpush1.msra.mxu0 %v573
  %1772 = vmatprep.subr.mxu0 %v587
  %1773 = vmatpush1.msra.mxu0 %v586
  %1774 = vmatprep.subr.mxu0 %v600
  %1775 = vmatpush1.msra.mxu0 %v599
  %1776 = vmatprep.subr.mxu0 %v613
  %1777 = vmatpush1.msra.mxu0 %v612
  %1778 = vmatprep.subr.mxu0 %v626
  %1779 = vmatpush1.msra.mxu0 %v625
  %1780 = vmatprep.subr.mxu0 %v639
  %1781 = vmatpush1.msra.mxu0 %v638
  %1782 = vmatprep.subr.mxu0 %v652
  %1783 = vmatpush1.msra.mxu0 %v651
  %1784 = vmatprep.subr.mxu0 %v665
  %1785 = vmatpush1.msra.mxu0 %v664
  %1786 = vmatprep.mubr.f32.mxu0 %v250
  %1787 = vmatmul.mubr.f32.gmra.mrb[0].mxu0 %v249
  %v1788 = vpop.f32.mrb[0].mxu0
  %v1789 = vadd.f32 %v1124, %v1788
  %v1790 = vpop.f32.mrb[0].mxu0
  %v1791 = vadd.f32 %v1128, %v1790
  %1792 = vdwg.mxu0
  %1793 = vmatprep.subr.mxu0 %v678
  %1794 = vmatpush1.msra.mxu0 %v677
  %1795 = vmatprep.subr.mxu0 %v691
  %1796 = vmatpush1.msra.mxu0 %v690
  %1797 = vmatprep.subr.mxu0 %v704
  %1798 = vmatpush1.msra.mxu0 %v703
  %1799 = vmatprep.subr.mxu0 %v717
  %1800 = vmatpush1.msra.mxu0 %v716
  %1801 = vmatprep.subr.mxu0 %v730
  %1802 = vmatpush1.msra.mxu0 %v729
  %1803 = vmatprep.subr.mxu0 %v743
  %1804 = vmatpush1.msra.mxu0 %v742
  %1805 = vmatprep.subr.mxu0 %v756
  %1806 = vmatpush1.msra.mxu0 %v755
  %1807 = vmatprep.subr.mxu0 %v769
  %1808 = vmatpush1.msra.mxu0 %v768
  %1809 = vmatprep.subr.mxu0 %v782
  %1810 = vmatpush1.msra.mxu0 %v781
  %1811 = vmatprep.subr.mxu0 %v795
  %1812 = vmatpush1.msra.mxu0 %v794
  %1813 = vmatprep.subr.mxu0 %v808
  %1814 = vmatpush1.msra.mxu0 %v807
  %1815 = vmatprep.subr.mxu0 %v821
  %1816 = vmatpush1.msra.mxu0 %v820
  %1817 = vmatprep.subr.mxu0 %v834
  %1818 = vmatpush1.msra.mxu0 %v833
  %1819 = vmatprep.subr.mxu0 %v847
  %1820 = vmatpush1.msra.mxu0 %v846
  %1821 = vmatprep.subr.mxu0 %v860
  %1822 = vmatpush1.msra.mxu0 %v859
  %1823 = vmatprep.subr.mxu0 %v873
  %1824 = vmatpush1.msra.mxu0 %v872
  %1825 = vmatprep.subr.mxu0 %v886
  %1826 = vmatpush1.msra.mxu0 %v885
  %1827 = vmatprep.subr.mxu0 %v899
  %1828 = vmatpush1.msra.mxu0 %v898
  %1829 = vmatprep.subr.mxu0 %v912
  %1830 = vmatpush1.msra.mxu0 %v911
  %1831 = vmatprep.subr.mxu0 %v925
  %1832 = vmatpush1.msra.mxu0 %v924
  %1833 = vmatprep.subr.mxu0 %v938
  %1834 = vmatpush1.msra.mxu0 %v937
  %1835 = vmatprep.subr.mxu0 %v951
  %1836 = vmatpush1.msra.mxu0 %v950
  %1837 = vmatprep.subr.mxu0 %v964
  %1838 = vmatpush1.msra.mxu0 %v963
  %1839 = vmatprep.subr.mxu0 %v977
  %1840 = vmatpush1.msra.mxu0 %v976
  %1841 = vmatprep.subr.mxu0 %v990
  %1842 = vmatpush1.msra.mxu0 %v989
  %1843 = vmatprep.subr.mxu0 %v1003
  %1844 = vmatpush1.msra.mxu0 %v1002
  %1845 = vmatprep.subr.mxu0 %v1016
  %1846 = vmatpush1.msra.mxu0 %v1015
  %1847 = vmatprep.subr.mxu0 %v1029
  %1848 = vmatpush1.msra.mxu0 %v1028
  %1849 = vmatprep.subr.mxu0 %v1042
  %1850 = vmatpush1.msra.mxu0 %v1041
  %1851 = vmatprep.subr.mxu0 %v1055
  %1852 = vmatpush1.msra.mxu0 %v1054
  %1853 = vmatprep.subr.mxu0 %v1068
  %1854 = vmatpush1.msra.mxu0 %v1067
  %1855 = vmatprep.subr.mxu0 %v1081
  %1856 = vmatpush1.msra.mxu0 %v1080
  %1857 = vmatprep.mubr.f32.mxu0 %v252
  %1858 = vmatmul.mubr.f32.gmra.mrb[0].mxu0 %v251
  %v1859 = vpop.f32.mrb[0].mxu0
  %v1860 = vadd.f32 %v1789, %v1859
  %v1861 = vpop.f32.mrb[0].mxu0
  %v1862 = vadd.f32 %v1791, %v1861
  %1863 = vdwg.mxu0
  %1864 = vmatprep.subr.mxu0 %v264
  %1865 = vmatpush1.msra.mxu0 %v263
  %1866 = vmatprep.subr.mxu0 %v277
  %1867 = vmatpush1.msra.mxu0 %v276
  %1868 = vmatprep.subr.mxu0 %v290
  %1869 = vmatpush1.msra.mxu0 %v289
  %1870 = vmatprep.subr.mxu0 %v303
  %1871 = vmatpush1.msra.mxu0 %v302
  %1872 = vmatprep.subr.mxu0 %v316
  %1873 = vmatpush1.msra.mxu0 %v315
  %1874 = vmatprep.subr.mxu0 %v329
  %1875 = vmatpush1.msra.mxu0 %v328
  %1876 = vmatprep.subr.mxu0 %v342
  %1877 = vmatpush1.msra.mxu0 %v341
  %1878 = vmatprep.subr.mxu0 %v355
  %1879 = vmatpush1.msra.mxu0 %v354
  %1880 = vmatprep.subr.mxu0 %v368
  %1881 = vmatpush1.msra.mxu0 %v367
  %1882 = vmatprep.subr.mxu0 %v381
  %1883 = vmatpush1.msra.mxu0 %v380
  %1884 = vmatprep.subr.mxu0 %v394
  %1885 = vmatpush1.msra.mxu0 %v393
  %1886 = vmatprep.subr.mxu0 %v407
  %1887 = vmatpush1.msra.mxu0 %v406
  %1888 = vmatprep.subr.mxu0 %v420
  %1889 = vmatpush1.msra.mxu0 %v419
  %1890 = vmatprep.subr.mxu0 %v433
  %1891 = vmatpush1.msra.mxu0 %v432
  %1892 = vmatprep.subr.mxu0 %v446
  %1893 = vmatpush1.msra.mxu0 %v445
  %1894 = vmatprep.subr.mxu0 %v459
  %1895 = vmatpush1.msra.mxu0 %v458
  %1896 = vmatprep.subr.mxu0 %v472
  %1897 = vmatpush1.msra.mxu0 %v471
  %1898 = vmatprep.subr.mxu0 %v485
  %1899 = vmatpush1.msra.mxu0 %v484
  %1900 = vmatprep.subr.mxu0 %v498
  %1901 = vmatpush1.msra.mxu0 %v497
  %1902 = vmatprep.subr.mxu0 %v511
  %1903 = vmatpush1.msra.mxu0 %v510
  %1904 = vmatprep.subr.mxu0 %v524
  %1905 = vmatpush1.msra.mxu0 %v523
  %1906 = vmatprep.subr.mxu0 %v537
  %1907 = vmatpush1.msra.mxu0 %v536
  %1908 = vmatprep.subr.mxu0 %v550
  %1909 = vmatpush1.msra.mxu0 %v549
  %1910 = vmatprep.subr.mxu0 %v563
  %1911 = vmatpush1.msra.mxu0 %v562
  %1912 = vmatprep.subr.mxu0 %v576
  %1913 = vmatpush1.msra.mxu0 %v575
  %1914 = vmatprep.subr.mxu0 %v589
  %1915 = vmatpush1.msra.mxu0 %v588
  %1916 = vmatprep.subr.mxu0 %v602
  %1917 = vmatpush1.msra.mxu0 %v601
  %1918 = vmatprep.subr.mxu0 %v615
  %1919 = vmatpush1.msra.mxu0 %v614
  %1920 = vmatprep.subr.mxu0 %v628
  %1921 = vmatpush1.msra.mxu0 %v627
  %1922 = vmatprep.subr.mxu0 %v641
  %1923 = vmatpush1.msra.mxu0 %v640
  %1924 = vmatprep.subr.mxu0 %v654
  %1925 = vmatpush1.msra.mxu0 %v653
  %1926 = vmatprep.subr.mxu0 %v667
  %1927 = vmatpush1.msra.mxu0 %v666
  %1928 = vmatprep.mubr.f32.mxu0 %v250
  %1929 = vmatmul.mubr.f32.gmra.mrb[0].mxu0 %v249
  %v1930 = vpop.f32.mrb[0].mxu0
  %v1931 = vadd.f32 %v1132, %v1930
  %v1932 = vpop.f32.mrb[0].mxu0
  %v1933 = vadd.f32 %v1136, %v1932
  %1934 = vdwg.mxu0
  %1935 = vmatprep.subr.mxu0 %v680
  %1936 = vmatpush1.msra.mxu0 %v679
  %1937 = vmatprep.subr.mxu0 %v693
  %1938 = vmatpush1.msra.mxu0 %v692
  %1939 = vmatprep.subr.mxu0 %v706
  %1940 = vmatpush1.msra.mxu0 %v705
  %1941 = vmatprep.subr.mxu0 %v719
  %1942 = vmatpush1.msra.mxu0 %v718
  %1943 = vmatprep.subr.mxu0 %v732
  %1944 = vmatpush1.msra.mxu0 %v731
  %1945 = vmatprep.subr.mxu0 %v745
  %1946 = vmatpush1.msra.mxu0 %v744
  %1947 = vmatprep.subr.mxu0 %v758
  %1948 = vmatpush1.msra.mxu0 %v757
  %1949 = vmatprep.subr.mxu0 %v771
  %1950 = vmatpush1.msra.mxu0 %v770
  %1951 = vmatprep.subr.mxu0 %v784
  %1952 = vmatpush1.msra.mxu0 %v783
  %1953 = vmatprep.subr.mxu0 %v797
  %1954 = vmatpush1.msra.mxu0 %v796
  %1955 = vmatprep.subr.mxu0 %v810
  %1956 = vmatpush1.msra.mxu0 %v809
  %1957 = vmatprep.subr.mxu0 %v823
  %1958 = vmatpush1.msra.mxu0 %v822
  %1959 = vmatprep.subr.mxu0 %v836
  %1960 = vmatpush1.msra.mxu0 %v835
  %1961 = vmatprep.subr.mxu0 %v849
  %1962 = vmatpush1.msra.mxu0 %v848
  %1963 = vmatprep.subr.mxu0 %v862
  %1964 = vmatpush1.msra.mxu0 %v861
  %1965 = vmatprep.subr.mxu0 %v875
  %1966 = vmatpush1.msra.mxu0 %v874
  %1967 = vmatprep.subr.mxu0 %v888
  %1968 = vmatpush1.msra.mxu0 %v887
  %1969 = vmatprep.subr.mxu0 %v901
  %1970 = vmatpush1.msra.mxu0 %v900
  %1971 = vmatprep.subr.mxu0 %v914
  %1972 = vmatpush1.msra.mxu0 %v913
  %1973 = vmatprep.subr.mxu0 %v927
  %1974 = vmatpush1.msra.mxu0 %v926
  %1975 = vmatprep.subr.mxu0 %v940
  %1976 = vmatpush1.msra.mxu0 %v939
  %1977 = vmatprep.subr.mxu0 %v953
  %1978 = vmatpush1.msra.mxu0 %v952
  %1979 = vmatprep.subr.mxu0 %v966
  %1980 = vmatpush1.msra.mxu0 %v965
  %1981 = vmatprep.subr.mxu0 %v979
  %1982 = vmatpush1.msra.mxu0 %v978
  %1983 = vmatprep.subr.mxu0 %v992
  %1984 = vmatpush1.msra.mxu0 %v991
  %1985 = vmatprep.subr.mxu0 %v1005
  %1986 = vmatpush1.msra.mxu0 %v1004
  %1987 = vmatprep.subr.mxu0 %v1018
  %1988 = vmatpush1.msra.mxu0 %v1017
  %1989 = vmatprep.subr.mxu0 %v1031
  %1990 = vmatpush1.msra.mxu0 %v1030
  %1991 = vmatprep.subr.mxu0 %v1044
  %1992 = vmatpush1.msra.mxu0 %v1043
  %1993 = vmatprep.subr.mxu0 %v1057
  %1994 = vmatpush1.msra.mxu0 %v1056
  %1995 = vmatprep.subr.mxu0 %v1070
  %1996 = vmatpush1.msra.mxu0 %v1069
  %1997 = vmatprep.subr.mxu0 %v1083
  %1998 = vmatpush1.msra.mxu0 %v1082
  %1999 = vmatprep.mubr.f32.mxu0 %v252
  %2000 = vmatmul.mubr.f32.gmra.mrb[0].mxu0 %v251
  %v2001 = vpop.f32.mrb[0].mxu0
  %v2002 = vadd.f32 %v1931, %v2001
  %v2003 = vpop.f32.mrb[0].mxu0
  %v2004 = vadd.f32 %v1933, %v2003
  %2005 = vdwg.mxu0
  %2006 = vmatprep.subr.mxu0 0.0
  %2007 = vmatpush1.msra.mxu0 %v265
  %2008 = vmatprep.subr.mxu0 0.0
  %2009 = vmatpush1.msra.mxu0 %v278
  %2010 = vmatprep.subr.mxu0 0.0
  %2011 = vmatpush1.msra.mxu0 %v291
  %2012 = vmatprep.subr.mxu0 0.0
  %2013 = vmatpush1.msra.mxu0 %v304
  %2014 = vmatprep.subr.mxu0 0.0
  %2015 = vmatpush1.msra.mxu0 %v317
  %2016 = vmatprep.subr.mxu0 0.0
  %2017 = vmatpush1.msra.mxu0 %v330
  %2018 = vmatprep.subr.mxu0 0.0
  %2019 = vmatpush1.msra.mxu0 %v343
  %2020 = vmatprep.subr.mxu0 0.0
  %2021 = vmatpush1.msra.mxu0 %v356
  %2022 = vmatprep.subr.mxu0 0.0
  %2023 = vmatpush1.msra.mxu0 %v369
  %2024 = vmatprep.subr.mxu0 0.0
  %2025 = vmatpush1.msra.mxu0 %v382
  %2026 = vmatprep.subr.mxu0 0.0
  %2027 = vmatpush1.msra.mxu0 %v395
  %2028 = vmatprep.subr.mxu0 0.0
  %2029 = vmatpush1.msra.mxu0 %v408
  %2030 = vmatprep.subr.mxu0 0.0
  %2031 = vmatpush1.msra.mxu0 %v421
  %2032 = vmatprep.subr.mxu0 0.0
  %2033 = vmatpush1.msra.mxu0 %v434
  %2034 = vmatprep.subr.mxu0 0.0
  %2035 = vmatpush1.msra.mxu0 %v447
  %2036 = vmatprep.subr.mxu0 0.0
  %2037 = vmatpush1.msra.mxu0 %v460
  %2038 = vmatprep.subr.mxu0 0.0
  %2039 = vmatpush1.msra.mxu0 %v473
  %2040 = vmatprep.subr.mxu0 0.0
  %2041 = vmatpush1.msra.mxu0 %v486
  %2042 = vmatprep.subr.mxu0 0.0
  %2043 = vmatpush1.msra.mxu0 %v499
  %2044 = vmatprep.subr.mxu0 0.0
  %2045 = vmatpush1.msra.mxu0 %v512
  %2046 = vmatprep.subr.mxu0 0.0
  %2047 = vmatpush1.msra.mxu0 %v525
  %2048 = vmatprep.subr.mxu0 0.0
  %2049 = vmatpush1.msra.mxu0 %v538
  %2050 = vmatprep.subr.mxu0 0.0
  %2051 = vmatpush1.msra.mxu0 %v551
  %2052 = vmatprep.subr.mxu0 0.0
  %2053 = vmatpush1.msra.mxu0 %v564
  %2054 = vmatprep.subr.mxu0 0.0
  %2055 = vmatpush1.msra.mxu0 %v577
  %2056 = vmatprep.subr.mxu0 0.0
  %2057 = vmatpush1.msra.mxu0 %v590
  %2058 = vmatprep.subr.mxu0 0.0
  %2059 = vmatpush1.msra.mxu0 %v603
  %2060 = vmatprep.subr.mxu0 0.0
  %2061 = vmatpush1.msra.mxu0 %v616
  %2062 = vmatprep.subr.mxu0 0.0
  %2063 = vmatpush1.msra.mxu0 %v629
  %2064 = vmatprep.subr.mxu0 0.0
  %2065 = vmatpush1.msra.mxu0 %v642
  %2066 = vmatprep.subr.mxu0 0.0
  %2067 = vmatpush1.msra.mxu0 %v655
  %2068 = vmatprep.subr.mxu0 0.0
  %2069 = vmatpush1.msra.mxu0 %v668
  %2070 = vmatprep.mubr.f32.mxu0 %v250
  %2071 = vmatmul.mubr.f32.gmra.mrb[0].mxu0 %v249
  %v2072 = vpop.f32.mrb[0].mxu0
  %v2073 = vadd.f32 %v1140, %v2072
  %v2074 = vpop.f32.mrb[0].mxu0
  %2075 = vdwg.mxu0
  %2076 = vmatprep.subr.mxu0 0.0
  %2077 = vmatpush1.msra.mxu0 %v681
  %2078 = vmatprep.subr.mxu0 0.0
  %2079 = vmatpush1.msra.mxu0 %v694
  %2080 = vmatprep.subr.mxu0 0.0
  %2081 = vmatpush1.msra.mxu0 %v707
  %2082 = vmatprep.subr.mxu0 0.0
  %2083 = vmatpush1.msra.mxu0 %v720
  %2084 = vmatprep.subr.mxu0 0.0
  %2085 = vmatpush1.msra.mxu0 %v733
  %2086 = vmatprep.subr.mxu0 0.0
  %2087 = vmatpush1.msra.mxu0 %v746
  %2088 = vmatprep.subr.mxu0 0.0
  %2089 = vmatpush1.msra.mxu0 %v759
  %2090 = vmatprep.subr.mxu0 0.0
  %2091 = vmatpush1.msra.mxu0 %v772
  %2092 = vmatprep.subr.mxu0 0.0
  %2093 = vmatpush1.msra.mxu0 %v785
  %2094 = vmatprep.subr.mxu0 0.0
  %2095 = vmatpush1.msra.mxu0 %v798
  %2096 = vmatprep.subr.mxu0 0.0
  %2097 = vmatpush1.msra.mxu0 %v811
  %2098 = vmatprep.subr.mxu0 0.0
  %2099 = vmatpush1.msra.mxu0 %v824
  %2100 = vmatprep.subr.mxu0 0.0
  %2101 = vmatpush1.msra.mxu0 %v837
  %2102 = vmatprep.subr.mxu0 0.0
  %2103 = vmatpush1.msra.mxu0 %v850
  %2104 = vmatprep.subr.mxu0 0.0
  %2105 = vmatpush1.msra.mxu0 %v863
  %2106 = vmatprep.subr.mxu0 0.0
  %2107 = vmatpush1.msra.mxu0 %v876
  %2108 = vmatprep.subr.mxu0 0.0
  %2109 = vmatpush1.msra.mxu0 %v889
  %2110 = vmatprep.subr.mxu0 0.0
  %2111 = vmatpush1.msra.mxu0 %v902
  %2112 = vmatprep.subr.mxu0 0.0
  %2113 = vmatpush1.msra.mxu0 %v915
  %2114 = vmatprep.subr.mxu0 0.0
  %2115 = vmatpush1.msra.mxu0 %v928
  %2116 = vmatprep.subr.mxu0 0.0
  %2117 = vmatpush1.msra.mxu0 %v941
  %2118 = vmatprep.subr.mxu0 0.0
  %2119 = vmatpush1.msra.mxu0 %v954
  %2120 = vmatprep.subr.mxu0 0.0
  %2121 = vmatpush1.msra.mxu0 %v967
  %2122 = vmatprep.subr.mxu0 0.0
  %2123 = vmatpush1.msra.mxu0 %v980
  %2124 = vmatprep.subr.mxu0 0.0
  %2125 = vmatpush1.msra.mxu0 %v993
  %2126 = vmatprep.subr.mxu0 0.0
  %2127 = vmatpush1.msra.mxu0 %v1006
  %2128 = vmatprep.subr.mxu0 0.0
  %2129 = vmatpush1.msra.mxu0 %v1019
  %2130 = vmatprep.subr.mxu0 0.0
  %2131 = vmatpush1.msra.mxu0 %v1032
  %2132 = vmatprep.subr.mxu0 0.0
  %2133 = vmatpush1.msra.mxu0 %v1045
  %2134 = vmatprep.subr.mxu0 0.0
  %2135 = vmatpush1.msra.mxu0 %v1058
  %2136 = vmatprep.subr.mxu0 0.0
  %2137 = vmatpush1.msra.mxu0 %v1071
  %2138 = vmatprep.subr.mxu0 0.0
  %2139 = vmatpush1.msra.mxu0 %v1084
  %2140 = vmatprep.mubr.f32.mxu0 %v252
  %2141 = vmatmul.mubr.f32.gmra.mrb[0].mxu0 %v251
  %v2142 = vpop.f32.mrb[0].mxu0
  %v2143 = vadd.f32 %v2073, %v2142
  %v2144 = vpop.f32.mrb[0].mxu0
  %2145 = vdwg.mxu0
  %v2146 = vmax.f32 %v1292, 0.0
  %v2147 = vmax.f32 %v1294, 0.0
  %v2148 = vmax.f32 %v1434, 0.0
  %v2149 = vmax.f32 %v1436, 0.0
  %v2150 = vmax.f32 %v1576, 0.0
  %v2151 = vmax.f32 %v1578, 0.0
  %v2152 = vmax.f32 %v1718, 0.0
  %v2153 = vmax.f32 %v1720, 0.0
  %v2154 = vmax.f32 %v1860, 0.0
  %v2155 = vmax.f32 %v1862, 0.0
  %v2156 = vmax.f32 %v2002, 0.0
  %v2157 = vmax.f32 %v2004, 0.0
  %v2158 = vmax.f32 %v2143, 0.0
  %v2172 = vcombine.low %v2146, %v2147
  %v2173 = vcombine.low %v2148, %v2149
  %v2175 = vunpack.c.l.s4 1983009808
  %v2176 = vunpack.c.0.s8 %v2175
  %v2177 = vlaneseq
  %v2178 = vshrl.u32 %v2177, 7
  %v2179 = vsub.s32 %v2176, %v2178
  %v2180 = vrot.slane %v2172, %v2179
  %v2182 = vunpack.c.l.s4 1983009808
  %v2183 = vunpack.c.0.s8 %v2182
  %v2184 = vlaneseq
  %v2185 = vshrl.u32 %v2184, 7
  %v2186 = vsub.s32 %v2183, %v2185
  %v2187 = vrot.slane %v2173, %v2186
  %v2188 = vcombine.low %v2180, %v2187
  %v2189 = vcombine.low %v2150, %v2151
  %v2190 = vcombine.low %v2152, %v2153
  %v2192 = vunpack.c.l.s4 1983009808
  %v2193 = vunpack.c.0.s8 %v2192
  %v2194 = vlaneseq
  %v2195 = vshrl.u32 %v2194, 7
  %v2196 = vsub.s32 %v2193, %v2195
  %v2197 = vrot.slane %v2189, %v2196
  %v2199 = vunpack.c.l.s4 1983009808
  %v2200 = vunpack.c.0.s8 %v2199
  %v2201 = vlaneseq
  %v2202 = vshrl.u32 %v2201, 7
  %v2203 = vsub.s32 %v2200, %v2202
  %v2204 = vrot.slane %v2190, %v2203
  %v2205 = vcombine.low %v2197, %v2204
  %v2206 = vcombine.low %v2154, %v2155
  %v2207 = vcombine.low %v2156, %v2157
  %v2209 = vunpack.c.l.s4 1983009808
  %v2210 = vunpack.c.0.s8 %v2209
  %v2211 = vlaneseq
  %v2212 = vshrl.u32 %v2211, 7
  %v2213 = vsub.s32 %v2210, %v2212
  %v2214 = vrot.slane %v2206, %v2213
  %v2216 = vunpack.c.l.s4 1983009808
  %v2217 = vunpack.c.0.s8 %v2216
  %v2218 = vlaneseq
  %v2219 = vshrl.u32 %v2218, 7
  %v2220 = vsub.s32 %v2217, %v2219
  %v2221 = vrot.slane %v2207, %v2220
  %v2222 = vcombine.low %v2214, %v2221
  %v2224 = vunpack.c.l.s4 1983009808
  %v2225 = vunpack.c.0.s8 %v2224
  %v2226 = vlaneseq
  %v2227 = vshrl.u32 %v2226, 7
  %v2228 = vsub.s32 %v2225, %v2227
  %v2229 = vrot.slane %v2158, %v2228
  %2234 = vst [vmem:[%s5] sm:$0xff] %v2188
  %2235 = vst [vmem:[%s5 + $0x8] sm:$0xff] %v2205
  %2236 = vst [vmem:[%s5 + $0x10] sm:$0xff] %v2222
  %vm2237 = vcmask 517120
  %2238 = vst.msk [vmem:[%s5 + $0x18] sm:$0x3] %vm2237, %v2229
  // Predicated region
  $region22: #{inverse_cifar10_forward.3} parent=0 // pred_check
    _
  $region23: #{inverse_cifar10_forward.3} parent=0 // pred_check_branch
    %2240 = sbr.rel (0) target = $region25
  $region24: #{inverse_cifar10_forward.3} parent=0 // pred_region
    _
  $region25: #{inverse_cifar10_forward.3} parent=0 // pred_fallthru
    _
  // Predicated region
  $region26: #{inverse_cifar10_forward.3} parent=0 // pred_check
    _
  $region27: #{inverse_cifar10_forward.3} parent=0 // pred_check_branch
    %2242 = sbr.rel (0) target = $region29
  $region28: #{inverse_cifar10_forward.3} parent=0 // pred_region
    _
  $region29: #{inverse_cifar10_forward.3} parent=0 // pred_fallthru
    _

// kernel: inverse_cifar10_forward.4
$region0: #{inverse_cifar10_forward.4}
  #allocation0 [shape = 'u32[]', space=smem, size = 0x4, offset = 0x4, fixed_abs, tag = 'smem constant byte address 0x4 - core index']
  #allocation1 [shape = 'u32[144,128]{1,0:T(1,128)}', space=vmem, size = 0x12000, scoped, tag = 'internal scratch']
  %s0 = inlined_call_operand.vmem [shape: f32[2,1600,196], index: 0, kind: input, shape index: {}]
  %s1 = inlined_call_operand.vmem [shape: f32[32,1600], index: 1, kind: input, shape index: {}]
  %s2 = inlined_call_operand.vmem [shape: f32[32,1], index: 2, kind: input, shape index: {}]
  %s3 = inlined_call_operand.vmem [shape: f32[2,32,196], index: 3, kind: output, shape index: {}]
  %s4 = sld [smem:[#allocation0]]
  $region45: #{inverse_cifar10_forward.4} parent=0
    _
  %s6 = ssub.s32 1, %s4
  %s7 = scalar_select 0, %s6, %s4
  loop: start=0, step=1, limit=4
  $region2: #{inverse_cifar10_forward.4} parent=0 // loop_pre_header
    _
  $region3: #{inverse_cifar10_forward.4} parent=0 // loop_header
    %s9 = sphi 0, %s13
    %p10 = scmp.ge.s32.totalorder %s9, 4
    %s16 = sphi 0, %s28
    %s17 = sphi 0, %s24
    %s18 = sphi 0, %s16
    %s19 = sphi 0, %s17
    %s20 = sphi 0, %s18
    %s21 = sphi 0, %s19
    %s33 = sphi 0, %s35
    %s36 = sphi 0, %s33
    %s37 = sphi 0, %s36
    %s53 = sphi 0, %s37
    %s57 = sphi 0, %s57
    %s59 = sphi 0, %s57
    %s60 = sphi 0, %s59
    %s74 = sphi 0, %s60
    %s78 = sphi 0, %s78
    %s80 = sphi 0, %s78
    %s81 = sphi 0, %s80
    %s95 = sphi 0, %s81
    %s103 = sphi 0, %s105
    %s106 = sphi 0, %s103
    %s107 = sphi 0, %s106
    %s123 = sphi 0, %s107
  $region4: #{inverse_cifar10_forward.4} parent=0 // loop_header_branch
    %12 = sbr.rel (%p10) target = $region8
  $region5: #{inverse_cifar10_forward.4} parent=0 // loop_body
    %s14 = ssub.s32 %s9, 1
    %s15 = ssub.s32 %s9, 2
    %s22 = sadd.s32 1, %s17
    %p23 = scmp.ge.s32.totalorder %s22, 1
    %s24 = scalar_select %p23, 0, %s22
    %s25 = sadd.s32 1, %s16
    %s26 = scalar_select %p23, %s25, %s16
    %p27 = scmp.ge.s32.totalorder %s26, 2
    %s28 = scalar_select %p27, 0, %s26
    %s29 = ssub.s32 %s16, %s28
    %s30 = ssub.s32 %s17, %s24
    %s31 = sor.u32 %s29, %s30
    %p32 = scmp.eq.s32.totalorder %s31, 0
    %s34 = sadd.s32 %s33, 1
    %s35 = scalar_select %p32, %s33, %s34
    %p38 = pneg %p32
    %p39 = scmp.eq.s32.totalorder %s9, 1
    %p40 = por %p38, %p39
    %p41 = scmp.ne.s32.totalorder %s33, %s36
    %p42 = scmp.eq.s32.totalorder %s9, 0
    %p43 = por %p41, %p42
    %p44 = scmp.ne.s32.totalorder %s33, %s36
    %p45 = scmp.eq.s32.totalorder %s14, 1
    %p46 = por %p44, %p45
    %p47 = scmp.ne.s32.totalorder %s36, %s37
    %p48 = scmp.eq.s32.totalorder %s14, 0
    %p49 = por %p47, %p48
    %p50 = scmp.ne.s32.totalorder %s36, %s37
    %p51 = scmp.eq.s32.totalorder %s15, 1
    %p52 = por %p50, %p51
    %p54 = scmp.ne.s32.totalorder %s37, %s53
    %p55 = scmp.eq.s32.totalorder %s15, 0
    %p56 = por %p54, %p55
    %s58 = sadd.s32 %s57, 1
    %p61 = scmp.eq.s32.totalorder %s9, 1
    %p62 = scmp.ne.s32.totalorder %s57, %s59
    %p63 = scmp.eq.s32.totalorder %s9, 0
    %p64 = por %p62, %p63
    %p65 = scmp.ne.s32.totalorder %s57, %s59
    %p66 = scmp.eq.s32.totalorder %s14, 1
    %p67 = por %p65, %p66
    %p68 = scmp.ne.s32.totalorder %s59, %s60
    %p69 = scmp.eq.s32.totalorder %s14, 0
    %p70 = por %p68, %p69
    %p71 = scmp.ne.s32.totalorder %s59, %s60
    %p72 = scmp.eq.s32.totalorder %s15, 1
    %p73 = por %p71, %p72
    %p75 = scmp.ne.s32.totalorder %s60, %s74
    %p76 = scmp.eq.s32.totalorder %s15, 0
    %p77 = por %p75, %p76
    %s79 = sadd.s32 %s78, 1
    %p82 = scmp.eq.s32.totalorder %s9, 1
    %p83 = scmp.ne.s32.totalorder %s78, %s80
    %p84 = scmp.eq.s32.totalorder %s9, 0
    %p85 = por %p83, %p84
    %p86 = scmp.ne.s32.totalorder %s78, %s80
    %p87 = scmp.eq.s32.totalorder %s14, 1
    %p88 = por %p86, %p87
    %p89 = scmp.ne.s32.totalorder %s80, %s81
    %p90 = scmp.eq.s32.totalorder %s14, 0
    %p91 = por %p89, %p90
    %p92 = scmp.ne.s32.totalorder %s80, %s81
    %p93 = scmp.eq.s32.totalorder %s15, 1
    %p94 = por %p92, %p93
    %p96 = scmp.ne.s32.totalorder %s81, %s95
    %p97 = scmp.eq.s32.totalorder %s15, 0
    %p98 = por %p96, %p97
    %s99 = ssub.s32 %s16, %s28
    %s100 = ssub.s32 %s17, %s24
    %s101 = sor.u32 %s99, %s100
    %p102 = scmp.eq.s32.totalorder %s101, 0
    %s104 = sadd.s32 %s103, 1
    %s105 = scalar_select %p102, %s103, %s104
    %p108 = pneg %p102
    %p109 = scmp.eq.s32.totalorder %s9, 1
    %p110 = por %p108, %p109
    %p111 = scmp.ne.s32.totalorder %s103, %s106
    %p112 = scmp.eq.s32.totalorder %s9, 0
    %p113 = por %p111, %p112
    %p114 = scmp.ne.s32.totalorder %s103, %s106
    %p115 = scmp.eq.s32.totalorder %s14, 1
    %p116 = por %p114, %p115
    %p117 = scmp.ne.s32.totalorder %s106, %s107
    %p118 = scmp.eq.s32.totalorder %s14, 0
    %p119 = por %p117, %p118
    %p120 = scmp.ne.s32.totalorder %s106, %s107
    %p121 = scmp.eq.s32.totalorder %s15, 1
    %p122 = por %p120, %p121
    %p124 = scmp.ne.s32.totalorder %s107, %s123
    %p125 = scmp.eq.s32.totalorder %s15, 0
    %p126 = por %p124, %p125
    %p127 = scmp.le.s32.totalorder 1, %s9
    %p128 = scmp.lt.s32.totalorder %s9, 3
    %p129 = pnand %p127, %p128
    %p130 = pneg %p129
    // Predicated region
    $region9: #{inverse_cifar10_forward.4} parent=5 // pred_check
      _
    $region10: #{inverse_cifar10_forward.4} parent=5 // pred_check_branch
      %132 = sbr.rel (%p129) target = $region12
    $region11: #{inverse_cifar10_forward.4} parent=5 // pred_region
      %s133 = ssub.s32 %s9, 1
      // Predicated region
      $region13: #{inverse_cifar10_forward.4} parent=11 // pred_check
        %p134 = pneg %p70
      $region14: #{inverse_cifar10_forward.4} parent=11 // pred_check_branch
        %136 = sbr.rel (%p134) target = $region16
      $region15: #{inverse_cifar10_forward.4} parent=11 // pred_region
        _
      $region16: #{inverse_cifar10_forward.4} parent=11 // pred_fallthru
        _
      // Predicated region
      $region17: #{inverse_cifar10_forward.4} parent=11 // pred_check
        %p137 = pneg %p91
      $region18: #{inverse_cifar10_forward.4} parent=11 // pred_check_branch
        %139 = sbr.rel (%p137) target = $region20
      $region19: #{inverse_cifar10_forward.4} parent=11 // pred_region
        _
      $region20: #{inverse_cifar10_forward.4} parent=11 // pred_fallthru
        _
    $region12: #{inverse_cifar10_forward.4} parent=5 // pred_fallthru
      _
    %p140 = scmp.lt.s32.totalorder %s9, 2
    // Predicated region
    $region21: #{inverse_cifar10_forward.4} parent=5 // pred_check
      %p141 = pneg %p140
    $region22: #{inverse_cifar10_forward.4} parent=5 // pred_check_branch
      %143 = sbr.rel (%p141) target = $region24
    $region23: #{inverse_cifar10_forward.4} parent=5 // pred_region
      // Predicated region
      $region25: #{inverse_cifar10_forward.4} parent=23 // pred_check
        %p144 = pneg %p43
      $region26: #{inverse_cifar10_forward.4} parent=23 // pred_check_branch
        %146 = sbr.rel (%p144) target = $region28
      $region27: #{inverse_cifar10_forward.4} parent=23 // pred_region
        %s147 = smul.u32 2, %s17
        %p148 = scmp.lt.s32.totalorder %s16, 1
        %s149 = scalar_select %p148, %s16, 1
        %p150 = scmp.lt.s32.totalorder %s147, 1
        %s151 = scalar_select %p150, %s147, 1
        %s152 = smul.addr %s149, 400
        %s153 = sadd.s32 %s151, %s152
        %s154 = smul.addr %s153, 8
        %s155 = scalar_lea.vmem %s0, %s154
        %s156 = smul.u32 2, %s17
      $region28: #{inverse_cifar10_forward.4} parent=23 // pred_fallthru
        _
    $region24: #{inverse_cifar10_forward.4} parent=5 // pred_fallthru
      _
    %p157 = scmp.le.s32.totalorder 1, %s9
    %p158 = scmp.lt.s32.totalorder %s9, 3
    %p159 = pnand %p157, %p158
    %p160 = pneg %p159
    // Predicated region
    $region29: #{inverse_cifar10_forward.4} parent=5 // pred_check
      _
    $region30: #{inverse_cifar10_forward.4} parent=5 // pred_check_branch
      %162 = sbr.rel (%p159) target = $region32
    $region31: #{inverse_cifar10_forward.4} parent=5 // pred_region
      %s163 = ssub.s32 %s9, 1
      %s164 = smul.u32 2, %s19
      %p165 = scmp.lt.s32.totalorder %s18, 1
      %s166 = scalar_select %p165, %s18, 1
      %p167 = scmp.lt.s32.totalorder %s164, 1
      %s168 = scalar_select %p167, %s164, 1
      %s169 = smul.addr %s166, 400
      %s170 = sadd.s32 %s168, %s169
      %s171 = smul.addr %s170, 8
      %s172 = scalar_lea.vmem %s0, %s171
      %p173 = pneg %p49
      %p174 = pneg %p46
      %p175 = pneg %p70
      %p176 = pneg %p67
      %p177 = pneg %p91
      %p178 = pneg %p88
      %p179 = pneg %p119
      %p180 = pneg %p116
      %s181 = smul.u32 2, %s19
      %p182 = scmp.lt.s32.totalorder %s18, 1
      %s183 = scalar_select %p182, %s18, 1
      %p184 = scmp.lt.s32.totalorder %s181, 1
      %s185 = scalar_select %p184, %s181, 1
      %s186 = smul.addr %s183, 8
      %s187 = sadd.s32 %s185, %s186
      %s188 = smul.addr %s187, 8
      %s189 = scalar_lea.vmem %s3, %s188
      %s190 = smul.u32 2, %s19
      %p191 = scmp.lt.s32.totalorder %s18, 1
      %s192 = scalar_select %p191, %s18, 1
      %p193 = scmp.lt.s32.totalorder %s190, 1
      %s194 = scalar_select %p193, %s190, 1
      %s195 = smul.addr %s192, 400
      %s196 = sadd.s32 %s194, %s195
      %s197 = smul.addr %s196, 8
      %s198 = scalar_lea.vmem %s0, %s197
      %s199 = smul.u32 2, %s19
      %s200 = smul.u32 2, %s19
      %p201 = scmp.lt.s32.totalorder %s18, 1
      %s202 = scalar_select %p201, %s18, 1
      %p203 = scmp.lt.s32.totalorder %s200, 1
      %s204 = scalar_select %p203, %s200, 1
      %s205 = smul.addr %s202, 8
      %s206 = sadd.s32 %s204, %s205
      %s207 = smul.addr %s206, 8
      %s208 = scalar_lea.vmem %s3, %s207
      %s209 = smul.u32 2, %s19
      %v210 = vld [vmem:[%s1] sm:$0xff]
      %v211 = vld [vmem:[%s1 + $0x8] sm:$0xff]
      %v212 = vld [vmem:[%s1 + $0x10] sm:$0xff]
      %v213 = vld [vmem:[%s1 + $0x18] sm:$0xff]
      %v214 = vld [vmem:[%s1 + $0x20] sm:$0xff]
      %v215 = vld [vmem:[%s1 + $0x28] sm:$0xff]
      %v216 = vld [vmem:[%s1 + $0x30] sm:$0xff]
      %v217 = vld [vmem:[%s1 + $0x38] sm:$0xff]
      %v218 = vld [vmem:[%s1 + $0x40] sm:$0xff]
      %v219 = vld [vmem:[%s1 + $0x48] sm:$0xff]
      %v220 = vld [vmem:[%s1 + $0x50] sm:$0xff]
      %v221 = vld [vmem:[%s1 + $0x58] sm:$0xff]
      %v222 = vld [vmem:[%s1 + $0x60] sm:$0xff]
      %v223 = vld [vmem:[%s1 + $0x68] sm:$0xff]
      %v224 = vld [vmem:[%s1 + $0x70] sm:$0xff]
      %v225 = vld [vmem:[%s1 + $0x78] sm:$0xff]
      %v226 = vld [vmem:[%s1 + $0x80] sm:$0xff]
      %v227 = vld [vmem:[%s1 + $0x88] sm:$0xff]
      %v228 = vld [vmem:[%s1 + $0x90] sm:$0xff]
      %v229 = vld [vmem:[%s1 + $0x98] sm:$0xff]
      %v230 = vld [vmem:[%s1 + $0xa0] sm:$0xff]
      %v231 = vld [vmem:[%s1 + $0xa8] sm:$0xff]
      %v232 = vld [vmem:[%s1 + $0xb0] sm:$0xff]
      %v233 = vld [vmem:[%s1 + $0xb8] sm:$0xff]
      %v234 = vld [vmem:[%s1 + $0xc0] sm:$0xff]
      %v235 = vld [vmem:[%s1 + $0xc8] sm:$0xff]
      %v236 = vld [vmem:[%s1 + $0xd0] sm:$0xff]
      %v237 = vld [vmem:[%s1 + $0xd8] sm:$0xff]
      %v238 = vld [vmem:[%s1 + $0xe0] sm:$0xff]
      %v239 = vld [vmem:[%s1 + $0xe8] sm:$0xff]
      %v240 = vld [vmem:[%s1 + $0xf0] sm:$0xff]
      %v241 = vld [vmem:[%s1 + $0xf8] sm:$0xff]
      %v242 = vld [vmem:[%s1 + $0x100] sm:$0xff]
      %v243 = vld [vmem:[%s1 + $0x108] sm:$0xff]
      %v244 = vld [vmem:[%s1 + $0x110] sm:$0xff]
      %v245 = vld [vmem:[%s1 + $0x118] sm:$0xff]
      %v246 = vld [vmem:[%s1 + $0x120] sm:$0xff]
      %v247 = vld [vmem:[%s1 + $0x128] sm:$0xff]
      %v248 = vld [vmem:[%s1 + $0x130] sm:$0xff]
      %v249 = vld [vmem:[%s1 + $0x138] sm:$0xff]
      %v250 = vld [vmem:[%s1 + $0x140] sm:$0xff]
      %v251 = vld [vmem:[%s1 + $0x148] sm:$0xff]
      %v252 = vld [vmem:[%s1 + $0x150] sm:$0xff]
      %v253 = vld [vmem:[%s1 + $0x158] sm:$0xff]
      %v254 = vld [vmem:[%s1 + $0x160] sm:$0xff]
      %v255 = vld [vmem:[%s1 + $0x168] sm:$0xff]
      %v256 = vld [vmem:[%s1 + $0x170] sm:$0xff]
      %v257 = vld [vmem:[%s1 + $0x178] sm:$0xff]
      %v258 = vld [vmem:[%s1 + $0x180] sm:$0xff]
      %v259 = vld [vmem:[%s1 + $0x188] sm:$0xff]
      %v260 = vld [vmem:[%s1 + $0x190] sm:$0xff]
      %v261 = vld [vmem:[%s1 + $0x198] sm:$0xff]
      %v262 = vld [vmem:[%s198] sm:$0xff]
      %v263 = vld [vmem:[%s198 + $0x8] sm:$0xff]
      %v264 = vld [vmem:[%s198 + $0x10] sm:$0xff]
      %v265 = vld [vmem:[%s198 + $0x18] sm:$0xff]
      %v266 = vld [vmem:[%s198 + $0x20] sm:$0xff]
      %v267 = vld [vmem:[%s198 + $0x28] sm:$0xff]
      %v268 = vld [vmem:[%s198 + $0x30] sm:$0xff]
      %v269 = vld [vmem:[%s198 + $0x38] sm:$0xff]
      %v270 = vld [vmem:[%s198 + $0x40] sm:$0xff]
      %v271 = vld [vmem:[%s198 + $0x48] sm:$0xff]
      %v272 = vld [vmem:[%s198 + $0x50] sm:$0xff]
      %v273 = vld [vmem:[%s198 + $0x58] sm:$0xff]
      %v274 = vld [vmem:[%s198 + $0x60] sm:$0xff]
      %v275 = vld [vmem:[%s198 + $0x68] sm:$0xff]
      %v276 = vld [vmem:[%s198 + $0x70] sm:$0xff]
      %v277 = vld [vmem:[%s198 + $0x78] sm:$0xff]
      %v278 = vld [vmem:[%s198 + $0x80] sm:$0xff]
      %v279 = vld [vmem:[%s198 + $0x88] sm:$0xff]
      %v280 = vld [vmem:[%s198 + $0x90] sm:$0xff]
      %v281 = vld [vmem:[%s198 + $0x98] sm:$0xff]
      %v282 = vld [vmem:[%s198 + $0xa0] sm:$0xff]
      %v283 = vld [vmem:[%s198 + $0xa8] sm:$0xff]
      %v284 = vld [vmem:[%s198 + $0xb0] sm:$0xff]
      %v285 = vld [vmem:[%s198 + $0xb8] sm:$0xff]
      %v286 = vld [vmem:[%s198 + $0xc0] sm:$0xff]
      %v287 = vld [vmem:[%s198 + $0xc8] sm:$0xff]
      %v288 = vld [vmem:[%s198 + $0xd0] sm:$0xff]
      %v289 = vld [vmem:[%s198 + $0xd8] sm:$0xff]
      %v290 = vld [vmem:[%s198 + $0xe0] sm:$0xff]
      %v291 = vld [vmem:[%s198 + $0xe8] sm:$0xff]
      %v292 = vld [vmem:[%s198 + $0xf0] sm:$0xff]
      %v293 = vld [vmem:[%s198 + $0xf8] sm:$0xff]
      %v294 = vld [vmem:[%s198 + $0x100] sm:$0xff]
      %v295 = vld [vmem:[%s198 + $0x108] sm:$0xff]
      %v296 = vld [vmem:[%s198 + $0x110] sm:$0xff]
      %v297 = vld [vmem:[%s198 + $0x118] sm:$0xff]
      %v298 = vld [vmem:[%s198 + $0x120] sm:$0xff]
      %v299 = vld [vmem:[%s198 + $0x128] sm:$0xff]
      %v300 = vld [vmem:[%s198 + $0x130] sm:$0xff]
      %v301 = vld [vmem:[%s198 + $0x138] sm:$0xff]
      %v302 = vld [vmem:[%s198 + $0x140] sm:$0xff]
      %v303 = vld [vmem:[%s198 + $0x148] sm:$0xff]
      %v304 = vld [vmem:[%s198 + $0x150] sm:$0xff]
      %v305 = vld [vmem:[%s198 + $0x158] sm:$0xff]
      %v306 = vld [vmem:[%s198 + $0x160] sm:$0xff]
      %v307 = vld [vmem:[%s198 + $0x168] sm:$0xff]
      %v308 = vld [vmem:[%s198 + $0x170] sm:$0xff]
      %v309 = vld [vmem:[%s198 + $0x178] sm:$0xff]
      %v310 = vld [vmem:[%s198 + $0x180] sm:$0xff]
      %v311 = vld [vmem:[%s198 + $0x188] sm:$0xff]
      %v312 = vld [vmem:[%s198 + $0x190] sm:$0xff]
      %v313 = vld [vmem:[%s198 + $0x198] sm:$0xff]
      %v314 = vld [vmem:[%s198 + $0x1a0] sm:$0xff]
      %v315 = vld [vmem:[%s198 + $0x1a8] sm:$0xff]
      %v316 = vld [vmem:[%s198 + $0x1b0] sm:$0xff]
      %v317 = vld [vmem:[%s198 + $0x1b8] sm:$0xff]
      %v318 = vld [vmem:[%s198 + $0x1c0] sm:$0xff]
      %v319 = vld [vmem:[%s198 + $0x1c8] sm:$0xff]
      %v320 = vld [vmem:[%s198 + $0x1d0] sm:$0xff]
      %v321 = vld [vmem:[%s198 + $0x1d8] sm:$0xff]
      %v322 = vld [vmem:[%s198 + $0x1e0] sm:$0xff]
      %v323 = vld [vmem:[%s198 + $0x1e8] sm:$0xff]
      %v324 = vld [vmem:[%s198 + $0x1f0] sm:$0xff]
      %v325 = vld [vmem:[%s198 + $0x1f8] sm:$0xff]
      %v326 = vld [vmem:[%s198 + $0x200] sm:$0xff]
      %v327 = vld [vmem:[%s198 + $0x208] sm:$0xff]
      %v328 = vld [vmem:[%s198 + $0x210] sm:$0xff]
      %v329 = vld [vmem:[%s198 + $0x218] sm:$0xff]
      %v330 = vld [vmem:[%s198 + $0x220] sm:$0xff]
      %v331 = vld [vmem:[%s198 + $0x228] sm:$0xff]
      %v332 = vld [vmem:[%s198 + $0x230] sm:$0xff]
      %v333 = vld [vmem:[%s198 + $0x238] sm:$0xff]
      %v334 = vld [vmem:[%s198 + $0x240] sm:$0xff]
      %v335 = vld [vmem:[%s198 + $0x248] sm:$0xff]
      %v336 = vld [vmem:[%s198 + $0x250] sm:$0xff]
      %v337 = vld [vmem:[%s198 + $0x258] sm:$0xff]
      %v338 = vld [vmem:[%s198 + $0x260] sm:$0xff]
      %v339 = vld [vmem:[%s198 + $0x268] sm:$0xff]
      %v340 = vld [vmem:[%s198 + $0x270] sm:$0xff]
      %v341 = vld [vmem:[%s198 + $0x278] sm:$0xff]
      %v342 = vld [vmem:[%s198 + $0x280] sm:$0xff]
      %v343 = vld [vmem:[%s198 + $0x288] sm:$0xff]
      %v344 = vld [vmem:[%s198 + $0x290] sm:$0xff]
      %v345 = vld [vmem:[%s198 + $0x298] sm:$0xff]
      %v346 = vld [vmem:[%s198 + $0x2a0] sm:$0xff]
      %v347 = vld [vmem:[%s198 + $0x2a8] sm:$0xff]
      %v348 = vld [vmem:[%s198 + $0x2b0] sm:$0xff]
      %v349 = vld [vmem:[%s198 + $0x2b8] sm:$0xff]
      %v350 = vld [vmem:[%s198 + $0x2c0] sm:$0xff]
      %v351 = vld [vmem:[%s198 + $0x2c8] sm:$0xff]
      %v352 = vld [vmem:[%s198 + $0x2d0] sm:$0xff]
      %v353 = vld [vmem:[%s198 + $0x2d8] sm:$0xff]
      %v354 = vld [vmem:[%s198 + $0x2e0] sm:$0xff]
      %v355 = vld [vmem:[%s198 + $0x2e8] sm:$0xff]
      %v356 = vld [vmem:[%s198 + $0x2f0] sm:$0xff]
      %v357 = vld [vmem:[%s198 + $0x2f8] sm:$0xff]
      %v358 = vld [vmem:[%s198 + $0x300] sm:$0xff]
      %v359 = vld [vmem:[%s198 + $0x308] sm:$0xff]
      %v360 = vld [vmem:[%s198 + $0x310] sm:$0xff]
      %v361 = vld [vmem:[%s198 + $0x318] sm:$0xff]
      %v362 = vld [vmem:[%s198 + $0x320] sm:$0xff]
      %v363 = vld [vmem:[%s198 + $0x328] sm:$0xff]
      %v364 = vld [vmem:[%s198 + $0x330] sm:$0xff]
      %v365 = vld [vmem:[%s198 + $0x338] sm:$0xff]
      %v366 = vld [vmem:[%s198 + $0x340] sm:$0xff]
      %v367 = vld [vmem:[%s198 + $0x348] sm:$0xff]
      %v368 = vld [vmem:[%s198 + $0x350] sm:$0xff]
      %v369 = vld [vmem:[%s198 + $0x358] sm:$0xff]
      %v370 = vld [vmem:[%s198 + $0x360] sm:$0xff]
      %v371 = vld [vmem:[%s198 + $0x368] sm:$0xff]
      %v372 = vld [vmem:[%s198 + $0x370] sm:$0xff]
      %v373 = vld [vmem:[%s198 + $0x378] sm:$0xff]
      %v374 = vld [vmem:[%s198 + $0x380] sm:$0xff]
      %v375 = vld [vmem:[%s198 + $0x388] sm:$0xff]
      %v376 = vld [vmem:[%s198 + $0x390] sm:$0xff]
      %v377 = vld [vmem:[%s198 + $0x398] sm:$0xff]
      %v378 = vld [vmem:[%s198 + $0x3a0] sm:$0xff]
      %v379 = vld [vmem:[%s198 + $0x3a8] sm:$0xff]
      %v380 = vld [vmem:[%s198 + $0x3b0] sm:$0xff]
      %v381 = vld [vmem:[%s198 + $0x3b8] sm:$0xff]
      %v382 = vld [vmem:[%s198 + $0x3c0] sm:$0xff]
      %v383 = vld [vmem:[%s198 + $0x3c8] sm:$0xff]
      %v384 = vld [vmem:[%s198 + $0x3d0] sm:$0xff]
      %v385 = vld [vmem:[%s198 + $0x3d8] sm:$0xff]
      %v386 = vld [vmem:[%s198 + $0x3e0] sm:$0xff]
      %v387 = vld [vmem:[%s198 + $0x3e8] sm:$0xff]
      %v388 = vld [vmem:[%s198 + $0x3f0] sm:$0xff]
      %v389 = vld [vmem:[%s198 + $0x3f8] sm:$0xff]
      %v390 = vld [vmem:[%s198 + $0x400] sm:$0xff]
      %v391 = vld [vmem:[%s198 + $0x408] sm:$0xff]
      %v392 = vld [vmem:[%s198 + $0x410] sm:$0xff]
      %v393 = vld [vmem:[%s198 + $0x418] sm:$0xff]
      %v394 = vld [vmem:[%s198 + $0x420] sm:$0xff]
      %v395 = vld [vmem:[%s198 + $0x428] sm:$0xff]
      %v396 = vld [vmem:[%s198 + $0x430] sm:$0xff]
      %v397 = vld [vmem:[%s198 + $0x438] sm:$0xff]
      %v398 = vld [vmem:[%s198 + $0x440] sm:$0xff]
      %v399 = vld [vmem:[%s198 + $0x448] sm:$0xff]
      %v400 = vld [vmem:[%s198 + $0x450] sm:$0xff]
      %v401 = vld [vmem:[%s198 + $0x458] sm:$0xff]
      %v402 = vld [vmem:[%s198 + $0x460] sm:$0xff]
      %v403 = vld [vmem:[%s198 + $0x468] sm:$0xff]
      %v404 = vld [vmem:[%s198 + $0x470] sm:$0xff]
      %v405 = vld [vmem:[%s198 + $0x478] sm:$0xff]
      %v406 = vld [vmem:[%s198 + $0x480] sm:$0xff]
      %v407 = vld [vmem:[%s198 + $0x488] sm:$0xff]
      %v408 = vld [vmem:[%s198 + $0x490] sm:$0xff]
      %v409 = vld [vmem:[%s198 + $0x498] sm:$0xff]
      %v410 = vld [vmem:[%s198 + $0x4a0] sm:$0xff]
      %v411 = vld [vmem:[%s198 + $0x4a8] sm:$0xff]
      %v412 = vld [vmem:[%s198 + $0x4b0] sm:$0xff]
      %v413 = vld [vmem:[%s198 + $0x4b8] sm:$0xff]
      %v414 = vld [vmem:[%s198 + $0x4c0] sm:$0xff]
      %v415 = vld [vmem:[%s198 + $0x4c8] sm:$0xff]
      %v416 = vld [vmem:[%s198 + $0x4d0] sm:$0xff]
      %v417 = vld [vmem:[%s198 + $0x4d8] sm:$0xff]
      %v418 = vld [vmem:[%s198 + $0x4e0] sm:$0xff]
      %v419 = vld [vmem:[%s198 + $0x4e8] sm:$0xff]
      %v420 = vld [vmem:[%s198 + $0x4f0] sm:$0xff]
      %v421 = vld [vmem:[%s198 + $0x4f8] sm:$0xff]
      %v422 = vld [vmem:[%s198 + $0x500] sm:$0xff]
      %v423 = vld [vmem:[%s198 + $0x508] sm:$0xff]
      %v424 = vld [vmem:[%s198 + $0x510] sm:$0xff]
      %v425 = vld [vmem:[%s198 + $0x518] sm:$0xff]
      %v426 = vld [vmem:[%s198 + $0x520] sm:$0xff]
      %v427 = vld [vmem:[%s198 + $0x528] sm:$0xff]
      %v428 = vld [vmem:[%s198 + $0x530] sm:$0xff]
      %v429 = vld [vmem:[%s198 + $0x538] sm:$0xff]
      %v430 = vld [vmem:[%s198 + $0x540] sm:$0xff]
      %v431 = vld [vmem:[%s198 + $0x548] sm:$0xff]
      %v432 = vld [vmem:[%s198 + $0x550] sm:$0xff]
      %v433 = vld [vmem:[%s198 + $0x558] sm:$0xff]
      %v434 = vld [vmem:[%s198 + $0x560] sm:$0xff]
      %v435 = vld [vmem:[%s198 + $0x568] sm:$0xff]
      %v436 = vld [vmem:[%s198 + $0x570] sm:$0xff]
      %v437 = vld [vmem:[%s198 + $0x578] sm:$0xff]
      %v438 = vld [vmem:[%s198 + $0x580] sm:$0xff]
      %v439 = vld [vmem:[%s198 + $0x588] sm:$0xff]
      %v440 = vld [vmem:[%s198 + $0x590] sm:$0xff]
      %v441 = vld [vmem:[%s198 + $0x598] sm:$0xff]
      %v442 = vld [vmem:[%s198 + $0x5a0] sm:$0xff]
      %v443 = vld [vmem:[%s198 + $0x5a8] sm:$0xff]
      %v444 = vld [vmem:[%s198 + $0x5b0] sm:$0xff]
      %v445 = vld [vmem:[%s198 + $0x5b8] sm:$0xff]
      %v446 = vld [vmem:[%s198 + $0x5c0] sm:$0xff]
      %v447 = vld [vmem:[%s198 + $0x5c8] sm:$0xff]
      %v448 = vld [vmem:[%s198 + $0x5d0] sm:$0xff]
      %v449 = vld [vmem:[%s198 + $0x5d8] sm:$0xff]
      %v450 = vld [vmem:[%s198 + $0x5e0] sm:$0xff]
      %v451 = vld [vmem:[%s198 + $0x5e8] sm:$0xff]
      %v452 = vld [vmem:[%s198 + $0x5f0] sm:$0xff]
      %v453 = vld [vmem:[%s198 + $0x5f8] sm:$0xff]
      %v454 = vld [vmem:[%s198 + $0x600] sm:$0xff]
      %v455 = vld [vmem:[%s198 + $0x608] sm:$0xff]
      %v456 = vld [vmem:[%s198 + $0x610] sm:$0xff]
      %v457 = vld [vmem:[%s198 + $0x618] sm:$0xff]
      %v458 = vld [vmem:[%s198 + $0x620] sm:$0xff]
      %v459 = vld [vmem:[%s198 + $0x628] sm:$0xff]
      %v460 = vld [vmem:[%s198 + $0x630] sm:$0xff]
      %v461 = vld [vmem:[%s198 + $0x638] sm:$0xff]
      %v462 = vld [vmem:[%s198 + $0x640] sm:$0xff]
      %v463 = vld [vmem:[%s198 + $0x648] sm:$0xff]
      %v464 = vld [vmem:[%s198 + $0x650] sm:$0xff]
      %v465 = vld [vmem:[%s198 + $0x658] sm:$0xff]
      %v466 = vld [vmem:[%s198 + $0x660] sm:$0xff]
      %v467 = vld [vmem:[%s198 + $0x668] sm:$0xff]
      %v468 = vld [vmem:[%s198 + $0x670] sm:$0xff]
      %v469 = vld [vmem:[%s198 + $0x678] sm:$0xff]
      %v470 = vld [vmem:[%s198 + $0x680] sm:$0xff]
      %v471 = vld [vmem:[%s198 + $0x688] sm:$0xff]
      %v472 = vld [vmem:[%s198 + $0x690] sm:$0xff]
      %v473 = vld [vmem:[%s198 + $0x698] sm:$0xff]
      %v474 = vld [vmem:[%s198 + $0x6a0] sm:$0xff]
      %v475 = vld [vmem:[%s198 + $0x6a8] sm:$0xff]
      %v476 = vld [vmem:[%s198 + $0x6b0] sm:$0xff]
      %v477 = vld [vmem:[%s198 + $0x6b8] sm:$0xff]
      %v478 = vld [vmem:[%s198 + $0x6c0] sm:$0xff]
      %v479 = vld [vmem:[%s198 + $0x6c8] sm:$0xff]
      %v480 = vld [vmem:[%s198 + $0x6d0] sm:$0xff]
      %v481 = vld [vmem:[%s198 + $0x6d8] sm:$0xff]
      %v482 = vld [vmem:[%s198 + $0x6e0] sm:$0xff]
      %v483 = vld [vmem:[%s198 + $0x6e8] sm:$0xff]
      %v484 = vld [vmem:[%s198 + $0x6f0] sm:$0xff]
      %v485 = vld [vmem:[%s198 + $0x6f8] sm:$0xff]
      %v486 = vld [vmem:[%s198 + $0x700] sm:$0xff]
      %v487 = vld [vmem:[%s198 + $0x708] sm:$0xff]
      %v488 = vld [vmem:[%s198 + $0x710] sm:$0xff]
      %v489 = vld [vmem:[%s198 + $0x718] sm:$0xff]
      %v490 = vld [vmem:[%s198 + $0x720] sm:$0xff]
      %v491 = vld [vmem:[%s198 + $0x728] sm:$0xff]
      %v492 = vld [vmem:[%s198 + $0x730] sm:$0xff]
      %v493 = vld [vmem:[%s198 + $0x738] sm:$0xff]
      %v494 = vld [vmem:[%s198 + $0x740] sm:$0xff]
      %v495 = vld [vmem:[%s198 + $0x748] sm:$0xff]
      %v496 = vld [vmem:[%s198 + $0x750] sm:$0xff]
      %v497 = vld [vmem:[%s198 + $0x758] sm:$0xff]
      %v498 = vld [vmem:[%s198 + $0x760] sm:$0xff]
      %v499 = vld [vmem:[%s198 + $0x768] sm:$0xff]
      %v500 = vld [vmem:[%s198 + $0x770] sm:$0xff]
      %v501 = vld [vmem:[%s198 + $0x778] sm:$0xff]
      %v502 = vld [vmem:[%s198 + $0x780] sm:$0xff]
      %v503 = vld [vmem:[%s198 + $0x788] sm:$0xff]
      %v504 = vld [vmem:[%s198 + $0x790] sm:$0xff]
      %v505 = vld [vmem:[%s198 + $0x798] sm:$0xff]
      %v506 = vld [vmem:[%s198 + $0x7a0] sm:$0xff]
      %v507 = vld [vmem:[%s198 + $0x7a8] sm:$0xff]
      %v508 = vld [vmem:[%s198 + $0x7b0] sm:$0xff]
      %v509 = vld [vmem:[%s198 + $0x7b8] sm:$0xff]
      %v510 = vld [vmem:[%s198 + $0x7c0] sm:$0xff]
      %v511 = vld [vmem:[%s198 + $0x7c8] sm:$0xff]
      %v512 = vld [vmem:[%s198 + $0x7d0] sm:$0xff]
      %v513 = vld [vmem:[%s198 + $0x7d8] sm:$0xff]
      %v514 = vld [vmem:[%s198 + $0x7e0] sm:$0xff]
      %v515 = vld [vmem:[%s198 + $0x7e8] sm:$0xff]
      %v516 = vld [vmem:[%s198 + $0x7f0] sm:$0xff]
      %v517 = vld [vmem:[%s198 + $0x7f8] sm:$0xff]
      %v518 = vld [vmem:[%s198 + $0x800] sm:$0xff]
      %v519 = vld [vmem:[%s198 + $0x808] sm:$0xff]
      %v520 = vld [vmem:[%s198 + $0x810] sm:$0xff]
      %v521 = vld [vmem:[%s198 + $0x818] sm:$0xff]
      %v522 = vld [vmem:[%s198 + $0x820] sm:$0xff]
      %v523 = vld [vmem:[%s198 + $0x828] sm:$0xff]
      %v524 = vld [vmem:[%s198 + $0x830] sm:$0xff]
      %v525 = vld [vmem:[%s198 + $0x838] sm:$0xff]
      %v526 = vld [vmem:[%s198 + $0x840] sm:$0xff]
      %v527 = vld [vmem:[%s198 + $0x848] sm:$0xff]
      %v528 = vld [vmem:[%s198 + $0x850] sm:$0xff]
      %v529 = vld [vmem:[%s198 + $0x858] sm:$0xff]
      %v530 = vld [vmem:[%s198 + $0x860] sm:$0xff]
      %v531 = vld [vmem:[%s198 + $0x868] sm:$0xff]
      %v532 = vld [vmem:[%s198 + $0x870] sm:$0xff]
      %v533 = vld [vmem:[%s198 + $0x878] sm:$0xff]
      %v534 = vld [vmem:[%s198 + $0x880] sm:$0xff]
      %v535 = vld [vmem:[%s198 + $0x888] sm:$0xff]
      %v536 = vld [vmem:[%s198 + $0x890] sm:$0xff]
      %v537 = vld [vmem:[%s198 + $0x898] sm:$0xff]
      %v538 = vld [vmem:[%s198 + $0x8a0] sm:$0xff]
      %v539 = vld [vmem:[%s198 + $0x8a8] sm:$0xff]
      %v540 = vld [vmem:[%s198 + $0x8b0] sm:$0xff]
      %v541 = vld [vmem:[%s198 + $0x8b8] sm:$0xff]
      %v542 = vld [vmem:[%s198 + $0x8c0] sm:$0xff]
      %v543 = vld [vmem:[%s198 + $0x8c8] sm:$0xff]
      %v544 = vld [vmem:[%s198 + $0x8d0] sm:$0xff]
      %v545 = vld [vmem:[%s198 + $0x8d8] sm:$0xff]
      %v546 = vld [vmem:[%s198 + $0x8e0] sm:$0xff]
      %v547 = vld [vmem:[%s198 + $0x8e8] sm:$0xff]
      %v548 = vld [vmem:[%s198 + $0x8f0] sm:$0xff]
      %v549 = vld [vmem:[%s198 + $0x8f8] sm:$0xff]
      %v550 = vld [vmem:[%s198 + $0x900] sm:$0xff]
      %v551 = vld [vmem:[%s198 + $0x908] sm:$0xff]
      %v552 = vld [vmem:[%s198 + $0x910] sm:$0xff]
      %v553 = vld [vmem:[%s198 + $0x918] sm:$0xff]
      %v554 = vld [vmem:[%s198 + $0x920] sm:$0xff]
      %v555 = vld [vmem:[%s198 + $0x928] sm:$0xff]
      %v556 = vld [vmem:[%s198 + $0x930] sm:$0xff]
      %v557 = vld [vmem:[%s198 + $0x938] sm:$0xff]
      %v558 = vld [vmem:[%s198 + $0x940] sm:$0xff]
      %v559 = vld [vmem:[%s198 + $0x948] sm:$0xff]
      %v560 = vld [vmem:[%s198 + $0x950] sm:$0xff]
      %v561 = vld [vmem:[%s198 + $0x958] sm:$0xff]
      %v562 = vld [vmem:[%s198 + $0x960] sm:$0xff]
      %v563 = vld [vmem:[%s198 + $0x968] sm:$0xff]
      %v564 = vld [vmem:[%s198 + $0x970] sm:$0xff]
      %v565 = vld [vmem:[%s198 + $0x978] sm:$0xff]
      %v566 = vld [vmem:[%s198 + $0x980] sm:$0xff]
      %v567 = vld [vmem:[%s198 + $0x988] sm:$0xff]
      %v568 = vld [vmem:[%s198 + $0x990] sm:$0xff]
      %v569 = vld [vmem:[%s198 + $0x998] sm:$0xff]
      %v570 = vld [vmem:[%s198 + $0x9a0] sm:$0xff]
      %v571 = vld [vmem:[%s198 + $0x9a8] sm:$0xff]
      %v572 = vld [vmem:[%s198 + $0x9b0] sm:$0xff]
      %v573 = vld [vmem:[%s198 + $0x9b8] sm:$0xff]
      %v574 = vld [vmem:[%s198 + $0x9c0] sm:$0xff]
      %v575 = vld [vmem:[%s198 + $0x9c8] sm:$0xff]
      %v576 = vld [vmem:[%s198 + $0x9d0] sm:$0xff]
      %v577 = vld [vmem:[%s198 + $0x9d8] sm:$0xff]
      %v578 = vld [vmem:[%s198 + $0x9e0] sm:$0xff]
      %v579 = vld [vmem:[%s198 + $0x9e8] sm:$0xff]
      %v580 = vld [vmem:[%s198 + $0x9f0] sm:$0xff]
      %v581 = vld [vmem:[%s198 + $0x9f8] sm:$0xff]
      %v582 = vld [vmem:[%s198 + $0xa00] sm:$0xff]
      %v583 = vld [vmem:[%s198 + $0xa08] sm:$0xff]
      %v584 = vld [vmem:[%s198 + $0xa10] sm:$0xff]
      %v585 = vld [vmem:[%s198 + $0xa18] sm:$0xff]
      %v586 = vld [vmem:[%s198 + $0xa20] sm:$0xff]
      %v587 = vld [vmem:[%s198 + $0xa28] sm:$0xff]
      %v588 = vld [vmem:[%s198 + $0xa30] sm:$0xff]
      %v589 = vld [vmem:[%s198 + $0xa38] sm:$0xff]
      %v590 = vld [vmem:[%s198 + $0xa40] sm:$0xff]
      %v591 = vld [vmem:[%s198 + $0xa48] sm:$0xff]
      %v592 = vld [vmem:[%s198 + $0xa50] sm:$0xff]
      %v593 = vld [vmem:[%s198 + $0xa58] sm:$0xff]
      %v594 = vld [vmem:[%s198 + $0xa60] sm:$0xff]
      %v595 = vld [vmem:[%s198 + $0xa68] sm:$0xff]
      %v596 = vld [vmem:[%s198 + $0xa70] sm:$0xff]
      %v597 = vld [vmem:[%s198 + $0xa78] sm:$0xff]
      %v598 = vld [vmem:[%s198 + $0xa80] sm:$0xff]
      %v599 = vld [vmem:[%s198 + $0xa88] sm:$0xff]
      %v600 = vld [vmem:[%s198 + $0xa90] sm:$0xff]
      %v601 = vld [vmem:[%s198 + $0xa98] sm:$0xff]
      %v602 = vld [vmem:[%s198 + $0xaa0] sm:$0xff]
      %v603 = vld [vmem:[%s198 + $0xaa8] sm:$0xff]
      %v604 = vld [vmem:[%s198 + $0xab0] sm:$0xff]
      %v605 = vld [vmem:[%s198 + $0xab8] sm:$0xff]
      %v606 = vld [vmem:[%s198 + $0xac0] sm:$0xff]
      %v607 = vld [vmem:[%s198 + $0xac8] sm:$0xff]
      %v608 = vld [vmem:[%s198 + $0xad0] sm:$0xff]
      %v609 = vld [vmem:[%s198 + $0xad8] sm:$0xff]
      %v610 = vld [vmem:[%s198 + $0xae0] sm:$0xff]
      %v611 = vld [vmem:[%s198 + $0xae8] sm:$0xff]
      %v612 = vld [vmem:[%s198 + $0xaf0] sm:$0xff]
      %v613 = vld [vmem:[%s198 + $0xaf8] sm:$0xff]
      %v614 = vld [vmem:[%s198 + $0xb00] sm:$0xff]
      %v615 = vld [vmem:[%s198 + $0xb08] sm:$0xff]
      %v616 = vld [vmem:[%s198 + $0xb10] sm:$0xff]
      %v617 = vld [vmem:[%s198 + $0xb18] sm:$0xff]
      %v618 = vld [vmem:[%s198 + $0xb20] sm:$0xff]
      %v619 = vld [vmem:[%s198 + $0xb28] sm:$0xff]
      %v620 = vld [vmem:[%s198 + $0xb30] sm:$0xff]
      %v621 = vld [vmem:[%s198 + $0xb38] sm:$0xff]
      %v622 = vld [vmem:[%s198 + $0xb40] sm:$0xff]
      %v623 = vld [vmem:[%s198 + $0xb48] sm:$0xff]
      %v624 = vld [vmem:[%s198 + $0xb50] sm:$0xff]
      %v625 = vld [vmem:[%s198 + $0xb58] sm:$0xff]
      %v626 = vld [vmem:[%s198 + $0xb60] sm:$0xff]
      %v627 = vld [vmem:[%s198 + $0xb68] sm:$0xff]
      %v628 = vld [vmem:[%s198 + $0xb70] sm:$0xff]
      %v629 = vld [vmem:[%s198 + $0xb78] sm:$0xff]
      %v630 = vld [vmem:[%s198 + $0xb80] sm:$0xff]
      %v631 = vld [vmem:[%s198 + $0xb88] sm:$0xff]
      %v632 = vld [vmem:[%s198 + $0xb90] sm:$0xff]
      %v633 = vld [vmem:[%s198 + $0xb98] sm:$0xff]
      %v634 = vld [vmem:[%s198 + $0xba0] sm:$0xff]
      %v635 = vld [vmem:[%s198 + $0xba8] sm:$0xff]
      %v636 = vld [vmem:[%s198 + $0xbb0] sm:$0xff]
      %v637 = vld [vmem:[%s198 + $0xbb8] sm:$0xff]
      %v638 = vld [vmem:[%s198 + $0xbc0] sm:$0xff]
      %v639 = vld [vmem:[%s198 + $0xbc8] sm:$0xff]
      %v640 = vld [vmem:[%s198 + $0xbd0] sm:$0xff]
      %v641 = vld [vmem:[%s198 + $0xbd8] sm:$0xff]
      %v642 = vld [vmem:[%s198 + $0xbe0] sm:$0xff]
      %v643 = vld [vmem:[%s198 + $0xbe8] sm:$0xff]
      %v644 = vld [vmem:[%s198 + $0xbf0] sm:$0xff]
      %v645 = vld [vmem:[%s198 + $0xbf8] sm:$0xff]
      %v646 = vld [vmem:[%s198 + $0xc00] sm:$0xff]
      %v647 = vld [vmem:[%s198 + $0xc08] sm:$0xff]
      %v648 = vld [vmem:[%s198 + $0xc10] sm:$0xff]
      %v649 = vld [vmem:[%s198 + $0xc18] sm:$0xff]
      %v650 = vld [vmem:[%s198 + $0xc20] sm:$0xff]
      %v651 = vld [vmem:[%s198 + $0xc28] sm:$0xff]
      %v652 = vld [vmem:[%s198 + $0xc30] sm:$0xff]
      %v653 = vld [vmem:[%s198 + $0xc38] sm:$0xff]
      %v654 = vld [vmem:[%s198 + $0xc40] sm:$0xff]
      %v655 = vld [vmem:[%s198 + $0xc48] sm:$0xff]
      %v656 = vld [vmem:[%s198 + $0xc50] sm:$0xff]
      %v657 = vld [vmem:[%s198 + $0xc58] sm:$0xff]
      %v658 = vld [vmem:[%s198 + $0xc60] sm:$0xff]
      %v659 = vld [vmem:[%s198 + $0xc68] sm:$0xff]
      %v660 = vld [vmem:[%s198 + $0xc70] sm:$0xff]
      %v661 = vld [vmem:[%s198 + $0xc78] sm:$0xff]
      %v662 = vld [vmem:[%s2] sm:$0xff]
      %v663 = vld [vmem:[%s2 + $0x8] sm:$0xff]
      %v664 = vld [vmem:[%s2 + $0x10] sm:$0xff]
      %v665 = vld [vmem:[%s2 + $0x18] sm:$0xff]
      %667 = vset.pattern.permute.xlu0 0
      %668 = vperm.xlu0 %667, %v662
      %v669 = vpop.permute.xlu0 %668
      %672 = vset.pattern.permute.xlu0 0
      %673 = vperm.xlu0 %672, %v663
      %v674 = vpop.permute.xlu0 %673
      %677 = vset.pattern.permute.xlu0 0
      %678 = vperm.xlu0 %677, %v664
      %v679 = vpop.permute.xlu0 %678
      %682 = vset.pattern.permute.xlu0 0
      %683 = vperm.xlu0 %682, %v665
      %v684 = vpop.permute.xlu0 %683
      %vm686 = vcmask 523264
      %v688 = vsel %vm686, %v222, 0
      %v691 = vsel %vm686, %v235, 0
      %v694 = vsel %vm686, %v248, 0
      %v697 = vsel %vm686, %v261, 0
      %699 = vmatprep.subr.mxu0 %v263
      %700 = vmatpush1.msra.mxu0 %v262
      %701 = vmatprep.subr.mxu0 %v265
      %702 = vmatpush1.msra.mxu0 %v264
      %703 = vmatprep.subr.mxu0 %v267
      %704 = vmatpush1.msra.mxu0 %v266
      %705 = vmatprep.subr.mxu0 %v269
      %706 = vmatpush1.msra.mxu0 %v268
      %707 = vmatprep.subr.mxu0 %v271
      %708 = vmatpush1.msra.mxu0 %v270
      %709 = vmatprep.subr.mxu0 %v273
      %710 = vmatpush1.msra.mxu0 %v272
      %711 = vmatprep.subr.mxu0 %v275
      %712 = vmatpush1.msra.mxu0 %v274
      %713 = vmatprep.subr.mxu0 %v277
      %714 = vmatpush1.msra.mxu0 %v276
      %715 = vmatprep.subr.mxu0 %v279
      %716 = vmatpush1.msra.mxu0 %v278
      %717 = vmatprep.subr.mxu0 %v281
      %718 = vmatpush1.msra.mxu0 %v280
      %719 = vmatprep.subr.mxu0 %v283
      %720 = vmatpush1.msra.mxu0 %v282
      %721 = vmatprep.subr.mxu0 %v285
      %722 = vmatpush1.msra.mxu0 %v284
      %723 = vmatprep.subr.mxu0 %v287
      %724 = vmatpush1.msra.mxu0 %v286
      %725 = vmatprep.subr.mxu0 %v289
      %726 = vmatpush1.msra.mxu0 %v288
      %727 = vmatprep.subr.mxu0 %v291
      %728 = vmatpush1.msra.mxu0 %v290
      %729 = vmatprep.subr.mxu0 %v293
      %730 = vmatpush1.msra.mxu0 %v292
      %731 = vmatprep.subr.mxu0 %v295
      %732 = vmatpush1.msra.mxu0 %v294
      %733 = vmatprep.subr.mxu0 %v297
      %734 = vmatpush1.msra.mxu0 %v296
      %735 = vmatprep.subr.mxu0 %v299
      %736 = vmatpush1.msra.mxu0 %v298
      %737 = vmatprep.subr.mxu0 %v301
      %738 = vmatpush1.msra.mxu0 %v300
      %739 = vmatprep.subr.mxu0 %v303
      %740 = vmatpush1.msra.mxu0 %v302
      %741 = vmatprep.subr.mxu0 %v305
      %742 = vmatpush1.msra.mxu0 %v304
      %743 = vmatprep.subr.mxu0 %v307
      %744 = vmatpush1.msra.mxu0 %v306
      %745 = vmatprep.subr.mxu0 %v309
      %746 = vmatpush1.msra.mxu0 %v308
      %747 = vmatprep.subr.mxu0 %v311
      %748 = vmatpush1.msra.mxu0 %v310
      %749 = vmatprep.subr.mxu0 %v313
      %750 = vmatpush1.msra.mxu0 %v312
      %751 = vmatprep.subr.mxu0 %v315
      %752 = vmatpush1.msra.mxu0 %v314
      %753 = vmatprep.subr.mxu0 %v317
      %754 = vmatpush1.msra.mxu0 %v316
      %755 = vmatprep.subr.mxu0 %v319
      %756 = vmatpush1.msra.mxu0 %v318
      %757 = vmatprep.subr.mxu0 %v321
      %758 = vmatpush1.msra.mxu0 %v320
      %759 = vmatprep.subr.mxu0 %v323
      %760 = vmatpush1.msra.mxu0 %v322
      %761 = vmatprep.subr.mxu0 %v325
      %762 = vmatpush1.msra.mxu0 %v324
      %763 = vmatprep.mubr.f32.mxu0 %v211
      %764 = vmatmul.mubr.f32.gmra.mrb[0].mxu0 %v210
      %v765 = vpop.f32.mrb[0].mxu0
      %v766 = vadd.f32 %v669, %v765
      %v767 = vpop.f32.mrb[0].mxu0
      %v768 = vadd.f32 %v669, %v767
      %769 = vmatprep.mubr.f32.mxu0 %v224
      %770 = vmatmul.mubr.f32.gmra.mrb[0].mxu0 %v223
      %v771 = vpop.f32.mrb[0].mxu0
      %v772 = vadd.f32 %v674, %v771
      %v773 = vpop.f32.mrb[0].mxu0
      %v774 = vadd.f32 %v674, %v773
      %775 = vmatprep.mubr.f32.mxu0 %v237
      %776 = vmatmul.mubr.f32.gmra.mrb[0].mxu0 %v236
      %v777 = vpop.f32.mrb[0].mxu0
      %v778 = vadd.f32 %v679, %v777
      %v779 = vpop.f32.mrb[0].mxu0
      %v780 = vadd.f32 %v679, %v779
      %781 = vmatprep.mubr.f32.mxu0 %v250
      %782 = vmatmul.mubr.f32.gmra.mrb[0].mxu0 %v249
      %v783 = vpop.f32.mrb[0].mxu0
      %v784 = vadd.f32 %v684, %v783
      %v785 = vpop.f32.mrb[0].mxu0
      %v786 = vadd.f32 %v684, %v785
      %787 = vdwg.mxu0
      %788 = vmatprep.subr.mxu0 %v327
      %789 = vmatpush1.msra.mxu0 %v326
      %790 = vmatprep.subr.mxu0 %v329
      %791 = vmatpush1.msra.mxu0 %v328
      %792 = vmatprep.subr.mxu0 %v331
      %793 = vmatpush1.msra.mxu0 %v330
      %794 = vmatprep.subr.mxu0 %v333
      %795 = vmatpush1.msra.mxu0 %v332
      %796 = vmatprep.subr.mxu0 %v335
      %797 = vmatpush1.msra.mxu0 %v334
      %798 = vmatprep.subr.mxu0 %v337
      %799 = vmatpush1.msra.mxu0 %v336
      %800 = vmatprep.subr.mxu0 %v339
      %801 = vmatpush1.msra.mxu0 %v338
      %802 = vmatprep.subr.mxu0 %v341
      %803 = vmatpush1.msra.mxu0 %v340
      %804 = vmatprep.subr.mxu0 %v343
      %805 = vmatpush1.msra.mxu0 %v342
      %806 = vmatprep.subr.mxu0 %v345
      %807 = vmatpush1.msra.mxu0 %v344
      %808 = vmatprep.subr.mxu0 %v347
      %809 = vmatpush1.msra.mxu0 %v346
      %810 = vmatprep.subr.mxu0 %v349
      %811 = vmatpush1.msra.mxu0 %v348
      %812 = vmatprep.subr.mxu0 %v351
      %813 = vmatpush1.msra.mxu0 %v350
      %814 = vmatprep.subr.mxu0 %v353
      %815 = vmatpush1.msra.mxu0 %v352
      %816 = vmatprep.subr.mxu0 %v355
      %817 = vmatpush1.msra.mxu0 %v354
      %818 = vmatprep.subr.mxu0 %v357
      %819 = vmatpush1.msra.mxu0 %v356
      %820 = vmatprep.subr.mxu0 %v359
      %821 = vmatpush1.msra.mxu0 %v358
      %822 = vmatprep.subr.mxu0 %v361
      %823 = vmatpush1.msra.mxu0 %v360
      %824 = vmatprep.subr.mxu0 %v363
      %825 = vmatpush1.msra.mxu0 %v362
      %826 = vmatprep.subr.mxu0 %v365
      %827 = vmatpush1.msra.mxu0 %v364
      %828 = vmatprep.subr.mxu0 %v367
      %829 = vmatpush1.msra.mxu0 %v366
      %830 = vmatprep.subr.mxu0 %v369
      %831 = vmatpush1.msra.mxu0 %v368
      %832 = vmatprep.subr.mxu0 %v371
      %833 = vmatpush1.msra.mxu0 %v370
      %834 = vmatprep.subr.mxu0 %v373
      %835 = vmatpush1.msra.mxu0 %v372
      %836 = vmatprep.subr.mxu0 %v375
      %837 = vmatpush1.msra.mxu0 %v374
      %838 = vmatprep.subr.mxu0 %v377
      %839 = vmatpush1.msra.mxu0 %v376
      %840 = vmatprep.subr.mxu0 %v379
      %841 = vmatpush1.msra.mxu0 %v378
      %842 = vmatprep.subr.mxu0 %v381
      %843 = vmatpush1.msra.mxu0 %v380
      %844 = vmatprep.subr.mxu0 %v383
      %845 = vmatpush1.msra.mxu0 %v382
      %846 = vmatprep.subr.mxu0 %v385
      %847 = vmatpush1.msra.mxu0 %v384
      %848 = vmatprep.subr.mxu0 %v387
      %849 = vmatpush1.msra.mxu0 %v386
      %850 = vmatprep.subr.mxu0 %v389
      %851 = vmatpush1.msra.mxu0 %v388
      %852 = vmatprep.mubr.f32.mxu0 %v213
      %853 = vmatmul.mubr.f32.gmra.mrb[0].mxu0 %v212
      %v854 = vpop.f32.mrb[0].mxu0
      %v855 = vadd.f32 %v766, %v854
      %v856 = vpop.f32.mrb[0].mxu0
      %v857 = vadd.f32 %v768, %v856
      %858 = vmatprep.mubr.f32.mxu0 %v226
      %859 = vmatmul.mubr.f32.gmra.mrb[0].mxu0 %v225
      %v860 = vpop.f32.mrb[0].mxu0
      %v861 = vadd.f32 %v772, %v860
      %v862 = vpop.f32.mrb[0].mxu0
      %v863 = vadd.f32 %v774, %v862
      %864 = vmatprep.mubr.f32.mxu0 %v239
      %865 = vmatmul.mubr.f32.gmra.mrb[0].mxu0 %v238
      %v866 = vpop.f32.mrb[0].mxu0
      %v867 = vadd.f32 %v778, %v866
      %v868 = vpop.f32.mrb[0].mxu0
      %v869 = vadd.f32 %v780, %v868
      %870 = vmatprep.mubr.f32.mxu0 %v252
      %871 = vmatmul.mubr.f32.gmra.mrb[0].mxu0 %v251
      %v872 = vpop.f32.mrb[0].mxu0
      %v873 = vadd.f32 %v784, %v872
      %v874 = vpop.f32.mrb[0].mxu0
      %v875 = vadd.f32 %v786, %v874
      %876 = vdwg.mxu0
      %877 = vmatprep.subr.mxu0 %v391
      %878 = vmatpush1.msra.mxu0 %v390
      %879 = vmatprep.subr.mxu0 %v393
      %880 = vmatpush1.msra.mxu0 %v392
      %881 = vmatprep.subr.mxu0 %v395
      %882 = vmatpush1.msra.mxu0 %v394
      %883 = vmatprep.subr.mxu0 %v397
      %884 = vmatpush1.msra.mxu0 %v396
      %885 = vmatprep.subr.mxu0 %v399
      %886 = vmatpush1.msra.mxu0 %v398
      %887 = vmatprep.subr.mxu0 %v401
      %888 = vmatpush1.msra.mxu0 %v400
      %889 = vmatprep.subr.mxu0 %v403
      %890 = vmatpush1.msra.mxu0 %v402
      %891 = vmatprep.subr.mxu0 %v405
      %892 = vmatpush1.msra.mxu0 %v404
      %893 = vmatprep.subr.mxu0 %v407
      %894 = vmatpush1.msra.mxu0 %v406
      %895 = vmatprep.subr.mxu0 %v409
      %896 = vmatpush1.msra.mxu0 %v408
      %897 = vmatprep.subr.mxu0 %v411
      %898 = vmatpush1.msra.mxu0 %v410
      %899 = vmatprep.subr.mxu0 %v413
      %900 = vmatpush1.msra.mxu0 %v412
      %901 = vmatprep.subr.mxu0 %v415
      %902 = vmatpush1.msra.mxu0 %v414
      %903 = vmatprep.subr.mxu0 %v417
      %904 = vmatpush1.msra.mxu0 %v416
      %905 = vmatprep.subr.mxu0 %v419
      %906 = vmatpush1.msra.mxu0 %v418
      %907 = vmatprep.subr.mxu0 %v421
      %908 = vmatpush1.msra.mxu0 %v420
      %909 = vmatprep.subr.mxu0 %v423
      %910 = vmatpush1.msra.mxu0 %v422
      %911 = vmatprep.subr.mxu0 %v425
      %912 = vmatpush1.msra.mxu0 %v424
      %913 = vmatprep.subr.mxu0 %v427
      %914 = vmatpush1.msra.mxu0 %v426
      %915 = vmatprep.subr.mxu0 %v429
      %916 = vmatpush1.msra.mxu0 %v428
      %917 = vmatprep.subr.mxu0 %v431
      %918 = vmatpush1.msra.mxu0 %v430
      %919 = vmatprep.subr.mxu0 %v433
      %920 = vmatpush1.msra.mxu0 %v432
      %921 = vmatprep.subr.mxu0 %v435
      %922 = vmatpush1.msra.mxu0 %v434
      %923 = vmatprep.subr.mxu0 %v437
      %924 = vmatpush1.msra.mxu0 %v436
      %925 = vmatprep.subr.mxu0 %v439
      %926 = vmatpush1.msra.mxu0 %v438
      %927 = vmatprep.subr.mxu0 %v441
      %928 = vmatpush1.msra.mxu0 %v440
      %929 = vmatprep.subr.mxu0 %v443
      %930 = vmatpush1.msra.mxu0 %v442
      %931 = vmatprep.subr.mxu0 %v445
      %932 = vmatpush1.msra.mxu0 %v444
      %933 = vmatprep.subr.mxu0 %v447
      %934 = vmatpush1.msra.mxu0 %v446
      %935 = vmatprep.subr.mxu0 %v449
      %936 = vmatpush1.msra.mxu0 %v448
      %937 = vmatprep.subr.mxu0 %v451
      %938 = vmatpush1.msra.mxu0 %v450
      %939 = vmatprep.subr.mxu0 %v453
      %940 = vmatpush1.msra.mxu0 %v452
      %941 = vmatprep.mubr.f32.mxu0 %v215
      %942 = vmatmul.mubr.f32.gmra.mrb[0].mxu0 %v214
      %v943 = vpop.f32.mrb[0].mxu0
      %v944 = vadd.f32 %v855, %v943
      %v945 = vpop.f32.mrb[0].mxu0
      %v946 = vadd.f32 %v857, %v945
      %947 = vmatprep.mubr.f32.mxu0 %v228
      %948 = vmatmul.mubr.f32.gmra.mrb[0].mxu0 %v227
      %v949 = vpop.f32.mrb[0].mxu0
      %v950 = vadd.f32 %v861, %v949
      %v951 = vpop.f32.mrb[0].mxu0
      %v952 = vadd.f32 %v863, %v951
      %953 = vmatprep.mubr.f32.mxu0 %v241
      %954 = vmatmul.mubr.f32.gmra.mrb[0].mxu0 %v240
      %v955 = vpop.f32.mrb[0].mxu0
      %v956 = vadd.f32 %v867, %v955
      %v957 = vpop.f32.mrb[0].mxu0
      %v958 = vadd.f32 %v869, %v957
      %959 = vmatprep.mubr.f32.mxu0 %v254
      %960 = vmatmul.mubr.f32.gmra.mrb[0].mxu0 %v253
      %v961 = vpop.f32.mrb[0].mxu0
      %v962 = vadd.f32 %v873, %v961
      %v963 = vpop.f32.mrb[0].mxu0
      %v964 = vadd.f32 %v875, %v963
      %965 = vdwg.mxu0
      %966 = vmatprep.subr.mxu0 %v455
      %967 = vmatpush1.msra.mxu0 %v454
      %968 = vmatprep.subr.mxu0 %v457
      %969 = vmatpush1.msra.mxu0 %v456
      %970 = vmatprep.subr.mxu0 %v459
      %971 = vmatpush1.msra.mxu0 %v458
      %972 = vmatprep.subr.mxu0 %v461
      %973 = vmatpush1.msra.mxu0 %v460
      %974 = vmatprep.subr.mxu0 %v463
      %975 = vmatpush1.msra.mxu0 %v462
      %976 = vmatprep.subr.mxu0 %v465
      %977 = vmatpush1.msra.mxu0 %v464
      %978 = vmatprep.subr.mxu0 %v467
      %979 = vmatpush1.msra.mxu0 %v466
      %980 = vmatprep.subr.mxu0 %v469
      %981 = vmatpush1.msra.mxu0 %v468
      %982 = vmatprep.subr.mxu0 %v471
      %983 = vmatpush1.msra.mxu0 %v470
      %984 = vmatprep.subr.mxu0 %v473
      %985 = vmatpush1.msra.mxu0 %v472
      %986 = vmatprep.subr.mxu0 %v475
      %987 = vmatpush1.msra.mxu0 %v474
      %988 = vmatprep.subr.mxu0 %v477
      %989 = vmatpush1.msra.mxu0 %v476
      %990 = vmatprep.subr.mxu0 %v479
      %991 = vmatpush1.msra.mxu0 %v478
      %992 = vmatprep.subr.mxu0 %v481
      %993 = vmatpush1.msra.mxu0 %v480
      %994 = vmatprep.subr.mxu0 %v483
      %995 = vmatpush1.msra.mxu0 %v482
      %996 = vmatprep.subr.mxu0 %v485
      %997 = vmatpush1.msra.mxu0 %v484
      %998 = vmatprep.subr.mxu0 %v487
      %999 = vmatpush1.msra.mxu0 %v486
      %1000 = vmatprep.subr.mxu0 %v489
      %1001 = vmatpush1.msra.mxu0 %v488
      %1002 = vmatprep.subr.mxu0 %v491
      %1003 = vmatpush1.msra.mxu0 %v490
      %1004 = vmatprep.subr.mxu0 %v493
      %1005 = vmatpush1.msra.mxu0 %v492
      %1006 = vmatprep.subr.mxu0 %v495
      %1007 = vmatpush1.msra.mxu0 %v494
      %1008 = vmatprep.subr.mxu0 %v497
      %1009 = vmatpush1.msra.mxu0 %v496
      %1010 = vmatprep.subr.mxu0 %v499
      %1011 = vmatpush1.msra.mxu0 %v498
      %1012 = vmatprep.subr.mxu0 %v501
      %1013 = vmatpush1.msra.mxu0 %v500
      %1014 = vmatprep.subr.mxu0 %v503
      %1015 = vmatpush1.msra.mxu0 %v502
      %1016 = vmatprep.subr.mxu0 %v505
      %1017 = vmatpush1.msra.mxu0 %v504
      %1018 = vmatprep.subr.mxu0 %v507
      %1019 = vmatpush1.msra.mxu0 %v506
      %1020 = vmatprep.subr.mxu0 %v509
      %1021 = vmatpush1.msra.mxu0 %v508
      %1022 = vmatprep.subr.mxu0 %v511
      %1023 = vmatpush1.msra.mxu0 %v510
      %1024 = vmatprep.subr.mxu0 %v513
      %1025 = vmatpush1.msra.mxu0 %v512
      %1026 = vmatprep.subr.mxu0 %v515
      %1027 = vmatpush1.msra.mxu0 %v514
      %1028 = vmatprep.subr.mxu0 %v517
      %1029 = vmatpush1.msra.mxu0 %v516
      %1030 = vmatprep.mubr.f32.mxu0 %v217
      %1031 = vmatmul.mubr.f32.gmra.mrb[0].mxu0 %v216
      %v1032 = vpop.f32.mrb[0].mxu0
      %v1033 = vadd.f32 %v944, %v1032
      %v1034 = vpop.f32.mrb[0].mxu0
      %v1035 = vadd.f32 %v946, %v1034
      %1036 = vmatprep.mubr.f32.mxu0 %v230
      %1037 = vmatmul.mubr.f32.gmra.mrb[0].mxu0 %v229
      %v1038 = vpop.f32.mrb[0].mxu0
      %v1039 = vadd.f32 %v950, %v1038
      %v1040 = vpop.f32.mrb[0].mxu0
      %v1041 = vadd.f32 %v952, %v1040
      %1042 = vmatprep.mubr.f32.mxu0 %v243
      %1043 = vmatmul.mubr.f32.gmra.mrb[0].mxu0 %v242
      %v1044 = vpop.f32.mrb[0].mxu0
      %v1045 = vadd.f32 %v956, %v1044
      %v1046 = vpop.f32.mrb[0].mxu0
      %v1047 = vadd.f32 %v958, %v1046
      %1048 = vmatprep.mubr.f32.mxu0 %v256
      %1049 = vmatmul.mubr.f32.gmra.mrb[0].mxu0 %v255
      %v1050 = vpop.f32.mrb[0].mxu0
      %v1051 = vadd.f32 %v962, %v1050
      %v1052 = vpop.f32.mrb[0].mxu0
      %v1053 = vadd.f32 %v964, %v1052
      %1054 = vdwg.mxu0
      %1055 = vmatprep.subr.mxu0 %v519
      %1056 = vmatpush1.msra.mxu0 %v518
      %1057 = vmatprep.subr.mxu0 %v521
      %1058 = vmatpush1.msra.mxu0 %v520
      %1059 = vmatprep.subr.mxu0 %v523
      %1060 = vmatpush1.msra.mxu0 %v522
      %1061 = vmatprep.subr.mxu0 %v525
      %1062 = vmatpush1.msra.mxu0 %v524
      %1063 = vmatprep.subr.mxu0 %v527
      %1064 = vmatpush1.msra.mxu0 %v526
      %1065 = vmatprep.subr.mxu0 %v529
      %1066 = vmatpush1.msra.mxu0 %v528
      %1067 = vmatprep.subr.mxu0 %v531
      %1068 = vmatpush1.msra.mxu0 %v530
      %1069 = vmatprep.subr.mxu0 %v533
      %1070 = vmatpush1.msra.mxu0 %v532
      %1071 = vmatprep.subr.mxu0 %v535
      %1072 = vmatpush1.msra.mxu0 %v534
      %1073 = vmatprep.subr.mxu0 %v537
      %1074 = vmatpush1.msra.mxu0 %v536
      %1075 = vmatprep.subr.mxu0 %v539
      %1076 = vmatpush1.msra.mxu0 %v538
      %1077 = vmatprep.subr.mxu0 %v541
      %1078 = vmatpush1.msra.mxu0 %v540
      %1079 = vmatprep.subr.mxu0 %v543
      %1080 = vmatpush1.msra.mxu0 %v542
      %1081 = vmatprep.subr.mxu0 %v545
      %1082 = vmatpush1.msra.mxu0 %v544
      %1083 = vmatprep.subr.mxu0 %v547
      %1084 = vmatpush1.msra.mxu0 %v546
      %1085 = vmatprep.subr.mxu0 %v549
      %1086 = vmatpush1.msra.mxu0 %v548
      %1087 = vmatprep.subr.mxu0 %v551
      %1088 = vmatpush1.msra.mxu0 %v550
      %1089 = vmatprep.subr.mxu0 %v553
      %1090 = vmatpush1.msra.mxu0 %v552
      %1091 = vmatprep.subr.mxu0 %v555
      %1092 = vmatpush1.msra.mxu0 %v554
      %1093 = vmatprep.subr.mxu0 %v557
      %1094 = vmatpush1.msra.mxu0 %v556
      %1095 = vmatprep.subr.mxu0 %v559
      %1096 = vmatpush1.msra.mxu0 %v558
      %1097 = vmatprep.subr.mxu0 %v561
      %1098 = vmatpush1.msra.mxu0 %v560
      %1099 = vmatprep.subr.mxu0 %v563
      %1100 = vmatpush1.msra.mxu0 %v562
      %1101 = vmatprep.subr.mxu0 %v565
      %1102 = vmatpush1.msra.mxu0 %v564
      %1103 = vmatprep.subr.mxu0 %v567
      %1104 = vmatpush1.msra.mxu0 %v566
      %1105 = vmatprep.subr.mxu0 %v569
      %1106 = vmatpush1.msra.mxu0 %v568
      %1107 = vmatprep.subr.mxu0 %v571
      %1108 = vmatpush1.msra.mxu0 %v570
      %1109 = vmatprep.subr.mxu0 %v573
      %1110 = vmatpush1.msra.mxu0 %v572
      %1111 = vmatprep.subr.mxu0 %v575
      %1112 = vmatpush1.msra.mxu0 %v574
      %1113 = vmatprep.subr.mxu0 %v577
      %1114 = vmatpush1.msra.mxu0 %v576
      %1115 = vmatprep.subr.mxu0 %v579
      %1116 = vmatpush1.msra.mxu0 %v578
      %1117 = vmatprep.subr.mxu0 %v581
      %1118 = vmatpush1.msra.mxu0 %v580
      %1119 = vmatprep.mubr.f32.mxu0 %v219
      %1120 = vmatmul.mubr.f32.gmra.mrb[0].mxu0 %v218
      %v1121 = vpop.f32.mrb[0].mxu0
      %v1122 = vadd.f32 %v1033, %v1121
      %v1123 = vpop.f32.mrb[0].mxu0
      %v1124 = vadd.f32 %v1035, %v1123
      %1125 = vmatprep.mubr.f32.mxu0 %v232
      %1126 = vmatmul.mubr.f32.gmra.mrb[0].mxu0 %v231
      %v1127 = vpop.f32.mrb[0].mxu0
      %v1128 = vadd.f32 %v1039, %v1127
      %v1129 = vpop.f32.mrb[0].mxu0
      %v1130 = vadd.f32 %v1041, %v1129
      %1131 = vmatprep.mubr.f32.mxu0 %v245
      %1132 = vmatmul.mubr.f32.gmra.mrb[0].mxu0 %v244
      %v1133 = vpop.f32.mrb[0].mxu0
      %v1134 = vadd.f32 %v1045, %v1133
      %v1135 = vpop.f32.mrb[0].mxu0
      %v1136 = vadd.f32 %v1047, %v1135
      %1137 = vmatprep.mubr.f32.mxu0 %v258
      %1138 = vmatmul.mubr.f32.gmra.mrb[0].mxu0 %v257
      %v1139 = vpop.f32.mrb[0].mxu0
      %v1140 = vadd.f32 %v1051, %v1139
      %v1141 = vpop.f32.mrb[0].mxu0
      %v1142 = vadd.f32 %v1053, %v1141
      %1143 = vdwg.mxu0
      %1144 = vmatprep.subr.mxu0 %v583
      %1145 = vmatpush1.msra.mxu0 %v582
      %1146 = vmatprep.subr.mxu0 %v585
      %1147 = vmatpush1.msra.mxu0 %v584
      %1148 = vmatprep.subr.mxu0 %v587
      %1149 = vmatpush1.msra.mxu0 %v586
      %1150 = vmatprep.subr.mxu0 %v589
      %1151 = vmatpush1.msra.mxu0 %v588
      %1152 = vmatprep.subr.mxu0 %v591
      %1153 = vmatpush1.msra.mxu0 %v590
      %1154 = vmatprep.subr.mxu0 %v593
      %1155 = vmatpush1.msra.mxu0 %v592
      %1156 = vmatprep.subr.mxu0 %v595
      %1157 = vmatpush1.msra.mxu0 %v594
      %1158 = vmatprep.subr.mxu0 %v597
      %1159 = vmatpush1.msra.mxu0 %v596
      %1160 = vmatprep.subr.mxu0 %v599
      %1161 = vmatpush1.msra.mxu0 %v598
      %1162 = vmatprep.subr.mxu0 %v601
      %1163 = vmatpush1.msra.mxu0 %v600
      %1164 = vmatprep.subr.mxu0 %v603
      %1165 = vmatpush1.msra.mxu0 %v602
      %1166 = vmatprep.subr.mxu0 %v605
      %1167 = vmatpush1.msra.mxu0 %v604
      %1168 = vmatprep.subr.mxu0 %v607
      %1169 = vmatpush1.msra.mxu0 %v606
      %1170 = vmatprep.subr.mxu0 %v609
      %1171 = vmatpush1.msra.mxu0 %v608
      %1172 = vmatprep.subr.mxu0 %v611
      %1173 = vmatpush1.msra.mxu0 %v610
      %1174 = vmatprep.subr.mxu0 %v613
      %1175 = vmatpush1.msra.mxu0 %v612
      %1176 = vmatprep.subr.mxu0 %v615
      %1177 = vmatpush1.msra.mxu0 %v614
      %1178 = vmatprep.subr.mxu0 %v617
      %1179 = vmatpush1.msra.mxu0 %v616
      %1180 = vmatprep.subr.mxu0 %v619
      %1181 = vmatpush1.msra.mxu0 %v618
      %1182 = vmatprep.subr.mxu0 %v621
      %1183 = vmatpush1.msra.mxu0 %v620
      %1184 = vmatprep.subr.mxu0 %v623
      %1185 = vmatpush1.msra.mxu0 %v622
      %1186 = vmatprep.subr.mxu0 %v625
      %1187 = vmatpush1.msra.mxu0 %v624
      %1188 = vmatprep.subr.mxu0 %v627
      %1189 = vmatpush1.msra.mxu0 %v626
      %1190 = vmatprep.subr.mxu0 %v629
      %1191 = vmatpush1.msra.mxu0 %v628
      %1192 = vmatprep.subr.mxu0 %v631
      %1193 = vmatpush1.msra.mxu0 %v630
      %1194 = vmatprep.subr.mxu0 %v633
      %1195 = vmatpush1.msra.mxu0 %v632
      %1196 = vmatprep.subr.mxu0 %v635
      %1197 = vmatpush1.msra.mxu0 %v634
      %1198 = vmatprep.subr.mxu0 %v637
      %1199 = vmatpush1.msra.mxu0 %v636
      %1200 = vmatprep.subr.mxu0 %v639
      %1201 = vmatpush1.msra.mxu0 %v638
      %1202 = vmatprep.subr.mxu0 %v641
      %1203 = vmatpush1.msra.mxu0 %v640
      %1204 = vmatprep.subr.mxu0 %v643
      %1205 = vmatpush1.msra.mxu0 %v642
      %1206 = vmatprep.subr.mxu0 %v645
      %1207 = vmatpush1.msra.mxu0 %v644
      %1208 = vmatprep.mubr.f32.mxu0 %v221
      %1209 = vmatmul.mubr.f32.gmra.mrb[0].mxu0 %v220
      %v1210 = vpop.f32.mrb[0].mxu0
      %v1211 = vadd.f32 %v1122, %v1210
      %v1212 = vpop.f32.mrb[0].mxu0
      %v1213 = vadd.f32 %v1124, %v1212
      %1214 = vmatprep.mubr.f32.mxu0 %v234
      %1215 = vmatmul.mubr.f32.gmra.mrb[0].mxu0 %v233
      %v1216 = vpop.f32.mrb[0].mxu0
      %v1217 = vadd.f32 %v1128, %v1216
      %v1218 = vpop.f32.mrb[0].mxu0
      %v1219 = vadd.f32 %v1130, %v1218
      %1220 = vmatprep.mubr.f32.mxu0 %v247
      %1221 = vmatmul.mubr.f32.gmra.mrb[0].mxu0 %v246
      %v1222 = vpop.f32.mrb[0].mxu0
      %v1223 = vadd.f32 %v1134, %v1222
      %v1224 = vpop.f32.mrb[0].mxu0
      %v1225 = vadd.f32 %v1136, %v1224
      %1226 = vmatprep.mubr.f32.mxu0 %v260
      %1227 = vmatmul.mubr.f32.gmra.mrb[0].mxu0 %v259
      %v1228 = vpop.f32.mrb[0].mxu0
      %v1229 = vadd.f32 %v1140, %v1228
      %v1230 = vpop.f32.mrb[0].mxu0
      %v1231 = vadd.f32 %v1142, %v1230
      %1232 = vdwg.mxu0
      %1233 = vmatprep.subr.mxu0 %v647
      %1234 = vmatpush1.msra.mxu0 %v646
      %1235 = vmatprep.subr.mxu0 %v649
      %1236 = vmatpush1.msra.mxu0 %v648
      %1237 = vmatprep.subr.mxu0 %v651
      %1238 = vmatpush1.msra.mxu0 %v650
      %1239 = vmatprep.subr.mxu0 %v653
      %1240 = vmatpush1.msra.mxu0 %v652
      %1241 = vmatprep.subr.mxu0 %v655
      %1242 = vmatpush1.msra.mxu0 %v654
      %1243 = vmatprep.subr.mxu0 %v657
      %1244 = vmatpush1.msra.mxu0 %v656
      %1245 = vmatprep.subr.mxu0 %v659
      %1246 = vmatpush1.msra.mxu0 %v658
      %1247 = vmatprep.subr.mxu0 %v661
      %1248 = vmatpush1.msra.mxu0 %v660
      %1249 = vmatprep.subr.mxu0 0.0
      %1250 = vmatpush1.msra.mxu0 0.0
      %1251 = vmatprep.subr.mxu0 0.0
      %1252 = vmatpush1.msra.mxu0 0.0
      %1253 = vmatprep.subr.mxu0 0.0
      %1254 = vmatpush1.msra.mxu0 0.0
      %1255 = vmatprep.subr.mxu0 0.0
      %1256 = vmatpush1.msra.mxu0 0.0
      %1257 = vmatprep.subr.mxu0 0.0
      %1258 = vmatpush1.msra.mxu0 0.0
      %1259 = vmatprep.subr.mxu0 0.0
      %1260 = vmatpush1.msra.mxu0 0.0
      %1261 = vmatprep.subr.mxu0 0.0
      %1262 = vmatpush1.msra.mxu0 0.0
      %1263 = vmatprep.subr.mxu0 0.0
      %1264 = vmatpush1.msra.mxu0 0.0
      %1265 = vmatprep.subr.mxu0 0.0
      %1266 = vmatpush1.msra.mxu0 0.0
      %1267 = vmatprep.subr.mxu0 0.0
      %1268 = vmatpush1.msra.mxu0 0.0
      %1269 = vmatprep.subr.mxu0 0.0
      %1270 = vmatpush1.msra.mxu0 0.0
      %1271 = vmatprep.subr.mxu0 0.0
      %1272 = vmatpush1.msra.mxu0 0.0
      %1273 = vmatprep.subr.mxu0 0.0
      %1274 = vmatpush1.msra.mxu0 0.0
      %1275 = vmatprep.subr.mxu0 0.0
      %1276 = vmatpush1.msra.mxu0 0.0
      %1277 = vmatprep.subr.mxu0 0.0
      %1278 = vmatpush1.msra.mxu0 0.0
      %1279 = vmatprep.subr.mxu0 0.0
      %1280 = vmatpush1.msra.mxu0 0.0
      %1281 = vmatprep.subr.mxu0 0.0
      %1282 = vmatpush1.msra.mxu0 0.0
      %1283 = vmatprep.subr.mxu0 0.0
      %1284 = vmatpush1.msra.mxu0 0.0
      %1285 = vmatprep.subr.mxu0 0.0
      %1286 = vmatpush1.msra.mxu0 0.0
      %1287 = vmatprep.subr.mxu0 0.0
      %1288 = vmatpush1.msra.mxu0 0.0
      %1289 = vmatprep.subr.mxu0 0.0
      %1290 = vmatpush1.msra.mxu0 0.0
      %1291 = vmatprep.subr.mxu0 0.0
      %1292 = vmatpush1.msra.mxu0 0.0
      %1293 = vmatprep.subr.mxu0 0.0
      %1294 = vmatpush1.msra.mxu0 0.0
      %1295 = vmatprep.subr.mxu0 0.0
      %1296 = vmatpush1.msra.mxu0 0.0
      %1297 = vmatprep.mubr.f32.mxu0 0.0
      %1298 = vmatmul.mubr.f32.gmra.mrb[0].mxu0 %v688
      %v1299 = vpop.f32.mrb[0].mxu0
      %v1300 = vadd.f32 %v1211, %v1299
      %v1301 = vpop.f32.mrb[0].mxu0
      %v1302 = vadd.f32 %v1213, %v1301
      %1303 = vmatprep.mubr.f32.mxu0 0.0
      %1304 = vmatmul.mubr.f32.gmra.mrb[0].mxu0 %v691
      %v1305 = vpop.f32.mrb[0].mxu0
      %v1306 = vadd.f32 %v1217, %v1305
      %v1307 = vpop.f32.mrb[0].mxu0
      %v1308 = vadd.f32 %v1219, %v1307
      %1309 = vmatprep.mubr.f32.mxu0 0.0
      %1310 = vmatmul.mubr.f32.gmra.mrb[0].mxu0 %v694
      %v1311 = vpop.f32.mrb[0].mxu0
      %v1312 = vadd.f32 %v1223, %v1311
      %v1313 = vpop.f32.mrb[0].mxu0
      %v1314 = vadd.f32 %v1225, %v1313
      %1315 = vmatprep.mubr.f32.mxu0 0.0
      %1316 = vmatmul.mubr.f32.gmra.mrb[0].mxu0 %v697
      %v1317 = vpop.f32.mrb[0].mxu0
      %v1318 = vadd.f32 %v1229, %v1317
      %v1319 = vpop.f32.mrb[0].mxu0
      %v1320 = vadd.f32 %v1231, %v1319
      %1321 = vdwg.mxu0
      %v1322 = vmax.f32 %v1300, 0.0
      %v1323 = vmax.f32 %v1302, 0.0
      %v1324 = vmax.f32 %v1306, 0.0
      %v1325 = vmax.f32 %v1308, 0.0
      %v1326 = vmax.f32 %v1312, 0.0
      %v1327 = vmax.f32 %v1314, 0.0
      %v1328 = vmax.f32 %v1318, 0.0
      %v1329 = vmax.f32 %v1320, 0.0
      %1330 = vst [vmem:[%s208] sm:$0xff] %v1322
      %vm1331 = vcmask 556032
      %1332 = vst.msk [vmem:[%s208 + $0x8] sm:$0xff] %vm1331, %v1323
      %1333 = vst [vmem:[%s208 + $0x10] sm:$0xff] %v1324
      %1334 = vst.msk [vmem:[%s208 + $0x18] sm:$0xff] %vm1331, %v1325
      %1335 = vst [vmem:[%s208 + $0x20] sm:$0xff] %v1326
      %1336 = vst.msk [vmem:[%s208 + $0x28] sm:$0xff] %vm1331, %v1327
      %1337 = vst [vmem:[%s208 + $0x30] sm:$0xff] %v1328
      %1338 = vst.msk [vmem:[%s208 + $0x38] sm:$0xff] %vm1331, %v1329
      %s1339 = smul.u32 2, %s19
      %p1340 = scmp.lt.s32.totalorder %s18, 1
      %s1341 = scalar_select %p1340, %s18, 1
      %p1342 = scmp.lt.s32.totalorder %s1339, 1
      %s1343 = scalar_select %p1342, %s1339, 1
      %s1344 = smul.addr %s1341, 8
      %s1345 = sadd.s32 %s1343, %s1344
      %s1346 = smul.addr %s1345, 8
      %s1347 = scalar_lea.vmem %s3, %s1346
      // Predicated region
      $region33: #{inverse_cifar10_forward.4} parent=31 // pred_check
        %p1348 = pneg %p116
      $region34: #{inverse_cifar10_forward.4} parent=31 // pred_check_branch
        %1350 = sbr.rel (%p1348) target = $region36
      $region35: #{inverse_cifar10_forward.4} parent=31 // pred_region
        %s1351 = smul.u32 2, %s19
      $region36: #{inverse_cifar10_forward.4} parent=31 // pred_fallthru
        _
    $region32: #{inverse_cifar10_forward.4} parent=5 // pred_fallthru
      _
    %p1352 = scmp.le.s32.totalorder 2, %s9
    // Predicated region
    $region37: #{inverse_cifar10_forward.4} parent=5 // pred_check
      %p1353 = pneg %p1352
    $region38: #{inverse_cifar10_forward.4} parent=5 // pred_check_branch
      %1355 = sbr.rel (%p1353) target = $region40
    $region39: #{inverse_cifar10_forward.4} parent=5 // pred_region
      %s1356 = ssub.s32 %s9, 2
      // Predicated region
      $region41: #{inverse_cifar10_forward.4} parent=39 // pred_check
        %p1357 = pneg %p122
      $region42: #{inverse_cifar10_forward.4} parent=39 // pred_check_branch
        %1359 = sbr.rel (%p1357) target = $region44
      $region43: #{inverse_cifar10_forward.4} parent=39 // pred_region
        %s1360 = smul.u32 2, %s21
        %p1361 = scmp.lt.s32.totalorder %s20, 1
        %s1362 = scalar_select %p1361, %s20, 1
        %p1363 = scmp.lt.s32.totalorder %s1360, 1
        %s1364 = scalar_select %p1363, %s1360, 1
        %s1365 = smul.addr %s1362, 8
        %s1366 = sadd.s32 %s1364, %s1365
        %s1367 = smul.addr %s1366, 8
        %s1368 = scalar_lea.vmem %s3, %s1367
      $region44: #{inverse_cifar10_forward.4} parent=39 // pred_fallthru
        _
    $region40: #{inverse_cifar10_forward.4} parent=5 // pred_fallthru
      _
  $region6: #{inverse_cifar10_forward.4} parent=0 // loop_footer
    %s13 = sadd.s32 1, %s9
  $region7: #{inverse_cifar10_forward.4} parent=0 // loop_footer_branch
    %8 = sbr.rel target = $region3
  $region8: #{inverse_cifar10_forward.4} parent=0 // loop_exit
    _

// kernel: inverse_cifar10_forward.5
$region0: #{inverse_cifar10_forward.5}
  #allocation0 [shape = 'u32[]', space=smem, size = 0x4, offset = 0x4, fixed_abs, tag = 'smem constant byte address 0x4 - core index']
  #allocation1 [shape = 'u32[144,128]{1,0:T(1,128)}', space=vmem, size = 0x12000, scoped, tag = 'internal scratch']
  %s0 = inlined_call_operand.vmem [shape: f32[2,800,1024], index: 0, kind: input, shape index: {}]
  %s1 = inlined_call_operand.vmem [shape: f32[3,800], index: 1, kind: input, shape index: {}]
  %s2 = inlined_call_operand.vmem [shape: f32[3,1], index: 2, kind: input, shape index: {}]
  %s3 = inlined_call_operand.vmem [shape: f32[2,3,1024], index: 3, kind: output, shape index: {}]
  %s4 = sld [smem:[#allocation0]]
  $region68: #{inverse_cifar10_forward.5} parent=0
    _
  %s6 = ssub.s32 1, %s4
  %s7 = scalar_select 0, %s6, %s4
  $region1: #{inverse_cifar10_forward.5} parent=0
    #allocation2 [shape = 'u8[3276800]{0}', space=vmem, size = 0x320000, scoped, tag = 'input window, operand 0']
    loop: start=0, step=1, limit=6
    $region2: #{inverse_cifar10_forward.5} parent=1 // loop_pre_header
      _
    $region3: #{inverse_cifar10_forward.5} parent=1 // loop_header
      %s9 = sphi 0, %s13
      %p10 = scmp.ge.s32.totalorder %s9, 6
      %s16 = sphi 0, %s28
      %s17 = sphi 0, %s24
      %s18 = sphi 0, %s16
      %s19 = sphi 0, %s17
      %s20 = sphi 0, %s18
      %s21 = sphi 0, %s19
      %s33 = sphi 0, %s35
      %s36 = sphi 0, %s33
      %s37 = sphi 0, %s36
      %s53 = sphi 0, %s37
      %s57 = sphi 0, %s57
      %s59 = sphi 0, %s57
      %s60 = sphi 0, %s59
      %s74 = sphi 0, %s60
      %s78 = sphi 0, %s78
      %s80 = sphi 0, %s78
      %s81 = sphi 0, %s80
      %s95 = sphi 0, %s81
      %s103 = sphi 0, %s105
      %s106 = sphi 0, %s103
      %s107 = sphi 0, %s106
      %s123 = sphi 0, %s107
    $region4: #{inverse_cifar10_forward.5} parent=1 // loop_header_branch
      %12 = sbr.rel (%p10) target = $region8
    $region5: #{inverse_cifar10_forward.5} parent=1 // loop_body
      %s14 = ssub.s32 %s9, 1
      %s15 = ssub.s32 %s9, 2
      %s22 = sadd.s32 1, %s17
      %p23 = scmp.ge.s32.totalorder %s22, 2
      %s24 = scalar_select %p23, 0, %s22
      %s25 = sadd.s32 1, %s16
      %s26 = scalar_select %p23, %s25, %s16
      %p27 = scmp.ge.s32.totalorder %s26, 2
      %s28 = scalar_select %p27, 0, %s26
      %s29 = ssub.s32 %s16, %s28
      %s30 = ssub.s32 %s17, %s24
      %s31 = sor.u32 %s29, %s30
      %p32 = scmp.eq.s32.totalorder %s31, 0
      %s34 = sadd.s32 %s33, 1
      %s35 = scalar_select %p32, %s33, %s34
      %p38 = pneg %p32
      %p39 = scmp.eq.s32.totalorder %s9, 3
      %p40 = por %p38, %p39
      %p41 = scmp.ne.s32.totalorder %s33, %s36
      %p42 = scmp.eq.s32.totalorder %s9, 0
      %p43 = por %p41, %p42
      %p44 = scmp.ne.s32.totalorder %s33, %s36
      %p45 = scmp.eq.s32.totalorder %s14, 3
      %p46 = por %p44, %p45
      %p47 = scmp.ne.s32.totalorder %s36, %s37
      %p48 = scmp.eq.s32.totalorder %s14, 0
      %p49 = por %p47, %p48
      %p50 = scmp.ne.s32.totalorder %s36, %s37
      %p51 = scmp.eq.s32.totalorder %s15, 3
      %p52 = por %p50, %p51
      %p54 = scmp.ne.s32.totalorder %s37, %s53
      %p55 = scmp.eq.s32.totalorder %s15, 0
      %p56 = por %p54, %p55
      %s58 = sadd.s32 %s57, 1
      %p61 = scmp.eq.s32.totalorder %s9, 3
      %p62 = scmp.ne.s32.totalorder %s57, %s59
      %p63 = scmp.eq.s32.totalorder %s9, 0
      %p64 = por %p62, %p63
      %p65 = scmp.ne.s32.totalorder %s57, %s59
      %p66 = scmp.eq.s32.totalorder %s14, 3
      %p67 = por %p65, %p66
      %p68 = scmp.ne.s32.totalorder %s59, %s60
      %p69 = scmp.eq.s32.totalorder %s14, 0
      %p70 = por %p68, %p69
      %p71 = scmp.ne.s32.totalorder %s59, %s60
      %p72 = scmp.eq.s32.totalorder %s15, 3
      %p73 = por %p71, %p72
      %p75 = scmp.ne.s32.totalorder %s60, %s74
      %p76 = scmp.eq.s32.totalorder %s15, 0
      %p77 = por %p75, %p76
      %s79 = sadd.s32 %s78, 1
      %p82 = scmp.eq.s32.totalorder %s9, 3
      %p83 = scmp.ne.s32.totalorder %s78, %s80
      %p84 = scmp.eq.s32.totalorder %s9, 0
      %p85 = por %p83, %p84
      %p86 = scmp.ne.s32.totalorder %s78, %s80
      %p87 = scmp.eq.s32.totalorder %s14, 3
      %p88 = por %p86, %p87
      %p89 = scmp.ne.s32.totalorder %s80, %s81
      %p90 = scmp.eq.s32.totalorder %s14, 0
      %p91 = por %p89, %p90
      %p92 = scmp.ne.s32.totalorder %s80, %s81
      %p93 = scmp.eq.s32.totalorder %s15, 3
      %p94 = por %p92, %p93
      %p96 = scmp.ne.s32.totalorder %s81, %s95
      %p97 = scmp.eq.s32.totalorder %s15, 0
      %p98 = por %p96, %p97
      %s99 = ssub.s32 %s16, %s28
      %s100 = ssub.s32 %s17, %s24
      %s101 = sor.u32 %s99, %s100
      %p102 = scmp.eq.s32.totalorder %s101, 0
      %s104 = sadd.s32 %s103, 1
      %s105 = scalar_select %p102, %s103, %s104
      %p108 = pneg %p102
      %p109 = scmp.eq.s32.totalorder %s9, 3
      %p110 = por %p108, %p109
      %p111 = scmp.ne.s32.totalorder %s103, %s106
      %p112 = scmp.eq.s32.totalorder %s9, 0
      %p113 = por %p111, %p112
      %p114 = scmp.ne.s32.totalorder %s103, %s106
      %p115 = scmp.eq.s32.totalorder %s14, 3
      %p116 = por %p114, %p115
      %p117 = scmp.ne.s32.totalorder %s106, %s107
      %p118 = scmp.eq.s32.totalorder %s14, 0
      %p119 = por %p117, %p118
      %p120 = scmp.ne.s32.totalorder %s106, %s107
      %p121 = scmp.eq.s32.totalorder %s15, 3
      %p122 = por %p120, %p121
      %p124 = scmp.ne.s32.totalorder %s107, %s123
      %p125 = scmp.eq.s32.totalorder %s15, 0
      %p126 = por %p124, %p125
      %p127 = scmp.le.s32.totalorder 1, %s9
      %p128 = scmp.lt.s32.totalorder %s9, 5
      %p129 = pnand %p127, %p128
      %p130 = pneg %p129
      // Predicated region
      $region9: #{inverse_cifar10_forward.5} parent=5 // pred_check
        _
      $region10: #{inverse_cifar10_forward.5} parent=5 // pred_check_branch
        %132 = sbr.rel (%p129) target = $region12
      $region11: #{inverse_cifar10_forward.5} parent=5 // pred_region
        %s133 = ssub.s32 %s9, 1
        // Predicated region
        $region13: #{inverse_cifar10_forward.5} parent=11 // pred_check
          %p134 = pneg %p70
        $region14: #{inverse_cifar10_forward.5} parent=11 // pred_check_branch
          %136 = sbr.rel (%p134) target = $region16
        $region15: #{inverse_cifar10_forward.5} parent=11 // pred_region
          _
        $region16: #{inverse_cifar10_forward.5} parent=11 // pred_fallthru
          _
        // Predicated region
        $region17: #{inverse_cifar10_forward.5} parent=11 // pred_check
          %p137 = pneg %p91
        $region18: #{inverse_cifar10_forward.5} parent=11 // pred_check_branch
          %139 = sbr.rel (%p137) target = $region20
        $region19: #{inverse_cifar10_forward.5} parent=11 // pred_region
          _
        $region20: #{inverse_cifar10_forward.5} parent=11 // pred_fallthru
          _
      $region12: #{inverse_cifar10_forward.5} parent=5 // pred_fallthru
        _
      %p140 = scmp.lt.s32.totalorder %s9, 4
      // Predicated region
      $region21: #{inverse_cifar10_forward.5} parent=5 // pred_check
        %p141 = pneg %p140
      $region22: #{inverse_cifar10_forward.5} parent=5 // pred_check_branch
        %143 = sbr.rel (%p141) target = $region24
      $region23: #{inverse_cifar10_forward.5} parent=5 // pred_region
        // Predicated region
        $region25: #{inverse_cifar10_forward.5} parent=23 // pred_check
          %p144 = pneg %p43
        $region26: #{inverse_cifar10_forward.5} parent=23 // pred_check_branch
          %146 = sbr.rel (%p144) target = $region28
        $region27: #{inverse_cifar10_forward.5} parent=23 // pred_region
          %s147 = sand.u32 %s33, 1
          %s148 = sand.u32 %s33, 1
          %s149 = smul.addr %s148, 3200
          %s150 = scalar_lea.vmem [#allocation2], %s149
          %s151 = smul.u32 4, %s17
          %s152 = smul.addr %s16, 800
          %s153 = sadd.s32 %s151, %s152
          %s154 = smul.addr %s153, 8
          %s155 = scalar_lea.vmem %s0, %s154
          // Predicated region
          $region29: #{inverse_cifar10_forward.5} parent=27 // pred_check
            _
          $region30: #{inverse_cifar10_forward.5} parent=27 // pred_check_branch
            %157 = sbr.rel (0) target = $region32
          $region31: #{inverse_cifar10_forward.5} parent=27 // pred_region
            // Predicated region
            $region33: #{inverse_cifar10_forward.5} parent=31 // pred_check
              _
            $region34: #{inverse_cifar10_forward.5} parent=31 // pred_check_branch
              %159 = sbr.rel (0) target = $region36
            $region35: #{inverse_cifar10_forward.5} parent=31 // pred_region
              loop: start=0, step=1, limit=1
              $region37: #{inverse_cifar10_forward.5} parent=35 // loop_pre_header
                _
              $region38: #{inverse_cifar10_forward.5} parent=35 // loop_header
                %s161 = sphi 0, %s165
                %p162 = scmp.ge.s32.totalorder %s161, 1
                %s166 = sphi %s155, %s155
                %s167 = sphi %s150, %s150
              $region39: #{inverse_cifar10_forward.5} parent=35 // loop_header_branch
                %164 = sbr.rel (%p162) target = $region43
              $region40: #{inverse_cifar10_forward.5} parent=35 // loop_body
                %v168 = vld [vmem:[%s166] sm:$0xff]
                %169 = vst [vmem:[%s167] sm:$0xff] %v168
                %v170 = vld [vmem:[%s166 + $0x8] sm:$0xff]
                %171 = vst [vmem:[%s167 + $0x8] sm:$0xff] %v170
                %v172 = vld [vmem:[%s166 + $0x10] sm:$0xff]
                %173 = vst [vmem:[%s167 + $0x10] sm:$0xff] %v172
                %v174 = vld [vmem:[%s166 + $0x18] sm:$0xff]
                %175 = vst [vmem:[%s167 + $0x18] sm:$0xff] %v174
                %v176 = vld [vmem:[%s166 + $0x40] sm:$0xff]
                %177 = vst [vmem:[%s167 + $0x20] sm:$0xff] %v176
                %v178 = vld [vmem:[%s166 + $0x48] sm:$0xff]
                %179 = vst [vmem:[%s167 + $0x28] sm:$0xff] %v178
                %v180 = vld [vmem:[%s166 + $0x50] sm:$0xff]
                %181 = vst [vmem:[%s167 + $0x30] sm:$0xff] %v180
                %v182 = vld [vmem:[%s166 + $0x58] sm:$0xff]
                %183 = vst [vmem:[%s167 + $0x38] sm:$0xff] %v182
                %v184 = vld [vmem:[%s166 + $0x80] sm:$0xff]
                %185 = vst [vmem:[%s167 + $0x40] sm:$0xff] %v184
                %v186 = vld [vmem:[%s166 + $0x88] sm:$0xff]
                %187 = vst [vmem:[%s167 + $0x48] sm:$0xff] %v186
                %v188 = vld [vmem:[%s166 + $0x90] sm:$0xff]
                %189 = vst [vmem:[%s167 + $0x50] sm:$0xff] %v188
                %v190 = vld [vmem:[%s166 + $0x98] sm:$0xff]
                %191 = vst [vmem:[%s167 + $0x58] sm:$0xff] %v190
                %v192 = vld [vmem:[%s166 + $0xc0] sm:$0xff]
                %193 = vst [vmem:[%s167 + $0x60] sm:$0xff] %v192
                %v194 = vld [vmem:[%s166 + $0xc8] sm:$0xff]
                %195 = vst [vmem:[%s167 + $0x68] sm:$0xff] %v194
                %v196 = vld [vmem:[%s166 + $0xd0] sm:$0xff]
                %197 = vst [vmem:[%s167 + $0x70] sm:$0xff] %v196
                %v198 = vld [vmem:[%s166 + $0xd8] sm:$0xff]
                %199 = vst [vmem:[%s167 + $0x78] sm:$0xff] %v198
                %v200 = vld [vmem:[%s166 + $0x100] sm:$0xff]
                %201 = vst [vmem:[%s167 + $0x80] sm:$0xff] %v200
                %v202 = vld [vmem:[%s166 + $0x108] sm:$0xff]
                %203 = vst [vmem:[%s167 + $0x88] sm:$0xff] %v202
                %v204 = vld [vmem:[%s166 + $0x110] sm:$0xff]
                %205 = vst [vmem:[%s167 + $0x90] sm:$0xff] %v204
                %v206 = vld [vmem:[%s166 + $0x118] sm:$0xff]
                %207 = vst [vmem:[%s167 + $0x98] sm:$0xff] %v206
                %v208 = vld [vmem:[%s166 + $0x140] sm:$0xff]
                %209 = vst [vmem:[%s167 + $0xa0] sm:$0xff] %v208
                %v210 = vld [vmem:[%s166 + $0x148] sm:$0xff]
                %211 = vst [vmem:[%s167 + $0xa8] sm:$0xff] %v210
                %v212 = vld [vmem:[%s166 + $0x150] sm:$0xff]
                %213 = vst [vmem:[%s167 + $0xb0] sm:$0xff] %v212
                %v214 = vld [vmem:[%s166 + $0x158] sm:$0xff]
                %215 = vst [vmem:[%s167 + $0xb8] sm:$0xff] %v214
                %v216 = vld [vmem:[%s166 + $0x180] sm:$0xff]
                %217 = vst [vmem:[%s167 + $0xc0] sm:$0xff] %v216
                %v218 = vld [vmem:[%s166 + $0x188] sm:$0xff]
                %219 = vst [vmem:[%s167 + $0xc8] sm:$0xff] %v218
                %v220 = vld [vmem:[%s166 + $0x190] sm:$0xff]
                %221 = vst [vmem:[%s167 + $0xd0] sm:$0xff] %v220
                %v222 = vld [vmem:[%s166 + $0x198] sm:$0xff]
                %223 = vst [vmem:[%s167 + $0xd8] sm:$0xff] %v222
                %v224 = vld [vmem:[%s166 + $0x1c0] sm:$0xff]
                %225 = vst [vmem:[%s167 + $0xe0] sm:$0xff] %v224
                %v226 = vld [vmem:[%s166 + $0x1c8] sm:$0xff]
                %227 = vst [vmem:[%s167 + $0xe8] sm:$0xff] %v226
                %v228 = vld [vmem:[%s166 + $0x1d0] sm:$0xff]
                %229 = vst [vmem:[%s167 + $0xf0] sm:$0xff] %v228
                %v230 = vld [vmem:[%s166 + $0x1d8] sm:$0xff]
                %231 = vst [vmem:[%s167 + $0xf8] sm:$0xff] %v230
                %v232 = vld [vmem:[%s166 + $0x200] sm:$0xff]
                %233 = vst [vmem:[%s167 + $0x100] sm:$0xff] %v232
                %v234 = vld [vmem:[%s166 + $0x208] sm:$0xff]
                %235 = vst [vmem:[%s167 + $0x108] sm:$0xff] %v234
                %v236 = vld [vmem:[%s166 + $0x210] sm:$0xff]
                %237 = vst [vmem:[%s167 + $0x110] sm:$0xff] %v236
                %v238 = vld [vmem:[%s166 + $0x218] sm:$0xff]
                %239 = vst [vmem:[%s167 + $0x118] sm:$0xff] %v238
                %v240 = vld [vmem:[%s166 + $0x240] sm:$0xff]
                %241 = vst [vmem:[%s167 + $0x120] sm:$0xff] %v240
                %v242 = vld [vmem:[%s166 + $0x248] sm:$0xff]
                %243 = vst [vmem:[%s167 + $0x128] sm:$0xff] %v242
                %v244 = vld [vmem:[%s166 + $0x250] sm:$0xff]
                %245 = vst [vmem:[%s167 + $0x130] sm:$0xff] %v244
                %v246 = vld [vmem:[%s166 + $0x258] sm:$0xff]
                %247 = vst [vmem:[%s167 + $0x138] sm:$0xff] %v246
                %v248 = vld [vmem:[%s166 + $0x280] sm:$0xff]
                %249 = vst [vmem:[%s167 + $0x140] sm:$0xff] %v248
                %v250 = vld [vmem:[%s166 + $0x288] sm:$0xff]
                %251 = vst [vmem:[%s167 + $0x148] sm:$0xff] %v250
                %v252 = vld [vmem:[%s166 + $0x290] sm:$0xff]
                %253 = vst [vmem:[%s167 + $0x150] sm:$0xff] %v252
                %v254 = vld [vmem:[%s166 + $0x298] sm:$0xff]
                %255 = vst [vmem:[%s167 + $0x158] sm:$0xff] %v254
                %v256 = vld [vmem:[%s166 + $0x2c0] sm:$0xff]
                %257 = vst [vmem:[%s167 + $0x160] sm:$0xff] %v256
                %v258 = vld [vmem:[%s166 + $0x2c8] sm:$0xff]
                %259 = vst [vmem:[%s167 + $0x168] sm:$0xff] %v258
                %v260 = vld [vmem:[%s166 + $0x2d0] sm:$0xff]
                %261 = vst [vmem:[%s167 + $0x170] sm:$0xff] %v260
                %v262 = vld [vmem:[%s166 + $0x2d8] sm:$0xff]
                %263 = vst [vmem:[%s167 + $0x178] sm:$0xff] %v262
                %v264 = vld [vmem:[%s166 + $0x300] sm:$0xff]
                %265 = vst [vmem:[%s167 + $0x180] sm:$0xff] %v264
                %v266 = vld [vmem:[%s166 + $0x308] sm:$0xff]
                %267 = vst [vmem:[%s167 + $0x188] sm:$0xff] %v266
                %v268 = vld [vmem:[%s166 + $0x310] sm:$0xff]
                %269 = vst [vmem:[%s167 + $0x190] sm:$0xff] %v268
                %v270 = vld [vmem:[%s166 + $0x318] sm:$0xff]
                %271 = vst [vmem:[%s167 + $0x198] sm:$0xff] %v270
                %v272 = vld [vmem:[%s166 + $0x340] sm:$0xff]
                %273 = vst [vmem:[%s167 + $0x1a0] sm:$0xff] %v272
                %v274 = vld [vmem:[%s166 + $0x348] sm:$0xff]
                %275 = vst [vmem:[%s167 + $0x1a8] sm:$0xff] %v274
                %v276 = vld [vmem:[%s166 + $0x350] sm:$0xff]
                %277 = vst [vmem:[%s167 + $0x1b0] sm:$0xff] %v276
                %v278 = vld [vmem:[%s166 + $0x358] sm:$0xff]
                %279 = vst [vmem:[%s167 + $0x1b8] sm:$0xff] %v278
                %v280 = vld [vmem:[%s166 + $0x380] sm:$0xff]
                %281 = vst [vmem:[%s167 + $0x1c0] sm:$0xff] %v280
                %v282 = vld [vmem:[%s166 + $0x388] sm:$0xff]
                %283 = vst [vmem:[%s167 + $0x1c8] sm:$0xff] %v282
                %v284 = vld [vmem:[%s166 + $0x390] sm:$0xff]
                %285 = vst [vmem:[%s167 + $0x1d0] sm:$0xff] %v284
                %v286 = vld [vmem:[%s166 + $0x398] sm:$0xff]
                %287 = vst [vmem:[%s167 + $0x1d8] sm:$0xff] %v286
                %v288 = vld [vmem:[%s166 + $0x3c0] sm:$0xff]
                %289 = vst [vmem:[%s167 + $0x1e0] sm:$0xff] %v288
                %v290 = vld [vmem:[%s166 + $0x3c8] sm:$0xff]
                %291 = vst [vmem:[%s167 + $0x1e8] sm:$0xff] %v290
                %v292 = vld [vmem:[%s166 + $0x3d0] sm:$0xff]
                %293 = vst [vmem:[%s167 + $0x1f0] sm:$0xff] %v292
                %v294 = vld [vmem:[%s166 + $0x3d8] sm:$0xff]
                %295 = vst [vmem:[%s167 + $0x1f8] sm:$0xff] %v294
                %v296 = vld [vmem:[%s166 + $0x400] sm:$0xff]
                %297 = vst [vmem:[%s167 + $0x200] sm:$0xff] %v296
                %v298 = vld [vmem:[%s166 + $0x408] sm:$0xff]
                %299 = vst [vmem:[%s167 + $0x208] sm:$0xff] %v298
                %v300 = vld [vmem:[%s166 + $0x410] sm:$0xff]
                %301 = vst [vmem:[%s167 + $0x210] sm:$0xff] %v300
                %v302 = vld [vmem:[%s166 + $0x418] sm:$0xff]
                %303 = vst [vmem:[%s167 + $0x218] sm:$0xff] %v302
                %v304 = vld [vmem:[%s166 + $0x440] sm:$0xff]
                %305 = vst [vmem:[%s167 + $0x220] sm:$0xff] %v304
                %v306 = vld [vmem:[%s166 + $0x448] sm:$0xff]
                %307 = vst [vmem:[%s167 + $0x228] sm:$0xff] %v306
                %v308 = vld [vmem:[%s166 + $0x450] sm:$0xff]
                %309 = vst [vmem:[%s167 + $0x230] sm:$0xff] %v308
                %v310 = vld [vmem:[%s166 + $0x458] sm:$0xff]
                %311 = vst [vmem:[%s167 + $0x238] sm:$0xff] %v310
                %v312 = vld [vmem:[%s166 + $0x480] sm:$0xff]
                %313 = vst [vmem:[%s167 + $0x240] sm:$0xff] %v312
                %v314 = vld [vmem:[%s166 + $0x488] sm:$0xff]
                %315 = vst [vmem:[%s167 + $0x248] sm:$0xff] %v314
                %v316 = vld [vmem:[%s166 + $0x490] sm:$0xff]
                %317 = vst [vmem:[%s167 + $0x250] sm:$0xff] %v316
                %v318 = vld [vmem:[%s166 + $0x498] sm:$0xff]
                %319 = vst [vmem:[%s167 + $0x258] sm:$0xff] %v318
                %v320 = vld [vmem:[%s166 + $0x4c0] sm:$0xff]
                %321 = vst [vmem:[%s167 + $0x260] sm:$0xff] %v320
                %v322 = vld [vmem:[%s166 + $0x4c8] sm:$0xff]
                %323 = vst [vmem:[%s167 + $0x268] sm:$0xff] %v322
                %v324 = vld [vmem:[%s166 + $0x4d0] sm:$0xff]
                %325 = vst [vmem:[%s167 + $0x270] sm:$0xff] %v324
                %v326 = vld [vmem:[%s166 + $0x4d8] sm:$0xff]
                %327 = vst [vmem:[%s167 + $0x278] sm:$0xff] %v326
                %v328 = vld [vmem:[%s166 + $0x500] sm:$0xff]
                %329 = vst [vmem:[%s167 + $0x280] sm:$0xff] %v328
                %v330 = vld [vmem:[%s166 + $0x508] sm:$0xff]
                %331 = vst [vmem:[%s167 + $0x288] sm:$0xff] %v330
                %v332 = vld [vmem:[%s166 + $0x510] sm:$0xff]
                %333 = vst [vmem:[%s167 + $0x290] sm:$0xff] %v332
                %v334 = vld [vmem:[%s166 + $0x518] sm:$0xff]
                %335 = vst [vmem:[%s167 + $0x298] sm:$0xff] %v334
                %v336 = vld [vmem:[%s166 + $0x540] sm:$0xff]
                %337 = vst [vmem:[%s167 + $0x2a0] sm:$0xff] %v336
                %v338 = vld [vmem:[%s166 + $0x548] sm:$0xff]
                %339 = vst [vmem:[%s167 + $0x2a8] sm:$0xff] %v338
                %v340 = vld [vmem:[%s166 + $0x550] sm:$0xff]
                %341 = vst [vmem:[%s167 + $0x2b0] sm:$0xff] %v340
                %v342 = vld [vmem:[%s166 + $0x558] sm:$0xff]
                %343 = vst [vmem:[%s167 + $0x2b8] sm:$0xff] %v342
                %v344 = vld [vmem:[%s166 + $0x580] sm:$0xff]
                %345 = vst [vmem:[%s167 + $0x2c0] sm:$0xff] %v344
                %v346 = vld [vmem:[%s166 + $0x588] sm:$0xff]
                %347 = vst [vmem:[%s167 + $0x2c8] sm:$0xff] %v346
                %v348 = vld [vmem:[%s166 + $0x590] sm:$0xff]
                %349 = vst [vmem:[%s167 + $0x2d0] sm:$0xff] %v348
                %v350 = vld [vmem:[%s166 + $0x598] sm:$0xff]
                %351 = vst [vmem:[%s167 + $0x2d8] sm:$0xff] %v350
                %v352 = vld [vmem:[%s166 + $0x5c0] sm:$0xff]
                %353 = vst [vmem:[%s167 + $0x2e0] sm:$0xff] %v352
                %v354 = vld [vmem:[%s166 + $0x5c8] sm:$0xff]
                %355 = vst [vmem:[%s167 + $0x2e8] sm:$0xff] %v354
                %v356 = vld [vmem:[%s166 + $0x5d0] sm:$0xff]
                %357 = vst [vmem:[%s167 + $0x2f0] sm:$0xff] %v356
                %v358 = vld [vmem:[%s166 + $0x5d8] sm:$0xff]
                %359 = vst [vmem:[%s167 + $0x2f8] sm:$0xff] %v358
                %v360 = vld [vmem:[%s166 + $0x600] sm:$0xff]
                %361 = vst [vmem:[%s167 + $0x300] sm:$0xff] %v360
                %v362 = vld [vmem:[%s166 + $0x608] sm:$0xff]
                %363 = vst [vmem:[%s167 + $0x308] sm:$0xff] %v362
                %v364 = vld [vmem:[%s166 + $0x610] sm:$0xff]
                %365 = vst [vmem:[%s167 + $0x310] sm:$0xff] %v364
                %v366 = vld [vmem:[%s166 + $0x618] sm:$0xff]
                %367 = vst [vmem:[%s167 + $0x318] sm:$0xff] %v366
                %v368 = vld [vmem:[%s166 + $0x640] sm:$0xff]
                %369 = vst [vmem:[%s167 + $0x320] sm:$0xff] %v368
                %v370 = vld [vmem:[%s166 + $0x648] sm:$0xff]
                %371 = vst [vmem:[%s167 + $0x328] sm:$0xff] %v370
                %v372 = vld [vmem:[%s166 + $0x650] sm:$0xff]
                %373 = vst [vmem:[%s167 + $0x330] sm:$0xff] %v372
                %v374 = vld [vmem:[%s166 + $0x658] sm:$0xff]
                %375 = vst [vmem:[%s167 + $0x338] sm:$0xff] %v374
                %v376 = vld [vmem:[%s166 + $0x680] sm:$0xff]
                %377 = vst [vmem:[%s167 + $0x340] sm:$0xff] %v376
                %v378 = vld [vmem:[%s166 + $0x688] sm:$0xff]
                %379 = vst [vmem:[%s167 + $0x348] sm:$0xff] %v378
                %v380 = vld [vmem:[%s166 + $0x690] sm:$0xff]
                %381 = vst [vmem:[%s167 + $0x350] sm:$0xff] %v380
                %v382 = vld [vmem:[%s166 + $0x698] sm:$0xff]
                %383 = vst [vmem:[%s167 + $0x358] sm:$0xff] %v382
                %v384 = vld [vmem:[%s166 + $0x6c0] sm:$0xff]
                %385 = vst [vmem:[%s167 + $0x360] sm:$0xff] %v384
                %v386 = vld [vmem:[%s166 + $0x6c8] sm:$0xff]
                %387 = vst [vmem:[%s167 + $0x368] sm:$0xff] %v386
                %v388 = vld [vmem:[%s166 + $0x6d0] sm:$0xff]
                %389 = vst [vmem:[%s167 + $0x370] sm:$0xff] %v388
                %v390 = vld [vmem:[%s166 + $0x6d8] sm:$0xff]
                %391 = vst [vmem:[%s167 + $0x378] sm:$0xff] %v390
                %v392 = vld [vmem:[%s166 + $0x700] sm:$0xff]
                %393 = vst [vmem:[%s167 + $0x380] sm:$0xff] %v392
                %v394 = vld [vmem:[%s166 + $0x708] sm:$0xff]
                %395 = vst [vmem:[%s167 + $0x388] sm:$0xff] %v394
                %v396 = vld [vmem:[%s166 + $0x710] sm:$0xff]
                %397 = vst [vmem:[%s167 + $0x390] sm:$0xff] %v396
                %v398 = vld [vmem:[%s166 + $0x718] sm:$0xff]
                %399 = vst [vmem:[%s167 + $0x398] sm:$0xff] %v398
                %v400 = vld [vmem:[%s166 + $0x740] sm:$0xff]
                %401 = vst [vmem:[%s167 + $0x3a0] sm:$0xff] %v400
                %v402 = vld [vmem:[%s166 + $0x748] sm:$0xff]
                %403 = vst [vmem:[%s167 + $0x3a8] sm:$0xff] %v402
                %v404 = vld [vmem:[%s166 + $0x750] sm:$0xff]
                %405 = vst [vmem:[%s167 + $0x3b0] sm:$0xff] %v404
                %v406 = vld [vmem:[%s166 + $0x758] sm:$0xff]
                %407 = vst [vmem:[%s167 + $0x3b8] sm:$0xff] %v406
                %v408 = vld [vmem:[%s166 + $0x780] sm:$0xff]
                %409 = vst [vmem:[%s167 + $0x3c0] sm:$0xff] %v408
                %v410 = vld [vmem:[%s166 + $0x788] sm:$0xff]
                %411 = vst [vmem:[%s167 + $0x3c8] sm:$0xff] %v410
                %v412 = vld [vmem:[%s166 + $0x790] sm:$0xff]
                %413 = vst [vmem:[%s167 + $0x3d0] sm:$0xff] %v412
                %v414 = vld [vmem:[%s166 + $0x798] sm:$0xff]
                %415 = vst [vmem:[%s167 + $0x3d8] sm:$0xff] %v414
                %v416 = vld [vmem:[%s166 + $0x7c0] sm:$0xff]
                %417 = vst [vmem:[%s167 + $0x3e0] sm:$0xff] %v416
                %v418 = vld [vmem:[%s166 + $0x7c8] sm:$0xff]
                %419 = vst [vmem:[%s167 + $0x3e8] sm:$0xff] %v418
                %v420 = vld [vmem:[%s166 + $0x7d0] sm:$0xff]
                %421 = vst [vmem:[%s167 + $0x3f0] sm:$0xff] %v420
                %v422 = vld [vmem:[%s166 + $0x7d8] sm:$0xff]
                %423 = vst [vmem:[%s167 + $0x3f8] sm:$0xff] %v422
                %v424 = vld [vmem:[%s166 + $0x800] sm:$0xff]
                %425 = vst [vmem:[%s167 + $0x400] sm:$0xff] %v424
                %v426 = vld [vmem:[%s166 + $0x808] sm:$0xff]
                %427 = vst [vmem:[%s167 + $0x408] sm:$0xff] %v426
                %v428 = vld [vmem:[%s166 + $0x810] sm:$0xff]
                %429 = vst [vmem:[%s167 + $0x410] sm:$0xff] %v428
                %v430 = vld [vmem:[%s166 + $0x818] sm:$0xff]
                %431 = vst [vmem:[%s167 + $0x418] sm:$0xff] %v430
                %v432 = vld [vmem:[%s166 + $0x840] sm:$0xff]
                %433 = vst [vmem:[%s167 + $0x420] sm:$0xff] %v432
                %v434 = vld [vmem:[%s166 + $0x848] sm:$0xff]
                %435 = vst [vmem:[%s167 + $0x428] sm:$0xff] %v434
                %v436 = vld [vmem:[%s166 + $0x850] sm:$0xff]
                %437 = vst [vmem:[%s167 + $0x430] sm:$0xff] %v436
                %v438 = vld [vmem:[%s166 + $0x858] sm:$0xff]
                %439 = vst [vmem:[%s167 + $0x438] sm:$0xff] %v438
                %v440 = vld [vmem:[%s166 + $0x880] sm:$0xff]
                %441 = vst [vmem:[%s167 + $0x440] sm:$0xff] %v440
                %v442 = vld [vmem:[%s166 + $0x888] sm:$0xff]
                %443 = vst [vmem:[%s167 + $0x448] sm:$0xff] %v442
                %v444 = vld [vmem:[%s166 + $0x890] sm:$0xff]
                %445 = vst [vmem:[%s167 + $0x450] sm:$0xff] %v444
                %v446 = vld [vmem:[%s166 + $0x898] sm:$0xff]
                %447 = vst [vmem:[%s167 + $0x458] sm:$0xff] %v446
                %v448 = vld [vmem:[%s166 + $0x8c0] sm:$0xff]
                %449 = vst [vmem:[%s167 + $0x460] sm:$0xff] %v448
                %v450 = vld [vmem:[%s166 + $0x8c8] sm:$0xff]
                %451 = vst [vmem:[%s167 + $0x468] sm:$0xff] %v450
                %v452 = vld [vmem:[%s166 + $0x8d0] sm:$0xff]
                %453 = vst [vmem:[%s167 + $0x470] sm:$0xff] %v452
                %v454 = vld [vmem:[%s166 + $0x8d8] sm:$0xff]
                %455 = vst [vmem:[%s167 + $0x478] sm:$0xff] %v454
                %v456 = vld [vmem:[%s166 + $0x900] sm:$0xff]
                %457 = vst [vmem:[%s167 + $0x480] sm:$0xff] %v456
                %v458 = vld [vmem:[%s166 + $0x908] sm:$0xff]
                %459 = vst [vmem:[%s167 + $0x488] sm:$0xff] %v458
                %v460 = vld [vmem:[%s166 + $0x910] sm:$0xff]
                %461 = vst [vmem:[%s167 + $0x490] sm:$0xff] %v460
                %v462 = vld [vmem:[%s166 + $0x918] sm:$0xff]
                %463 = vst [vmem:[%s167 + $0x498] sm:$0xff] %v462
                %v464 = vld [vmem:[%s166 + $0x940] sm:$0xff]
                %465 = vst [vmem:[%s167 + $0x4a0] sm:$0xff] %v464
                %v466 = vld [vmem:[%s166 + $0x948] sm:$0xff]
                %467 = vst [vmem:[%s167 + $0x4a8] sm:$0xff] %v466
                %v468 = vld [vmem:[%s166 + $0x950] sm:$0xff]
                %469 = vst [vmem:[%s167 + $0x4b0] sm:$0xff] %v468
                %v470 = vld [vmem:[%s166 + $0x958] sm:$0xff]
                %471 = vst [vmem:[%s167 + $0x4b8] sm:$0xff] %v470
                %v472 = vld [vmem:[%s166 + $0x980] sm:$0xff]
                %473 = vst [vmem:[%s167 + $0x4c0] sm:$0xff] %v472
                %v474 = vld [vmem:[%s166 + $0x988] sm:$0xff]
                %475 = vst [vmem:[%s167 + $0x4c8] sm:$0xff] %v474
                %v476 = vld [vmem:[%s166 + $0x990] sm:$0xff]
                %477 = vst [vmem:[%s167 + $0x4d0] sm:$0xff] %v476
                %v478 = vld [vmem:[%s166 + $0x998] sm:$0xff]
                %479 = vst [vmem:[%s167 + $0x4d8] sm:$0xff] %v478
                %v480 = vld [vmem:[%s166 + $0x9c0] sm:$0xff]
                %481 = vst [vmem:[%s167 + $0x4e0] sm:$0xff] %v480
                %v482 = vld [vmem:[%s166 + $0x9c8] sm:$0xff]
                %483 = vst [vmem:[%s167 + $0x4e8] sm:$0xff] %v482
                %v484 = vld [vmem:[%s166 + $0x9d0] sm:$0xff]
                %485 = vst [vmem:[%s167 + $0x4f0] sm:$0xff] %v484
                %v486 = vld [vmem:[%s166 + $0x9d8] sm:$0xff]
                %487 = vst [vmem:[%s167 + $0x4f8] sm:$0xff] %v486
                %v488 = vld [vmem:[%s166 + $0xa00] sm:$0xff]
                %489 = vst [vmem:[%s167 + $0x500] sm:$0xff] %v488
                %v490 = vld [vmem:[%s166 + $0xa08] sm:$0xff]
                %491 = vst [vmem:[%s167 + $0x508] sm:$0xff] %v490
                %v492 = vld [vmem:[%s166 + $0xa10] sm:$0xff]
                %493 = vst [vmem:[%s167 + $0x510] sm:$0xff] %v492
                %v494 = vld [vmem:[%s166 + $0xa18] sm:$0xff]
                %495 = vst [vmem:[%s167 + $0x518] sm:$0xff] %v494
                %v496 = vld [vmem:[%s166 + $0xa40] sm:$0xff]
                %497 = vst [vmem:[%s167 + $0x520] sm:$0xff] %v496
                %v498 = vld [vmem:[%s166 + $0xa48] sm:$0xff]
                %499 = vst [vmem:[%s167 + $0x528] sm:$0xff] %v498
                %v500 = vld [vmem:[%s166 + $0xa50] sm:$0xff]
                %501 = vst [vmem:[%s167 + $0x530] sm:$0xff] %v500
                %v502 = vld [vmem:[%s166 + $0xa58] sm:$0xff]
                %503 = vst [vmem:[%s167 + $0x538] sm:$0xff] %v502
                %v504 = vld [vmem:[%s166 + $0xa80] sm:$0xff]
                %505 = vst [vmem:[%s167 + $0x540] sm:$0xff] %v504
                %v506 = vld [vmem:[%s166 + $0xa88] sm:$0xff]
                %507 = vst [vmem:[%s167 + $0x548] sm:$0xff] %v506
                %v508 = vld [vmem:[%s166 + $0xa90] sm:$0xff]
                %509 = vst [vmem:[%s167 + $0x550] sm:$0xff] %v508
                %v510 = vld [vmem:[%s166 + $0xa98] sm:$0xff]
                %511 = vst [vmem:[%s167 + $0x558] sm:$0xff] %v510
                %v512 = vld [vmem:[%s166 + $0xac0] sm:$0xff]
                %513 = vst [vmem:[%s167 + $0x560] sm:$0xff] %v512
                %v514 = vld [vmem:[%s166 + $0xac8] sm:$0xff]
                %515 = vst [vmem:[%s167 + $0x568] sm:$0xff] %v514
                %v516 = vld [vmem:[%s166 + $0xad0] sm:$0xff]
                %517 = vst [vmem:[%s167 + $0x570] sm:$0xff] %v516
                %v518 = vld [vmem:[%s166 + $0xad8] sm:$0xff]
                %519 = vst [vmem:[%s167 + $0x578] sm:$0xff] %v518
                %v520 = vld [vmem:[%s166 + $0xb00] sm:$0xff]
                %521 = vst [vmem:[%s167 + $0x580] sm:$0xff] %v520
                %v522 = vld [vmem:[%s166 + $0xb08] sm:$0xff]
                %523 = vst [vmem:[%s167 + $0x588] sm:$0xff] %v522
                %v524 = vld [vmem:[%s166 + $0xb10] sm:$0xff]
                %525 = vst [vmem:[%s167 + $0x590] sm:$0xff] %v524
                %v526 = vld [vmem:[%s166 + $0xb18] sm:$0xff]
                %527 = vst [vmem:[%s167 + $0x598] sm:$0xff] %v526
                %v528 = vld [vmem:[%s166 + $0xb40] sm:$0xff]
                %529 = vst [vmem:[%s167 + $0x5a0] sm:$0xff] %v528
                %v530 = vld [vmem:[%s166 + $0xb48] sm:$0xff]
                %531 = vst [vmem:[%s167 + $0x5a8] sm:$0xff] %v530
                %v532 = vld [vmem:[%s166 + $0xb50] sm:$0xff]
                %533 = vst [vmem:[%s167 + $0x5b0] sm:$0xff] %v532
                %v534 = vld [vmem:[%s166 + $0xb58] sm:$0xff]
                %535 = vst [vmem:[%s167 + $0x5b8] sm:$0xff] %v534
                %v536 = vld [vmem:[%s166 + $0xb80] sm:$0xff]
                %537 = vst [vmem:[%s167 + $0x5c0] sm:$0xff] %v536
                %v538 = vld [vmem:[%s166 + $0xb88] sm:$0xff]
                %539 = vst [vmem:[%s167 + $0x5c8] sm:$0xff] %v538
                %v540 = vld [vmem:[%s166 + $0xb90] sm:$0xff]
                %541 = vst [vmem:[%s167 + $0x5d0] sm:$0xff] %v540
                %v542 = vld [vmem:[%s166 + $0xb98] sm:$0xff]
                %543 = vst [vmem:[%s167 + $0x5d8] sm:$0xff] %v542
                %v544 = vld [vmem:[%s166 + $0xbc0] sm:$0xff]
                %545 = vst [vmem:[%s167 + $0x5e0] sm:$0xff] %v544
                %v546 = vld [vmem:[%s166 + $0xbc8] sm:$0xff]
                %547 = vst [vmem:[%s167 + $0x5e8] sm:$0xff] %v546
                %v548 = vld [vmem:[%s166 + $0xbd0] sm:$0xff]
                %549 = vst [vmem:[%s167 + $0x5f0] sm:$0xff] %v548
                %v550 = vld [vmem:[%s166 + $0xbd8] sm:$0xff]
                %551 = vst [vmem:[%s167 + $0x5f8] sm:$0xff] %v550
                %v552 = vld [vmem:[%s166 + $0xc00] sm:$0xff]
                %553 = vst [vmem:[%s167 + $0x600] sm:$0xff] %v552
                %v554 = vld [vmem:[%s166 + $0xc08] sm:$0xff]
                %555 = vst [vmem:[%s167 + $0x608] sm:$0xff] %v554
                %v556 = vld [vmem:[%s166 + $0xc10] sm:$0xff]
                %557 = vst [vmem:[%s167 + $0x610] sm:$0xff] %v556
                %v558 = vld [vmem:[%s166 + $0xc18] sm:$0xff]
                %559 = vst [vmem:[%s167 + $0x618] sm:$0xff] %v558
                %v560 = vld [vmem:[%s166 + $0xc40] sm:$0xff]
                %561 = vst [vmem:[%s167 + $0x620] sm:$0xff] %v560
                %v562 = vld [vmem:[%s166 + $0xc48] sm:$0xff]
                %563 = vst [vmem:[%s167 + $0x628] sm:$0xff] %v562
                %v564 = vld [vmem:[%s166 + $0xc50] sm:$0xff]
                %565 = vst [vmem:[%s167 + $0x630] sm:$0xff] %v564
                %v566 = vld [vmem:[%s166 + $0xc58] sm:$0xff]
                %567 = vst [vmem:[%s167 + $0x638] sm:$0xff] %v566
                %v568 = vld [vmem:[%s166 + $0xc80] sm:$0xff]
                %569 = vst [vmem:[%s167 + $0x640] sm:$0xff] %v568
                %v570 = vld [vmem:[%s166 + $0xc88] sm:$0xff]
                %571 = vst [vmem:[%s167 + $0x648] sm:$0xff] %v570
                %v572 = vld [vmem:[%s166 + $0xc90] sm:$0xff]
                %573 = vst [vmem:[%s167 + $0x650] sm:$0xff] %v572
                %v574 = vld [vmem:[%s166 + $0xc98] sm:$0xff]
                %575 = vst [vmem:[%s167 + $0x658] sm:$0xff] %v574
                %v576 = vld [vmem:[%s166 + $0xcc0] sm:$0xff]
                %577 = vst [vmem:[%s167 + $0x660] sm:$0xff] %v576
                %v578 = vld [vmem:[%s166 + $0xcc8] sm:$0xff]
                %579 = vst [vmem:[%s167 + $0x668] sm:$0xff] %v578
                %v580 = vld [vmem:[%s166 + $0xcd0] sm:$0xff]
                %581 = vst [vmem:[%s167 + $0x670] sm:$0xff] %v580
                %v582 = vld [vmem:[%s166 + $0xcd8] sm:$0xff]
                %583 = vst [vmem:[%s167 + $0x678] sm:$0xff] %v582
                %v584 = vld [vmem:[%s166 + $0xd00] sm:$0xff]
                %585 = vst [vmem:[%s167 + $0x680] sm:$0xff] %v584
                %v586 = vld [vmem:[%s166 + $0xd08] sm:$0xff]
                %587 = vst [vmem:[%s167 + $0x688] sm:$0xff] %v586
                %v588 = vld [vmem:[%s166 + $0xd10] sm:$0xff]
                %589 = vst [vmem:[%s167 + $0x690] sm:$0xff] %v588
                %v590 = vld [vmem:[%s166 + $0xd18] sm:$0xff]
                %591 = vst [vmem:[%s167 + $0x698] sm:$0xff] %v590
                %v592 = vld [vmem:[%s166 + $0xd40] sm:$0xff]
                %593 = vst [vmem:[%s167 + $0x6a0] sm:$0xff] %v592
                %v594 = vld [vmem:[%s166 + $0xd48] sm:$0xff]
                %595 = vst [vmem:[%s167 + $0x6a8] sm:$0xff] %v594
                %v596 = vld [vmem:[%s166 + $0xd50] sm:$0xff]
                %597 = vst [vmem:[%s167 + $0x6b0] sm:$0xff] %v596
                %v598 = vld [vmem:[%s166 + $0xd58] sm:$0xff]
                %599 = vst [vmem:[%s167 + $0x6b8] sm:$0xff] %v598
                %v600 = vld [vmem:[%s166 + $0xd80] sm:$0xff]
                %601 = vst [vmem:[%s167 + $0x6c0] sm:$0xff] %v600
                %v602 = vld [vmem:[%s166 + $0xd88] sm:$0xff]
                %603 = vst [vmem:[%s167 + $0x6c8] sm:$0xff] %v602
                %v604 = vld [vmem:[%s166 + $0xd90] sm:$0xff]
                %605 = vst [vmem:[%s167 + $0x6d0] sm:$0xff] %v604
                %v606 = vld [vmem:[%s166 + $0xd98] sm:$0xff]
                %607 = vst [vmem:[%s167 + $0x6d8] sm:$0xff] %v606
                %v608 = vld [vmem:[%s166 + $0xdc0] sm:$0xff]
                %609 = vst [vmem:[%s167 + $0x6e0] sm:$0xff] %v608
                %v610 = vld [vmem:[%s166 + $0xdc8] sm:$0xff]
                %611 = vst [vmem:[%s167 + $0x6e8] sm:$0xff] %v610
                %v612 = vld [vmem:[%s166 + $0xdd0] sm:$0xff]
                %613 = vst [vmem:[%s167 + $0x6f0] sm:$0xff] %v612
                %v614 = vld [vmem:[%s166 + $0xdd8] sm:$0xff]
                %615 = vst [vmem:[%s167 + $0x6f8] sm:$0xff] %v614
                %v616 = vld [vmem:[%s166 + $0xe00] sm:$0xff]
                %617 = vst [vmem:[%s167 + $0x700] sm:$0xff] %v616
                %v618 = vld [vmem:[%s166 + $0xe08] sm:$0xff]
                %619 = vst [vmem:[%s167 + $0x708] sm:$0xff] %v618
                %v620 = vld [vmem:[%s166 + $0xe10] sm:$0xff]
                %621 = vst [vmem:[%s167 + $0x710] sm:$0xff] %v620
                %v622 = vld [vmem:[%s166 + $0xe18] sm:$0xff]
                %623 = vst [vmem:[%s167 + $0x718] sm:$0xff] %v622
                %v624 = vld [vmem:[%s166 + $0xe40] sm:$0xff]
                %625 = vst [vmem:[%s167 + $0x720] sm:$0xff] %v624
                %v626 = vld [vmem:[%s166 + $0xe48] sm:$0xff]
                %627 = vst [vmem:[%s167 + $0x728] sm:$0xff] %v626
                %v628 = vld [vmem:[%s166 + $0xe50] sm:$0xff]
                %629 = vst [vmem:[%s167 + $0x730] sm:$0xff] %v628
                %v630 = vld [vmem:[%s166 + $0xe58] sm:$0xff]
                %631 = vst [vmem:[%s167 + $0x738] sm:$0xff] %v630
                %v632 = vld [vmem:[%s166 + $0xe80] sm:$0xff]
                %633 = vst [vmem:[%s167 + $0x740] sm:$0xff] %v632
                %v634 = vld [vmem:[%s166 + $0xe88] sm:$0xff]
                %635 = vst [vmem:[%s167 + $0x748] sm:$0xff] %v634
                %v636 = vld [vmem:[%s166 + $0xe90] sm:$0xff]
                %637 = vst [vmem:[%s167 + $0x750] sm:$0xff] %v636
                %v638 = vld [vmem:[%s166 + $0xe98] sm:$0xff]
                %639 = vst [vmem:[%s167 + $0x758] sm:$0xff] %v638
                %v640 = vld [vmem:[%s166 + $0xec0] sm:$0xff]
                %641 = vst [vmem:[%s167 + $0x760] sm:$0xff] %v640
                %v642 = vld [vmem:[%s166 + $0xec8] sm:$0xff]
                %643 = vst [vmem:[%s167 + $0x768] sm:$0xff] %v642
                %v644 = vld [vmem:[%s166 + $0xed0] sm:$0xff]
                %645 = vst [vmem:[%s167 + $0x770] sm:$0xff] %v644
                %v646 = vld [vmem:[%s166 + $0xed8] sm:$0xff]
                %647 = vst [vmem:[%s167 + $0x778] sm:$0xff] %v646
                %v648 = vld [vmem:[%s166 + $0xf00] sm:$0xff]
                %649 = vst [vmem:[%s167 + $0x780] sm:$0xff] %v648
                %v650 = vld [vmem:[%s166 + $0xf08] sm:$0xff]
                %651 = vst [vmem:[%s167 + $0x788] sm:$0xff] %v650
                %v652 = vld [vmem:[%s166 + $0xf10] sm:$0xff]
                %653 = vst [vmem:[%s167 + $0x790] sm:$0xff] %v652
                %v654 = vld [vmem:[%s166 + $0xf18] sm:$0xff]
                %655 = vst [vmem:[%s167 + $0x798] sm:$0xff] %v654
                %v656 = vld [vmem:[%s166 + $0xf40] sm:$0xff]
                %657 = vst [vmem:[%s167 + $0x7a0] sm:$0xff] %v656
                %v658 = vld [vmem:[%s166 + $0xf48] sm:$0xff]
                %659 = vst [vmem:[%s167 + $0x7a8] sm:$0xff] %v658
                %v660 = vld [vmem:[%s166 + $0xf50] sm:$0xff]
                %661 = vst [vmem:[%s167 + $0x7b0] sm:$0xff] %v660
                %v662 = vld [vmem:[%s166 + $0xf58] sm:$0xff]
                %663 = vst [vmem:[%s167 + $0x7b8] sm:$0xff] %v662
                %v664 = vld [vmem:[%s166 + $0xf80] sm:$0xff]
                %665 = vst [vmem:[%s167 + $0x7c0] sm:$0xff] %v664
                %v666 = vld [vmem:[%s166 + $0xf88] sm:$0xff]
                %667 = vst [vmem:[%s167 + $0x7c8] sm:$0xff] %v666
                %v668 = vld [vmem:[%s166 + $0xf90] sm:$0xff]
                %669 = vst [vmem:[%s167 + $0x7d0] sm:$0xff] %v668
                %v670 = vld [vmem:[%s166 + $0xf98] sm:$0xff]
                %671 = vst [vmem:[%s167 + $0x7d8] sm:$0xff] %v670
                %v672 = vld [vmem:[%s166 + $0xfc0] sm:$0xff]
                %673 = vst [vmem:[%s167 + $0x7e0] sm:$0xff] %v672
                %v674 = vld [vmem:[%s166 + $0xfc8] sm:$0xff]
                %675 = vst [vmem:[%s167 + $0x7e8] sm:$0xff] %v674
                %v676 = vld [vmem:[%s166 + $0xfd0] sm:$0xff]
                %677 = vst [vmem:[%s167 + $0x7f0] sm:$0xff] %v676
                %v678 = vld [vmem:[%s166 + $0xfd8] sm:$0xff]
                %679 = vst [vmem:[%s167 + $0x7f8] sm:$0xff] %v678
                %v680 = vld [vmem:[%s166 + $0x1000] sm:$0xff]
                %681 = vst [vmem:[%s167 + $0x800] sm:$0xff] %v680
                %v682 = vld [vmem:[%s166 + $0x1008] sm:$0xff]
                %683 = vst [vmem:[%s167 + $0x808] sm:$0xff] %v682
                %v684 = vld [vmem:[%s166 + $0x1010] sm:$0xff]
                %685 = vst [vmem:[%s167 + $0x810] sm:$0xff] %v684
                %v686 = vld [vmem:[%s166 + $0x1018] sm:$0xff]
                %687 = vst [vmem:[%s167 + $0x818] sm:$0xff] %v686
                %v688 = vld [vmem:[%s166 + $0x1040] sm:$0xff]
                %689 = vst [vmem:[%s167 + $0x820] sm:$0xff] %v688
                %v690 = vld [vmem:[%s166 + $0x1048] sm:$0xff]
                %691 = vst [vmem:[%s167 + $0x828] sm:$0xff] %v690
                %v692 = vld [vmem:[%s166 + $0x1050] sm:$0xff]
                %693 = vst [vmem:[%s167 + $0x830] sm:$0xff] %v692
                %v694 = vld [vmem:[%s166 + $0x1058] sm:$0xff]
                %695 = vst [vmem:[%s167 + $0x838] sm:$0xff] %v694
                %v696 = vld [vmem:[%s166 + $0x1080] sm:$0xff]
                %697 = vst [vmem:[%s167 + $0x840] sm:$0xff] %v696
                %v698 = vld [vmem:[%s166 + $0x1088] sm:$0xff]
                %699 = vst [vmem:[%s167 + $0x848] sm:$0xff] %v698
                %v700 = vld [vmem:[%s166 + $0x1090] sm:$0xff]
                %701 = vst [vmem:[%s167 + $0x850] sm:$0xff] %v700
                %v702 = vld [vmem:[%s166 + $0x1098] sm:$0xff]
                %703 = vst [vmem:[%s167 + $0x858] sm:$0xff] %v702
                %v704 = vld [vmem:[%s166 + $0x10c0] sm:$0xff]
                %705 = vst [vmem:[%s167 + $0x860] sm:$0xff] %v704
                %v706 = vld [vmem:[%s166 + $0x10c8] sm:$0xff]
                %707 = vst [vmem:[%s167 + $0x868] sm:$0xff] %v706
                %v708 = vld [vmem:[%s166 + $0x10d0] sm:$0xff]
                %709 = vst [vmem:[%s167 + $0x870] sm:$0xff] %v708
                %v710 = vld [vmem:[%s166 + $0x10d8] sm:$0xff]
                %711 = vst [vmem:[%s167 + $0x878] sm:$0xff] %v710
                %v712 = vld [vmem:[%s166 + $0x1100] sm:$0xff]
                %713 = vst [vmem:[%s167 + $0x880] sm:$0xff] %v712
                %v714 = vld [vmem:[%s166 + $0x1108] sm:$0xff]
                %715 = vst [vmem:[%s167 + $0x888] sm:$0xff] %v714
                %v716 = vld [vmem:[%s166 + $0x1110] sm:$0xff]
                %717 = vst [vmem:[%s167 + $0x890] sm:$0xff] %v716
                %v718 = vld [vmem:[%s166 + $0x1118] sm:$0xff]
                %719 = vst [vmem:[%s167 + $0x898] sm:$0xff] %v718
                %v720 = vld [vmem:[%s166 + $0x1140] sm:$0xff]
                %721 = vst [vmem:[%s167 + $0x8a0] sm:$0xff] %v720
                %v722 = vld [vmem:[%s166 + $0x1148] sm:$0xff]
                %723 = vst [vmem:[%s167 + $0x8a8] sm:$0xff] %v722
                %v724 = vld [vmem:[%s166 + $0x1150] sm:$0xff]
                %725 = vst [vmem:[%s167 + $0x8b0] sm:$0xff] %v724
                %v726 = vld [vmem:[%s166 + $0x1158] sm:$0xff]
                %727 = vst [vmem:[%s167 + $0x8b8] sm:$0xff] %v726
                %v728 = vld [vmem:[%s166 + $0x1180] sm:$0xff]
                %729 = vst [vmem:[%s167 + $0x8c0] sm:$0xff] %v728
                %v730 = vld [vmem:[%s166 + $0x1188] sm:$0xff]
                %731 = vst [vmem:[%s167 + $0x8c8] sm:$0xff] %v730
                %v732 = vld [vmem:[%s166 + $0x1190] sm:$0xff]
                %733 = vst [vmem:[%s167 + $0x8d0] sm:$0xff] %v732
                %v734 = vld [vmem:[%s166 + $0x1198] sm:$0xff]
                %735 = vst [vmem:[%s167 + $0x8d8] sm:$0xff] %v734
                %v736 = vld [vmem:[%s166 + $0x11c0] sm:$0xff]
                %737 = vst [vmem:[%s167 + $0x8e0] sm:$0xff] %v736
                %v738 = vld [vmem:[%s166 + $0x11c8] sm:$0xff]
                %739 = vst [vmem:[%s167 + $0x8e8] sm:$0xff] %v738
                %v740 = vld [vmem:[%s166 + $0x11d0] sm:$0xff]
                %741 = vst [vmem:[%s167 + $0x8f0] sm:$0xff] %v740
                %v742 = vld [vmem:[%s166 + $0x11d8] sm:$0xff]
                %743 = vst [vmem:[%s167 + $0x8f8] sm:$0xff] %v742
                %v744 = vld [vmem:[%s166 + $0x1200] sm:$0xff]
                %745 = vst [vmem:[%s167 + $0x900] sm:$0xff] %v744
                %v746 = vld [vmem:[%s166 + $0x1208] sm:$0xff]
                %747 = vst [vmem:[%s167 + $0x908] sm:$0xff] %v746
                %v748 = vld [vmem:[%s166 + $0x1210] sm:$0xff]
                %749 = vst [vmem:[%s167 + $0x910] sm:$0xff] %v748
                %v750 = vld [vmem:[%s166 + $0x1218] sm:$0xff]
                %751 = vst [vmem:[%s167 + $0x918] sm:$0xff] %v750
                %v752 = vld [vmem:[%s166 + $0x1240] sm:$0xff]
                %753 = vst [vmem:[%s167 + $0x920] sm:$0xff] %v752
                %v754 = vld [vmem:[%s166 + $0x1248] sm:$0xff]
                %755 = vst [vmem:[%s167 + $0x928] sm:$0xff] %v754
                %v756 = vld [vmem:[%s166 + $0x1250] sm:$0xff]
                %757 = vst [vmem:[%s167 + $0x930] sm:$0xff] %v756
                %v758 = vld [vmem:[%s166 + $0x1258] sm:$0xff]
                %759 = vst [vmem:[%s167 + $0x938] sm:$0xff] %v758
                %v760 = vld [vmem:[%s166 + $0x1280] sm:$0xff]
                %761 = vst [vmem:[%s167 + $0x940] sm:$0xff] %v760
                %v762 = vld [vmem:[%s166 + $0x1288] sm:$0xff]
                %763 = vst [vmem:[%s167 + $0x948] sm:$0xff] %v762
                %v764 = vld [vmem:[%s166 + $0x1290] sm:$0xff]
                %765 = vst [vmem:[%s167 + $0x950] sm:$0xff] %v764
                %v766 = vld [vmem:[%s166 + $0x1298] sm:$0xff]
                %767 = vst [vmem:[%s167 + $0x958] sm:$0xff] %v766
                %v768 = vld [vmem:[%s166 + $0x12c0] sm:$0xff]
                %769 = vst [vmem:[%s167 + $0x960] sm:$0xff] %v768
                %v770 = vld [vmem:[%s166 + $0x12c8] sm:$0xff]
                %771 = vst [vmem:[%s167 + $0x968] sm:$0xff] %v770
                %v772 = vld [vmem:[%s166 + $0x12d0] sm:$0xff]
                %773 = vst [vmem:[%s167 + $0x970] sm:$0xff] %v772
                %v774 = vld [vmem:[%s166 + $0x12d8] sm:$0xff]
                %775 = vst [vmem:[%s167 + $0x978] sm:$0xff] %v774
                %v776 = vld [vmem:[%s166 + $0x1300] sm:$0xff]
                %777 = vst [vmem:[%s167 + $0x980] sm:$0xff] %v776
                %v778 = vld [vmem:[%s166 + $0x1308] sm:$0xff]
                %779 = vst [vmem:[%s167 + $0x988] sm:$0xff] %v778
                %v780 = vld [vmem:[%s166 + $0x1310] sm:$0xff]
                %781 = vst [vmem:[%s167 + $0x990] sm:$0xff] %v780
                %v782 = vld [vmem:[%s166 + $0x1318] sm:$0xff]
                %783 = vst [vmem:[%s167 + $0x998] sm:$0xff] %v782
                %v784 = vld [vmem:[%s166 + $0x1340] sm:$0xff]
                %785 = vst [vmem:[%s167 + $0x9a0] sm:$0xff] %v784
                %v786 = vld [vmem:[%s166 + $0x1348] sm:$0xff]
                %787 = vst [vmem:[%s167 + $0x9a8] sm:$0xff] %v786
                %v788 = vld [vmem:[%s166 + $0x1350] sm:$0xff]
                %789 = vst [vmem:[%s167 + $0x9b0] sm:$0xff] %v788
                %v790 = vld [vmem:[%s166 + $0x1358] sm:$0xff]
                %791 = vst [vmem:[%s167 + $0x9b8] sm:$0xff] %v790
                %v792 = vld [vmem:[%s166 + $0x1380] sm:$0xff]
                %793 = vst [vmem:[%s167 + $0x9c0] sm:$0xff] %v792
                %v794 = vld [vmem:[%s166 + $0x1388] sm:$0xff]
                %795 = vst [vmem:[%s167 + $0x9c8] sm:$0xff] %v794
                %v796 = vld [vmem:[%s166 + $0x1390] sm:$0xff]
                %797 = vst [vmem:[%s167 + $0x9d0] sm:$0xff] %v796
                %v798 = vld [vmem:[%s166 + $0x1398] sm:$0xff]
                %799 = vst [vmem:[%s167 + $0x9d8] sm:$0xff] %v798
                %v800 = vld [vmem:[%s166 + $0x13c0] sm:$0xff]
                %801 = vst [vmem:[%s167 + $0x9e0] sm:$0xff] %v800
                %v802 = vld [vmem:[%s166 + $0x13c8] sm:$0xff]
                %803 = vst [vmem:[%s167 + $0x9e8] sm:$0xff] %v802
                %v804 = vld [vmem:[%s166 + $0x13d0] sm:$0xff]
                %805 = vst [vmem:[%s167 + $0x9f0] sm:$0xff] %v804
                %v806 = vld [vmem:[%s166 + $0x13d8] sm:$0xff]
                %807 = vst [vmem:[%s167 + $0x9f8] sm:$0xff] %v806
                %v808 = vld [vmem:[%s166 + $0x1400] sm:$0xff]
                %809 = vst [vmem:[%s167 + $0xa00] sm:$0xff] %v808
                %v810 = vld [vmem:[%s166 + $0x1408] sm:$0xff]
                %811 = vst [vmem:[%s167 + $0xa08] sm:$0xff] %v810
                %v812 = vld [vmem:[%s166 + $0x1410] sm:$0xff]
                %813 = vst [vmem:[%s167 + $0xa10] sm:$0xff] %v812
                %v814 = vld [vmem:[%s166 + $0x1418] sm:$0xff]
                %815 = vst [vmem:[%s167 + $0xa18] sm:$0xff] %v814
                %v816 = vld [vmem:[%s166 + $0x1440] sm:$0xff]
                %817 = vst [vmem:[%s167 + $0xa20] sm:$0xff] %v816
                %v818 = vld [vmem:[%s166 + $0x1448] sm:$0xff]
                %819 = vst [vmem:[%s167 + $0xa28] sm:$0xff] %v818
                %v820 = vld [vmem:[%s166 + $0x1450] sm:$0xff]
                %821 = vst [vmem:[%s167 + $0xa30] sm:$0xff] %v820
                %v822 = vld [vmem:[%s166 + $0x1458] sm:$0xff]
                %823 = vst [vmem:[%s167 + $0xa38] sm:$0xff] %v822
                %v824 = vld [vmem:[%s166 + $0x1480] sm:$0xff]
                %825 = vst [vmem:[%s167 + $0xa40] sm:$0xff] %v824
                %v826 = vld [vmem:[%s166 + $0x1488] sm:$0xff]
                %827 = vst [vmem:[%s167 + $0xa48] sm:$0xff] %v826
                %v828 = vld [vmem:[%s166 + $0x1490] sm:$0xff]
                %829 = vst [vmem:[%s167 + $0xa50] sm:$0xff] %v828
                %v830 = vld [vmem:[%s166 + $0x1498] sm:$0xff]
                %831 = vst [vmem:[%s167 + $0xa58] sm:$0xff] %v830
                %v832 = vld [vmem:[%s166 + $0x14c0] sm:$0xff]
                %833 = vst [vmem:[%s167 + $0xa60] sm:$0xff] %v832
                %v834 = vld [vmem:[%s166 + $0x14c8] sm:$0xff]
                %835 = vst [vmem:[%s167 + $0xa68] sm:$0xff] %v834
                %v836 = vld [vmem:[%s166 + $0x14d0] sm:$0xff]
                %837 = vst [vmem:[%s167 + $0xa70] sm:$0xff] %v836
                %v838 = vld [vmem:[%s166 + $0x14d8] sm:$0xff]
                %839 = vst [vmem:[%s167 + $0xa78] sm:$0xff] %v838
                %v840 = vld [vmem:[%s166 + $0x1500] sm:$0xff]
                %841 = vst [vmem:[%s167 + $0xa80] sm:$0xff] %v840
                %v842 = vld [vmem:[%s166 + $0x1508] sm:$0xff]
                %843 = vst [vmem:[%s167 + $0xa88] sm:$0xff] %v842
                %v844 = vld [vmem:[%s166 + $0x1510] sm:$0xff]
                %845 = vst [vmem:[%s167 + $0xa90] sm:$0xff] %v844
                %v846 = vld [vmem:[%s166 + $0x1518] sm:$0xff]
                %847 = vst [vmem:[%s167 + $0xa98] sm:$0xff] %v846
                %v848 = vld [vmem:[%s166 + $0x1540] sm:$0xff]
                %849 = vst [vmem:[%s167 + $0xaa0] sm:$0xff] %v848
                %v850 = vld [vmem:[%s166 + $0x1548] sm:$0xff]
                %851 = vst [vmem:[%s167 + $0xaa8] sm:$0xff] %v850
                %v852 = vld [vmem:[%s166 + $0x1550] sm:$0xff]
                %853 = vst [vmem:[%s167 + $0xab0] sm:$0xff] %v852
                %v854 = vld [vmem:[%s166 + $0x1558] sm:$0xff]
                %855 = vst [vmem:[%s167 + $0xab8] sm:$0xff] %v854
                %v856 = vld [vmem:[%s166 + $0x1580] sm:$0xff]
                %857 = vst [vmem:[%s167 + $0xac0] sm:$0xff] %v856
                %v858 = vld [vmem:[%s166 + $0x1588] sm:$0xff]
                %859 = vst [vmem:[%s167 + $0xac8] sm:$0xff] %v858
                %v860 = vld [vmem:[%s166 + $0x1590] sm:$0xff]
                %861 = vst [vmem:[%s167 + $0xad0] sm:$0xff] %v860
                %v862 = vld [vmem:[%s166 + $0x1598] sm:$0xff]
                %863 = vst [vmem:[%s167 + $0xad8] sm:$0xff] %v862
                %v864 = vld [vmem:[%s166 + $0x15c0] sm:$0xff]
                %865 = vst [vmem:[%s167 + $0xae0] sm:$0xff] %v864
                %v866 = vld [vmem:[%s166 + $0x15c8] sm:$0xff]
                %867 = vst [vmem:[%s167 + $0xae8] sm:$0xff] %v866
                %v868 = vld [vmem:[%s166 + $0x15d0] sm:$0xff]
                %869 = vst [vmem:[%s167 + $0xaf0] sm:$0xff] %v868
                %v870 = vld [vmem:[%s166 + $0x15d8] sm:$0xff]
                %871 = vst [vmem:[%s167 + $0xaf8] sm:$0xff] %v870
                %v872 = vld [vmem:[%s166 + $0x1600] sm:$0xff]
                %873 = vst [vmem:[%s167 + $0xb00] sm:$0xff] %v872
                %v874 = vld [vmem:[%s166 + $0x1608] sm:$0xff]
                %875 = vst [vmem:[%s167 + $0xb08] sm:$0xff] %v874
                %v876 = vld [vmem:[%s166 + $0x1610] sm:$0xff]
                %877 = vst [vmem:[%s167 + $0xb10] sm:$0xff] %v876
                %v878 = vld [vmem:[%s166 + $0x1618] sm:$0xff]
                %879 = vst [vmem:[%s167 + $0xb18] sm:$0xff] %v878
                %v880 = vld [vmem:[%s166 + $0x1640] sm:$0xff]
                %881 = vst [vmem:[%s167 + $0xb20] sm:$0xff] %v880
                %v882 = vld [vmem:[%s166 + $0x1648] sm:$0xff]
                %883 = vst [vmem:[%s167 + $0xb28] sm:$0xff] %v882
                %v884 = vld [vmem:[%s166 + $0x1650] sm:$0xff]
                %885 = vst [vmem:[%s167 + $0xb30] sm:$0xff] %v884
                %v886 = vld [vmem:[%s166 + $0x1658] sm:$0xff]
                %887 = vst [vmem:[%s167 + $0xb38] sm:$0xff] %v886
                %v888 = vld [vmem:[%s166 + $0x1680] sm:$0xff]
                %889 = vst [vmem:[%s167 + $0xb40] sm:$0xff] %v888
                %v890 = vld [vmem:[%s166 + $0x1688] sm:$0xff]
                %891 = vst [vmem:[%s167 + $0xb48] sm:$0xff] %v890
                %v892 = vld [vmem:[%s166 + $0x1690] sm:$0xff]
                %893 = vst [vmem:[%s167 + $0xb50] sm:$0xff] %v892
                %v894 = vld [vmem:[%s166 + $0x1698] sm:$0xff]
                %895 = vst [vmem:[%s167 + $0xb58] sm:$0xff] %v894
                %v896 = vld [vmem:[%s166 + $0x16c0] sm:$0xff]
                %897 = vst [vmem:[%s167 + $0xb60] sm:$0xff] %v896
                %v898 = vld [vmem:[%s166 + $0x16c8] sm:$0xff]
                %899 = vst [vmem:[%s167 + $0xb68] sm:$0xff] %v898
                %v900 = vld [vmem:[%s166 + $0x16d0] sm:$0xff]
                %901 = vst [vmem:[%s167 + $0xb70] sm:$0xff] %v900
                %v902 = vld [vmem:[%s166 + $0x16d8] sm:$0xff]
                %903 = vst [vmem:[%s167 + $0xb78] sm:$0xff] %v902
                %v904 = vld [vmem:[%s166 + $0x1700] sm:$0xff]
                %905 = vst [vmem:[%s167 + $0xb80] sm:$0xff] %v904
                %v906 = vld [vmem:[%s166 + $0x1708] sm:$0xff]
                %907 = vst [vmem:[%s167 + $0xb88] sm:$0xff] %v906
                %v908 = vld [vmem:[%s166 + $0x1710] sm:$0xff]
                %909 = vst [vmem:[%s167 + $0xb90] sm:$0xff] %v908
                %v910 = vld [vmem:[%s166 + $0x1718] sm:$0xff]
                %911 = vst [vmem:[%s167 + $0xb98] sm:$0xff] %v910
                %v912 = vld [vmem:[%s166 + $0x1740] sm:$0xff]
                %913 = vst [vmem:[%s167 + $0xba0] sm:$0xff] %v912
                %v914 = vld [vmem:[%s166 + $0x1748] sm:$0xff]
                %915 = vst [vmem:[%s167 + $0xba8] sm:$0xff] %v914
                %v916 = vld [vmem:[%s166 + $0x1750] sm:$0xff]
                %917 = vst [vmem:[%s167 + $0xbb0] sm:$0xff] %v916
                %v918 = vld [vmem:[%s166 + $0x1758] sm:$0xff]
                %919 = vst [vmem:[%s167 + $0xbb8] sm:$0xff] %v918
                %v920 = vld [vmem:[%s166 + $0x1780] sm:$0xff]
                %921 = vst [vmem:[%s167 + $0xbc0] sm:$0xff] %v920
                %v922 = vld [vmem:[%s166 + $0x1788] sm:$0xff]
                %923 = vst [vmem:[%s167 + $0xbc8] sm:$0xff] %v922
                %v924 = vld [vmem:[%s166 + $0x1790] sm:$0xff]
                %925 = vst [vmem:[%s167 + $0xbd0] sm:$0xff] %v924
                %v926 = vld [vmem:[%s166 + $0x1798] sm:$0xff]
                %927 = vst [vmem:[%s167 + $0xbd8] sm:$0xff] %v926
                %v928 = vld [vmem:[%s166 + $0x17c0] sm:$0xff]
                %929 = vst [vmem:[%s167 + $0xbe0] sm:$0xff] %v928
                %v930 = vld [vmem:[%s166 + $0x17c8] sm:$0xff]
                %931 = vst [vmem:[%s167 + $0xbe8] sm:$0xff] %v930
                %v932 = vld [vmem:[%s166 + $0x17d0] sm:$0xff]
                %933 = vst [vmem:[%s167 + $0xbf0] sm:$0xff] %v932
                %v934 = vld [vmem:[%s166 + $0x17d8] sm:$0xff]
                %935 = vst [vmem:[%s167 + $0xbf8] sm:$0xff] %v934
                %v936 = vld [vmem:[%s166 + $0x1800] sm:$0xff]
                %937 = vst [vmem:[%s167 + $0xc00] sm:$0xff] %v936
                %v938 = vld [vmem:[%s166 + $0x1808] sm:$0xff]
                %939 = vst [vmem:[%s167 + $0xc08] sm:$0xff] %v938
                %v940 = vld [vmem:[%s166 + $0x1810] sm:$0xff]
                %941 = vst [vmem:[%s167 + $0xc10] sm:$0xff] %v940
                %v942 = vld [vmem:[%s166 + $0x1818] sm:$0xff]
                %943 = vst [vmem:[%s167 + $0xc18] sm:$0xff] %v942
                %v944 = vld [vmem:[%s166 + $0x1840] sm:$0xff]
                %945 = vst [vmem:[%s167 + $0xc20] sm:$0xff] %v944
                %v946 = vld [vmem:[%s166 + $0x1848] sm:$0xff]
                %947 = vst [vmem:[%s167 + $0xc28] sm:$0xff] %v946
                %v948 = vld [vmem:[%s166 + $0x1850] sm:$0xff]
                %949 = vst [vmem:[%s167 + $0xc30] sm:$0xff] %v948
                %v950 = vld [vmem:[%s166 + $0x1858] sm:$0xff]
                %951 = vst [vmem:[%s167 + $0xc38] sm:$0xff] %v950
                %v952 = vld [vmem:[%s166 + $0x1880] sm:$0xff]
                %953 = vst [vmem:[%s167 + $0xc40] sm:$0xff] %v952
                %v954 = vld [vmem:[%s166 + $0x1888] sm:$0xff]
                %955 = vst [vmem:[%s167 + $0xc48] sm:$0xff] %v954
                %v956 = vld [vmem:[%s166 + $0x1890] sm:$0xff]
                %957 = vst [vmem:[%s167 + $0xc50] sm:$0xff] %v956
                %v958 = vld [vmem:[%s166 + $0x1898] sm:$0xff]
                %959 = vst [vmem:[%s167 + $0xc58] sm:$0xff] %v958
                %v960 = vld [vmem:[%s166 + $0x18c0] sm:$0xff]
                %961 = vst [vmem:[%s167 + $0xc60] sm:$0xff] %v960
                %v962 = vld [vmem:[%s166 + $0x18c8] sm:$0xff]
                %963 = vst [vmem:[%s167 + $0xc68] sm:$0xff] %v962
                %v964 = vld [vmem:[%s166 + $0x18d0] sm:$0xff]
                %965 = vst [vmem:[%s167 + $0xc70] sm:$0xff] %v964
                %v966 = vld [vmem:[%s166 + $0x18d8] sm:$0xff]
                %967 = vst [vmem:[%s167 + $0xc78] sm:$0xff] %v966
              $region41: #{inverse_cifar10_forward.5} parent=35 // loop_footer
                %s165 = sadd.s32 1, %s161
              $region42: #{inverse_cifar10_forward.5} parent=35 // loop_footer_branch
                %160 = sbr.rel target = $region38
              $region43: #{inverse_cifar10_forward.5} parent=35 // loop_exit
                _
            $region36: #{inverse_cifar10_forward.5} parent=31 // pred_fallthru
              _
            // Predicated region
            $region44: #{inverse_cifar10_forward.5} parent=31 // pred_check
              _
            $region45: #{inverse_cifar10_forward.5} parent=31 // pred_check_branch
              %969 = sbr.rel target = $region47
            $region46: #{inverse_cifar10_forward.5} parent=31 // pred_region
              _
            $region47: #{inverse_cifar10_forward.5} parent=31 // pred_fallthru
              _
          $region32: #{inverse_cifar10_forward.5} parent=27 // pred_fallthru
            _
          %970 = vnop
        $region28: #{inverse_cifar10_forward.5} parent=23 // pred_fallthru
          _
      $region24: #{inverse_cifar10_forward.5} parent=5 // pred_fallthru
        _
      %p971 = scmp.le.s32.totalorder 1, %s9
      %p972 = scmp.lt.s32.totalorder %s9, 5
      %p973 = pnand %p971, %p972
      %p974 = pneg %p973
      // Predicated region
      $region48: #{inverse_cifar10_forward.5} parent=5 // pred_check
        _
      $region49: #{inverse_cifar10_forward.5} parent=5 // pred_check_branch
        %976 = sbr.rel (%p973) target = $region51
      $region50: #{inverse_cifar10_forward.5} parent=5 // pred_region
        %s977 = ssub.s32 %s9, 1
        %s978 = sand.u32 %s36, 1
        %s979 = sand.u32 %s36, 1
        %s980 = smul.addr %s979, 3200
        %s981 = scalar_lea.vmem [#allocation2], %s980
        // Predicated region
        $region52: #{inverse_cifar10_forward.5} parent=50 // pred_check
          %p982 = pneg %p49
        $region53: #{inverse_cifar10_forward.5} parent=50 // pred_check_branch
          %984 = sbr.rel (%p982) target = $region55
        $region54: #{inverse_cifar10_forward.5} parent=50 // pred_region
          _
        $region55: #{inverse_cifar10_forward.5} parent=50 // pred_fallthru
          _
        %s985 = sand.u32 %s36, 1
        %s986 = sand.u32 %s36, 1
        %s987 = smul.addr %s986, 3200
        %s988 = scalar_lea.vmem [#allocation2], %s987
        %p989 = pneg %p49
        %p990 = pneg %p46
        %p991 = pneg %p70
        %p992 = pneg %p67
        %p993 = pneg %p91
        %p994 = pneg %p88
        %p995 = pneg %p119
        %p996 = pneg %p116
        %s997 = smul.u32 4, %s19
        %p998 = scmp.lt.s32.totalorder %s18, 1
        %s999 = scalar_select %p998, %s18, 1
        %p1000 = scmp.lt.s32.totalorder %s997, 7
        %s1001 = scalar_select %p1000, %s997, 7
        %s1002 = smul.addr %s999, 8
        %s1003 = sadd.s32 %s1001, %s1002
        %s1004 = smul.addr %s1003, 4
        %s1005 = scalar_lea.vmem %s3, %s1004
        %s1006 = smul.u32 4, %s19
        %s1007 = smul.u32 4, %s19
        %p1008 = scmp.lt.s32.totalorder %s18, 1
        %s1009 = scalar_select %p1008, %s18, 1
        %p1010 = scmp.lt.s32.totalorder %s1007, 7
        %s1011 = scalar_select %p1010, %s1007, 7
        %s1012 = smul.addr %s1009, 8
        %s1013 = sadd.s32 %s1011, %s1012
        %s1014 = smul.addr %s1013, 4
        %s1015 = scalar_lea.vmem %s3, %s1014
        %s1016 = smul.u32 4, %s19
        %v1017 = vld [vmem:[%s1] sm:$0x77]
        %v1018 = vld [vmem:[%s1 + $0x8] sm:$0x77]
        %v1019 = vld [vmem:[%s1 + $0x10] sm:$0x77]
        %v1020 = vld [vmem:[%s1 + $0x18] sm:$0x7]
        %v1021 = vld [vmem:[%s981] sm:$0xff]
        %v1022 = vld [vmem:[%s981 + $0x8] sm:$0xff]
        %v1023 = vld [vmem:[%s981 + $0x10] sm:$0xff]
        %v1024 = vld [vmem:[%s981 + $0x18] sm:$0xff]
        %v1025 = vld [vmem:[%s981 + $0x20] sm:$0xff]
        %v1026 = vld [vmem:[%s981 + $0x28] sm:$0xff]
        %v1027 = vld [vmem:[%s981 + $0x30] sm:$0xff]
        %v1028 = vld [vmem:[%s981 + $0x38] sm:$0xff]
        %v1029 = vld [vmem:[%s981 + $0x40] sm:$0xff]
        %v1030 = vld [vmem:[%s981 + $0x48] sm:$0xff]
        %v1031 = vld [vmem:[%s981 + $0x50] sm:$0xff]
        %v1032 = vld [vmem:[%s981 + $0x58] sm:$0xff]
        %v1033 = vld [vmem:[%s981 + $0x60] sm:$0xff]
        %v1034 = vld [vmem:[%s981 + $0x68] sm:$0xff]
        %v1035 = vld [vmem:[%s981 + $0x70] sm:$0xff]
        %v1036 = vld [vmem:[%s981 + $0x78] sm:$0xff]
        %v1037 = vld [vmem:[%s981 + $0x80] sm:$0xff]
        %v1038 = vld [vmem:[%s981 + $0x88] sm:$0xff]
        %v1039 = vld [vmem:[%s981 + $0x90] sm:$0xff]
        %v1040 = vld [vmem:[%s981 + $0x98] sm:$0xff]
        %v1041 = vld [vmem:[%s981 + $0xa0] sm:$0xff]
        %v1042 = vld [vmem:[%s981 + $0xa8] sm:$0xff]
        %v1043 = vld [vmem:[%s981 + $0xb0] sm:$0xff]
        %v1044 = vld [vmem:[%s981 + $0xb8] sm:$0xff]
        %v1045 = vld [vmem:[%s981 + $0xc0] sm:$0xff]
        %v1046 = vld [vmem:[%s981 + $0xc8] sm:$0xff]
        %v1047 = vld [vmem:[%s981 + $0xd0] sm:$0xff]
        %v1048 = vld [vmem:[%s981 + $0xd8] sm:$0xff]
        %v1049 = vld [vmem:[%s981 + $0xe0] sm:$0xff]
        %v1050 = vld [vmem:[%s981 + $0xe8] sm:$0xff]
        %v1051 = vld [vmem:[%s981 + $0xf0] sm:$0xff]
        %v1052 = vld [vmem:[%s981 + $0xf8] sm:$0xff]
        %v1053 = vld [vmem:[%s981 + $0x100] sm:$0xff]
        %v1054 = vld [vmem:[%s981 + $0x108] sm:$0xff]
        %v1055 = vld [vmem:[%s981 + $0x110] sm:$0xff]
        %v1056 = vld [vmem:[%s981 + $0x118] sm:$0xff]
        %v1057 = vld [vmem:[%s981 + $0x120] sm:$0xff]
        %v1058 = vld [vmem:[%s981 + $0x128] sm:$0xff]
        %v1059 = vld [vmem:[%s981 + $0x130] sm:$0xff]
        %v1060 = vld [vmem:[%s981 + $0x138] sm:$0xff]
        %v1061 = vld [vmem:[%s981 + $0x140] sm:$0xff]
        %v1062 = vld [vmem:[%s981 + $0x148] sm:$0xff]
        %v1063 = vld [vmem:[%s981 + $0x150] sm:$0xff]
        %v1064 = vld [vmem:[%s981 + $0x158] sm:$0xff]
        %v1065 = vld [vmem:[%s981 + $0x160] sm:$0xff]
        %v1066 = vld [vmem:[%s981 + $0x168] sm:$0xff]
        %v1067 = vld [vmem:[%s981 + $0x170] sm:$0xff]
        %v1068 = vld [vmem:[%s981 + $0x178] sm:$0xff]
        %v1069 = vld [vmem:[%s981 + $0x180] sm:$0xff]
        %v1070 = vld [vmem:[%s981 + $0x188] sm:$0xff]
        %v1071 = vld [vmem:[%s981 + $0x190] sm:$0xff]
        %v1072 = vld [vmem:[%s981 + $0x198] sm:$0xff]
        %v1073 = vld [vmem:[%s981 + $0x1a0] sm:$0xff]
        %v1074 = vld [vmem:[%s981 + $0x1a8] sm:$0xff]
        %v1075 = vld [vmem:[%s981 + $0x1b0] sm:$0xff]
        %v1076 = vld [vmem:[%s981 + $0x1b8] sm:$0xff]
        %v1077 = vld [vmem:[%s981 + $0x1c0] sm:$0xff]
        %v1078 = vld [vmem:[%s981 + $0x1c8] sm:$0xff]
        %v1079 = vld [vmem:[%s981 + $0x1d0] sm:$0xff]
        %v1080 = vld [vmem:[%s981 + $0x1d8] sm:$0xff]
        %v1081 = vld [vmem:[%s981 + $0x1e0] sm:$0xff]
        %v1082 = vld [vmem:[%s981 + $0x1e8] sm:$0xff]
        %v1083 = vld [vmem:[%s981 + $0x1f0] sm:$0xff]
        %v1084 = vld [vmem:[%s981 + $0x1f8] sm:$0xff]
        %v1085 = vld [vmem:[%s981 + $0x200] sm:$0xff]
        %v1086 = vld [vmem:[%s981 + $0x208] sm:$0xff]
        %v1087 = vld [vmem:[%s981 + $0x210] sm:$0xff]
        %v1088 = vld [vmem:[%s981 + $0x218] sm:$0xff]
        %v1089 = vld [vmem:[%s981 + $0x220] sm:$0xff]
        %v1090 = vld [vmem:[%s981 + $0x228] sm:$0xff]
        %v1091 = vld [vmem:[%s981 + $0x230] sm:$0xff]
        %v1092 = vld [vmem:[%s981 + $0x238] sm:$0xff]
        %v1093 = vld [vmem:[%s981 + $0x240] sm:$0xff]
        %v1094 = vld [vmem:[%s981 + $0x248] sm:$0xff]
        %v1095 = vld [vmem:[%s981 + $0x250] sm:$0xff]
        %v1096 = vld [vmem:[%s981 + $0x258] sm:$0xff]
        %v1097 = vld [vmem:[%s981 + $0x260] sm:$0xff]
        %v1098 = vld [vmem:[%s981 + $0x268] sm:$0xff]
        %v1099 = vld [vmem:[%s981 + $0x270] sm:$0xff]
        %v1100 = vld [vmem:[%s981 + $0x278] sm:$0xff]
        %v1101 = vld [vmem:[%s981 + $0x280] sm:$0xff]
        %v1102 = vld [vmem:[%s981 + $0x288] sm:$0xff]
        %v1103 = vld [vmem:[%s981 + $0x290] sm:$0xff]
        %v1104 = vld [vmem:[%s981 + $0x298] sm:$0xff]
        %v1105 = vld [vmem:[%s981 + $0x2a0] sm:$0xff]
        %v1106 = vld [vmem:[%s981 + $0x2a8] sm:$0xff]
        %v1107 = vld [vmem:[%s981 + $0x2b0] sm:$0xff]
        %v1108 = vld [vmem:[%s981 + $0x2b8] sm:$0xff]
        %v1109 = vld [vmem:[%s981 + $0x2c0] sm:$0xff]
        %v1110 = vld [vmem:[%s981 + $0x2c8] sm:$0xff]
        %v1111 = vld [vmem:[%s981 + $0x2d0] sm:$0xff]
        %v1112 = vld [vmem:[%s981 + $0x2d8] sm:$0xff]
        %v1113 = vld [vmem:[%s981 + $0x2e0] sm:$0xff]
        %v1114 = vld [vmem:[%s981 + $0x2e8] sm:$0xff]
        %v1115 = vld [vmem:[%s981 + $0x2f0] sm:$0xff]
        %v1116 = vld [vmem:[%s981 + $0x2f8] sm:$0xff]
        %v1117 = vld [vmem:[%s981 + $0x300] sm:$0xff]
        %v1118 = vld [vmem:[%s981 + $0x308] sm:$0xff]
        %v1119 = vld [vmem:[%s981 + $0x310] sm:$0xff]
        %v1120 = vld [vmem:[%s981 + $0x318] sm:$0xff]
        %v1121 = vld [vmem:[%s981 + $0x320] sm:$0xff]
        %v1122 = vld [vmem:[%s981 + $0x328] sm:$0xff]
        %v1123 = vld [vmem:[%s981 + $0x330] sm:$0xff]
        %v1124 = vld [vmem:[%s981 + $0x338] sm:$0xff]
        %v1125 = vld [vmem:[%s981 + $0x340] sm:$0xff]
        %v1126 = vld [vmem:[%s981 + $0x348] sm:$0xff]
        %v1127 = vld [vmem:[%s981 + $0x350] sm:$0xff]
        %v1128 = vld [vmem:[%s981 + $0x358] sm:$0xff]
        %v1129 = vld [vmem:[%s981 + $0x360] sm:$0xff]
        %v1130 = vld [vmem:[%s981 + $0x368] sm:$0xff]
        %v1131 = vld [vmem:[%s981 + $0x370] sm:$0xff]
        %v1132 = vld [vmem:[%s981 + $0x378] sm:$0xff]
        %v1133 = vld [vmem:[%s981 + $0x380] sm:$0xff]
        %v1134 = vld [vmem:[%s981 + $0x388] sm:$0xff]
        %v1135 = vld [vmem:[%s981 + $0x390] sm:$0xff]
        %v1136 = vld [vmem:[%s981 + $0x398] sm:$0xff]
        %v1137 = vld [vmem:[%s981 + $0x3a0] sm:$0xff]
        %v1138 = vld [vmem:[%s981 + $0x3a8] sm:$0xff]
        %v1139 = vld [vmem:[%s981 + $0x3b0] sm:$0xff]
        %v1140 = vld [vmem:[%s981 + $0x3b8] sm:$0xff]
        %v1141 = vld [vmem:[%s981 + $0x3c0] sm:$0xff]
        %v1142 = vld [vmem:[%s981 + $0x3c8] sm:$0xff]
        %v1143 = vld [vmem:[%s981 + $0x3d0] sm:$0xff]
        %v1144 = vld [vmem:[%s981 + $0x3d8] sm:$0xff]
        %v1145 = vld [vmem:[%s981 + $0x3e0] sm:$0xff]
        %v1146 = vld [vmem:[%s981 + $0x3e8] sm:$0xff]
        %v1147 = vld [vmem:[%s981 + $0x3f0] sm:$0xff]
        %v1148 = vld [vmem:[%s981 + $0x3f8] sm:$0xff]
        %v1149 = vld [vmem:[%s981 + $0x400] sm:$0xff]
        %v1150 = vld [vmem:[%s981 + $0x408] sm:$0xff]
        %v1151 = vld [vmem:[%s981 + $0x410] sm:$0xff]
        %v1152 = vld [vmem:[%s981 + $0x418] sm:$0xff]
        %v1153 = vld [vmem:[%s981 + $0x420] sm:$0xff]
        %v1154 = vld [vmem:[%s981 + $0x428] sm:$0xff]
        %v1155 = vld [vmem:[%s981 + $0x430] sm:$0xff]
        %v1156 = vld [vmem:[%s981 + $0x438] sm:$0xff]
        %v1157 = vld [vmem:[%s981 + $0x440] sm:$0xff]
        %v1158 = vld [vmem:[%s981 + $0x448] sm:$0xff]
        %v1159 = vld [vmem:[%s981 + $0x450] sm:$0xff]
        %v1160 = vld [vmem:[%s981 + $0x458] sm:$0xff]
        %v1161 = vld [vmem:[%s981 + $0x460] sm:$0xff]
        %v1162 = vld [vmem:[%s981 + $0x468] sm:$0xff]
        %v1163 = vld [vmem:[%s981 + $0x470] sm:$0xff]
        %v1164 = vld [vmem:[%s981 + $0x478] sm:$0xff]
        %v1165 = vld [vmem:[%s981 + $0x480] sm:$0xff]
        %v1166 = vld [vmem:[%s981 + $0x488] sm:$0xff]
        %v1167 = vld [vmem:[%s981 + $0x490] sm:$0xff]
        %v1168 = vld [vmem:[%s981 + $0x498] sm:$0xff]
        %v1169 = vld [vmem:[%s981 + $0x4a0] sm:$0xff]
        %v1170 = vld [vmem:[%s981 + $0x4a8] sm:$0xff]
        %v1171 = vld [vmem:[%s981 + $0x4b0] sm:$0xff]
        %v1172 = vld [vmem:[%s981 + $0x4b8] sm:$0xff]
        %v1173 = vld [vmem:[%s981 + $0x4c0] sm:$0xff]
        %v1174 = vld [vmem:[%s981 + $0x4c8] sm:$0xff]
        %v1175 = vld [vmem:[%s981 + $0x4d0] sm:$0xff]
        %v1176 = vld [vmem:[%s981 + $0x4d8] sm:$0xff]
        %v1177 = vld [vmem:[%s981 + $0x4e0] sm:$0xff]
        %v1178 = vld [vmem:[%s981 + $0x4e8] sm:$0xff]
        %v1179 = vld [vmem:[%s981 + $0x4f0] sm:$0xff]
        %v1180 = vld [vmem:[%s981 + $0x4f8] sm:$0xff]
        %v1181 = vld [vmem:[%s981 + $0x500] sm:$0xff]
        %v1182 = vld [vmem:[%s981 + $0x508] sm:$0xff]
        %v1183 = vld [vmem:[%s981 + $0x510] sm:$0xff]
        %v1184 = vld [vmem:[%s981 + $0x518] sm:$0xff]
        %v1185 = vld [vmem:[%s981 + $0x520] sm:$0xff]
        %v1186 = vld [vmem:[%s981 + $0x528] sm:$0xff]
        %v1187 = vld [vmem:[%s981 + $0x530] sm:$0xff]
        %v1188 = vld [vmem:[%s981 + $0x538] sm:$0xff]
        %v1189 = vld [vmem:[%s981 + $0x540] sm:$0xff]
        %v1190 = vld [vmem:[%s981 + $0x548] sm:$0xff]
        %v1191 = vld [vmem:[%s981 + $0x550] sm:$0xff]
        %v1192 = vld [vmem:[%s981 + $0x558] sm:$0xff]
        %v1193 = vld [vmem:[%s981 + $0x560] sm:$0xff]
        %v1194 = vld [vmem:[%s981 + $0x568] sm:$0xff]
        %v1195 = vld [vmem:[%s981 + $0x570] sm:$0xff]
        %v1196 = vld [vmem:[%s981 + $0x578] sm:$0xff]
        %v1197 = vld [vmem:[%s981 + $0x580] sm:$0xff]
        %v1198 = vld [vmem:[%s981 + $0x588] sm:$0xff]
        %v1199 = vld [vmem:[%s981 + $0x590] sm:$0xff]
        %v1200 = vld [vmem:[%s981 + $0x598] sm:$0xff]
        %v1201 = vld [vmem:[%s981 + $0x5a0] sm:$0xff]
        %v1202 = vld [vmem:[%s981 + $0x5a8] sm:$0xff]
        %v1203 = vld [vmem:[%s981 + $0x5b0] sm:$0xff]
        %v1204 = vld [vmem:[%s981 + $0x5b8] sm:$0xff]
        %v1205 = vld [vmem:[%s981 + $0x5c0] sm:$0xff]
        %v1206 = vld [vmem:[%s981 + $0x5c8] sm:$0xff]
        %v1207 = vld [vmem:[%s981 + $0x5d0] sm:$0xff]
        %v1208 = vld [vmem:[%s981 + $0x5d8] sm:$0xff]
        %v1209 = vld [vmem:[%s981 + $0x5e0] sm:$0xff]
        %v1210 = vld [vmem:[%s981 + $0x5e8] sm:$0xff]
        %v1211 = vld [vmem:[%s981 + $0x5f0] sm:$0xff]
        %v1212 = vld [vmem:[%s981 + $0x5f8] sm:$0xff]
        %v1213 = vld [vmem:[%s981 + $0x600] sm:$0xff]
        %v1214 = vld [vmem:[%s981 + $0x608] sm:$0xff]
        %v1215 = vld [vmem:[%s981 + $0x610] sm:$0xff]
        %v1216 = vld [vmem:[%s981 + $0x618] sm:$0xff]
        %v1217 = vld [vmem:[%s981 + $0x620] sm:$0xff]
        %v1218 = vld [vmem:[%s981 + $0x628] sm:$0xff]
        %v1219 = vld [vmem:[%s981 + $0x630] sm:$0xff]
        %v1220 = vld [vmem:[%s981 + $0x638] sm:$0xff]
        %v1221 = vld [vmem:[%s981 + $0x640] sm:$0xff]
        %v1222 = vld [vmem:[%s981 + $0x648] sm:$0xff]
        %v1223 = vld [vmem:[%s981 + $0x650] sm:$0xff]
        %v1224 = vld [vmem:[%s981 + $0x658] sm:$0xff]
        %v1225 = vld [vmem:[%s981 + $0x660] sm:$0xff]
        %v1226 = vld [vmem:[%s981 + $0x668] sm:$0xff]
        %v1227 = vld [vmem:[%s981 + $0x670] sm:$0xff]
        %v1228 = vld [vmem:[%s981 + $0x678] sm:$0xff]
        %v1229 = vld [vmem:[%s981 + $0x680] sm:$0xff]
        %v1230 = vld [vmem:[%s981 + $0x688] sm:$0xff]
        %v1231 = vld [vmem:[%s981 + $0x690] sm:$0xff]
        %v1232 = vld [vmem:[%s981 + $0x698] sm:$0xff]
        %v1233 = vld [vmem:[%s981 + $0x6a0] sm:$0xff]
        %v1234 = vld [vmem:[%s981 + $0x6a8] sm:$0xff]
        %v1235 = vld [vmem:[%s981 + $0x6b0] sm:$0xff]
        %v1236 = vld [vmem:[%s981 + $0x6b8] sm:$0xff]
        %v1237 = vld [vmem:[%s981 + $0x6c0] sm:$0xff]
        %v1238 = vld [vmem:[%s981 + $0x6c8] sm:$0xff]
        %v1239 = vld [vmem:[%s981 + $0x6d0] sm:$0xff]
        %v1240 = vld [vmem:[%s981 + $0x6d8] sm:$0xff]
        %v1241 = vld [vmem:[%s981 + $0x6e0] sm:$0xff]
        %v1242 = vld [vmem:[%s981 + $0x6e8] sm:$0xff]
        %v1243 = vld [vmem:[%s981 + $0x6f0] sm:$0xff]
        %v1244 = vld [vmem:[%s981 + $0x6f8] sm:$0xff]
        %v1245 = vld [vmem:[%s981 + $0x700] sm:$0xff]
        %v1246 = vld [vmem:[%s981 + $0x708] sm:$0xff]
        %v1247 = vld [vmem:[%s981 + $0x710] sm:$0xff]
        %v1248 = vld [vmem:[%s981 + $0x718] sm:$0xff]
        %v1249 = vld [vmem:[%s981 + $0x720] sm:$0xff]
        %v1250 = vld [vmem:[%s981 + $0x728] sm:$0xff]
        %v1251 = vld [vmem:[%s981 + $0x730] sm:$0xff]
        %v1252 = vld [vmem:[%s981 + $0x738] sm:$0xff]
        %v1253 = vld [vmem:[%s981 + $0x740] sm:$0xff]
        %v1254 = vld [vmem:[%s981 + $0x748] sm:$0xff]
        %v1255 = vld [vmem:[%s981 + $0x750] sm:$0xff]
        %v1256 = vld [vmem:[%s981 + $0x758] sm:$0xff]
        %v1257 = vld [vmem:[%s981 + $0x760] sm:$0xff]
        %v1258 = vld [vmem:[%s981 + $0x768] sm:$0xff]
        %v1259 = vld [vmem:[%s981 + $0x770] sm:$0xff]
        %v1260 = vld [vmem:[%s981 + $0x778] sm:$0xff]
        %v1261 = vld [vmem:[%s981 + $0x780] sm:$0xff]
        %v1262 = vld [vmem:[%s981 + $0x788] sm:$0xff]
        %v1263 = vld [vmem:[%s981 + $0x790] sm:$0xff]
        %v1264 = vld [vmem:[%s981 + $0x798] sm:$0xff]
        %v1265 = vld [vmem:[%s981 + $0x7a0] sm:$0xff]
        %v1266 = vld [vmem:[%s981 + $0x7a8] sm:$0xff]
        %v1267 = vld [vmem:[%s981 + $0x7b0] sm:$0xff]
        %v1268 = vld [vmem:[%s981 + $0x7b8] sm:$0xff]
        %v1269 = vld [vmem:[%s981 + $0x7c0] sm:$0xff]
        %v1270 = vld [vmem:[%s981 + $0x7c8] sm:$0xff]
        %v1271 = vld [vmem:[%s981 + $0x7d0] sm:$0xff]
        %v1272 = vld [vmem:[%s981 + $0x7d8] sm:$0xff]
        %v1273 = vld [vmem:[%s981 + $0x7e0] sm:$0xff]
        %v1274 = vld [vmem:[%s981 + $0x7e8] sm:$0xff]
        %v1275 = vld [vmem:[%s981 + $0x7f0] sm:$0xff]
        %v1276 = vld [vmem:[%s981 + $0x7f8] sm:$0xff]
        %v1277 = vld [vmem:[%s981 + $0x800] sm:$0xff]
        %v1278 = vld [vmem:[%s981 + $0x808] sm:$0xff]
        %v1279 = vld [vmem:[%s981 + $0x810] sm:$0xff]
        %v1280 = vld [vmem:[%s981 + $0x818] sm:$0xff]
        %v1281 = vld [vmem:[%s981 + $0x820] sm:$0xff]
        %v1282 = vld [vmem:[%s981 + $0x828] sm:$0xff]
        %v1283 = vld [vmem:[%s981 + $0x830] sm:$0xff]
        %v1284 = vld [vmem:[%s981 + $0x838] sm:$0xff]
        %v1285 = vld [vmem:[%s981 + $0x840] sm:$0xff]
        %v1286 = vld [vmem:[%s981 + $0x848] sm:$0xff]
        %v1287 = vld [vmem:[%s981 + $0x850] sm:$0xff]
        %v1288 = vld [vmem:[%s981 + $0x858] sm:$0xff]
        %v1289 = vld [vmem:[%s981 + $0x860] sm:$0xff]
        %v1290 = vld [vmem:[%s981 + $0x868] sm:$0xff]
        %v1291 = vld [vmem:[%s981 + $0x870] sm:$0xff]
        %v1292 = vld [vmem:[%s981 + $0x878] sm:$0xff]
        %v1293 = vld [vmem:[%s981 + $0x880] sm:$0xff]
        %v1294 = vld [vmem:[%s981 + $0x888] sm:$0xff]
        %v1295 = vld [vmem:[%s981 + $0x890] sm:$0xff]
        %v1296 = vld [vmem:[%s981 + $0x898] sm:$0xff]
        %v1297 = vld [vmem:[%s981 + $0x8a0] sm:$0xff]
        %v1298 = vld [vmem:[%s981 + $0x8a8] sm:$0xff]
        %v1299 = vld [vmem:[%s981 + $0x8b0] sm:$0xff]
        %v1300 = vld [vmem:[%s981 + $0x8b8] sm:$0xff]
        %v1301 = vld [vmem:[%s981 + $0x8c0] sm:$0xff]
        %v1302 = vld [vmem:[%s981 + $0x8c8] sm:$0xff]
        %v1303 = vld [vmem:[%s981 + $0x8d0] sm:$0xff]
        %v1304 = vld [vmem:[%s981 + $0x8d8] sm:$0xff]
        %v1305 = vld [vmem:[%s981 + $0x8e0] sm:$0xff]
        %v1306 = vld [vmem:[%s981 + $0x8e8] sm:$0xff]
        %v1307 = vld [vmem:[%s981 + $0x8f0] sm:$0xff]
        %v1308 = vld [vmem:[%s981 + $0x8f8] sm:$0xff]
        %v1309 = vld [vmem:[%s981 + $0x900] sm:$0xff]
        %v1310 = vld [vmem:[%s981 + $0x908] sm:$0xff]
        %v1311 = vld [vmem:[%s981 + $0x910] sm:$0xff]
        %v1312 = vld [vmem:[%s981 + $0x918] sm:$0xff]
        %v1313 = vld [vmem:[%s981 + $0x920] sm:$0xff]
        %v1314 = vld [vmem:[%s981 + $0x928] sm:$0xff]
        %v1315 = vld [vmem:[%s981 + $0x930] sm:$0xff]
        %v1316 = vld [vmem:[%s981 + $0x938] sm:$0xff]
        %v1317 = vld [vmem:[%s981 + $0x940] sm:$0xff]
        %v1318 = vld [vmem:[%s981 + $0x948] sm:$0xff]
        %v1319 = vld [vmem:[%s981 + $0x950] sm:$0xff]
        %v1320 = vld [vmem:[%s981 + $0x958] sm:$0xff]
        %v1321 = vld [vmem:[%s981 + $0x960] sm:$0xff]
        %v1322 = vld [vmem:[%s981 + $0x968] sm:$0xff]
        %v1323 = vld [vmem:[%s981 + $0x970] sm:$0xff]
        %v1324 = vld [vmem:[%s981 + $0x978] sm:$0xff]
        %v1325 = vld [vmem:[%s981 + $0x980] sm:$0xff]
        %v1326 = vld [vmem:[%s981 + $0x988] sm:$0xff]
        %v1327 = vld [vmem:[%s981 + $0x990] sm:$0xff]
        %v1328 = vld [vmem:[%s981 + $0x998] sm:$0xff]
        %v1329 = vld [vmem:[%s981 + $0x9a0] sm:$0xff]
        %v1330 = vld [vmem:[%s981 + $0x9a8] sm:$0xff]
        %v1331 = vld [vmem:[%s981 + $0x9b0] sm:$0xff]
        %v1332 = vld [vmem:[%s981 + $0x9b8] sm:$0xff]
        %v1333 = vld [vmem:[%s981 + $0x9c0] sm:$0xff]
        %v1334 = vld [vmem:[%s981 + $0x9c8] sm:$0xff]
        %v1335 = vld [vmem:[%s981 + $0x9d0] sm:$0xff]
        %v1336 = vld [vmem:[%s981 + $0x9d8] sm:$0xff]
        %v1337 = vld [vmem:[%s981 + $0x9e0] sm:$0xff]
        %v1338 = vld [vmem:[%s981 + $0x9e8] sm:$0xff]
        %v1339 = vld [vmem:[%s981 + $0x9f0] sm:$0xff]
        %v1340 = vld [vmem:[%s981 + $0x9f8] sm:$0xff]
        %v1341 = vld [vmem:[%s981 + $0xa00] sm:$0xff]
        %v1342 = vld [vmem:[%s981 + $0xa08] sm:$0xff]
        %v1343 = vld [vmem:[%s981 + $0xa10] sm:$0xff]
        %v1344 = vld [vmem:[%s981 + $0xa18] sm:$0xff]
        %v1345 = vld [vmem:[%s981 + $0xa20] sm:$0xff]
        %v1346 = vld [vmem:[%s981 + $0xa28] sm:$0xff]
        %v1347 = vld [vmem:[%s981 + $0xa30] sm:$0xff]
        %v1348 = vld [vmem:[%s981 + $0xa38] sm:$0xff]
        %v1349 = vld [vmem:[%s981 + $0xa40] sm:$0xff]
        %v1350 = vld [vmem:[%s981 + $0xa48] sm:$0xff]
        %v1351 = vld [vmem:[%s981 + $0xa50] sm:$0xff]
        %v1352 = vld [vmem:[%s981 + $0xa58] sm:$0xff]
        %v1353 = vld [vmem:[%s981 + $0xa60] sm:$0xff]
        %v1354 = vld [vmem:[%s981 + $0xa68] sm:$0xff]
        %v1355 = vld [vmem:[%s981 + $0xa70] sm:$0xff]
        %v1356 = vld [vmem:[%s981 + $0xa78] sm:$0xff]
        %v1357 = vld [vmem:[%s981 + $0xa80] sm:$0xff]
        %v1358 = vld [vmem:[%s981 + $0xa88] sm:$0xff]
        %v1359 = vld [vmem:[%s981 + $0xa90] sm:$0xff]
        %v1360 = vld [vmem:[%s981 + $0xa98] sm:$0xff]
        %v1361 = vld [vmem:[%s981 + $0xaa0] sm:$0xff]
        %v1362 = vld [vmem:[%s981 + $0xaa8] sm:$0xff]
        %v1363 = vld [vmem:[%s981 + $0xab0] sm:$0xff]
        %v1364 = vld [vmem:[%s981 + $0xab8] sm:$0xff]
        %v1365 = vld [vmem:[%s981 + $0xac0] sm:$0xff]
        %v1366 = vld [vmem:[%s981 + $0xac8] sm:$0xff]
        %v1367 = vld [vmem:[%s981 + $0xad0] sm:$0xff]
        %v1368 = vld [vmem:[%s981 + $0xad8] sm:$0xff]
        %v1369 = vld [vmem:[%s981 + $0xae0] sm:$0xff]
        %v1370 = vld [vmem:[%s981 + $0xae8] sm:$0xff]
        %v1371 = vld [vmem:[%s981 + $0xaf0] sm:$0xff]
        %v1372 = vld [vmem:[%s981 + $0xaf8] sm:$0xff]
        %v1373 = vld [vmem:[%s981 + $0xb00] sm:$0xff]
        %v1374 = vld [vmem:[%s981 + $0xb08] sm:$0xff]
        %v1375 = vld [vmem:[%s981 + $0xb10] sm:$0xff]
        %v1376 = vld [vmem:[%s981 + $0xb18] sm:$0xff]
        %v1377 = vld [vmem:[%s981 + $0xb20] sm:$0xff]
        %v1378 = vld [vmem:[%s981 + $0xb28] sm:$0xff]
        %v1379 = vld [vmem:[%s981 + $0xb30] sm:$0xff]
        %v1380 = vld [vmem:[%s981 + $0xb38] sm:$0xff]
        %v1381 = vld [vmem:[%s981 + $0xb40] sm:$0xff]
        %v1382 = vld [vmem:[%s981 + $0xb48] sm:$0xff]
        %v1383 = vld [vmem:[%s981 + $0xb50] sm:$0xff]
        %v1384 = vld [vmem:[%s981 + $0xb58] sm:$0xff]
        %v1385 = vld [vmem:[%s981 + $0xb60] sm:$0xff]
        %v1386 = vld [vmem:[%s981 + $0xb68] sm:$0xff]
        %v1387 = vld [vmem:[%s981 + $0xb70] sm:$0xff]
        %v1388 = vld [vmem:[%s981 + $0xb78] sm:$0xff]
        %v1389 = vld [vmem:[%s981 + $0xb80] sm:$0xff]
        %v1390 = vld [vmem:[%s981 + $0xb88] sm:$0xff]
        %v1391 = vld [vmem:[%s981 + $0xb90] sm:$0xff]
        %v1392 = vld [vmem:[%s981 + $0xb98] sm:$0xff]
        %v1393 = vld [vmem:[%s981 + $0xba0] sm:$0xff]
        %v1394 = vld [vmem:[%s981 + $0xba8] sm:$0xff]
        %v1395 = vld [vmem:[%s981 + $0xbb0] sm:$0xff]
        %v1396 = vld [vmem:[%s981 + $0xbb8] sm:$0xff]
        %v1397 = vld [vmem:[%s981 + $0xbc0] sm:$0xff]
        %v1398 = vld [vmem:[%s981 + $0xbc8] sm:$0xff]
        %v1399 = vld [vmem:[%s981 + $0xbd0] sm:$0xff]
        %v1400 = vld [vmem:[%s981 + $0xbd8] sm:$0xff]
        %v1401 = vld [vmem:[%s981 + $0xbe0] sm:$0xff]
        %v1402 = vld [vmem:[%s981 + $0xbe8] sm:$0xff]
        %v1403 = vld [vmem:[%s981 + $0xbf0] sm:$0xff]
        %v1404 = vld [vmem:[%s981 + $0xbf8] sm:$0xff]
        %v1405 = vld [vmem:[%s981 + $0xc00] sm:$0xff]
        %v1406 = vld [vmem:[%s981 + $0xc08] sm:$0xff]
        %v1407 = vld [vmem:[%s981 + $0xc10] sm:$0xff]
        %v1408 = vld [vmem:[%s981 + $0xc18] sm:$0xff]
        %v1409 = vld [vmem:[%s981 + $0xc20] sm:$0xff]
        %v1410 = vld [vmem:[%s981 + $0xc28] sm:$0xff]
        %v1411 = vld [vmem:[%s981 + $0xc30] sm:$0xff]
        %v1412 = vld [vmem:[%s981 + $0xc38] sm:$0xff]
        %v1413 = vld [vmem:[%s981 + $0xc40] sm:$0xff]
        %v1414 = vld [vmem:[%s981 + $0xc48] sm:$0xff]
        %v1415 = vld [vmem:[%s981 + $0xc50] sm:$0xff]
        %v1416 = vld [vmem:[%s981 + $0xc58] sm:$0xff]
        %v1417 = vld [vmem:[%s981 + $0xc60] sm:$0xff]
        %v1418 = vld [vmem:[%s981 + $0xc68] sm:$0xff]
        %v1419 = vld [vmem:[%s981 + $0xc70] sm:$0xff]
        %v1420 = vld [vmem:[%s981 + $0xc78] sm:$0xff]
        %v1421 = vld [vmem:[%s2] sm:$0x7]
        %1423 = vset.pattern.permute.xlu0 0
        %1424 = vperm.xlu0 %1423, %v1421
        %v1425 = vpop.permute.xlu0 %1424
        %v1431 = vcombine.high %v1017, %v1017
        %v1432 = vcombine.high %v1018, %v1018
        %v1433 = vcombine.high %v1019, %v1019
        %vm1437 = vcmask 261120
        %v1438 = vsel %vm1437, %v1020, 0
        %1440 = vmatprep.subr.mxu0 %v1022
        %1441 = vmatpush1.msra.mxu0 %v1021
        %1442 = vmatprep.subr.mxu0 %v1026
        %1443 = vmatpush1.msra.mxu0 %v1025
        %1444 = vmatprep.subr.mxu0 %v1030
        %1445 = vmatpush1.msra.mxu0 %v1029
        %1446 = vmatprep.subr.mxu0 %v1034
        %1447 = vmatpush1.msra.mxu0 %v1033
        %1448 = vmatprep.subr.mxu0 %v1038
        %1449 = vmatpush1.msra.mxu0 %v1037
        %1450 = vmatprep.subr.mxu0 %v1042
        %1451 = vmatpush1.msra.mxu0 %v1041
        %1452 = vmatprep.subr.mxu0 %v1046
        %1453 = vmatpush1.msra.mxu0 %v1045
        %1454 = vmatprep.subr.mxu0 %v1050
        %1455 = vmatpush1.msra.mxu0 %v1049
        %1456 = vmatprep.subr.mxu0 %v1054
        %1457 = vmatpush1.msra.mxu0 %v1053
        %1458 = vmatprep.subr.mxu0 %v1058
        %1459 = vmatpush1.msra.mxu0 %v1057
        %1460 = vmatprep.subr.mxu0 %v1062
        %1461 = vmatpush1.msra.mxu0 %v1061
        %1462 = vmatprep.subr.mxu0 %v1066
        %1463 = vmatpush1.msra.mxu0 %v1065
        %1464 = vmatprep.subr.mxu0 %v1070
        %1465 = vmatpush1.msra.mxu0 %v1069
        %1466 = vmatprep.subr.mxu0 %v1074
        %1467 = vmatpush1.msra.mxu0 %v1073
        %1468 = vmatprep.subr.mxu0 %v1078
        %1469 = vmatpush1.msra.mxu0 %v1077
        %1470 = vmatprep.subr.mxu0 %v1082
        %1471 = vmatpush1.msra.mxu0 %v1081
        %1472 = vmatprep.subr.mxu0 %v1086
        %1473 = vmatpush1.msra.mxu0 %v1085
        %1474 = vmatprep.subr.mxu0 %v1090
        %1475 = vmatpush1.msra.mxu0 %v1089
        %1476 = vmatprep.subr.mxu0 %v1094
        %1477 = vmatpush1.msra.mxu0 %v1093
        %1478 = vmatprep.subr.mxu0 %v1098
        %1479 = vmatpush1.msra.mxu0 %v1097
        %1480 = vmatprep.subr.mxu0 %v1102
        %1481 = vmatpush1.msra.mxu0 %v1101
        %1482 = vmatprep.subr.mxu0 %v1106
        %1483 = vmatpush1.msra.mxu0 %v1105
        %1484 = vmatprep.subr.mxu0 %v1110
        %1485 = vmatpush1.msra.mxu0 %v1109
        %1486 = vmatprep.subr.mxu0 %v1114
        %1487 = vmatpush1.msra.mxu0 %v1113
        %1488 = vmatprep.subr.mxu0 %v1118
        %1489 = vmatpush1.msra.mxu0 %v1117
        %1490 = vmatprep.subr.mxu0 %v1122
        %1491 = vmatpush1.msra.mxu0 %v1121
        %1492 = vmatprep.subr.mxu0 %v1126
        %1493 = vmatpush1.msra.mxu0 %v1125
        %1494 = vmatprep.subr.mxu0 %v1130
        %1495 = vmatpush1.msra.mxu0 %v1129
        %1496 = vmatprep.subr.mxu0 %v1134
        %1497 = vmatpush1.msra.mxu0 %v1133
        %1498 = vmatprep.subr.mxu0 %v1138
        %1499 = vmatpush1.msra.mxu0 %v1137
        %1500 = vmatprep.subr.mxu0 %v1142
        %1501 = vmatpush1.msra.mxu0 %v1141
        %1502 = vmatprep.subr.mxu0 %v1146
        %1503 = vmatpush1.msra.mxu0 %v1145
        %1504 = vmatprep.mubr.f32.mxu0 %v1431
        %1505 = vmatmul.mubr.f32.gmra.mrb[0].mxu0 %v1017
        %v1506 = vpop.f32.mrb[0].mxu0
        %v1507 = vadd.f32 %v1425, %v1506
        %v1508 = vpop.f32.mrb[0].mxu0
        %v1509 = vadd.f32 %v1425, %v1508
        %1510 = vdwg.mxu0
        %1511 = vmatprep.subr.mxu0 %v1150
        %1512 = vmatpush1.msra.mxu0 %v1149
        %1513 = vmatprep.subr.mxu0 %v1154
        %1514 = vmatpush1.msra.mxu0 %v1153
        %1515 = vmatprep.subr.mxu0 %v1158
        %1516 = vmatpush1.msra.mxu0 %v1157
        %1517 = vmatprep.subr.mxu0 %v1162
        %1518 = vmatpush1.msra.mxu0 %v1161
        %1519 = vmatprep.subr.mxu0 %v1166
        %1520 = vmatpush1.msra.mxu0 %v1165
        %1521 = vmatprep.subr.mxu0 %v1170
        %1522 = vmatpush1.msra.mxu0 %v1169
        %1523 = vmatprep.subr.mxu0 %v1174
        %1524 = vmatpush1.msra.mxu0 %v1173
        %1525 = vmatprep.subr.mxu0 %v1178
        %1526 = vmatpush1.msra.mxu0 %v1177
        %1527 = vmatprep.subr.mxu0 %v1182
        %1528 = vmatpush1.msra.mxu0 %v1181
        %1529 = vmatprep.subr.mxu0 %v1186
        %1530 = vmatpush1.msra.mxu0 %v1185
        %1531 = vmatprep.subr.mxu0 %v1190
        %1532 = vmatpush1.msra.mxu0 %v1189
        %1533 = vmatprep.subr.mxu0 %v1194
        %1534 = vmatpush1.msra.mxu0 %v1193
        %1535 = vmatprep.subr.mxu0 %v1198
        %1536 = vmatpush1.msra.mxu0 %v1197
        %1537 = vmatprep.subr.mxu0 %v1202
        %1538 = vmatpush1.msra.mxu0 %v1201
        %1539 = vmatprep.subr.mxu0 %v1206
        %1540 = vmatpush1.msra.mxu0 %v1205
        %1541 = vmatprep.subr.mxu0 %v1210
        %1542 = vmatpush1.msra.mxu0 %v1209
        %1543 = vmatprep.subr.mxu0 %v1214
        %1544 = vmatpush1.msra.mxu0 %v1213
        %1545 = vmatprep.subr.mxu0 %v1218
        %1546 = vmatpush1.msra.mxu0 %v1217
        %1547 = vmatprep.subr.mxu0 %v1222
        %1548 = vmatpush1.msra.mxu0 %v1221
        %1549 = vmatprep.subr.mxu0 %v1226
        %1550 = vmatpush1.msra.mxu0 %v1225
        %1551 = vmatprep.subr.mxu0 %v1230
        %1552 = vmatpush1.msra.mxu0 %v1229
        %1553 = vmatprep.subr.mxu0 %v1234
        %1554 = vmatpush1.msra.mxu0 %v1233
        %1555 = vmatprep.subr.mxu0 %v1238
        %1556 = vmatpush1.msra.mxu0 %v1237
        %1557 = vmatprep.subr.mxu0 %v1242
        %1558 = vmatpush1.msra.mxu0 %v1241
        %1559 = vmatprep.subr.mxu0 %v1246
        %1560 = vmatpush1.msra.mxu0 %v1245
        %1561 = vmatprep.subr.mxu0 %v1250
        %1562 = vmatpush1.msra.mxu0 %v1249
        %1563 = vmatprep.subr.mxu0 %v1254
        %1564 = vmatpush1.msra.mxu0 %v1253
        %1565 = vmatprep.subr.mxu0 %v1258
        %1566 = vmatpush1.msra.mxu0 %v1257
        %1567 = vmatprep.subr.mxu0 %v1262
        %1568 = vmatpush1.msra.mxu0 %v1261
        %1569 = vmatprep.subr.mxu0 %v1266
        %1570 = vmatpush1.msra.mxu0 %v1265
        %1571 = vmatprep.subr.mxu0 %v1270
        %1572 = vmatpush1.msra.mxu0 %v1269
        %1573 = vmatprep.subr.mxu0 %v1274
        %1574 = vmatpush1.msra.mxu0 %v1273
        %1575 = vmatprep.mubr.f32.mxu0 %v1432
        %1576 = vmatmul.mubr.f32.gmra.mrb[0].mxu0 %v1018
        %v1577 = vpop.f32.mrb[0].mxu0
        %v1578 = vadd.f32 %v1507, %v1577
        %v1579 = vpop.f32.mrb[0].mxu0
        %v1580 = vadd.f32 %v1509, %v1579
        %1581 = vdwg.mxu0
        %1582 = vmatprep.subr.mxu0 %v1278
        %1583 = vmatpush1.msra.mxu0 %v1277
        %1584 = vmatprep.subr.mxu0 %v1282
        %1585 = vmatpush1.msra.mxu0 %v1281
        %1586 = vmatprep.subr.mxu0 %v1286
        %1587 = vmatpush1.msra.mxu0 %v1285
        %1588 = vmatprep.subr.mxu0 %v1290
        %1589 = vmatpush1.msra.mxu0 %v1289
        %1590 = vmatprep.subr.mxu0 %v1294
        %1591 = vmatpush1.msra.mxu0 %v1293
        %1592 = vmatprep.subr.mxu0 %v1298
        %1593 = vmatpush1.msra.mxu0 %v1297
        %1594 = vmatprep.subr.mxu0 %v1302
        %1595 = vmatpush1.msra.mxu0 %v1301
        %1596 = vmatprep.subr.mxu0 %v1306
        %1597 = vmatpush1.msra.mxu0 %v1305
        %1598 = vmatprep.subr.mxu0 %v1310
        %1599 = vmatpush1.msra.mxu0 %v1309
        %1600 = vmatprep.subr.mxu0 %v1314
        %1601 = vmatpush1.msra.mxu0 %v1313
        %1602 = vmatprep.subr.mxu0 %v1318
        %1603 = vmatpush1.msra.mxu0 %v1317
        %1604 = vmatprep.subr.mxu0 %v1322
        %1605 = vmatpush1.msra.mxu0 %v1321
        %1606 = vmatprep.subr.mxu0 %v1326
        %1607 = vmatpush1.msra.mxu0 %v1325
        %1608 = vmatprep.subr.mxu0 %v1330
        %1609 = vmatpush1.msra.mxu0 %v1329
        %1610 = vmatprep.subr.mxu0 %v1334
        %1611 = vmatpush1.msra.mxu0 %v1333
        %1612 = vmatprep.subr.mxu0 %v1338
        %1613 = vmatpush1.msra.mxu0 %v1337
        %1614 = vmatprep.subr.mxu0 %v1342
        %1615 = vmatpush1.msra.mxu0 %v1341
        %1616 = vmatprep.subr.mxu0 %v1346
        %1617 = vmatpush1.msra.mxu0 %v1345
        %1618 = vmatprep.subr.mxu0 %v1350
        %1619 = vmatpush1.msra.mxu0 %v1349
        %1620 = vmatprep.subr.mxu0 %v1354
        %1621 = vmatpush1.msra.mxu0 %v1353
        %1622 = vmatprep.subr.mxu0 %v1358
        %1623 = vmatpush1.msra.mxu0 %v1357
        %1624 = vmatprep.subr.mxu0 %v1362
        %1625 = vmatpush1.msra.mxu0 %v1361
        %1626 = vmatprep.subr.mxu0 %v1366
        %1627 = vmatpush1.msra.mxu0 %v1365
        %1628 = vmatprep.subr.mxu0 %v1370
        %1629 = vmatpush1.msra.mxu0 %v1369
        %1630 = vmatprep.subr.mxu0 %v1374
        %1631 = vmatpush1.msra.mxu0 %v1373
        %1632 = vmatprep.subr.mxu0 %v1378
        %1633 = vmatpush1.msra.mxu0 %v1377
        %1634 = vmatprep.subr.mxu0 %v1382
        %1635 = vmatpush1.msra.mxu0 %v1381
        %1636 = vmatprep.subr.mxu0 %v1386
        %1637 = vmatpush1.msra.mxu0 %v1385
        %1638 = vmatprep.subr.mxu0 %v1390
        %1639 = vmatpush1.msra.mxu0 %v1389
        %1640 = vmatprep.subr.mxu0 %v1394
        %1641 = vmatpush1.msra.mxu0 %v1393
        %1642 = vmatprep.subr.mxu0 %v1398
        %1643 = vmatpush1.msra.mxu0 %v1397
        %1644 = vmatprep.subr.mxu0 %v1402
        %1645 = vmatpush1.msra.mxu0 %v1401
        %1646 = vmatprep.mubr.f32.mxu0 %v1433
        %1647 = vmatmul.mubr.f32.gmra.mrb[0].mxu0 %v1019
        %v1648 = vpop.f32.mrb[0].mxu0
        %v1649 = vadd.f32 %v1578, %v1648
        %v1650 = vpop.f32.mrb[0].mxu0
        %v1651 = vadd.f32 %v1580, %v1650
        %1652 = vdwg.mxu0
        %1653 = vmatprep.subr.mxu0 %v1406
        %1654 = vmatpush1.msra.mxu0 %v1405
        %1655 = vmatprep.subr.mxu0 %v1410
        %1656 = vmatpush1.msra.mxu0 %v1409
        %1657 = vmatprep.subr.mxu0 %v1414
        %1658 = vmatpush1.msra.mxu0 %v1413
        %1659 = vmatprep.subr.mxu0 %v1418
        %1660 = vmatpush1.msra.mxu0 %v1417
        %1661 = vmatprep.subr.mxu0 0.0
        %1662 = vmatpush1.msra.mxu0 0.0
        %1663 = vmatprep.subr.mxu0 0.0
        %1664 = vmatpush1.msra.mxu0 0.0
        %1665 = vmatprep.subr.mxu0 0.0
        %1666 = vmatpush1.msra.mxu0 0.0
        %1667 = vmatprep.subr.mxu0 0.0
        %1668 = vmatpush1.msra.mxu0 0.0
        %1669 = vmatprep.subr.mxu0 0.0
        %1670 = vmatpush1.msra.mxu0 0.0
        %1671 = vmatprep.subr.mxu0 0.0
        %1672 = vmatpush1.msra.mxu0 0.0
        %1673 = vmatprep.subr.mxu0 0.0
        %1674 = vmatpush1.msra.mxu0 0.0
        %1675 = vmatprep.subr.mxu0 0.0
        %1676 = vmatpush1.msra.mxu0 0.0
        %1677 = vmatprep.subr.mxu0 0.0
        %1678 = vmatpush1.msra.mxu0 0.0
        %1679 = vmatprep.subr.mxu0 0.0
        %1680 = vmatpush1.msra.mxu0 0.0
        %1681 = vmatprep.subr.mxu0 0.0
        %1682 = vmatpush1.msra.mxu0 0.0
        %1683 = vmatprep.subr.mxu0 0.0
        %1684 = vmatpush1.msra.mxu0 0.0
        %1685 = vmatprep.subr.mxu0 0.0
        %1686 = vmatpush1.msra.mxu0 0.0
        %1687 = vmatprep.subr.mxu0 0.0
        %1688 = vmatpush1.msra.mxu0 0.0
        %1689 = vmatprep.subr.mxu0 0.0
        %1690 = vmatpush1.msra.mxu0 0.0
        %1691 = vmatprep.subr.mxu0 0.0
        %1692 = vmatpush1.msra.mxu0 0.0
        %1693 = vmatprep.subr.mxu0 0.0
        %1694 = vmatpush1.msra.mxu0 0.0
        %1695 = vmatprep.subr.mxu0 0.0
        %1696 = vmatpush1.msra.mxu0 0.0
        %1697 = vmatprep.subr.mxu0 0.0
        %1698 = vmatpush1.msra.mxu0 0.0
        %1699 = vmatprep.subr.mxu0 0.0
        %1700 = vmatpush1.msra.mxu0 0.0
        %1701 = vmatprep.subr.mxu0 0.0
        %1702 = vmatpush1.msra.mxu0 0.0
        %1703 = vmatprep.subr.mxu0 0.0
        %1704 = vmatpush1.msra.mxu0 0.0
        %1705 = vmatprep.subr.mxu0 0.0
        %1706 = vmatpush1.msra.mxu0 0.0
        %1707 = vmatprep.subr.mxu0 0.0
        %1708 = vmatpush1.msra.mxu0 0.0
        %1709 = vmatprep.subr.mxu0 0.0
        %1710 = vmatpush1.msra.mxu0 0.0
        %1711 = vmatprep.subr.mxu0 0.0
        %1712 = vmatpush1.msra.mxu0 0.0
        %1713 = vmatprep.subr.mxu0 0.0
        %1714 = vmatpush1.msra.mxu0 0.0
        %1715 = vmatprep.subr.mxu0 0.0
        %1716 = vmatpush1.msra.mxu0 0.0
        %1717 = vmatprep.mubr.f32.mxu0 0.0
        %1718 = vmatmul.mubr.f32.gmra.mrb[0].mxu0 %v1438
        %v1719 = vpop.f32.mrb[0].mxu0
        %v1720 = vadd.f32 %v1649, %v1719
        %v1721 = vpop.f32.mrb[0].mxu0
        %v1722 = vadd.f32 %v1651, %v1721
        %1723 = vdwg.mxu0
        %1724 = vmatprep.subr.mxu0 %v1024
        %1725 = vmatpush1.msra.mxu0 %v1023
        %1726 = vmatprep.subr.mxu0 %v1028
        %1727 = vmatpush1.msra.mxu0 %v1027
        %1728 = vmatprep.subr.mxu0 %v1032
        %1729 = vmatpush1.msra.mxu0 %v1031
        %1730 = vmatprep.subr.mxu0 %v1036
        %1731 = vmatpush1.msra.mxu0 %v1035
        %1732 = vmatprep.subr.mxu0 %v1040
        %1733 = vmatpush1.msra.mxu0 %v1039
        %1734 = vmatprep.subr.mxu0 %v1044
        %1735 = vmatpush1.msra.mxu0 %v1043
        %1736 = vmatprep.subr.mxu0 %v1048
        %1737 = vmatpush1.msra.mxu0 %v1047
        %1738 = vmatprep.subr.mxu0 %v1052
        %1739 = vmatpush1.msra.mxu0 %v1051
        %1740 = vmatprep.subr.mxu0 %v1056
        %1741 = vmatpush1.msra.mxu0 %v1055
        %1742 = vmatprep.subr.mxu0 %v1060
        %1743 = vmatpush1.msra.mxu0 %v1059
        %1744 = vmatprep.subr.mxu0 %v1064
        %1745 = vmatpush1.msra.mxu0 %v1063
        %1746 = vmatprep.subr.mxu0 %v1068
        %1747 = vmatpush1.msra.mxu0 %v1067
        %1748 = vmatprep.subr.mxu0 %v1072
        %1749 = vmatpush1.msra.mxu0 %v1071
        %1750 = vmatprep.subr.mxu0 %v1076
        %1751 = vmatpush1.msra.mxu0 %v1075
        %1752 = vmatprep.subr.mxu0 %v1080
        %1753 = vmatpush1.msra.mxu0 %v1079
        %1754 = vmatprep.subr.mxu0 %v1084
        %1755 = vmatpush1.msra.mxu0 %v1083
        %1756 = vmatprep.subr.mxu0 %v1088
        %1757 = vmatpush1.msra.mxu0 %v1087
        %1758 = vmatprep.subr.mxu0 %v1092
        %1759 = vmatpush1.msra.mxu0 %v1091
        %1760 = vmatprep.subr.mxu0 %v1096
        %1761 = vmatpush1.msra.mxu0 %v1095
        %1762 = vmatprep.subr.mxu0 %v1100
        %1763 = vmatpush1.msra.mxu0 %v1099
        %1764 = vmatprep.subr.mxu0 %v1104
        %1765 = vmatpush1.msra.mxu0 %v1103
        %1766 = vmatprep.subr.mxu0 %v1108
        %1767 = vmatpush1.msra.mxu0 %v1107
        %1768 = vmatprep.subr.mxu0 %v1112
        %1769 = vmatpush1.msra.mxu0 %v1111
        %1770 = vmatprep.subr.mxu0 %v1116
        %1771 = vmatpush1.msra.mxu0 %v1115
        %1772 = vmatprep.subr.mxu0 %v1120
        %1773 = vmatpush1.msra.mxu0 %v1119
        %1774 = vmatprep.subr.mxu0 %v1124
        %1775 = vmatpush1.msra.mxu0 %v1123
        %1776 = vmatprep.subr.mxu0 %v1128
        %1777 = vmatpush1.msra.mxu0 %v1127
        %1778 = vmatprep.subr.mxu0 %v1132
        %1779 = vmatpush1.msra.mxu0 %v1131
        %1780 = vmatprep.subr.mxu0 %v1136
        %1781 = vmatpush1.msra.mxu0 %v1135
        %1782 = vmatprep.subr.mxu0 %v1140
        %1783 = vmatpush1.msra.mxu0 %v1139
        %1784 = vmatprep.subr.mxu0 %v1144
        %1785 = vmatpush1.msra.mxu0 %v1143
        %1786 = vmatprep.subr.mxu0 %v1148
        %1787 = vmatpush1.msra.mxu0 %v1147
        %1788 = vmatprep.mubr.f32.mxu0 %v1431
        %1789 = vmatmul.mubr.f32.gmra.mrb[0].mxu0 %v1017
        %v1790 = vpop.f32.mrb[0].mxu0
        %v1791 = vadd.f32 %v1425, %v1790
        %v1792 = vpop.f32.mrb[0].mxu0
        %v1793 = vadd.f32 %v1425, %v1792
        %1794 = vdwg.mxu0
        %1795 = vmatprep.subr.mxu0 %v1152
        %1796 = vmatpush1.msra.mxu0 %v1151
        %1797 = vmatprep.subr.mxu0 %v1156
        %1798 = vmatpush1.msra.mxu0 %v1155
        %1799 = vmatprep.subr.mxu0 %v1160
        %1800 = vmatpush1.msra.mxu0 %v1159
        %1801 = vmatprep.subr.mxu0 %v1164
        %1802 = vmatpush1.msra.mxu0 %v1163
        %1803 = vmatprep.subr.mxu0 %v1168
        %1804 = vmatpush1.msra.mxu0 %v1167
        %1805 = vmatprep.subr.mxu0 %v1172
        %1806 = vmatpush1.msra.mxu0 %v1171
        %1807 = vmatprep.subr.mxu0 %v1176
        %1808 = vmatpush1.msra.mxu0 %v1175
        %1809 = vmatprep.subr.mxu0 %v1180
        %1810 = vmatpush1.msra.mxu0 %v1179
        %1811 = vmatprep.subr.mxu0 %v1184
        %1812 = vmatpush1.msra.mxu0 %v1183
        %1813 = vmatprep.subr.mxu0 %v1188
        %1814 = vmatpush1.msra.mxu0 %v1187
        %1815 = vmatprep.subr.mxu0 %v1192
        %1816 = vmatpush1.msra.mxu0 %v1191
        %1817 = vmatprep.subr.mxu0 %v1196
        %1818 = vmatpush1.msra.mxu0 %v1195
        %1819 = vmatprep.subr.mxu0 %v1200
        %1820 = vmatpush1.msra.mxu0 %v1199
        %1821 = vmatprep.subr.mxu0 %v1204
        %1822 = vmatpush1.msra.mxu0 %v1203
        %1823 = vmatprep.subr.mxu0 %v1208
        %1824 = vmatpush1.msra.mxu0 %v1207
        %1825 = vmatprep.subr.mxu0 %v1212
        %1826 = vmatpush1.msra.mxu0 %v1211
        %1827 = vmatprep.subr.mxu0 %v1216
        %1828 = vmatpush1.msra.mxu0 %v1215
        %1829 = vmatprep.subr.mxu0 %v1220
        %1830 = vmatpush1.msra.mxu0 %v1219
        %1831 = vmatprep.subr.mxu0 %v1224
        %1832 = vmatpush1.msra.mxu0 %v1223
        %1833 = vmatprep.subr.mxu0 %v1228
        %1834 = vmatpush1.msra.mxu0 %v1227
        %1835 = vmatprep.subr.mxu0 %v1232
        %1836 = vmatpush1.msra.mxu0 %v1231
        %1837 = vmatprep.subr.mxu0 %v1236
        %1838 = vmatpush1.msra.mxu0 %v1235
        %1839 = vmatprep.subr.mxu0 %v1240
        %1840 = vmatpush1.msra.mxu0 %v1239
        %1841 = vmatprep.subr.mxu0 %v1244
        %1842 = vmatpush1.msra.mxu0 %v1243
        %1843 = vmatprep.subr.mxu0 %v1248
        %1844 = vmatpush1.msra.mxu0 %v1247
        %1845 = vmatprep.subr.mxu0 %v1252
        %1846 = vmatpush1.msra.mxu0 %v1251
        %1847 = vmatprep.subr.mxu0 %v1256
        %1848 = vmatpush1.msra.mxu0 %v1255
        %1849 = vmatprep.subr.mxu0 %v1260
        %1850 = vmatpush1.msra.mxu0 %v1259
        %1851 = vmatprep.subr.mxu0 %v1264
        %1852 = vmatpush1.msra.mxu0 %v1263
        %1853 = vmatprep.subr.mxu0 %v1268
        %1854 = vmatpush1.msra.mxu0 %v1267
        %1855 = vmatprep.subr.mxu0 %v1272
        %1856 = vmatpush1.msra.mxu0 %v1271
        %1857 = vmatprep.subr.mxu0 %v1276
        %1858 = vmatpush1.msra.mxu0 %v1275
        %1859 = vmatprep.mubr.f32.mxu0 %v1432
        %1860 = vmatmul.mubr.f32.gmra.mrb[0].mxu0 %v1018
        %v1861 = vpop.f32.mrb[0].mxu0
        %v1862 = vadd.f32 %v1791, %v1861
        %v1863 = vpop.f32.mrb[0].mxu0
        %v1864 = vadd.f32 %v1793, %v1863
        %1865 = vdwg.mxu0
        %1866 = vmatprep.subr.mxu0 %v1280
        %1867 = vmatpush1.msra.mxu0 %v1279
        %1868 = vmatprep.subr.mxu0 %v1284
        %1869 = vmatpush1.msra.mxu0 %v1283
        %1870 = vmatprep.subr.mxu0 %v1288
        %1871 = vmatpush1.msra.mxu0 %v1287
        %1872 = vmatprep.subr.mxu0 %v1292
        %1873 = vmatpush1.msra.mxu0 %v1291
        %1874 = vmatprep.subr.mxu0 %v1296
        %1875 = vmatpush1.msra.mxu0 %v1295
        %1876 = vmatprep.subr.mxu0 %v1300
        %1877 = vmatpush1.msra.mxu0 %v1299
        %1878 = vmatprep.subr.mxu0 %v1304
        %1879 = vmatpush1.msra.mxu0 %v1303
        %1880 = vmatprep.subr.mxu0 %v1308
        %1881 = vmatpush1.msra.mxu0 %v1307
        %1882 = vmatprep.subr.mxu0 %v1312
        %1883 = vmatpush1.msra.mxu0 %v1311
        %1884 = vmatprep.subr.mxu0 %v1316
        %1885 = vmatpush1.msra.mxu0 %v1315
        %1886 = vmatprep.subr.mxu0 %v1320
        %1887 = vmatpush1.msra.mxu0 %v1319
        %1888 = vmatprep.subr.mxu0 %v1324
        %1889 = vmatpush1.msra.mxu0 %v1323
        %1890 = vmatprep.subr.mxu0 %v1328
        %1891 = vmatpush1.msra.mxu0 %v1327
        %1892 = vmatprep.subr.mxu0 %v1332
        %1893 = vmatpush1.msra.mxu0 %v1331
        %1894 = vmatprep.subr.mxu0 %v1336
        %1895 = vmatpush1.msra.mxu0 %v1335
        %1896 = vmatprep.subr.mxu0 %v1340
        %1897 = vmatpush1.msra.mxu0 %v1339
        %1898 = vmatprep.subr.mxu0 %v1344
        %1899 = vmatpush1.msra.mxu0 %v1343
        %1900 = vmatprep.subr.mxu0 %v1348
        %1901 = vmatpush1.msra.mxu0 %v1347
        %1902 = vmatprep.subr.mxu0 %v1352
        %1903 = vmatpush1.msra.mxu0 %v1351
        %1904 = vmatprep.subr.mxu0 %v1356
        %1905 = vmatpush1.msra.mxu0 %v1355
        %1906 = vmatprep.subr.mxu0 %v1360
        %1907 = vmatpush1.msra.mxu0 %v1359
        %1908 = vmatprep.subr.mxu0 %v1364
        %1909 = vmatpush1.msra.mxu0 %v1363
        %1910 = vmatprep.subr.mxu0 %v1368
        %1911 = vmatpush1.msra.mxu0 %v1367
        %1912 = vmatprep.subr.mxu0 %v1372
        %1913 = vmatpush1.msra.mxu0 %v1371
        %1914 = vmatprep.subr.mxu0 %v1376
        %1915 = vmatpush1.msra.mxu0 %v1375
        %1916 = vmatprep.subr.mxu0 %v1380
        %1917 = vmatpush1.msra.mxu0 %v1379
        %1918 = vmatprep.subr.mxu0 %v1384
        %1919 = vmatpush1.msra.mxu0 %v1383
        %1920 = vmatprep.subr.mxu0 %v1388
        %1921 = vmatpush1.msra.mxu0 %v1387
        %1922 = vmatprep.subr.mxu0 %v1392
        %1923 = vmatpush1.msra.mxu0 %v1391
        %1924 = vmatprep.subr.mxu0 %v1396
        %1925 = vmatpush1.msra.mxu0 %v1395
        %1926 = vmatprep.subr.mxu0 %v1400
        %1927 = vmatpush1.msra.mxu0 %v1399
        %1928 = vmatprep.subr.mxu0 %v1404
        %1929 = vmatpush1.msra.mxu0 %v1403
        %1930 = vmatprep.mubr.f32.mxu0 %v1433
        %1931 = vmatmul.mubr.f32.gmra.mrb[0].mxu0 %v1019
        %v1932 = vpop.f32.mrb[0].mxu0
        %v1933 = vadd.f32 %v1862, %v1932
        %v1934 = vpop.f32.mrb[0].mxu0
        %v1935 = vadd.f32 %v1864, %v1934
        %1936 = vdwg.mxu0
        %1937 = vmatprep.subr.mxu0 %v1408
        %1938 = vmatpush1.msra.mxu0 %v1407
        %1939 = vmatprep.subr.mxu0 %v1412
        %1940 = vmatpush1.msra.mxu0 %v1411
        %1941 = vmatprep.subr.mxu0 %v1416
        %1942 = vmatpush1.msra.mxu0 %v1415
        %1943 = vmatprep.subr.mxu0 %v1420
        %1944 = vmatpush1.msra.mxu0 %v1419
        %1945 = vmatprep.subr.mxu0 0.0
        %1946 = vmatpush1.msra.mxu0 0.0
        %1947 = vmatprep.subr.mxu0 0.0
        %1948 = vmatpush1.msra.mxu0 0.0
        %1949 = vmatprep.subr.mxu0 0.0
        %1950 = vmatpush1.msra.mxu0 0.0
        %1951 = vmatprep.subr.mxu0 0.0
        %1952 = vmatpush1.msra.mxu0 0.0
        %1953 = vmatprep.subr.mxu0 0.0
        %1954 = vmatpush1.msra.mxu0 0.0
        %1955 = vmatprep.subr.mxu0 0.0
        %1956 = vmatpush1.msra.mxu0 0.0
        %1957 = vmatprep.subr.mxu0 0.0
        %1958 = vmatpush1.msra.mxu0 0.0
        %1959 = vmatprep.subr.mxu0 0.0
        %1960 = vmatpush1.msra.mxu0 0.0
        %1961 = vmatprep.subr.mxu0 0.0
        %1962 = vmatpush1.msra.mxu0 0.0
        %1963 = vmatprep.subr.mxu0 0.0
        %1964 = vmatpush1.msra.mxu0 0.0
        %1965 = vmatprep.subr.mxu0 0.0
        %1966 = vmatpush1.msra.mxu0 0.0
        %1967 = vmatprep.subr.mxu0 0.0
        %1968 = vmatpush1.msra.mxu0 0.0
        %1969 = vmatprep.subr.mxu0 0.0
        %1970 = vmatpush1.msra.mxu0 0.0
        %1971 = vmatprep.subr.mxu0 0.0
        %1972 = vmatpush1.msra.mxu0 0.0
        %1973 = vmatprep.subr.mxu0 0.0
        %1974 = vmatpush1.msra.mxu0 0.0
        %1975 = vmatprep.subr.mxu0 0.0
        %1976 = vmatpush1.msra.mxu0 0.0
        %1977 = vmatprep.subr.mxu0 0.0
        %1978 = vmatpush1.msra.mxu0 0.0
        %1979 = vmatprep.subr.mxu0 0.0
        %1980 = vmatpush1.msra.mxu0 0.0
        %1981 = vmatprep.subr.mxu0 0.0
        %1982 = vmatpush1.msra.mxu0 0.0
        %1983 = vmatprep.subr.mxu0 0.0
        %1984 = vmatpush1.msra.mxu0 0.0
        %1985 = vmatprep.subr.mxu0 0.0
        %1986 = vmatpush1.msra.mxu0 0.0
        %1987 = vmatprep.subr.mxu0 0.0
        %1988 = vmatpush1.msra.mxu0 0.0
        %1989 = vmatprep.subr.mxu0 0.0
        %1990 = vmatpush1.msra.mxu0 0.0
        %1991 = vmatprep.subr.mxu0 0.0
        %1992 = vmatpush1.msra.mxu0 0.0
        %1993 = vmatprep.subr.mxu0 0.0
        %1994 = vmatpush1.msra.mxu0 0.0
        %1995 = vmatprep.subr.mxu0 0.0
        %1996 = vmatpush1.msra.mxu0 0.0
        %1997 = vmatprep.subr.mxu0 0.0
        %1998 = vmatpush1.msra.mxu0 0.0
        %1999 = vmatprep.subr.mxu0 0.0
        %2000 = vmatpush1.msra.mxu0 0.0
        %2001 = vmatprep.mubr.f32.mxu0 0.0
        %2002 = vmatmul.mubr.f32.gmra.mrb[0].mxu0 %v1438
        %v2003 = vpop.f32.mrb[0].mxu0
        %v2004 = vadd.f32 %v1933, %v2003
        %v2005 = vpop.f32.mrb[0].mxu0
        %v2006 = vadd.f32 %v1935, %v2005
        %2007 = vdwg.mxu0
        %v2012 = vcombine.low %v1720, %v1722
        %v2013 = vcombine.low %v2004, %v2006
        %2016 = vst [vmem:[%s1015] sm:$0x77] %v2012
        %2017 = vst [vmem:[%s1015 + $0x8] sm:$0x77] %v2013
        %s2018 = smul.u32 4, %s19
        %p2019 = scmp.lt.s32.totalorder %s18, 1
        %s2020 = scalar_select %p2019, %s18, 1
        %p2021 = scmp.lt.s32.totalorder %s2018, 7
        %s2022 = scalar_select %p2021, %s2018, 7
        %s2023 = smul.addr %s2020, 8
        %s2024 = sadd.s32 %s2022, %s2023
        %s2025 = smul.addr %s2024, 4
        %s2026 = scalar_lea.vmem %s3, %s2025
        // Predicated region
        $region56: #{inverse_cifar10_forward.5} parent=50 // pred_check
          %p2027 = pneg %p116
        $region57: #{inverse_cifar10_forward.5} parent=50 // pred_check_branch
          %2029 = sbr.rel (%p2027) target = $region59
        $region58: #{inverse_cifar10_forward.5} parent=50 // pred_region
          %s2030 = smul.u32 4, %s19
        $region59: #{inverse_cifar10_forward.5} parent=50 // pred_fallthru
          _
      $region51: #{inverse_cifar10_forward.5} parent=5 // pred_fallthru
        _
      %p2031 = scmp.le.s32.totalorder 2, %s9
      // Predicated region
      $region60: #{inverse_cifar10_forward.5} parent=5 // pred_check
        %p2032 = pneg %p2031
      $region61: #{inverse_cifar10_forward.5} parent=5 // pred_check_branch
        %2034 = sbr.rel (%p2032) target = $region63
      $region62: #{inverse_cifar10_forward.5} parent=5 // pred_region
        %s2035 = ssub.s32 %s9, 2
        // Predicated region
        $region64: #{inverse_cifar10_forward.5} parent=62 // pred_check
          %p2036 = pneg %p122
        $region65: #{inverse_cifar10_forward.5} parent=62 // pred_check_branch
          %2038 = sbr.rel (%p2036) target = $region67
        $region66: #{inverse_cifar10_forward.5} parent=62 // pred_region
          %s2039 = smul.u32 4, %s21
          %p2040 = scmp.lt.s32.totalorder %s20, 1
          %s2041 = scalar_select %p2040, %s20, 1
          %p2042 = scmp.lt.s32.totalorder %s2039, 7
          %s2043 = scalar_select %p2042, %s2039, 7
          %s2044 = smul.addr %s2041, 8
          %s2045 = sadd.s32 %s2043, %s2044
          %s2046 = smul.addr %s2045, 4
          %s2047 = scalar_lea.vmem %s3, %s2046
        $region67: #{inverse_cifar10_forward.5} parent=62 // pred_fallthru
          _
      $region63: #{inverse_cifar10_forward.5} parent=5 // pred_fallthru
        _
    $region6: #{inverse_cifar10_forward.5} parent=1 // loop_footer
      %s13 = sadd.s32 1, %s9
    $region7: #{inverse_cifar10_forward.5} parent=1 // loop_footer_branch
      %8 = sbr.rel target = $region3
    $region8: #{inverse_cifar10_forward.5} parent=1 // loop_exit
      _

</llo_original>
